<compile_context>
chip_gen: v6e
topology: v6e:2x2x1
jax: 0.10.0
libtpu: 0.0.40
codegen_flags: <defaults>
</compile_context>

<pallas_src>
import numpy as np
import jax
import jax.numpy as jnp
from jax.experimental import pallas as pl
from jax.experimental.pallas import tpu as pltpu

LEAKY_SLOPE = 0.01  # nn.LeakyReLU default negative_slope


# ----------------------------------------------------------------------------
# Host-side matrix builders (numpy, run once in prepare_params).
# Activation layout everywhere:  act[n, i, j, c]  <->  A[n*h + i, j*C + c].
# ----------------------------------------------------------------------------
def _refl(t, n):
    if t < 0:
        return -t
    if t >= n:
        return 2 * n - 2 - t
    return t


def _conv3_band(wt, bias, w_pix):
    """Conv2d(3x3, stride 1, reflect pad 1) -> stacked banded matrices.

    wt: (Cout, Cin, 3, 3) PyTorch weight.  Returns (Wstk, brow):
      Wstk: (3*w_pix*Cin, w_pix*Cout); rows [kh*K:(kh+1)*K] hold the banded
            matrix for kernel row kh (input row offset kh-1).  The band folds
            the three horizontal taps, reflect padding along W and the channel
            mixing into a single matmul.
      brow: (1, w_pix*Cout) bias broadcast over the width.
    """
    wt = np.asarray(wt, np.float32)
    bias = np.asarray(bias, np.float32)
    co, ci = wt.shape[0], wt.shape[1]
    mats = []
    for kh in range(3):
        band = np.zeros((w_pix * ci, w_pix * co), np.float32)
        for j in range(w_pix):
            for kw in range(3):
                js = _refl(j + kw - 1, w_pix)
                band[js * ci:(js + 1) * ci, j * co:(j + 1) * co] += wt[:, :, kh, kw].T
        mats.append(band)
    return np.concatenate(mats, axis=0), np.tile(bias, w_pix)[None, :]


def _row_shift_mats(n_img, h):
    """0/1 matrices Rm, Rp with (Rm @ A)[n, i] = A[n, reflect(i-1)] etc."""
    rows = n_img * h
    rm = np.zeros((rows, rows), np.float32)
    rp = np.zeros((rows, rows), np.float32)
    for n in range(n_img):
        for i in range(h):
            rm[n * h + i, n * h + _refl(i - 1, h)] = 1.0
            rp[n * h + i, n * h + _refl(i + 1, h)] = 1.0
    return rm, rp


def _pool_mats(n_img, h, w, c):
    """MaxPool2d(2,2): row-pair selectors (left matmul) + lane-pair selectors (right matmul)."""
    h2, w2 = h // 2, w // 2
    me = np.zeros((n_img * h2, n_img * h), np.float32)
    mo = np.zeros((n_img * h2, n_img * h), np.float32)
    for n in range(n_img):
        for i in range(h2):
            me[n * h2 + i, n * h + 2 * i] = 1.0
            mo[n * h2 + i, n * h + 2 * i + 1] = 1.0
    e0 = np.zeros((w * c, w2 * c), np.float32)
    e1 = np.zeros((w * c, w2 * c), np.float32)
    for j in range(w2):
        for cc in range(c):
            e0[(2 * j) * c + cc, j * c + cc] = 1.0
            e1[(2 * j + 1) * c + cc, j * c + cc] = 1.0
    return me, mo, e0, e1


def _convt_mats(wt, bias, n_img, h, w):
    """ConvTranspose2d(k=2, s=2): per-kernel-row lane matrices + 0/1 row scatters."""
    wt = np.asarray(wt, np.float32)          # (Cin, Cout, 2, 2) PyTorch layout
    bias = np.asarray(bias, np.float32)
    ci, co = wt.shape[0], wt.shape[1]
    mats = []
    for kh in range(2):
        m = np.zeros((w * ci, 2 * w * co), np.float32)
        for j in range(w):
            for kw in range(2):
                m[j * ci:(j + 1) * ci, (2 * j + kw) * co:(2 * j + kw + 1) * co] = wt[:, :, kh, kw]
        mats.append(m)
    mstk = np.concatenate(mats, axis=0)
    brow = np.tile(bias, 2 * w)[None, :]
    s0 = np.zeros((n_img * 2 * h, n_img * h), np.float32)
    s1 = np.zeros((n_img * 2 * h, n_img * h), np.float32)
    for n in range(n_img):
        for i in range(h):
            s0[n * 2 * h + 2 * i, n * h + i] = 1.0
            s1[n * 2 * h + 2 * i + 1, n * h + i] = 1.0
    return mstk, brow, s0, s1


def prepare_params(raw, batch, height, width):
    """PyTorch-layout weights -> matrices consumed by the fused kernel (built once)."""
    n_img, big_h, big_w = batch, height, width
    n_down = len(raw["down"])
    assert big_h % (2 ** n_down) == 0 and big_w % (2 ** n_down) == 0
    j = jnp.asarray

    prep = {"res": {}, "emb": [], "down": [], "bott": [], "up": [], "pred": []}

    h = big_h
    for _ in range(n_down + 1):
        rm, rp = _row_shift_mats(n_img, h)
        prep["res"][f"h{h}"] = {"rm": j(rm), "rp": j(rp)}
        h //= 2

    # Analyzer.embedding (3x 3x3 conv, no activation)
    for (wc, bc) in raw["ana_emb"]:
        wstk, brow = _conv3_band(wc, bc, big_w)
        prep["emb"].append({"w": j(wstk), "b": j(brow)})

    # DownsamplingUnits: MaxPool2d(2,2) then conv+LeakyReLU, conv+LeakyReLU
    h, w = big_h, big_w
    for unit in raw["down"]:
        c_in = unit[0][0].shape[1]
        me, mo, e0, e1 = _pool_mats(n_img, h, w, c_in)
        h //= 2
        w //= 2
        convs = []
        for (wc, bc) in unit:
            wstk, brow = _conv3_band(wc, bc, w)
            convs.append({"w": j(wstk), "b": j(brow)})
        prep["down"].append({"pool": {"me": j(me), "mo": j(mo), "e0": j(e0), "e1": j(e1)},
                             "convs": convs})

    # BottleNeck (conv+LeakyReLU, conv+LeakyReLU) at the coarsest resolution
    for (wc, bc) in raw["bottleneck"]:
        wstk, brow = _conv3_band(wc, bc, w)
        prep["bott"].append({"w": j(wstk), "b": j(brow)})

    # Synthesizer.embedding: ConvTranspose2d(k=2, s=2)
    mstk, brow, s0, s1 = _convt_mats(raw["syn_emb"][0], raw["syn_emb"][1], n_img, h, w)
    prep["synemb"] = {"m": j(mstk), "b": j(brow), "s0": j(s0), "s1": j(s1)}
    h *= 2
    w *= 2

    # UpsamplingUnits (bridge=False): conv+LReLU, conv+LReLU, ConvTranspose2d(2,2)
    for unit in raw["up"]:
        convs = []
        for (wc, bc) in unit[:2]:
            wstk, brow_c = _conv3_band(wc, bc, w)
            convs.append({"w": j(wstk), "b": j(brow_c)})
        mstk, brow_t, s0, s1 = _convt_mats(unit[2][0], unit[2][1], n_img, h, w)
        prep["up"].append({"convs": convs,
                           "convt": {"m": j(mstk), "b": j(brow_t), "s0": j(s0), "s1": j(s1)}})
        h *= 2
        w *= 2

    # predict head: fold the trailing 1x1 classifier into the second 3x3 conv
    # (exact: nn.Sequential(Conv3x3, Conv3x3, Conv1x1) has no nonlinearity).
    (w1, b1), (w2, b2), (w3, b3) = raw["predict"]
    w3m = np.asarray(w3, np.float32)[:, :, 0, 0]
    w2f = np.einsum("oc,cikl->oikl", w3m, np.asarray(w2, np.float32))
    b2f = w3m @ np.asarray(b2, np.float32) + np.asarray(b3, np.float32)
    for (wc, bc) in ((w1, b1), (w2f, b2f)):
        wstk, brow_p = _conv3_band(wc, bc, big_w)
        prep["pred"].append({"w": j(wstk), "b": j(brow_p)})
    return prep


# ----------------------------------------------------------------------------
# Fused forward: one grid-less pallas_call for the whole network.
# ----------------------------------------------------------------------------
def unet_no_bridge_forward(x_nchw, prep):
    n_img, c0, big_h, big_w = x_nchw.shape
    classes = prep["pred"][-1]["b"].shape[1] // big_w
    x2d = jnp.transpose(x_nchw, (0, 2, 3, 1)).reshape(n_img * big_h, big_w * c0)
    x2d = x2d.astype(jnp.float32)

    flat, treedef = jax.tree_util.tree_flatten(prep)
    n_par = len(flat)

    def kernel(*refs):
        x_ref = refs[0]
        out_ref = refs[1 + n_par]
        p = jax.tree_util.tree_unflatten(treedef, refs[1:1 + n_par])

        def dot(a, b):
            return jnp.dot(a, b, preferred_element_type=jnp.float32)

        def conv3(a, cp, rowp, leaky):
            k = a.shape[1]                       # w * Cin (static)
            w_ref = cp["w"]                      # (3k, w*Cout) stacked banded weight
            am = dot(rowp["rm"][...], a)         # row above (reflect at i == 0)
            ap = dot(rowp["rp"][...], a)         # row below (reflect at i == h-1)
            y = (dot(am, w_ref[0:k, :]) + dot(a, w_ref[k:2 * k, :])
                 + dot(ap, w_ref[2 * k:3 * k, :]) + cp["b"][...])
            if leaky:
                y = jnp.maximum(y, LEAKY_SLOPE * y)
            return y

        def maxpool(a, pp):
            xi = jnp.maximum(dot(pp["me"][...], a), dot(pp["mo"][...], a))
            return jnp.maximum(dot(xi, pp["e0"][...]), dot(xi, pp["e1"][...]))

        def convt(a, tp):
            k = a.shape[1]
            m_ref = tp["m"]
            y0 = dot(a, m_ref[0:k, :]) + tp["b"][...]      # even output rows
            y1 = dot(a, m_ref[k:2 * k, :]) + tp["b"][...]  # odd output rows
            return dot(tp["s0"][...], y0) + dot(tp["s1"][...], y1)

        a = x_ref[...]                                     # (N*H, W*C0)
        h = big_h
        rowp = p["res"][f"h{h}"]
        for cp in p["emb"]:                                # Analyzer.embedding
            a = conv3(a, cp, rowp, leaky=False)
        for dn in p["down"]:                               # DownsamplingUnits
            a = maxpool(a, dn["pool"])
            h //= 2
            rowp = p["res"][f"h{h}"]
            for cp in dn["convs"]:
                a = conv3(a, cp, rowp, leaky=True)
        for cp in p["bott"]:                               # BottleNeck
            a = conv3(a, cp, rowp, leaky=True)
        a = convt(a, p["synemb"])                          # Synthesizer.embedding
        h *= 2
        for up in p["up"]:                                 # UpsamplingUnits
            rowp = p["res"][f"h{h}"]
            for cp in up["convs"]:
                a = conv3(a, cp, rowp, leaky=True)
            a = convt(a, up["convt"])
            h *= 2
        rowp = p["res"][f"h{h}"]
        for cp in p["pred"]:                               # predict head (1x1 folded in)
            a = conv3(a, cp, rowp, leaky=False)
        out_ref[...] = a                                   # (N*H, W*classes)

    vmem = lambda: pl.BlockSpec(memory_space=pltpu.MemorySpace.VMEM)
    out2d = pl.pallas_call(
        kernel,
        out_shape=jax.ShapeDtypeStruct((n_img * big_h, big_w * classes), jnp.float32),
        in_specs=[vmem() for _ in range(1 + n_par)],
        out_specs=vmem(),
    )(x2d, *flat)
    y = out2d.reshape(n_img, big_h, big_w, classes)
    return jnp.transpose(y, (0, 3, 1, 2))                  # (N, classes, H, W)


# ----------------------------------------------------------------------------
# Pure-JAX (XLA) reference of the same module, for numerical cross-checking.
# ----------------------------------------------------------------------------
def _reference_forward(x_nchw, raw):
    def conv3(x, w, b):  # NHWC, reflect pad 1
        xp = jnp.pad(x, ((0, 0), (1, 1), (1, 1), (0, 0)), mode="reflect")
        y = jax.lax.conv_general_dilated(
            xp, jnp.transpose(w, (2, 3, 1, 0)), (1, 1), "VALID",
            dimension_numbers=("NHWC", "HWIO", "NHWC"))
        return y + b

    def lrelu(x):
        return jnp.maximum(x, LEAKY_SLOPE * x)

    def pool(x):
        n, h, w, c = x.shape
        return x.reshape(n, h // 2, 2, w // 2, 2, c).max(axis=(2, 4))

    def convt(x, w, b):  # ConvTranspose2d k=2 s=2, w: (Cin, Cout, 2, 2)
        n, h, wd, _ = x.shape
        co = w.shape[1]
        y = jnp.einsum("nhwi,iokl->nhkwlo", x, w).reshape(n, 2 * h, 2 * wd, co)
        return y + b

    f = jnp.transpose(x_nchw, (0, 2, 3, 1))
    for (w, b) in raw["ana_emb"]:
        f = conv3(f, w, b)
    for unit in raw["down"]:
        f = pool(f)
        for (w, b) in unit:
            f = lrelu(conv3(f, w, b))
    for (w, b) in raw["bottleneck"]:
        f = lrelu(conv3(f, w, b))
    f = convt(f, raw["syn_emb"][0], raw["syn_emb"][1])
    for unit in raw["up"]:
        for (w, b) in unit[:2]:
            f = lrelu(conv3(f, w, b))
        f = convt(f, unit[2][0], unit[2][1])
    (w1, b1), (w2, b2), (w3, b3) = raw["predict"]
    f = conv3(f, w1, b1)
    f = conv3(f, w2, b2)
    f = jnp.einsum("nhwc,oc->nhwo", f, w3[:, :, 0, 0]) + b3
    return jnp.transpose(f, (0, 3, 1, 2))


# ----------------------------------------------------------------------------
# Deterministic synthetic parameters (shapes exactly as the PyTorch __init__).
# ----------------------------------------------------------------------------
def _xavier(key, shape):
    rf = shape[2] * shape[3]
    fan_in, fan_out = shape[1] * rf, shape[0] * rf
    std = (2.0 / (fan_in + fan_out)) ** 0.5
    return std * jax.random.normal(key, shape, dtype=jnp.float32)


def init_raw_params(key, channels_org=3, classes=1, channels_net=8, channels_bn=48,
                    compression_level=3):
    ks = iter(jax.random.split(key, 64))
    cn = channels_net
    zeros = lambda n: jnp.zeros((n,), jnp.float32)                         # Conv2d bias init 0
    rnd = lambda n: 0.05 * jax.random.normal(next(ks), (n,), jnp.float32)  # ConvT default init

    p = {}
    p["ana_emb"] = [(_xavier(next(ks), (cn, channels_org, 3, 3)), zeros(cn)),
                    (_xavier(next(ks), (cn, cn, 3, 3)), zeros(cn)),
                    (_xavier(next(ks), (cn, cn, 3, 3)), zeros(cn))]
    p["down"] = [[(_xavier(next(ks), (cn, cn, 3, 3)), zeros(cn)),
                  (_xavier(next(ks), (cn, cn, 3, 3)), zeros(cn))]
                 for _ in range(compression_level)]
    p["bottleneck"] = [(_xavier(next(ks), (channels_bn, cn, 3, 3)), zeros(channels_bn)),
                       (_xavier(next(ks), (channels_bn, channels_bn, 3, 3)), zeros(channels_bn))]
    p["syn_emb"] = (_xavier(next(ks), (channels_bn, cn, 2, 2)), rnd(cn))
    p["up"] = [[(_xavier(next(ks), (cn, cn, 3, 3)), zeros(cn)),
                (_xavier(next(ks), (cn, cn, 3, 3)), zeros(cn)),
                (_xavier(next(ks), (cn, cn, 2, 2)), rnd(cn))]
               for _ in range(compression_level - 1)]
    p["predict"] = [(_xavier(next(ks), (cn, cn, 3, 3)), zeros(cn)),
                    (_xavier(next(ks), (cn, cn, 3, 3)), zeros(cn)),
                    (_xavier(next(ks), (classes, cn, 1, 1)), zeros(classes))]
    return p


if __name__ == "__main__":
    key = jax.random.PRNGKey(0)
    k_params, k_x = jax.random.split(key)

    raw = init_raw_params(k_params)
    N, H, W = 2, 16, 16
    prep = prepare_params(raw, batch=N, height=H, width=W)

    # UNetNoBridge input: (N, channels_org, H, W), H and W divisible by 2**compression_level.
    x = jax.random.normal(k_x, (N, 3, H, W), dtype=jnp.float32)

    fwd = jax.jit(unet_no_bridge_forward)
    y = jax.block_until_ready(fwd(x, prep))

    assert y.shape == (N, 1, H, W), y.shape
    assert y.dtype == jnp.float32
    assert bool(jnp.all(jnp.isfinite(y))), "non-finite output"

    # Cross-check against a pure-JAX (XLA) reference of the same module.
    y_ref = jax.block_until_ready(jax.jit(_reference_forward)(x, raw))
    err = float(jnp.max(jnp.abs(y - y_ref)))
    scale = float(jnp.max(jnp.abs(y_ref)))
    assert err <= 1e-1 * (1.0 + scale), ("kernel/reference mismatch", err, scale)

    print("KERNEL_OK")
</pallas_src>

<mosaic_0001>
module attributes {stable_mosaic.version = 11 : i64} {
  func.func @kernel(%arg0: memref<32x48xf32, #tpu.memory_space<vmem>>, %arg1: memref<1x96xf32, #tpu.memory_space<vmem>>, %arg2: memref<48x96xf32, #tpu.memory_space<vmem>>, %arg3: memref<1x96xf32, #tpu.memory_space<vmem>>, %arg4: memref<288x96xf32, #tpu.memory_space<vmem>>, %arg5: memref<1x64xf32, #tpu.memory_space<vmem>>, %arg6: memref<192x64xf32, #tpu.memory_space<vmem>>, %arg7: memref<1x64xf32, #tpu.memory_space<vmem>>, %arg8: memref<192x64xf32, #tpu.memory_space<vmem>>, %arg9: memref<128x64xf32, #tpu.memory_space<vmem>>, %arg10: memref<128x64xf32, #tpu.memory_space<vmem>>, %arg11: memref<16x32xf32, #tpu.memory_space<vmem>>, %arg12: memref<16x32xf32, #tpu.memory_space<vmem>>, %arg13: memref<1x32xf32, #tpu.memory_space<vmem>>, %arg14: memref<96x32xf32, #tpu.memory_space<vmem>>, %arg15: memref<1x32xf32, #tpu.memory_space<vmem>>, %arg16: memref<96x32xf32, #tpu.memory_space<vmem>>, %arg17: memref<64x32xf32, #tpu.memory_space<vmem>>, %arg18: memref<64x32xf32, #tpu.memory_space<vmem>>, %arg19: memref<8x16xf32, #tpu.memory_space<vmem>>, %arg20: memref<8x16xf32, #tpu.memory_space<vmem>>, %arg21: memref<1x16xf32, #tpu.memory_space<vmem>>, %arg22: memref<48x16xf32, #tpu.memory_space<vmem>>, %arg23: memref<1x16xf32, #tpu.memory_space<vmem>>, %arg24: memref<48x16xf32, #tpu.memory_space<vmem>>, %arg25: memref<32x16xf32, #tpu.memory_space<vmem>>, %arg26: memref<32x16xf32, #tpu.memory_space<vmem>>, %arg27: memref<4x8xf32, #tpu.memory_space<vmem>>, %arg28: memref<4x8xf32, #tpu.memory_space<vmem>>, %arg29: memref<1x128xf32, #tpu.memory_space<vmem>>, %arg30: memref<144x128xf32, #tpu.memory_space<vmem>>, %arg31: memref<1x128xf32, #tpu.memory_space<vmem>>, %arg32: memref<384x128xf32, #tpu.memory_space<vmem>>, %arg33: memref<1x128xf32, #tpu.memory_space<vmem>>, %arg34: memref<384x128xf32, #tpu.memory_space<vmem>>, %arg35: memref<1x128xf32, #tpu.memory_space<vmem>>, %arg36: memref<384x128xf32, #tpu.memory_space<vmem>>, %arg37: memref<1x16xf32, #tpu.memory_space<vmem>>, %arg38: memref<384x16xf32, #tpu.memory_space<vmem>>, %arg39: memref<32x32xf32, #tpu.memory_space<vmem>>, %arg40: memref<32x32xf32, #tpu.memory_space<vmem>>, %arg41: memref<4x4xf32, #tpu.memory_space<vmem>>, %arg42: memref<4x4xf32, #tpu.memory_space<vmem>>, %arg43: memref<8x8xf32, #tpu.memory_space<vmem>>, %arg44: memref<8x8xf32, #tpu.memory_space<vmem>>, %arg45: memref<16x16xf32, #tpu.memory_space<vmem>>, %arg46: memref<16x16xf32, #tpu.memory_space<vmem>>, %arg47: memref<1x32xf32, #tpu.memory_space<vmem>>, %arg48: memref<192x32xf32, #tpu.memory_space<vmem>>, %arg49: memref<8x4xf32, #tpu.memory_space<vmem>>, %arg50: memref<8x4xf32, #tpu.memory_space<vmem>>, %arg51: memref<1x32xf32, #tpu.memory_space<vmem>>, %arg52: memref<96x32xf32, #tpu.memory_space<vmem>>, %arg53: memref<1x32xf32, #tpu.memory_space<vmem>>, %arg54: memref<96x32xf32, #tpu.memory_space<vmem>>, %arg55: memref<1x64xf32, #tpu.memory_space<vmem>>, %arg56: memref<64x64xf32, #tpu.memory_space<vmem>>, %arg57: memref<16x8xf32, #tpu.memory_space<vmem>>, %arg58: memref<16x8xf32, #tpu.memory_space<vmem>>, %arg59: memref<1x64xf32, #tpu.memory_space<vmem>>, %arg60: memref<192x64xf32, #tpu.memory_space<vmem>>, %arg61: memref<1x64xf32, #tpu.memory_space<vmem>>, %arg62: memref<192x64xf32, #tpu.memory_space<vmem>>, %arg63: memref<1x128xf32, #tpu.memory_space<vmem>>, %arg64: memref<128x128xf32, #tpu.memory_space<vmem>>, %arg65: memref<32x16xf32, #tpu.memory_space<vmem>>, %arg66: memref<32x16xf32, #tpu.memory_space<vmem>>, %arg67: memref<32x16xf32, #tpu.memory_space<vmem>>) attributes {dimension_semantics = [], scalar_prefetch = 0 : i64, scratch_operands = 0 : i64, tpu.core_type = #tpu.core_type<tc>} {
    %c0 = arith.constant 0 : index
    %c0_0 = arith.constant 0 : index
    %0 = vector.load %arg0[%c0, %c0_0] : memref<32x48xf32, #tpu.memory_space<vmem>>, vector<32x48xf32>
    %c0_1 = arith.constant 0 : index
    %c0_2 = arith.constant 0 : index
    %1 = vector.load %arg39[%c0_1, %c0_2] : memref<32x32xf32, #tpu.memory_space<vmem>>, vector<32x32xf32>
    %cst = arith.constant dense<0.000000e+00> : vector<32x48xf32>
    %2 = tpu.matmul %1, %0, %cst {dimension_numbers = #tpu.dot_dimension_numbers<[1], [0], [0], [1], [0, 0, 1, 1], [], []>} : vector<32x32xf32>, vector<32x48xf32>, vector<32x48xf32> -> vector<32x48xf32>
    %c0_3 = arith.constant 0 : index
    %c0_4 = arith.constant 0 : index
    %3 = vector.load %arg40[%c0_3, %c0_4] : memref<32x32xf32, #tpu.memory_space<vmem>>, vector<32x32xf32>
    %cst_5 = arith.constant dense<0.000000e+00> : vector<32x48xf32>
    %4 = tpu.matmul %3, %0, %cst_5 {dimension_numbers = #tpu.dot_dimension_numbers<[1], [0], [0], [1], [0, 0, 1, 1], [], []>} : vector<32x32xf32>, vector<32x48xf32>, vector<32x48xf32> -> vector<32x48xf32>
    %c0_6 = arith.constant 0 : index
    %c0_7 = arith.constant 0 : index
    %5 = vector.load %arg30[%c0_6, %c0_7] : memref<144x128xf32, #tpu.memory_space<vmem>>, vector<48x128xf32>
    %cst_8 = arith.constant dense<0.000000e+00> : vector<32x128xf32>
    %6 = tpu.matmul %2, %5, %cst_8 {dimension_numbers = #tpu.dot_dimension_numbers<[1], [0], [0], [1], [0, 0, 1, 1], [], []>} : vector<32x48xf32>, vector<48x128xf32>, vector<32x128xf32> -> vector<32x128xf32>
    %c48 = arith.constant 48 : index
    %c0_9 = arith.constant 0 : index
    %7 = vector.load %arg30[%c48, %c0_9] : memref<144x128xf32, #tpu.memory_space<vmem>>, vector<48x128xf32>
    %cst_10 = arith.constant dense<0.000000e+00> : vector<32x128xf32>
    %8 = tpu.matmul %0, %7, %cst_10 {dimension_numbers = #tpu.dot_dimension_numbers<[1], [0], [0], [1], [0, 0, 1, 1], [], []>} : vector<32x48xf32>, vector<48x128xf32>, vector<32x128xf32> -> vector<32x128xf32>
    %9 = arith.addf %6, %8 : vector<32x128xf32>
    %c96 = arith.constant 96 : index
    %c0_11 = arith.constant 0 : index
    %10 = vector.load %arg30[%c96, %c0_11] : memref<144x128xf32, #tpu.memory_space<vmem>>, vector<48x128xf32>
    %cst_12 = arith.constant dense<0.000000e+00> : vector<32x128xf32>
    %11 = tpu.matmul %4, %10, %cst_12 {dimension_numbers = #tpu.dot_dimension_numbers<[1], [0], [0], [1], [0, 0, 1, 1], [], []>} : vector<32x48xf32>, vector<48x128xf32>, vector<32x128xf32> -> vector<32x128xf32>
    %12 = arith.addf %9, %11 : vector<32x128xf32>
    %c0_13 = arith.constant 0 : index
    %c0_14 = arith.constant 0 : index
    %13 = vector.load %arg29[%c0_13, %c0_14] : memref<1x128xf32, #tpu.memory_space<vmem>>, vector<1x128xf32>
    %14 = vector.broadcast %13 : vector<1x128xf32> to vector<32x128xf32>
    %15 = arith.addf %12, %14 : vector<32x128xf32>
    %c0_15 = arith.constant 0 : index
    %c0_16 = arith.constant 0 : index
    %16 = vector.load %arg39[%c0_15, %c0_16] : memref<32x32xf32, #tpu.memory_space<vmem>>, vector<32x32xf32>
    %cst_17 = arith.constant dense<0.000000e+00> : vector<32x128xf32>
    %17 = tpu.matmul %16, %15, %cst_17 {dimension_numbers = #tpu.dot_dimension_numbers<[1], [0], [0], [1], [0, 0, 1, 1], [], []>} : vector<32x32xf32>, vector<32x128xf32>, vector<32x128xf32> -> vector<32x128xf32>
    %c0_18 = arith.constant 0 : index
    %c0_19 = arith.constant 0 : index
    %18 = vector.load %arg40[%c0_18, %c0_19] : memref<32x32xf32, #tpu.memory_space<vmem>>, vector<32x32xf32>
    %cst_20 = arith.constant dense<0.000000e+00> : vector<32x128xf32>
    %19 = tpu.matmul %18, %15, %cst_20 {dimension_numbers = #tpu.dot_dimension_numbers<[1], [0], [0], [1], [0, 0, 1, 1], [], []>} : vector<32x32xf32>, vector<32x128xf32>, vector<32x128xf32> -> vector<32x128xf32>
    %c0_21 = arith.constant 0 : index
    %c0_22 = arith.constant 0 : index
    %20 = vector.load %arg32[%c0_21, %c0_22] : memref<384x128xf32, #tpu.memory_space<vmem>>, vector<128x128xf32>
    %cst_23 = arith.constant dense<0.000000e+00> : vector<32x128xf32>
    %21 = tpu.matmul %17, %20, %cst_23 {dimension_numbers = #tpu.dot_dimension_numbers<[1], [0], [0], [1], [0, 0, 1, 1], [], []>} : vector<32x128xf32>, vector<128x128xf32>, vector<32x128xf32> -> vector<32x128xf32>
    %c128 = arith.constant 128 : index
    %c0_24 = arith.constant 0 : index
    %22 = vector.load %arg32[%c128, %c0_24] : memref<384x128xf32, #tpu.memory_space<vmem>>, vector<128x128xf32>
    %cst_25 = arith.constant dense<0.000000e+00> : vector<32x128xf32>
    %23 = tpu.matmul %15, %22, %cst_25 {dimension_numbers = #tpu.dot_dimension_numbers<[1], [0], [0], [1], [0, 0, 1, 1], [], []>} : vector<32x128xf32>, vector<128x128xf32>, vector<32x128xf32> -> vector<32x128xf32>
    %24 = arith.addf %21, %23 : vector<32x128xf32>
    %c256 = arith.constant 256 : index
    %c0_26 = arith.constant 0 : index
    %25 = vector.load %arg32[%c256, %c0_26] : memref<384x128xf32, #tpu.memory_space<vmem>>, vector<128x128xf32>
    %cst_27 = arith.constant dense<0.000000e+00> : vector<32x128xf32>
    %26 = tpu.matmul %19, %25, %cst_27 {dimension_numbers = #tpu.dot_dimension_numbers<[1], [0], [0], [1], [0, 0, 1, 1], [], []>} : vector<32x128xf32>, vector<128x128xf32>, vector<32x128xf32> -> vector<32x128xf32>
    %27 = arith.addf %24, %26 : vector<32x128xf32>
    %c0_28 = arith.constant 0 : index
    %c0_29 = arith.constant 0 : index
    %28 = vector.load %arg31[%c0_28, %c0_29] : memref<1x128xf32, #tpu.memory_space<vmem>>, vector<1x128xf32>
    %29 = vector.broadcast %28 : vector<1x128xf32> to vector<32x128xf32>
    %30 = arith.addf %27, %29 : vector<32x128xf32>
    %c0_30 = arith.constant 0 : index
    %c0_31 = arith.constant 0 : index
    %31 = vector.load %arg39[%c0_30, %c0_31] : memref<32x32xf32, #tpu.memory_space<vmem>>, vector<32x32xf32>
    %cst_32 = arith.constant dense<0.000000e+00> : vector<32x128xf32>
    %32 = tpu.matmul %31, %30, %cst_32 {dimension_numbers = #tpu.dot_dimension_numbers<[1], [0], [0], [1], [0, 0, 1, 1], [], []>} : vector<32x32xf32>, vector<32x128xf32>, vector<32x128xf32> -> vector<32x128xf32>
    %c0_33 = arith.constant 0 : index
    %c0_34 = arith.constant 0 : index
    %33 = vector.load %arg40[%c0_33, %c0_34] : memref<32x32xf32, #tpu.memory_space<vmem>>, vector<32x32xf32>
    %cst_35 = arith.constant dense<0.000000e+00> : vector<32x128xf32>
    %34 = tpu.matmul %33, %30, %cst_35 {dimension_numbers = #tpu.dot_dimension_numbers<[1], [0], [0], [1], [0, 0, 1, 1], [], []>} : vector<32x32xf32>, vector<32x128xf32>, vector<32x128xf32> -> vector<32x128xf32>
    %c0_36 = arith.constant 0 : index
    %c0_37 = arith.constant 0 : index
    %35 = vector.load %arg34[%c0_36, %c0_37] : memref<384x128xf32, #tpu.memory_space<vmem>>, vector<128x128xf32>
    %cst_38 = arith.constant dense<0.000000e+00> : vector<32x128xf32>
    %36 = tpu.matmul %32, %35, %cst_38 {dimension_numbers = #tpu.dot_dimension_numbers<[1], [0], [0], [1], [0, 0, 1, 1], [], []>} : vector<32x128xf32>, vector<128x128xf32>, vector<32x128xf32> -> vector<32x128xf32>
    %c128_39 = arith.constant 128 : index
    %c0_40 = arith.constant 0 : index
    %37 = vector.load %arg34[%c128_39, %c0_40] : memref<384x128xf32, #tpu.memory_space<vmem>>, vector<128x128xf32>
    %cst_41 = arith.constant dense<0.000000e+00> : vector<32x128xf32>
    %38 = tpu.matmul %30, %37, %cst_41 {dimension_numbers = #tpu.dot_dimension_numbers<[1], [0], [0], [1], [0, 0, 1, 1], [], []>} : vector<32x128xf32>, vector<128x128xf32>, vector<32x128xf32> -> vector<32x128xf32>
    %39 = arith.addf %36, %38 : vector<32x128xf32>
    %c256_42 = arith.constant 256 : index
    %c0_43 = arith.constant 0 : index
    %40 = vector.load %arg34[%c256_42, %c0_43] : memref<384x128xf32, #tpu.memory_space<vmem>>, vector<128x128xf32>
    %cst_44 = arith.constant dense<0.000000e+00> : vector<32x128xf32>
    %41 = tpu.matmul %34, %40, %cst_44 {dimension_numbers = #tpu.dot_dimension_numbers<[1], [0], [0], [1], [0, 0, 1, 1], [], []>} : vector<32x128xf32>, vector<128x128xf32>, vector<32x128xf32> -> vector<32x128xf32>
    %42 = arith.addf %39, %41 : vector<32x128xf32>
    %c0_45 = arith.constant 0 : index
    %c0_46 = arith.constant 0 : index
    %43 = vector.load %arg33[%c0_45, %c0_46] : memref<1x128xf32, #tpu.memory_space<vmem>>, vector<1x128xf32>
    %44 = vector.broadcast %43 : vector<1x128xf32> to vector<32x128xf32>
    %45 = arith.addf %42, %44 : vector<32x128xf32>
    %c0_47 = arith.constant 0 : index
    %c0_48 = arith.constant 0 : index
    %46 = vector.load %arg11[%c0_47, %c0_48] : memref<16x32xf32, #tpu.memory_space<vmem>>, vector<16x32xf32>
    %cst_49 = arith.constant dense<0.000000e+00> : vector<16x128xf32>
    %47 = tpu.matmul %46, %45, %cst_49 {dimension_numbers = #tpu.dot_dimension_numbers<[1], [0], [0], [1], [0, 0, 1, 1], [], []>} : vector<16x32xf32>, vector<32x128xf32>, vector<16x128xf32> -> vector<16x128xf32>
    %c0_50 = arith.constant 0 : index
    %c0_51 = arith.constant 0 : index
    %48 = vector.load %arg12[%c0_50, %c0_51] : memref<16x32xf32, #tpu.memory_space<vmem>>, vector<16x32xf32>
    %cst_52 = arith.constant dense<0.000000e+00> : vector<16x128xf32>
    %49 = tpu.matmul %48, %45, %cst_52 {dimension_numbers = #tpu.dot_dimension_numbers<[1], [0], [0], [1], [0, 0, 1, 1], [], []>} : vector<16x32xf32>, vector<32x128xf32>, vector<16x128xf32> -> vector<16x128xf32>
    %50 = arith.maximumf %47, %49 : vector<16x128xf32>
    %c0_53 = arith.constant 0 : index
    %c0_54 = arith.constant 0 : index
    %51 = vector.load %arg9[%c0_53, %c0_54] : memref<128x64xf32, #tpu.memory_space<vmem>>, vector<128x64xf32>
    %cst_55 = arith.constant dense<0.000000e+00> : vector<16x64xf32>
    %52 = tpu.matmul %50, %51, %cst_55 {dimension_numbers = #tpu.dot_dimension_numbers<[1], [0], [0], [1], [0, 0, 1, 1], [], []>} : vector<16x128xf32>, vector<128x64xf32>, vector<16x64xf32> -> vector<16x64xf32>
    %c0_56 = arith.constant 0 : index
    %c0_57 = arith.constant 0 : index
    %53 = vector.load %arg10[%c0_56, %c0_57] : memref<128x64xf32, #tpu.memory_space<vmem>>, vector<128x64xf32>
    %cst_58 = arith.constant dense<0.000000e+00> : vector<16x64xf32>
    %54 = tpu.matmul %50, %53, %cst_58 {dimension_numbers = #tpu.dot_dimension_numbers<[1], [0], [0], [1], [0, 0, 1, 1], [], []>} : vector<16x128xf32>, vector<128x64xf32>, vector<16x64xf32> -> vector<16x64xf32>
    %55 = arith.maximumf %52, %54 : vector<16x64xf32>
    %c0_59 = arith.constant 0 : index
    %c0_60 = arith.constant 0 : index
    %56 = vector.load %arg45[%c0_59, %c0_60] : memref<16x16xf32, #tpu.memory_space<vmem>>, vector<16x16xf32>
    %cst_61 = arith.constant dense<0.000000e+00> : vector<16x64xf32>
    %57 = tpu.matmul %56, %55, %cst_61 {dimension_numbers = #tpu.dot_dimension_numbers<[1], [0], [0], [1], [0, 0, 1, 1], [], []>} : vector<16x16xf32>, vector<16x64xf32>, vector<16x64xf32> -> vector<16x64xf32>
    %c0_62 = arith.constant 0 : index
    %c0_63 = arith.constant 0 : index
    %58 = vector.load %arg46[%c0_62, %c0_63] : memref<16x16xf32, #tpu.memory_space<vmem>>, vector<16x16xf32>
    %cst_64 = arith.constant dense<0.000000e+00> : vector<16x64xf32>
    %59 = tpu.matmul %58, %55, %cst_64 {dimension_numbers = #tpu.dot_dimension_numbers<[1], [0], [0], [1], [0, 0, 1, 1], [], []>} : vector<16x16xf32>, vector<16x64xf32>, vector<16x64xf32> -> vector<16x64xf32>
    %c0_65 = arith.constant 0 : index
    %c0_66 = arith.constant 0 : index
    %60 = vector.load %arg6[%c0_65, %c0_66] : memref<192x64xf32, #tpu.memory_space<vmem>>, vector<64x64xf32>
    %cst_67 = arith.constant dense<0.000000e+00> : vector<16x64xf32>
    %61 = tpu.matmul %57, %60, %cst_67 {dimension_numbers = #tpu.dot_dimension_numbers<[1], [0], [0], [1], [0, 0, 1, 1], [], []>} : vector<16x64xf32>, vector<64x64xf32>, vector<16x64xf32> -> vector<16x64xf32>
    %c64 = arith.constant 64 : index
    %c0_68 = arith.constant 0 : index
    %62 = vector.load %arg6[%c64, %c0_68] : memref<192x64xf32, #tpu.memory_space<vmem>>, vector<64x64xf32>
    %cst_69 = arith.constant dense<0.000000e+00> : vector<16x64xf32>
    %63 = tpu.matmul %55, %62, %cst_69 {dimension_numbers = #tpu.dot_dimension_numbers<[1], [0], [0], [1], [0, 0, 1, 1], [], []>} : vector<16x64xf32>, vector<64x64xf32>, vector<16x64xf32> -> vector<16x64xf32>
    %64 = arith.addf %61, %63 : vector<16x64xf32>
    %c128_70 = arith.constant 128 : index
    %c0_71 = arith.constant 0 : index
    %65 = vector.load %arg6[%c128_70, %c0_71] : memref<192x64xf32, #tpu.memory_space<vmem>>, vector<64x64xf32>
    %cst_72 = arith.constant dense<0.000000e+00> : vector<16x64xf32>
    %66 = tpu.matmul %59, %65, %cst_72 {dimension_numbers = #tpu.dot_dimension_numbers<[1], [0], [0], [1], [0, 0, 1, 1], [], []>} : vector<16x64xf32>, vector<64x64xf32>, vector<16x64xf32> -> vector<16x64xf32>
    %67 = arith.addf %64, %66 : vector<16x64xf32>
    %c0_73 = arith.constant 0 : index
    %c0_74 = arith.constant 0 : index
    %68 = vector.load %arg5[%c0_73, %c0_74] : memref<1x64xf32, #tpu.memory_space<vmem>>, vector<1x64xf32>
    %69 = vector.broadcast %68 : vector<1x64xf32> to vector<16x64xf32>
    %70 = arith.addf %67, %69 : vector<16x64xf32>
    %cst_75 = arith.constant 0.00999999977 : f32
    %71 = vector.broadcast %cst_75 : f32 to vector<16x64xf32>
    %72 = arith.mulf %71, %70 : vector<16x64xf32>
    %73 = arith.maximumf %70, %72 : vector<16x64xf32>
    %c0_76 = arith.constant 0 : index
    %c0_77 = arith.constant 0 : index
    %74 = vector.load %arg45[%c0_76, %c0_77] : memref<16x16xf32, #tpu.memory_space<vmem>>, vector<16x16xf32>
    %cst_78 = arith.constant dense<0.000000e+00> : vector<16x64xf32>
    %75 = tpu.matmul %74, %73, %cst_78 {dimension_numbers = #tpu.dot_dimension_numbers<[1], [0], [0], [1], [0, 0, 1, 1], [], []>} : vector<16x16xf32>, vector<16x64xf32>, vector<16x64xf32> -> vector<16x64xf32>
    %c0_79 = arith.constant 0 : index
    %c0_80 = arith.constant 0 : index
    %76 = vector.load %arg46[%c0_79, %c0_80] : memref<16x16xf32, #tpu.memory_space<vmem>>, vector<16x16xf32>
    %cst_81 = arith.constant dense<0.000000e+00> : vector<16x64xf32>
    %77 = tpu.matmul %76, %73, %cst_81 {dimension_numbers = #tpu.dot_dimension_numbers<[1], [0], [0], [1], [0, 0, 1, 1], [], []>} : vector<16x16xf32>, vector<16x64xf32>, vector<16x64xf32> -> vector<16x64xf32>
    %c0_82 = arith.constant 0 : index
    %c0_83 = arith.constant 0 : index
    %78 = vector.load %arg8[%c0_82, %c0_83] : memref<192x64xf32, #tpu.memory_space<vmem>>, vector<64x64xf32>
    %cst_84 = arith.constant dense<0.000000e+00> : vector<16x64xf32>
    %79 = tpu.matmul %75, %78, %cst_84 {dimension_numbers = #tpu.dot_dimension_numbers<[1], [0], [0], [1], [0, 0, 1, 1], [], []>} : vector<16x64xf32>, vector<64x64xf32>, vector<16x64xf32> -> vector<16x64xf32>
    %c64_85 = arith.constant 64 : index
    %c0_86 = arith.constant 0 : index
    %80 = vector.load %arg8[%c64_85, %c0_86] : memref<192x64xf32, #tpu.memory_space<vmem>>, vector<64x64xf32>
    %cst_87 = arith.constant dense<0.000000e+00> : vector<16x64xf32>
    %81 = tpu.matmul %73, %80, %cst_87 {dimension_numbers = #tpu.dot_dimension_numbers<[1], [0], [0], [1], [0, 0, 1, 1], [], []>} : vector<16x64xf32>, vector<64x64xf32>, vector<16x64xf32> -> vector<16x64xf32>
    %82 = arith.addf %79, %81 : vector<16x64xf32>
    %c128_88 = arith.constant 128 : index
    %c0_89 = arith.constant 0 : index
    %83 = vector.load %arg8[%c128_88, %c0_89] : memref<192x64xf32, #tpu.memory_space<vmem>>, vector<64x64xf32>
    %cst_90 = arith.constant dense<0.000000e+00> : vector<16x64xf32>
    %84 = tpu.matmul %77, %83, %cst_90 {dimension_numbers = #tpu.dot_dimension_numbers<[1], [0], [0], [1], [0, 0, 1, 1], [], []>} : vector<16x64xf32>, vector<64x64xf32>, vector<16x64xf32> -> vector<16x64xf32>
    %85 = arith.addf %82, %84 : vector<16x64xf32>
    %c0_91 = arith.constant 0 : index
    %c0_92 = arith.constant 0 : index
    %86 = vector.load %arg7[%c0_91, %c0_92] : memref<1x64xf32, #tpu.memory_space<vmem>>, vector<1x64xf32>
    %87 = vector.broadcast %86 : vector<1x64xf32> to vector<16x64xf32>
    %88 = arith.addf %85, %87 : vector<16x64xf32>
    %cst_93 = arith.constant 0.00999999977 : f32
    %89 = vector.broadcast %cst_93 : f32 to vector<16x64xf32>
    %90 = arith.mulf %89, %88 : vector<16x64xf32>
    %91 = arith.maximumf %88, %90 : vector<16x64xf32>
    %c0_94 = arith.constant 0 : index
    %c0_95 = arith.constant 0 : index
    %92 = vector.load %arg19[%c0_94, %c0_95] : memref<8x16xf32, #tpu.memory_space<vmem>>, vector<8x16xf32>
    %cst_96 = arith.constant dense<0.000000e+00> : vector<8x64xf32>
    %93 = tpu.matmul %92, %91, %cst_96 {dimension_numbers = #tpu.dot_dimension_numbers<[1], [0], [0], [1], [0, 0, 1, 1], [], []>} : vector<8x16xf32>, vector<16x64xf32>, vector<8x64xf32> -> vector<8x64xf32>
    %c0_97 = arith.constant 0 : index
    %c0_98 = arith.constant 0 : index
    %94 = vector.load %arg20[%c0_97, %c0_98] : memref<8x16xf32, #tpu.memory_space<vmem>>, vector<8x16xf32>
    %cst_99 = arith.constant dense<0.000000e+00> : vector<8x64xf32>
    %95 = tpu.matmul %94, %91, %cst_99 {dimension_numbers = #tpu.dot_dimension_numbers<[1], [0], [0], [1], [0, 0, 1, 1], [], []>} : vector<8x16xf32>, vector<16x64xf32>, vector<8x64xf32> -> vector<8x64xf32>
    %96 = arith.maximumf %93, %95 : vector<8x64xf32>
    %c0_100 = arith.constant 0 : index
    %c0_101 = arith.constant 0 : index
    %97 = vector.load %arg17[%c0_100, %c0_101] : memref<64x32xf32, #tpu.memory_space<vmem>>, vector<64x32xf32>
    %cst_102 = arith.constant dense<0.000000e+00> : vector<8x32xf32>
    %98 = tpu.matmul %96, %97, %cst_102 {dimension_numbers = #tpu.dot_dimension_numbers<[1], [0], [0], [1], [0, 0, 1, 1], [], []>} : vector<8x64xf32>, vector<64x32xf32>, vector<8x32xf32> -> vector<8x32xf32>
    %c0_103 = arith.constant 0 : index
    %c0_104 = arith.constant 0 : index
    %99 = vector.load %arg18[%c0_103, %c0_104] : memref<64x32xf32, #tpu.memory_space<vmem>>, vector<64x32xf32>
    %cst_105 = arith.constant dense<0.000000e+00> : vector<8x32xf32>
    %100 = tpu.matmul %96, %99, %cst_105 {dimension_numbers = #tpu.dot_dimension_numbers<[1], [0], [0], [1], [0, 0, 1, 1], [], []>} : vector<8x64xf32>, vector<64x32xf32>, vector<8x32xf32> -> vector<8x32xf32>
    %101 = arith.maximumf %98, %100 : vector<8x32xf32>
    %c0_106 = arith.constant 0 : index
    %c0_107 = arith.constant 0 : index
    %102 = vector.load %arg43[%c0_106, %c0_107] : memref<8x8xf32, #tpu.memory_space<vmem>>, vector<8x8xf32>
    %cst_108 = arith.constant dense<0.000000e+00> : vector<8x32xf32>
    %103 = tpu.matmul %102, %101, %cst_108 {dimension_numbers = #tpu.dot_dimension_numbers<[1], [0], [0], [1], [0, 0, 1, 1], [], []>} : vector<8x8xf32>, vector<8x32xf32>, vector<8x32xf32> -> vector<8x32xf32>
    %c0_109 = arith.constant 0 : index
    %c0_110 = arith.constant 0 : index
    %104 = vector.load %arg44[%c0_109, %c0_110] : memref<8x8xf32, #tpu.memory_space<vmem>>, vector<8x8xf32>
    %cst_111 = arith.constant dense<0.000000e+00> : vector<8x32xf32>
    %105 = tpu.matmul %104, %101, %cst_111 {dimension_numbers = #tpu.dot_dimension_numbers<[1], [0], [0], [1], [0, 0, 1, 1], [], []>} : vector<8x8xf32>, vector<8x32xf32>, vector<8x32xf32> -> vector<8x32xf32>
    %c0_112 = arith.constant 0 : index
    %c0_113 = arith.constant 0 : index
    %106 = vector.load %arg14[%c0_112, %c0_113] : memref<96x32xf32, #tpu.memory_space<vmem>>, vector<32x32xf32>
    %cst_114 = arith.constant dense<0.000000e+00> : vector<8x32xf32>
    %107 = tpu.matmul %103, %106, %cst_114 {dimension_numbers = #tpu.dot_dimension_numbers<[1], [0], [0], [1], [0, 0, 1, 1], [], []>} : vector<8x32xf32>, vector<32x32xf32>, vector<8x32xf32> -> vector<8x32xf32>
    %c32 = arith.constant 32 : index
    %c0_115 = arith.constant 0 : index
    %108 = vector.load %arg14[%c32, %c0_115] : memref<96x32xf32, #tpu.memory_space<vmem>>, vector<32x32xf32>
    %cst_116 = arith.constant dense<0.000000e+00> : vector<8x32xf32>
    %109 = tpu.matmul %101, %108, %cst_116 {dimension_numbers = #tpu.dot_dimension_numbers<[1], [0], [0], [1], [0, 0, 1, 1], [], []>} : vector<8x32xf32>, vector<32x32xf32>, vector<8x32xf32> -> vector<8x32xf32>
    %110 = arith.addf %107, %109 : vector<8x32xf32>
    %c64_117 = arith.constant 64 : index
    %c0_118 = arith.constant 0 : index
    %111 = vector.load %arg14[%c64_117, %c0_118] : memref<96x32xf32, #tpu.memory_space<vmem>>, vector<32x32xf32>
    %cst_119 = arith.constant dense<0.000000e+00> : vector<8x32xf32>
    %112 = tpu.matmul %105, %111, %cst_119 {dimension_numbers = #tpu.dot_dimension_numbers<[1], [0], [0], [1], [0, 0, 1, 1], [], []>} : vector<8x32xf32>, vector<32x32xf32>, vector<8x32xf32> -> vector<8x32xf32>
    %113 = arith.addf %110, %112 : vector<8x32xf32>
    %c0_120 = arith.constant 0 : index
    %c0_121 = arith.constant 0 : index
    %114 = vector.load %arg13[%c0_120, %c0_121] : memref<1x32xf32, #tpu.memory_space<vmem>>, vector<1x32xf32>
    %115 = vector.broadcast %114 : vector<1x32xf32> to vector<8x32xf32>
    %116 = arith.addf %113, %115 : vector<8x32xf32>
    %cst_122 = arith.constant 0.00999999977 : f32
    %117 = vector.broadcast %cst_122 : f32 to vector<8x32xf32>
    %118 = arith.mulf %117, %116 : vector<8x32xf32>
    %119 = arith.maximumf %116, %118 : vector<8x32xf32>
    %c0_123 = arith.constant 0 : index
    %c0_124 = arith.constant 0 : index
    %120 = vector.load %arg43[%c0_123, %c0_124] : memref<8x8xf32, #tpu.memory_space<vmem>>, vector<8x8xf32>
    %cst_125 = arith.constant dense<0.000000e+00> : vector<8x32xf32>
    %121 = tpu.matmul %120, %119, %cst_125 {dimension_numbers = #tpu.dot_dimension_numbers<[1], [0], [0], [1], [0, 0, 1, 1], [], []>} : vector<8x8xf32>, vector<8x32xf32>, vector<8x32xf32> -> vector<8x32xf32>
    %c0_126 = arith.constant 0 : index
    %c0_127 = arith.constant 0 : index
    %122 = vector.load %arg44[%c0_126, %c0_127] : memref<8x8xf32, #tpu.memory_space<vmem>>, vector<8x8xf32>
    %cst_128 = arith.constant dense<0.000000e+00> : vector<8x32xf32>
    %123 = tpu.matmul %122, %119, %cst_128 {dimension_numbers = #tpu.dot_dimension_numbers<[1], [0], [0], [1], [0, 0, 1, 1], [], []>} : vector<8x8xf32>, vector<8x32xf32>, vector<8x32xf32> -> vector<8x32xf32>
    %c0_129 = arith.constant 0 : index
    %c0_130 = arith.constant 0 : index
    %124 = vector.load %arg16[%c0_129, %c0_130] : memref<96x32xf32, #tpu.memory_space<vmem>>, vector<32x32xf32>
    %cst_131 = arith.constant dense<0.000000e+00> : vector<8x32xf32>
    %125 = tpu.matmul %121, %124, %cst_131 {dimension_numbers = #tpu.dot_dimension_numbers<[1], [0], [0], [1], [0, 0, 1, 1], [], []>} : vector<8x32xf32>, vector<32x32xf32>, vector<8x32xf32> -> vector<8x32xf32>
    %c32_132 = arith.constant 32 : index
    %c0_133 = arith.constant 0 : index
    %126 = vector.load %arg16[%c32_132, %c0_133] : memref<96x32xf32, #tpu.memory_space<vmem>>, vector<32x32xf32>
    %cst_134 = arith.constant dense<0.000000e+00> : vector<8x32xf32>
    %127 = tpu.matmul %119, %126, %cst_134 {dimension_numbers = #tpu.dot_dimension_numbers<[1], [0], [0], [1], [0, 0, 1, 1], [], []>} : vector<8x32xf32>, vector<32x32xf32>, vector<8x32xf32> -> vector<8x32xf32>
    %128 = arith.addf %125, %127 : vector<8x32xf32>
    %c64_135 = arith.constant 64 : index
    %c0_136 = arith.constant 0 : index
    %129 = vector.load %arg16[%c64_135, %c0_136] : memref<96x32xf32, #tpu.memory_space<vmem>>, vector<32x32xf32>
    %cst_137 = arith.constant dense<0.000000e+00> : vector<8x32xf32>
    %130 = tpu.matmul %123, %129, %cst_137 {dimension_numbers = #tpu.dot_dimension_numbers<[1], [0], [0], [1], [0, 0, 1, 1], [], []>} : vector<8x32xf32>, vector<32x32xf32>, vector<8x32xf32> -> vector<8x32xf32>
    %131 = arith.addf %128, %130 : vector<8x32xf32>
    %c0_138 = arith.constant 0 : index
    %c0_139 = arith.constant 0 : index
    %132 = vector.load %arg15[%c0_138, %c0_139] : memref<1x32xf32, #tpu.memory_space<vmem>>, vector<1x32xf32>
    %133 = vector.broadcast %132 : vector<1x32xf32> to vector<8x32xf32>
    %134 = arith.addf %131, %133 : vector<8x32xf32>
    %cst_140 = arith.constant 0.00999999977 : f32
    %135 = vector.broadcast %cst_140 : f32 to vector<8x32xf32>
    %136 = arith.mulf %135, %134 : vector<8x32xf32>
    %137 = arith.maximumf %134, %136 : vector<8x32xf32>
    %c0_141 = arith.constant 0 : index
    %c0_142 = arith.constant 0 : index
    %138 = vector.load %arg27[%c0_141, %c0_142] : memref<4x8xf32, #tpu.memory_space<vmem>>, vector<4x8xf32>
    %cst_143 = arith.constant dense<0.000000e+00> : vector<4x32xf32>
    %139 = tpu.matmul %138, %137, %cst_143 {dimension_numbers = #tpu.dot_dimension_numbers<[1], [0], [0], [1], [0, 0, 1, 1], [], []>} : vector<4x8xf32>, vector<8x32xf32>, vector<4x32xf32> -> vector<4x32xf32>
    %c0_144 = arith.constant 0 : index
    %c0_145 = arith.constant 0 : index
    %140 = vector.load %arg28[%c0_144, %c0_145] : memref<4x8xf32, #tpu.memory_space<vmem>>, vector<4x8xf32>
    %cst_146 = arith.constant dense<0.000000e+00> : vector<4x32xf32>
    %141 = tpu.matmul %140, %137, %cst_146 {dimension_numbers = #tpu.dot_dimension_numbers<[1], [0], [0], [1], [0, 0, 1, 1], [], []>} : vector<4x8xf32>, vector<8x32xf32>, vector<4x32xf32> -> vector<4x32xf32>
    %142 = arith.maximumf %139, %141 : vector<4x32xf32>
    %c0_147 = arith.constant 0 : index
    %c0_148 = arith.constant 0 : index
    %143 = vector.load %arg25[%c0_147, %c0_148] : memref<32x16xf32, #tpu.memory_space<vmem>>, vector<32x16xf32>
    %cst_149 = arith.constant dense<0.000000e+00> : vector<4x16xf32>
    %144 = tpu.matmul %142, %143, %cst_149 {dimension_numbers = #tpu.dot_dimension_numbers<[1], [0], [0], [1], [0, 0, 1, 1], [], []>} : vector<4x32xf32>, vector<32x16xf32>, vector<4x16xf32> -> vector<4x16xf32>
    %c0_150 = arith.constant 0 : index
    %c0_151 = arith.constant 0 : index
    %145 = vector.load %arg26[%c0_150, %c0_151] : memref<32x16xf32, #tpu.memory_space<vmem>>, vector<32x16xf32>
    %cst_152 = arith.constant dense<0.000000e+00> : vector<4x16xf32>
    %146 = tpu.matmul %142, %145, %cst_152 {dimension_numbers = #tpu.dot_dimension_numbers<[1], [0], [0], [1], [0, 0, 1, 1], [], []>} : vector<4x32xf32>, vector<32x16xf32>, vector<4x16xf32> -> vector<4x16xf32>
    %147 = arith.maximumf %144, %146 : vector<4x16xf32>
    %c0_153 = arith.constant 0 : index
    %c0_154 = arith.constant 0 : index
    %148 = vector.load %arg41[%c0_153, %c0_154] : memref<4x4xf32, #tpu.memory_space<vmem>>, vector<4x4xf32>
    %cst_155 = arith.constant dense<0.000000e+00> : vector<4x16xf32>
    %149 = tpu.matmul %148, %147, %cst_155 {dimension_numbers = #tpu.dot_dimension_numbers<[1], [0], [0], [1], [0, 0, 1, 1], [], []>} : vector<4x4xf32>, vector<4x16xf32>, vector<4x16xf32> -> vector<4x16xf32>
    %c0_156 = arith.constant 0 : index
    %c0_157 = arith.constant 0 : index
    %150 = vector.load %arg42[%c0_156, %c0_157] : memref<4x4xf32, #tpu.memory_space<vmem>>, vector<4x4xf32>
    %cst_158 = arith.constant dense<0.000000e+00> : vector<4x16xf32>
    %151 = tpu.matmul %150, %147, %cst_158 {dimension_numbers = #tpu.dot_dimension_numbers<[1], [0], [0], [1], [0, 0, 1, 1], [], []>} : vector<4x4xf32>, vector<4x16xf32>, vector<4x16xf32> -> vector<4x16xf32>
    %c0_159 = arith.constant 0 : index
    %c0_160 = arith.constant 0 : index
    %152 = vector.load %arg22[%c0_159, %c0_160] : memref<48x16xf32, #tpu.memory_space<vmem>>, vector<16x16xf32>
    %cst_161 = arith.constant dense<0.000000e+00> : vector<4x16xf32>
    %153 = tpu.matmul %149, %152, %cst_161 {dimension_numbers = #tpu.dot_dimension_numbers<[1], [0], [0], [1], [0, 0, 1, 1], [], []>} : vector<4x16xf32>, vector<16x16xf32>, vector<4x16xf32> -> vector<4x16xf32>
    %c16 = arith.constant 16 : index
    %c0_162 = arith.constant 0 : index
    %154 = vector.load %arg22[%c16, %c0_162] : memref<48x16xf32, #tpu.memory_space<vmem>>, vector<16x16xf32>
    %cst_163 = arith.constant dense<0.000000e+00> : vector<4x16xf32>
    %155 = tpu.matmul %147, %154, %cst_163 {dimension_numbers = #tpu.dot_dimension_numbers<[1], [0], [0], [1], [0, 0, 1, 1], [], []>} : vector<4x16xf32>, vector<16x16xf32>, vector<4x16xf32> -> vector<4x16xf32>
    %156 = arith.addf %153, %155 : vector<4x16xf32>
    %c32_164 = arith.constant 32 : index
    %c0_165 = arith.constant 0 : index
    %157 = vector.load %arg22[%c32_164, %c0_165] : memref<48x16xf32, #tpu.memory_space<vmem>>, vector<16x16xf32>
    %cst_166 = arith.constant dense<0.000000e+00> : vector<4x16xf32>
    %158 = tpu.matmul %151, %157, %cst_166 {dimension_numbers = #tpu.dot_dimension_numbers<[1], [0], [0], [1], [0, 0, 1, 1], [], []>} : vector<4x16xf32>, vector<16x16xf32>, vector<4x16xf32> -> vector<4x16xf32>
    %159 = arith.addf %156, %158 : vector<4x16xf32>
    %c0_167 = arith.constant 0 : index
    %c0_168 = arith.constant 0 : index
    %160 = vector.load %arg21[%c0_167, %c0_168] : memref<1x16xf32, #tpu.memory_space<vmem>>, vector<1x16xf32>
    %161 = vector.broadcast %160 : vector<1x16xf32> to vector<4x16xf32>
    %162 = arith.addf %159, %161 : vector<4x16xf32>
    %cst_169 = arith.constant 0.00999999977 : f32
    %163 = vector.broadcast %cst_169 : f32 to vector<4x16xf32>
    %164 = arith.mulf %163, %162 : vector<4x16xf32>
    %165 = arith.maximumf %162, %164 : vector<4x16xf32>
    %c0_170 = arith.constant 0 : index
    %c0_171 = arith.constant 0 : index
    %166 = vector.load %arg41[%c0_170, %c0_171] : memref<4x4xf32, #tpu.memory_space<vmem>>, vector<4x4xf32>
    %cst_172 = arith.constant dense<0.000000e+00> : vector<4x16xf32>
    %167 = tpu.matmul %166, %165, %cst_172 {dimension_numbers = #tpu.dot_dimension_numbers<[1], [0], [0], [1], [0, 0, 1, 1], [], []>} : vector<4x4xf32>, vector<4x16xf32>, vector<4x16xf32> -> vector<4x16xf32>
    %c0_173 = arith.constant 0 : index
    %c0_174 = arith.constant 0 : index
    %168 = vector.load %arg42[%c0_173, %c0_174] : memref<4x4xf32, #tpu.memory_space<vmem>>, vector<4x4xf32>
    %cst_175 = arith.constant dense<0.000000e+00> : vector<4x16xf32>
    %169 = tpu.matmul %168, %165, %cst_175 {dimension_numbers = #tpu.dot_dimension_numbers<[1], [0], [0], [1], [0, 0, 1, 1], [], []>} : vector<4x4xf32>, vector<4x16xf32>, vector<4x16xf32> -> vector<4x16xf32>
    %c0_176 = arith.constant 0 : index
    %c0_177 = arith.constant 0 : index
    %170 = vector.load %arg24[%c0_176, %c0_177] : memref<48x16xf32, #tpu.memory_space<vmem>>, vector<16x16xf32>
    %cst_178 = arith.constant dense<0.000000e+00> : vector<4x16xf32>
    %171 = tpu.matmul %167, %170, %cst_178 {dimension_numbers = #tpu.dot_dimension_numbers<[1], [0], [0], [1], [0, 0, 1, 1], [], []>} : vector<4x16xf32>, vector<16x16xf32>, vector<4x16xf32> -> vector<4x16xf32>
    %c16_179 = arith.constant 16 : index
    %c0_180 = arith.constant 0 : index
    %172 = vector.load %arg24[%c16_179, %c0_180] : memref<48x16xf32, #tpu.memory_space<vmem>>, vector<16x16xf32>
    %cst_181 = arith.constant dense<0.000000e+00> : vector<4x16xf32>
    %173 = tpu.matmul %165, %172, %cst_181 {dimension_numbers = #tpu.dot_dimension_numbers<[1], [0], [0], [1], [0, 0, 1, 1], [], []>} : vector<4x16xf32>, vector<16x16xf32>, vector<4x16xf32> -> vector<4x16xf32>
    %174 = arith.addf %171, %173 : vector<4x16xf32>
    %c32_182 = arith.constant 32 : index
    %c0_183 = arith.constant 0 : index
    %175 = vector.load %arg24[%c32_182, %c0_183] : memref<48x16xf32, #tpu.memory_space<vmem>>, vector<16x16xf32>
    %cst_184 = arith.constant dense<0.000000e+00> : vector<4x16xf32>
    %176 = tpu.matmul %169, %175, %cst_184 {dimension_numbers = #tpu.dot_dimension_numbers<[1], [0], [0], [1], [0, 0, 1, 1], [], []>} : vector<4x16xf32>, vector<16x16xf32>, vector<4x16xf32> -> vector<4x16xf32>
    %177 = arith.addf %174, %176 : vector<4x16xf32>
    %c0_185 = arith.constant 0 : index
    %c0_186 = arith.constant 0 : index
    %178 = vector.load %arg23[%c0_185, %c0_186] : memref<1x16xf32, #tpu.memory_space<vmem>>, vector<1x16xf32>
    %179 = vector.broadcast %178 : vector<1x16xf32> to vector<4x16xf32>
    %180 = arith.addf %177, %179 : vector<4x16xf32>
    %cst_187 = arith.constant 0.00999999977 : f32
    %181 = vector.broadcast %cst_187 : f32 to vector<4x16xf32>
    %182 = arith.mulf %181, %180 : vector<4x16xf32>
    %183 = arith.maximumf %180, %182 : vector<4x16xf32>
    %c0_188 = arith.constant 0 : index
    %c0_189 = arith.constant 0 : index
    %184 = vector.load %arg41[%c0_188, %c0_189] : memref<4x4xf32, #tpu.memory_space<vmem>>, vector<4x4xf32>
    %cst_190 = arith.constant dense<0.000000e+00> : vector<4x16xf32>
    %185 = tpu.matmul %184, %183, %cst_190 {dimension_numbers = #tpu.dot_dimension_numbers<[1], [0], [0], [1], [0, 0, 1, 1], [], []>} : vector<4x4xf32>, vector<4x16xf32>, vector<4x16xf32> -> vector<4x16xf32>
    %c0_191 = arith.constant 0 : index
    %c0_192 = arith.constant 0 : index
    %186 = vector.load %arg42[%c0_191, %c0_192] : memref<4x4xf32, #tpu.memory_space<vmem>>, vector<4x4xf32>
    %cst_193 = arith.constant dense<0.000000e+00> : vector<4x16xf32>
    %187 = tpu.matmul %186, %183, %cst_193 {dimension_numbers = #tpu.dot_dimension_numbers<[1], [0], [0], [1], [0, 0, 1, 1], [], []>} : vector<4x4xf32>, vector<4x16xf32>, vector<4x16xf32> -> vector<4x16xf32>
    %c0_194 = arith.constant 0 : index
    %c0_195 = arith.constant 0 : index
    %188 = vector.load %arg2[%c0_194, %c0_195] : memref<48x96xf32, #tpu.memory_space<vmem>>, vector<16x96xf32>
    %cst_196 = arith.constant dense<0.000000e+00> : vector<4x96xf32>
    %189 = tpu.matmul %185, %188, %cst_196 {dimension_numbers = #tpu.dot_dimension_numbers<[1], [0], [0], [1], [0, 0, 1, 1], [], []>} : vector<4x16xf32>, vector<16x96xf32>, vector<4x96xf32> -> vector<4x96xf32>
    %c16_197 = arith.constant 16 : index
    %c0_198 = arith.constant 0 : index
    %190 = vector.load %arg2[%c16_197, %c0_198] : memref<48x96xf32, #tpu.memory_space<vmem>>, vector<16x96xf32>
    %cst_199 = arith.constant dense<0.000000e+00> : vector<4x96xf32>
    %191 = tpu.matmul %183, %190, %cst_199 {dimension_numbers = #tpu.dot_dimension_numbers<[1], [0], [0], [1], [0, 0, 1, 1], [], []>} : vector<4x16xf32>, vector<16x96xf32>, vector<4x96xf32> -> vector<4x96xf32>
    %192 = arith.addf %189, %191 : vector<4x96xf32>
    %c32_200 = arith.constant 32 : index
    %c0_201 = arith.constant 0 : index
    %193 = vector.load %arg2[%c32_200, %c0_201] : memref<48x96xf32, #tpu.memory_space<vmem>>, vector<16x96xf32>
    %cst_202 = arith.constant dense<0.000000e+00> : vector<4x96xf32>
    %194 = tpu.matmul %187, %193, %cst_202 {dimension_numbers = #tpu.dot_dimension_numbers<[1], [0], [0], [1], [0, 0, 1, 1], [], []>} : vector<4x16xf32>, vector<16x96xf32>, vector<4x96xf32> -> vector<4x96xf32>
    %195 = arith.addf %192, %194 : vector<4x96xf32>
    %c0_203 = arith.constant 0 : index
    %c0_204 = arith.constant 0 : index
    %196 = vector.load %arg1[%c0_203, %c0_204] : memref<1x96xf32, #tpu.memory_space<vmem>>, vector<1x96xf32>
    %197 = vector.broadcast %196 : vector<1x96xf32> to vector<4x96xf32>
    %198 = arith.addf %195, %197 : vector<4x96xf32>
    %cst_205 = arith.constant 0.00999999977 : f32
    %199 = vector.broadcast %cst_205 : f32 to vector<4x96xf32>
    %200 = arith.mulf %199, %198 : vector<4x96xf32>
    %201 = arith.maximumf %198, %200 : vector<4x96xf32>
    %c0_206 = arith.constant 0 : index
    %c0_207 = arith.constant 0 : index
    %202 = vector.load %arg41[%c0_206, %c0_207] : memref<4x4xf32, #tpu.memory_space<vmem>>, vector<4x4xf32>
    %cst_208 = arith.constant dense<0.000000e+00> : vector<4x96xf32>
    %203 = tpu.matmul %202, %201, %cst_208 {dimension_numbers = #tpu.dot_dimension_numbers<[1], [0], [0], [1], [0, 0, 1, 1], [], []>} : vector<4x4xf32>, vector<4x96xf32>, vector<4x96xf32> -> vector<4x96xf32>
    %c0_209 = arith.constant 0 : index
    %c0_210 = arith.constant 0 : index
    %204 = vector.load %arg42[%c0_209, %c0_210] : memref<4x4xf32, #tpu.memory_space<vmem>>, vector<4x4xf32>
    %cst_211 = arith.constant dense<0.000000e+00> : vector<4x96xf32>
    %205 = tpu.matmul %204, %201, %cst_211 {dimension_numbers = #tpu.dot_dimension_numbers<[1], [0], [0], [1], [0, 0, 1, 1], [], []>} : vector<4x4xf32>, vector<4x96xf32>, vector<4x96xf32> -> vector<4x96xf32>
    %c0_212 = arith.constant 0 : index
    %c0_213 = arith.constant 0 : index
    %206 = vector.load %arg4[%c0_212, %c0_213] : memref<288x96xf32, #tpu.memory_space<vmem>>, vector<96x96xf32>
    %cst_214 = arith.constant dense<0.000000e+00> : vector<4x96xf32>
    %207 = tpu.matmul %203, %206, %cst_214 {dimension_numbers = #tpu.dot_dimension_numbers<[1], [0], [0], [1], [0, 0, 1, 1], [], []>} : vector<4x96xf32>, vector<96x96xf32>, vector<4x96xf32> -> vector<4x96xf32>
    %c96_215 = arith.constant 96 : index
    %c0_216 = arith.constant 0 : index
    %208 = vector.load %arg4[%c96_215, %c0_216] : memref<288x96xf32, #tpu.memory_space<vmem>>, vector<96x96xf32>
    %cst_217 = arith.constant dense<0.000000e+00> : vector<4x96xf32>
    %209 = tpu.matmul %201, %208, %cst_217 {dimension_numbers = #tpu.dot_dimension_numbers<[1], [0], [0], [1], [0, 0, 1, 1], [], []>} : vector<4x96xf32>, vector<96x96xf32>, vector<4x96xf32> -> vector<4x96xf32>
    %210 = arith.addf %207, %209 : vector<4x96xf32>
    %c192 = arith.constant 192 : index
    %c0_218 = arith.constant 0 : index
    %211 = vector.load %arg4[%c192, %c0_218] : memref<288x96xf32, #tpu.memory_space<vmem>>, vector<96x96xf32>
    %cst_219 = arith.constant dense<0.000000e+00> : vector<4x96xf32>
    %212 = tpu.matmul %205, %211, %cst_219 {dimension_numbers = #tpu.dot_dimension_numbers<[1], [0], [0], [1], [0, 0, 1, 1], [], []>} : vector<4x96xf32>, vector<96x96xf32>, vector<4x96xf32> -> vector<4x96xf32>
    %213 = arith.addf %210, %212 : vector<4x96xf32>
    %c0_220 = arith.constant 0 : index
    %c0_221 = arith.constant 0 : index
    %214 = vector.load %arg3[%c0_220, %c0_221] : memref<1x96xf32, #tpu.memory_space<vmem>>, vector<1x96xf32>
    %215 = vector.broadcast %214 : vector<1x96xf32> to vector<4x96xf32>
    %216 = arith.addf %213, %215 : vector<4x96xf32>
    %cst_222 = arith.constant 0.00999999977 : f32
    %217 = vector.broadcast %cst_222 : f32 to vector<4x96xf32>
    %218 = arith.mulf %217, %216 : vector<4x96xf32>
    %219 = arith.maximumf %216, %218 : vector<4x96xf32>
    %c0_223 = arith.constant 0 : index
    %c0_224 = arith.constant 0 : index
    %220 = vector.load %arg48[%c0_223, %c0_224] : memref<192x32xf32, #tpu.memory_space<vmem>>, vector<96x32xf32>
    %cst_225 = arith.constant dense<0.000000e+00> : vector<4x32xf32>
    %221 = tpu.matmul %219, %220, %cst_225 {dimension_numbers = #tpu.dot_dimension_numbers<[1], [0], [0], [1], [0, 0, 1, 1], [], []>} : vector<4x96xf32>, vector<96x32xf32>, vector<4x32xf32> -> vector<4x32xf32>
    %c0_226 = arith.constant 0 : index
    %c0_227 = arith.constant 0 : index
    %222 = vector.load %arg47[%c0_226, %c0_227] : memref<1x32xf32, #tpu.memory_space<vmem>>, vector<1x32xf32>
    %223 = vector.broadcast %222 : vector<1x32xf32> to vector<4x32xf32>
    %224 = arith.addf %221, %223 : vector<4x32xf32>
    %c96_228 = arith.constant 96 : index
    %c0_229 = arith.constant 0 : index
    %225 = vector.load %arg48[%c96_228, %c0_229] : memref<192x32xf32, #tpu.memory_space<vmem>>, vector<96x32xf32>
    %cst_230 = arith.constant dense<0.000000e+00> : vector<4x32xf32>
    %226 = tpu.matmul %219, %225, %cst_230 {dimension_numbers = #tpu.dot_dimension_numbers<[1], [0], [0], [1], [0, 0, 1, 1], [], []>} : vector<4x96xf32>, vector<96x32xf32>, vector<4x32xf32> -> vector<4x32xf32>
    %c0_231 = arith.constant 0 : index
    %c0_232 = arith.constant 0 : index
    %227 = vector.load %arg47[%c0_231, %c0_232] : memref<1x32xf32, #tpu.memory_space<vmem>>, vector<1x32xf32>
    %228 = vector.broadcast %227 : vector<1x32xf32> to vector<4x32xf32>
    %229 = arith.addf %226, %228 : vector<4x32xf32>
    %c0_233 = arith.constant 0 : index
    %c0_234 = arith.constant 0 : index
    %230 = vector.load %arg49[%c0_233, %c0_234] : memref<8x4xf32, #tpu.memory_space<vmem>>, vector<8x4xf32>
    %cst_235 = arith.constant dense<0.000000e+00> : vector<8x32xf32>
    %231 = tpu.matmul %230, %224, %cst_235 {dimension_numbers = #tpu.dot_dimension_numbers<[1], [0], [0], [1], [0, 0, 1, 1], [], []>} : vector<8x4xf32>, vector<4x32xf32>, vector<8x32xf32> -> vector<8x32xf32>
    %c0_236 = arith.constant 0 : index
    %c0_237 = arith.constant 0 : index
    %232 = vector.load %arg50[%c0_236, %c0_237] : memref<8x4xf32, #tpu.memory_space<vmem>>, vector<8x4xf32>
    %cst_238 = arith.constant dense<0.000000e+00> : vector<8x32xf32>
    %233 = tpu.matmul %232, %229, %cst_238 {dimension_numbers = #tpu.dot_dimension_numbers<[1], [0], [0], [1], [0, 0, 1, 1], [], []>} : vector<8x4xf32>, vector<4x32xf32>, vector<8x32xf32> -> vector<8x32xf32>
    %234 = arith.addf %231, %233 : vector<8x32xf32>
    %c0_239 = arith.constant 0 : index
    %c0_240 = arith.constant 0 : index
    %235 = vector.load %arg43[%c0_239, %c0_240] : memref<8x8xf32, #tpu.memory_space<vmem>>, vector<8x8xf32>
    %cst_241 = arith.constant dense<0.000000e+00> : vector<8x32xf32>
    %236 = tpu.matmul %235, %234, %cst_241 {dimension_numbers = #tpu.dot_dimension_numbers<[1], [0], [0], [1], [0, 0, 1, 1], [], []>} : vector<8x8xf32>, vector<8x32xf32>, vector<8x32xf32> -> vector<8x32xf32>
    %c0_242 = arith.constant 0 : index
    %c0_243 = arith.constant 0 : index
    %237 = vector.load %arg44[%c0_242, %c0_243] : memref<8x8xf32, #tpu.memory_space<vmem>>, vector<8x8xf32>
    %cst_244 = arith.constant dense<0.000000e+00> : vector<8x32xf32>
    %238 = tpu.matmul %237, %234, %cst_244 {dimension_numbers = #tpu.dot_dimension_numbers<[1], [0], [0], [1], [0, 0, 1, 1], [], []>} : vector<8x8xf32>, vector<8x32xf32>, vector<8x32xf32> -> vector<8x32xf32>
    %c0_245 = arith.constant 0 : index
    %c0_246 = arith.constant 0 : index
    %239 = vector.load %arg52[%c0_245, %c0_246] : memref<96x32xf32, #tpu.memory_space<vmem>>, vector<32x32xf32>
    %cst_247 = arith.constant dense<0.000000e+00> : vector<8x32xf32>
    %240 = tpu.matmul %236, %239, %cst_247 {dimension_numbers = #tpu.dot_dimension_numbers<[1], [0], [0], [1], [0, 0, 1, 1], [], []>} : vector<8x32xf32>, vector<32x32xf32>, vector<8x32xf32> -> vector<8x32xf32>
    %c32_248 = arith.constant 32 : index
    %c0_249 = arith.constant 0 : index
    %241 = vector.load %arg52[%c32_248, %c0_249] : memref<96x32xf32, #tpu.memory_space<vmem>>, vector<32x32xf32>
    %cst_250 = arith.constant dense<0.000000e+00> : vector<8x32xf32>
    %242 = tpu.matmul %234, %241, %cst_250 {dimension_numbers = #tpu.dot_dimension_numbers<[1], [0], [0], [1], [0, 0, 1, 1], [], []>} : vector<8x32xf32>, vector<32x32xf32>, vector<8x32xf32> -> vector<8x32xf32>
    %243 = arith.addf %240, %242 : vector<8x32xf32>
    %c64_251 = arith.constant 64 : index
    %c0_252 = arith.constant 0 : index
    %244 = vector.load %arg52[%c64_251, %c0_252] : memref<96x32xf32, #tpu.memory_space<vmem>>, vector<32x32xf32>
    %cst_253 = arith.constant dense<0.000000e+00> : vector<8x32xf32>
    %245 = tpu.matmul %238, %244, %cst_253 {dimension_numbers = #tpu.dot_dimension_numbers<[1], [0], [0], [1], [0, 0, 1, 1], [], []>} : vector<8x32xf32>, vector<32x32xf32>, vector<8x32xf32> -> vector<8x32xf32>
    %246 = arith.addf %243, %245 : vector<8x32xf32>
    %c0_254 = arith.constant 0 : index
    %c0_255 = arith.constant 0 : index
    %247 = vector.load %arg51[%c0_254, %c0_255] : memref<1x32xf32, #tpu.memory_space<vmem>>, vector<1x32xf32>
    %248 = vector.broadcast %247 : vector<1x32xf32> to vector<8x32xf32>
    %249 = arith.addf %246, %248 : vector<8x32xf32>
    %cst_256 = arith.constant 0.00999999977 : f32
    %250 = vector.broadcast %cst_256 : f32 to vector<8x32xf32>
    %251 = arith.mulf %250, %249 : vector<8x32xf32>
    %252 = arith.maximumf %249, %251 : vector<8x32xf32>
    %c0_257 = arith.constant 0 : index
    %c0_258 = arith.constant 0 : index
    %253 = vector.load %arg43[%c0_257, %c0_258] : memref<8x8xf32, #tpu.memory_space<vmem>>, vector<8x8xf32>
    %cst_259 = arith.constant dense<0.000000e+00> : vector<8x32xf32>
    %254 = tpu.matmul %253, %252, %cst_259 {dimension_numbers = #tpu.dot_dimension_numbers<[1], [0], [0], [1], [0, 0, 1, 1], [], []>} : vector<8x8xf32>, vector<8x32xf32>, vector<8x32xf32> -> vector<8x32xf32>
    %c0_260 = arith.constant 0 : index
    %c0_261 = arith.constant 0 : index
    %255 = vector.load %arg44[%c0_260, %c0_261] : memref<8x8xf32, #tpu.memory_space<vmem>>, vector<8x8xf32>
    %cst_262 = arith.constant dense<0.000000e+00> : vector<8x32xf32>
    %256 = tpu.matmul %255, %252, %cst_262 {dimension_numbers = #tpu.dot_dimension_numbers<[1], [0], [0], [1], [0, 0, 1, 1], [], []>} : vector<8x8xf32>, vector<8x32xf32>, vector<8x32xf32> -> vector<8x32xf32>
    %c0_263 = arith.constant 0 : index
    %c0_264 = arith.constant 0 : index
    %257 = vector.load %arg54[%c0_263, %c0_264] : memref<96x32xf32, #tpu.memory_space<vmem>>, vector<32x32xf32>
    %cst_265 = arith.constant dense<0.000000e+00> : vector<8x32xf32>
    %258 = tpu.matmul %254, %257, %cst_265 {dimension_numbers = #tpu.dot_dimension_numbers<[1], [0], [0], [1], [0, 0, 1, 1], [], []>} : vector<8x32xf32>, vector<32x32xf32>, vector<8x32xf32> -> vector<8x32xf32>
    %c32_266 = arith.constant 32 : index
    %c0_267 = arith.constant 0 : index
    %259 = vector.load %arg54[%c32_266, %c0_267] : memref<96x32xf32, #tpu.memory_space<vmem>>, vector<32x32xf32>
    %cst_268 = arith.constant dense<0.000000e+00> : vector<8x32xf32>
    %260 = tpu.matmul %252, %259, %cst_268 {dimension_numbers = #tpu.dot_dimension_numbers<[1], [0], [0], [1], [0, 0, 1, 1], [], []>} : vector<8x32xf32>, vector<32x32xf32>, vector<8x32xf32> -> vector<8x32xf32>
    %261 = arith.addf %258, %260 : vector<8x32xf32>
    %c64_269 = arith.constant 64 : index
    %c0_270 = arith.constant 0 : index
    %262 = vector.load %arg54[%c64_269, %c0_270] : memref<96x32xf32, #tpu.memory_space<vmem>>, vector<32x32xf32>
    %cst_271 = arith.constant dense<0.000000e+00> : vector<8x32xf32>
    %263 = tpu.matmul %256, %262, %cst_271 {dimension_numbers = #tpu.dot_dimension_numbers<[1], [0], [0], [1], [0, 0, 1, 1], [], []>} : vector<8x32xf32>, vector<32x32xf32>, vector<8x32xf32> -> vector<8x32xf32>
    %264 = arith.addf %261, %263 : vector<8x32xf32>
    %c0_272 = arith.constant 0 : index
    %c0_273 = arith.constant 0 : index
    %265 = vector.load %arg53[%c0_272, %c0_273] : memref<1x32xf32, #tpu.memory_space<vmem>>, vector<1x32xf32>
    %266 = vector.broadcast %265 : vector<1x32xf32> to vector<8x32xf32>
    %267 = arith.addf %264, %266 : vector<8x32xf32>
    %cst_274 = arith.constant 0.00999999977 : f32
    %268 = vector.broadcast %cst_274 : f32 to vector<8x32xf32>
    %269 = arith.mulf %268, %267 : vector<8x32xf32>
    %270 = arith.maximumf %267, %269 : vector<8x32xf32>
    %c0_275 = arith.constant 0 : index
    %c0_276 = arith.constant 0 : index
    %271 = vector.load %arg56[%c0_275, %c0_276] : memref<64x64xf32, #tpu.memory_space<vmem>>, vector<32x64xf32>
    %cst_277 = arith.constant dense<0.000000e+00> : vector<8x64xf32>
    %272 = tpu.matmul %270, %271, %cst_277 {dimension_numbers = #tpu.dot_dimension_numbers<[1], [0], [0], [1], [0, 0, 1, 1], [], []>} : vector<8x32xf32>, vector<32x64xf32>, vector<8x64xf32> -> vector<8x64xf32>
    %c0_278 = arith.constant 0 : index
    %c0_279 = arith.constant 0 : index
    %273 = vector.load %arg55[%c0_278, %c0_279] : memref<1x64xf32, #tpu.memory_space<vmem>>, vector<1x64xf32>
    %274 = vector.broadcast %273 : vector<1x64xf32> to vector<8x64xf32>
    %275 = arith.addf %272, %274 : vector<8x64xf32>
    %c32_280 = arith.constant 32 : index
    %c0_281 = arith.constant 0 : index
    %276 = vector.load %arg56[%c32_280, %c0_281] : memref<64x64xf32, #tpu.memory_space<vmem>>, vector<32x64xf32>
    %cst_282 = arith.constant dense<0.000000e+00> : vector<8x64xf32>
    %277 = tpu.matmul %270, %276, %cst_282 {dimension_numbers = #tpu.dot_dimension_numbers<[1], [0], [0], [1], [0, 0, 1, 1], [], []>} : vector<8x32xf32>, vector<32x64xf32>, vector<8x64xf32> -> vector<8x64xf32>
    %c0_283 = arith.constant 0 : index
    %c0_284 = arith.constant 0 : index
    %278 = vector.load %arg55[%c0_283, %c0_284] : memref<1x64xf32, #tpu.memory_space<vmem>>, vector<1x64xf32>
    %279 = vector.broadcast %278 : vector<1x64xf32> to vector<8x64xf32>
    %280 = arith.addf %277, %279 : vector<8x64xf32>
    %c0_285 = arith.constant 0 : index
    %c0_286 = arith.constant 0 : index
    %281 = vector.load %arg57[%c0_285, %c0_286] : memref<16x8xf32, #tpu.memory_space<vmem>>, vector<16x8xf32>
    %cst_287 = arith.constant dense<0.000000e+00> : vector<16x64xf32>
    %282 = tpu.matmul %281, %275, %cst_287 {dimension_numbers = #tpu.dot_dimension_numbers<[1], [0], [0], [1], [0, 0, 1, 1], [], []>} : vector<16x8xf32>, vector<8x64xf32>, vector<16x64xf32> -> vector<16x64xf32>
    %c0_288 = arith.constant 0 : index
    %c0_289 = arith.constant 0 : index
    %283 = vector.load %arg58[%c0_288, %c0_289] : memref<16x8xf32, #tpu.memory_space<vmem>>, vector<16x8xf32>
    %cst_290 = arith.constant dense<0.000000e+00> : vector<16x64xf32>
    %284 = tpu.matmul %283, %280, %cst_290 {dimension_numbers = #tpu.dot_dimension_numbers<[1], [0], [0], [1], [0, 0, 1, 1], [], []>} : vector<16x8xf32>, vector<8x64xf32>, vector<16x64xf32> -> vector<16x64xf32>
    %285 = arith.addf %282, %284 : vector<16x64xf32>
    %c0_291 = arith.constant 0 : index
    %c0_292 = arith.constant 0 : index
    %286 = vector.load %arg45[%c0_291, %c0_292] : memref<16x16xf32, #tpu.memory_space<vmem>>, vector<16x16xf32>
    %cst_293 = arith.constant dense<0.000000e+00> : vector<16x64xf32>
    %287 = tpu.matmul %286, %285, %cst_293 {dimension_numbers = #tpu.dot_dimension_numbers<[1], [0], [0], [1], [0, 0, 1, 1], [], []>} : vector<16x16xf32>, vector<16x64xf32>, vector<16x64xf32> -> vector<16x64xf32>
    %c0_294 = arith.constant 0 : index
    %c0_295 = arith.constant 0 : index
    %288 = vector.load %arg46[%c0_294, %c0_295] : memref<16x16xf32, #tpu.memory_space<vmem>>, vector<16x16xf32>
    %cst_296 = arith.constant dense<0.000000e+00> : vector<16x64xf32>
    %289 = tpu.matmul %288, %285, %cst_296 {dimension_numbers = #tpu.dot_dimension_numbers<[1], [0], [0], [1], [0, 0, 1, 1], [], []>} : vector<16x16xf32>, vector<16x64xf32>, vector<16x64xf32> -> vector<16x64xf32>
    %c0_297 = arith.constant 0 : index
    %c0_298 = arith.constant 0 : index
    %290 = vector.load %arg60[%c0_297, %c0_298] : memref<192x64xf32, #tpu.memory_space<vmem>>, vector<64x64xf32>
    %cst_299 = arith.constant dense<0.000000e+00> : vector<16x64xf32>
    %291 = tpu.matmul %287, %290, %cst_299 {dimension_numbers = #tpu.dot_dimension_numbers<[1], [0], [0], [1], [0, 0, 1, 1], [], []>} : vector<16x64xf32>, vector<64x64xf32>, vector<16x64xf32> -> vector<16x64xf32>
    %c64_300 = arith.constant 64 : index
    %c0_301 = arith.constant 0 : index
    %292 = vector.load %arg60[%c64_300, %c0_301] : memref<192x64xf32, #tpu.memory_space<vmem>>, vector<64x64xf32>
    %cst_302 = arith.constant dense<0.000000e+00> : vector<16x64xf32>
    %293 = tpu.matmul %285, %292, %cst_302 {dimension_numbers = #tpu.dot_dimension_numbers<[1], [0], [0], [1], [0, 0, 1, 1], [], []>} : vector<16x64xf32>, vector<64x64xf32>, vector<16x64xf32> -> vector<16x64xf32>
    %294 = arith.addf %291, %293 : vector<16x64xf32>
    %c128_303 = arith.constant 128 : index
    %c0_304 = arith.constant 0 : index
    %295 = vector.load %arg60[%c128_303, %c0_304] : memref<192x64xf32, #tpu.memory_space<vmem>>, vector<64x64xf32>
    %cst_305 = arith.constant dense<0.000000e+00> : vector<16x64xf32>
    %296 = tpu.matmul %289, %295, %cst_305 {dimension_numbers = #tpu.dot_dimension_numbers<[1], [0], [0], [1], [0, 0, 1, 1], [], []>} : vector<16x64xf32>, vector<64x64xf32>, vector<16x64xf32> -> vector<16x64xf32>
    %297 = arith.addf %294, %296 : vector<16x64xf32>
    %c0_306 = arith.constant 0 : index
    %c0_307 = arith.constant 0 : index
    %298 = vector.load %arg59[%c0_306, %c0_307] : memref<1x64xf32, #tpu.memory_space<vmem>>, vector<1x64xf32>
    %299 = vector.broadcast %298 : vector<1x64xf32> to vector<16x64xf32>
    %300 = arith.addf %297, %299 : vector<16x64xf32>
    %cst_308 = arith.constant 0.00999999977 : f32
    %301 = vector.broadcast %cst_308 : f32 to vector<16x64xf32>
    %302 = arith.mulf %301, %300 : vector<16x64xf32>
    %303 = arith.maximumf %300, %302 : vector<16x64xf32>
    %c0_309 = arith.constant 0 : index
    %c0_310 = arith.constant 0 : index
    %304 = vector.load %arg45[%c0_309, %c0_310] : memref<16x16xf32, #tpu.memory_space<vmem>>, vector<16x16xf32>
    %cst_311 = arith.constant dense<0.000000e+00> : vector<16x64xf32>
    %305 = tpu.matmul %304, %303, %cst_311 {dimension_numbers = #tpu.dot_dimension_numbers<[1], [0], [0], [1], [0, 0, 1, 1], [], []>} : vector<16x16xf32>, vector<16x64xf32>, vector<16x64xf32> -> vector<16x64xf32>
    %c0_312 = arith.constant 0 : index
    %c0_313 = arith.constant 0 : index
    %306 = vector.load %arg46[%c0_312, %c0_313] : memref<16x16xf32, #tpu.memory_space<vmem>>, vector<16x16xf32>
    %cst_314 = arith.constant dense<0.000000e+00> : vector<16x64xf32>
    %307 = tpu.matmul %306, %303, %cst_314 {dimension_numbers = #tpu.dot_dimension_numbers<[1], [0], [0], [1], [0, 0, 1, 1], [], []>} : vector<16x16xf32>, vector<16x64xf32>, vector<16x64xf32> -> vector<16x64xf32>
    %c0_315 = arith.constant 0 : index
    %c0_316 = arith.constant 0 : index
    %308 = vector.load %arg62[%c0_315, %c0_316] : memref<192x64xf32, #tpu.memory_space<vmem>>, vector<64x64xf32>
    %cst_317 = arith.constant dense<0.000000e+00> : vector<16x64xf32>
    %309 = tpu.matmul %305, %308, %cst_317 {dimension_numbers = #tpu.dot_dimension_numbers<[1], [0], [0], [1], [0, 0, 1, 1], [], []>} : vector<16x64xf32>, vector<64x64xf32>, vector<16x64xf32> -> vector<16x64xf32>
    %c64_318 = arith.constant 64 : index
    %c0_319 = arith.constant 0 : index
    %310 = vector.load %arg62[%c64_318, %c0_319] : memref<192x64xf32, #tpu.memory_space<vmem>>, vector<64x64xf32>
    %cst_320 = arith.constant dense<0.000000e+00> : vector<16x64xf32>
    %311 = tpu.matmul %303, %310, %cst_320 {dimension_numbers = #tpu.dot_dimension_numbers<[1], [0], [0], [1], [0, 0, 1, 1], [], []>} : vector<16x64xf32>, vector<64x64xf32>, vector<16x64xf32> -> vector<16x64xf32>
    %312 = arith.addf %309, %311 : vector<16x64xf32>
    %c128_321 = arith.constant 128 : index
    %c0_322 = arith.constant 0 : index
    %313 = vector.load %arg62[%c128_321, %c0_322] : memref<192x64xf32, #tpu.memory_space<vmem>>, vector<64x64xf32>
    %cst_323 = arith.constant dense<0.000000e+00> : vector<16x64xf32>
    %314 = tpu.matmul %307, %313, %cst_323 {dimension_numbers = #tpu.dot_dimension_numbers<[1], [0], [0], [1], [0, 0, 1, 1], [], []>} : vector<16x64xf32>, vector<64x64xf32>, vector<16x64xf32> -> vector<16x64xf32>
    %315 = arith.addf %312, %314 : vector<16x64xf32>
    %c0_324 = arith.constant 0 : index
    %c0_325 = arith.constant 0 : index
    %316 = vector.load %arg61[%c0_324, %c0_325] : memref<1x64xf32, #tpu.memory_space<vmem>>, vector<1x64xf32>
    %317 = vector.broadcast %316 : vector<1x64xf32> to vector<16x64xf32>
    %318 = arith.addf %315, %317 : vector<16x64xf32>
    %cst_326 = arith.constant 0.00999999977 : f32
    %319 = vector.broadcast %cst_326 : f32 to vector<16x64xf32>
    %320 = arith.mulf %319, %318 : vector<16x64xf32>
    %321 = arith.maximumf %318, %320 : vector<16x64xf32>
    %c0_327 = arith.constant 0 : index
    %c0_328 = arith.constant 0 : index
    %322 = vector.load %arg64[%c0_327, %c0_328] : memref<128x128xf32, #tpu.memory_space<vmem>>, vector<64x128xf32>
    %cst_329 = arith.constant dense<0.000000e+00> : vector<16x128xf32>
    %323 = tpu.matmul %321, %322, %cst_329 {dimension_numbers = #tpu.dot_dimension_numbers<[1], [0], [0], [1], [0, 0, 1, 1], [], []>} : vector<16x64xf32>, vector<64x128xf32>, vector<16x128xf32> -> vector<16x128xf32>
    %c0_330 = arith.constant 0 : index
    %c0_331 = arith.constant 0 : index
    %324 = vector.load %arg63[%c0_330, %c0_331] : memref<1x128xf32, #tpu.memory_space<vmem>>, vector<1x128xf32>
    %325 = vector.broadcast %324 : vector<1x128xf32> to vector<16x128xf32>
    %326 = arith.addf %323, %325 : vector<16x128xf32>
    %c64_332 = arith.constant 64 : index
    %c0_333 = arith.constant 0 : index
    %327 = vector.load %arg64[%c64_332, %c0_333] : memref<128x128xf32, #tpu.memory_space<vmem>>, vector<64x128xf32>
    %cst_334 = arith.constant dense<0.000000e+00> : vector<16x128xf32>
    %328 = tpu.matmul %321, %327, %cst_334 {dimension_numbers = #tpu.dot_dimension_numbers<[1], [0], [0], [1], [0, 0, 1, 1], [], []>} : vector<16x64xf32>, vector<64x128xf32>, vector<16x128xf32> -> vector<16x128xf32>
    %c0_335 = arith.constant 0 : index
    %c0_336 = arith.constant 0 : index
    %329 = vector.load %arg63[%c0_335, %c0_336] : memref<1x128xf32, #tpu.memory_space<vmem>>, vector<1x128xf32>
    %330 = vector.broadcast %329 : vector<1x128xf32> to vector<16x128xf32>
    %331 = arith.addf %328, %330 : vector<16x128xf32>
    %c0_337 = arith.constant 0 : index
    %c0_338 = arith.constant 0 : index
    %332 = vector.load %arg65[%c0_337, %c0_338] : memref<32x16xf32, #tpu.memory_space<vmem>>, vector<32x16xf32>
    %cst_339 = arith.constant dense<0.000000e+00> : vector<32x128xf32>
    %333 = tpu.matmul %332, %326, %cst_339 {dimension_numbers = #tpu.dot_dimension_numbers<[1], [0], [0], [1], [0, 0, 1, 1], [], []>} : vector<32x16xf32>, vector<16x128xf32>, vector<32x128xf32> -> vector<32x128xf32>
    %c0_340 = arith.constant 0 : index
    %c0_341 = arith.constant 0 : index
    %334 = vector.load %arg66[%c0_340, %c0_341] : memref<32x16xf32, #tpu.memory_space<vmem>>, vector<32x16xf32>
    %cst_342 = arith.constant dense<0.000000e+00> : vector<32x128xf32>
    %335 = tpu.matmul %334, %331, %cst_342 {dimension_numbers = #tpu.dot_dimension_numbers<[1], [0], [0], [1], [0, 0, 1, 1], [], []>} : vector<32x16xf32>, vector<16x128xf32>, vector<32x128xf32> -> vector<32x128xf32>
    %336 = arith.addf %333, %335 : vector<32x128xf32>
    %c0_343 = arith.constant 0 : index
    %c0_344 = arith.constant 0 : index
    %337 = vector.load %arg39[%c0_343, %c0_344] : memref<32x32xf32, #tpu.memory_space<vmem>>, vector<32x32xf32>
    %cst_345 = arith.constant dense<0.000000e+00> : vector<32x128xf32>
    %338 = tpu.matmul %337, %336, %cst_345 {dimension_numbers = #tpu.dot_dimension_numbers<[1], [0], [0], [1], [0, 0, 1, 1], [], []>} : vector<32x32xf32>, vector<32x128xf32>, vector<32x128xf32> -> vector<32x128xf32>
    %c0_346 = arith.constant 0 : index
    %c0_347 = arith.constant 0 : index
    %339 = vector.load %arg40[%c0_346, %c0_347] : memref<32x32xf32, #tpu.memory_space<vmem>>, vector<32x32xf32>
    %cst_348 = arith.constant dense<0.000000e+00> : vector<32x128xf32>
    %340 = tpu.matmul %339, %336, %cst_348 {dimension_numbers = #tpu.dot_dimension_numbers<[1], [0], [0], [1], [0, 0, 1, 1], [], []>} : vector<32x32xf32>, vector<32x128xf32>, vector<32x128xf32> -> vector<32x128xf32>
    %c0_349 = arith.constant 0 : index
    %c0_350 = arith.constant 0 : index
    %341 = vector.load %arg36[%c0_349, %c0_350] : memref<384x128xf32, #tpu.memory_space<vmem>>, vector<128x128xf32>
    %cst_351 = arith.constant dense<0.000000e+00> : vector<32x128xf32>
    %342 = tpu.matmul %338, %341, %cst_351 {dimension_numbers = #tpu.dot_dimension_numbers<[1], [0], [0], [1], [0, 0, 1, 1], [], []>} : vector<32x128xf32>, vector<128x128xf32>, vector<32x128xf32> -> vector<32x128xf32>
    %c128_352 = arith.constant 128 : index
    %c0_353 = arith.constant 0 : index
    %343 = vector.load %arg36[%c128_352, %c0_353] : memref<384x128xf32, #tpu.memory_space<vmem>>, vector<128x128xf32>
    %cst_354 = arith.constant dense<0.000000e+00> : vector<32x128xf32>
    %344 = tpu.matmul %336, %343, %cst_354 {dimension_numbers = #tpu.dot_dimension_numbers<[1], [0], [0], [1], [0, 0, 1, 1], [], []>} : vector<32x128xf32>, vector<128x128xf32>, vector<32x128xf32> -> vector<32x128xf32>
    %345 = arith.addf %342, %344 : vector<32x128xf32>
    %c256_355 = arith.constant 256 : index
    %c0_356 = arith.constant 0 : index
    %346 = vector.load %arg36[%c256_355, %c0_356] : memref<384x128xf32, #tpu.memory_space<vmem>>, vector<128x128xf32>
    %cst_357 = arith.constant dense<0.000000e+00> : vector<32x128xf32>
    %347 = tpu.matmul %340, %346, %cst_357 {dimension_numbers = #tpu.dot_dimension_numbers<[1], [0], [0], [1], [0, 0, 1, 1], [], []>} : vector<32x128xf32>, vector<128x128xf32>, vector<32x128xf32> -> vector<32x128xf32>
    %348 = arith.addf %345, %347 : vector<32x128xf32>
    %c0_358 = arith.constant 0 : index
    %c0_359 = arith.constant 0 : index
    %349 = vector.load %arg35[%c0_358, %c0_359] : memref<1x128xf32, #tpu.memory_space<vmem>>, vector<1x128xf32>
    %350 = vector.broadcast %349 : vector<1x128xf32> to vector<32x128xf32>
    %351 = arith.addf %348, %350 : vector<32x128xf32>
    %c0_360 = arith.constant 0 : index
    %c0_361 = arith.constant 0 : index
    %352 = vector.load %arg39[%c0_360, %c0_361] : memref<32x32xf32, #tpu.memory_space<vmem>>, vector<32x32xf32>
    %cst_362 = arith.constant dense<0.000000e+00> : vector<32x128xf32>
    %353 = tpu.matmul %352, %351, %cst_362 {dimension_numbers = #tpu.dot_dimension_numbers<[1], [0], [0], [1], [0, 0, 1, 1], [], []>} : vector<32x32xf32>, vector<32x128xf32>, vector<32x128xf32> -> vector<32x128xf32>
    %c0_363 = arith.constant 0 : index
    %c0_364 = arith.constant 0 : index
    %354 = vector.load %arg40[%c0_363, %c0_364] : memref<32x32xf32, #tpu.memory_space<vmem>>, vector<32x32xf32>
    %cst_365 = arith.constant dense<0.000000e+00> : vector<32x128xf32>
    %355 = tpu.matmul %354, %351, %cst_365 {dimension_numbers = #tpu.dot_dimension_numbers<[1], [0], [0], [1], [0, 0, 1, 1], [], []>} : vector<32x32xf32>, vector<32x128xf32>, vector<32x128xf32> -> vector<32x128xf32>
    %c0_366 = arith.constant 0 : index
    %c0_367 = arith.constant 0 : index
    %356 = vector.load %arg38[%c0_366, %c0_367] : memref<384x16xf32, #tpu.memory_space<vmem>>, vector<128x16xf32>
    %cst_368 = arith.constant dense<0.000000e+00> : vector<32x16xf32>
    %357 = tpu.matmul %353, %356, %cst_368 {dimension_numbers = #tpu.dot_dimension_numbers<[1], [0], [0], [1], [0, 0, 1, 1], [], []>} : vector<32x128xf32>, vector<128x16xf32>, vector<32x16xf32> -> vector<32x16xf32>
    %c128_369 = arith.constant 128 : index
    %c0_370 = arith.constant 0 : index
    %358 = vector.load %arg38[%c128_369, %c0_370] : memref<384x16xf32, #tpu.memory_space<vmem>>, vector<128x16xf32>
    %cst_371 = arith.constant dense<0.000000e+00> : vector<32x16xf32>
    %359 = tpu.matmul %351, %358, %cst_371 {dimension_numbers = #tpu.dot_dimension_numbers<[1], [0], [0], [1], [0, 0, 1, 1], [], []>} : vector<32x128xf32>, vector<128x16xf32>, vector<32x16xf32> -> vector<32x16xf32>
    %360 = arith.addf %357, %359 : vector<32x16xf32>
    %c256_372 = arith.constant 256 : index
    %c0_373 = arith.constant 0 : index
    %361 = vector.load %arg38[%c256_372, %c0_373] : memref<384x16xf32, #tpu.memory_space<vmem>>, vector<128x16xf32>
    %cst_374 = arith.constant dense<0.000000e+00> : vector<32x16xf32>
    %362 = tpu.matmul %355, %361, %cst_374 {dimension_numbers = #tpu.dot_dimension_numbers<[1], [0], [0], [1], [0, 0, 1, 1], [], []>} : vector<32x128xf32>, vector<128x16xf32>, vector<32x16xf32> -> vector<32x16xf32>
    %363 = arith.addf %360, %362 : vector<32x16xf32>
    %c0_375 = arith.constant 0 : index
    %c0_376 = arith.constant 0 : index
    %364 = vector.load %arg37[%c0_375, %c0_376] : memref<1x16xf32, #tpu.memory_space<vmem>>, vector<1x16xf32>
    %365 = vector.broadcast %364 : vector<1x16xf32> to vector<32x16xf32>
    %366 = arith.addf %363, %365 : vector<32x16xf32>
    %c0_377 = arith.constant 0 : index
    %c0_378 = arith.constant 0 : index
    %367 = vector.load %arg67[%c0_377, %c0_378] : memref<32x16xf32, #tpu.memory_space<vmem>>, vector<32x16xf32>
    tpu.vector_store %arg67[%c0_377, %c0_378], %366 {strides = array<i32>} : memref<32x16xf32, #tpu.memory_space<vmem>>, vector<32x16xf32>,
    return
  }
}

</mosaic_0001>

<llo_original>
// kernel: unet_no_bridge_forward.1
$region0: #{unet_no_bridge_forward.1}
  #allocation0 [shape = 'u32[]', space=smem, size = 0x4, offset = 0x4, fixed_abs, tag = 'smem constant byte address 0x4 - core index']
  #allocation1 [shape = 'u32[144,128]{1,0:T(1,128)}', space=vmem, size = 0x12000, scoped, tag = 'internal scratch']
  %s0 = inlined_call_operand.smem [shape: u32[68], index: -1, kind: input, shape index: {}]
  %s1 = sld [smem:[%s0]]
  %s2 = scalar_lea.smem %s0, 1
  %s3 = sld [smem:[%s2]]
  %s4 = scalar_lea.smem %s0, 2
  %s5 = sld [smem:[%s4]]
  %s6 = scalar_lea.smem %s0, 3
  %s7 = sld [smem:[%s6]]
  %s8 = scalar_lea.smem %s0, 4
  %s9 = sld [smem:[%s8]]
  %s10 = scalar_lea.smem %s0, 5
  %s11 = sld [smem:[%s10]]
  %s12 = scalar_lea.smem %s0, 6
  %s13 = sld [smem:[%s12]]
  %s14 = scalar_lea.smem %s0, 7
  %s15 = sld [smem:[%s14]]
  %s16 = scalar_lea.smem %s0, 8
  %s17 = sld [smem:[%s16]]
  %s18 = scalar_lea.smem %s0, 9
  %s19 = sld [smem:[%s18]]
  %s20 = scalar_lea.smem %s0, 10
  %s21 = sld [smem:[%s20]]
  %s22 = scalar_lea.smem %s0, 11
  %s23 = sld [smem:[%s22]]
  %s24 = scalar_lea.smem %s0, 12
  %s25 = sld [smem:[%s24]]
  %s26 = scalar_lea.smem %s0, 13
  %s27 = sld [smem:[%s26]]
  %s28 = scalar_lea.smem %s0, 14
  %s29 = sld [smem:[%s28]]
  %s30 = scalar_lea.smem %s0, 15
  %s31 = sld [smem:[%s30]]
  %s32 = scalar_lea.smem %s0, 16
  %s33 = sld [smem:[%s32]]
  %s34 = scalar_lea.smem %s0, 17
  %s35 = sld [smem:[%s34]]
  %s36 = scalar_lea.smem %s0, 18
  %s37 = sld [smem:[%s36]]
  %s38 = scalar_lea.smem %s0, 19
  %s39 = sld [smem:[%s38]]
  %s40 = scalar_lea.smem %s0, 20
  %s41 = sld [smem:[%s40]]
  %s42 = scalar_lea.smem %s0, 21
  %s43 = sld [smem:[%s42]]
  %s44 = scalar_lea.smem %s0, 22
  %s45 = sld [smem:[%s44]]
  %s46 = scalar_lea.smem %s0, 23
  %s47 = sld [smem:[%s46]]
  %s48 = scalar_lea.smem %s0, 24
  %s49 = sld [smem:[%s48]]
  %s50 = scalar_lea.smem %s0, 25
  %s51 = sld [smem:[%s50]]
  %s52 = scalar_lea.smem %s0, 26
  %s53 = sld [smem:[%s52]]
  %s54 = scalar_lea.smem %s0, 27
  %s55 = sld [smem:[%s54]]
  %s56 = scalar_lea.smem %s0, 28
  %s57 = sld [smem:[%s56]]
  %s58 = scalar_lea.smem %s0, 29
  %s59 = sld [smem:[%s58]]
  %s60 = scalar_lea.smem %s0, 30
  %s61 = sld [smem:[%s60]]
  %s62 = scalar_lea.smem %s0, 31
  %s63 = sld [smem:[%s62]]
  %s64 = scalar_lea.smem %s0, 32
  %s65 = sld [smem:[%s64]]
  %s66 = scalar_lea.smem %s0, 33
  %s67 = sld [smem:[%s66]]
  %s68 = scalar_lea.smem %s0, 34
  %s69 = sld [smem:[%s68]]
  %s70 = scalar_lea.smem %s0, 35
  %s71 = sld [smem:[%s70]]
  %s72 = scalar_lea.smem %s0, 36
  %s73 = sld [smem:[%s72]]
  %s74 = scalar_lea.smem %s0, 37
  %s75 = sld [smem:[%s74]]
  %s76 = scalar_lea.smem %s0, 38
  %s77 = sld [smem:[%s76]]
  %s78 = scalar_lea.smem %s0, 39
  %s79 = sld [smem:[%s78]]
  %s80 = scalar_lea.smem %s0, 40
  %s81 = sld [smem:[%s80]]
  %s82 = scalar_lea.smem %s0, 41
  %s83 = sld [smem:[%s82]]
  %s84 = scalar_lea.smem %s0, 42
  %s85 = sld [smem:[%s84]]
  %s86 = scalar_lea.smem %s0, 43
  %s87 = sld [smem:[%s86]]
  %s88 = scalar_lea.smem %s0, 44
  %s89 = sld [smem:[%s88]]
  %s90 = scalar_lea.smem %s0, 45
  %s91 = sld [smem:[%s90]]
  %s92 = scalar_lea.smem %s0, 46
  %s93 = sld [smem:[%s92]]
  %s94 = scalar_lea.smem %s0, 47
  %s95 = sld [smem:[%s94]]
  %s96 = scalar_lea.smem %s0, 48
  %s97 = sld [smem:[%s96]]
  %s98 = scalar_lea.smem %s0, 49
  %s99 = sld [smem:[%s98]]
  %s100 = scalar_lea.smem %s0, 50
  %s101 = sld [smem:[%s100]]
  %s102 = scalar_lea.smem %s0, 51
  %s103 = sld [smem:[%s102]]
  %s104 = scalar_lea.smem %s0, 52
  %s105 = sld [smem:[%s104]]
  %s106 = scalar_lea.smem %s0, 53
  %s107 = sld [smem:[%s106]]
  %s108 = scalar_lea.smem %s0, 54
  %s109 = sld [smem:[%s108]]
  %s110 = scalar_lea.smem %s0, 55
  %s111 = sld [smem:[%s110]]
  %s112 = scalar_lea.smem %s0, 56
  %s113 = sld [smem:[%s112]]
  %s114 = scalar_lea.smem %s0, 57
  %s115 = sld [smem:[%s114]]
  %s116 = scalar_lea.smem %s0, 58
  %s117 = sld [smem:[%s116]]
  %s118 = scalar_lea.smem %s0, 59
  %s119 = sld [smem:[%s118]]
  %s120 = scalar_lea.smem %s0, 60
  %s121 = sld [smem:[%s120]]
  %s122 = scalar_lea.smem %s0, 61
  %s123 = sld [smem:[%s122]]
  %s124 = scalar_lea.smem %s0, 62
  %s125 = sld [smem:[%s124]]
  %s126 = scalar_lea.smem %s0, 63
  %s127 = sld [smem:[%s126]]
  %s128 = scalar_lea.smem %s0, 64
  %s129 = sld [smem:[%s128]]
  %s130 = scalar_lea.smem %s0, 65
  %s131 = sld [smem:[%s130]]
  %s132 = scalar_lea.smem %s0, 66
  %s133 = sld [smem:[%s132]]
  %s134 = scalar_lea.smem %s0, 67
  %s135 = sld [smem:[%s134]]
  %s136 = sld [smem:[#allocation0]]
  $region334: #{unet_no_bridge_forward.1} parent=0
    _
  %s138 = ssub.s32 1, %s136
  %s139 = scalar_select 0, %s138, %s136
  $region1: #{unet_no_bridge_forward.1} parent=0
    #allocation2 [shape = 'u8[512]{0}', space=vmem, size = 0x400, scoped, tag = 'input window, operand 21, single buffered']
    #allocation3 [shape = 's32[1]{0}', space=sflag, size = 0x4, scoped, tag = 'scoped memory for unet_no_bridge_forward.1']
    #allocation4 [shape = 's32[1]{0}', space=sflag, size = 0x4, scoped, tag = 'scoped memory for unet_no_bridge_forward.1']
    #allocation5 [shape = 'u8[512]{0}', space=vmem, size = 0x400, scoped, tag = 'input window, operand 23, single buffered']
    #allocation6 [shape = 's32[1]{0}', space=sflag, size = 0x4, scoped, tag = 'scoped memory for unet_no_bridge_forward.1']
    #allocation7 [shape = 'u8[512]{0}', space=vmem, size = 0x400, scoped, tag = 'input window, operand 29, single buffered']
    #allocation8 [shape = 'u8[512]{0}', space=vmem, size = 0x400, scoped, tag = 'input window, operand 31, single buffered']
    #allocation9 [shape = 's32[1]{0}', space=sflag, size = 0x4, scoped, tag = 'scoped memory for unet_no_bridge_forward.1']
    #allocation10 [shape = 'u8[512]{0}', space=vmem, size = 0x400, scoped, tag = 'input window, operand 33, single buffered']
    #allocation11 [shape = 'u8[512]{0}', space=vmem, size = 0x400, scoped, tag = 'input window, operand 35, single buffered']
    #allocation12 [shape = 's32[1]{0}', space=sflag, size = 0x4, scoped, tag = 'scoped memory for unet_no_bridge_forward.1']
    #allocation13 [shape = 'u8[512]{0}', space=vmem, size = 0x400, scoped, tag = 'input window, operand 37, single buffered']
    #allocation14 [shape = 'u8[512]{0}', space=vmem, size = 0x400, scoped, tag = 'input window, operand 47, single buffered']
    #allocation15 [shape = 's32[1]{0}', space=sflag, size = 0x4, scoped, tag = 'scoped memory for unet_no_bridge_forward.1']
    #allocation16 [shape = 'u8[512]{0}', space=vmem, size = 0x400, scoped, tag = 'input window, operand 51, single buffered']
    #allocation17 [shape = 'u8[512]{0}', space=vmem, size = 0x400, scoped, tag = 'input window, operand 53, single buffered']
    #allocation18 [shape = 's32[1]{0}', space=sflag, size = 0x4, scoped, tag = 'scoped memory for unet_no_bridge_forward.1']
    #allocation19 [shape = 'u8[512]{0}', space=vmem, size = 0x400, scoped, tag = 'input window, operand 55, single buffered']
    #allocation20 [shape = 'u8[512]{0}', space=vmem, size = 0x400, scoped, tag = 'input window, operand 59, single buffered']
    #allocation21 [shape = 's32[1]{0}', space=sflag, size = 0x4, scoped, tag = 'scoped memory for unet_no_bridge_forward.1']
    #allocation22 [shape = 'u8[512]{0}', space=vmem, size = 0x400, scoped, tag = 'input window, operand 61, single buffered']
    #allocation23 [shape = 'u8[512]{0}', space=vmem, size = 0x400, scoped, tag = 'input window, operand 63, single buffered']
    #allocation24 [shape = 's32[1]{0}', space=sflag, size = 0x4, scoped, tag = 'scoped memory for unet_no_bridge_forward.1']
    #allocation25 [shape = 'u8[16384]{0}', space=vmem, size = 0x4000, scoped, tag = 'output window, operand 0, single buffered']
    %140 = vsyncpa [#allocation3], 0
    %141 = vsyncpa [#allocation6], 0
    %142 = vsyncpa [#allocation9], 0
    %143 = vsyncpa [#allocation12], 0
    %144 = vsyncpa [#allocation15], 0
    %145 = vsyncpa [#allocation18], 0
    %146 = vsyncpa [#allocation21], 0
    %147 = vsyncpa [#allocation24], 0
    %148 = vsyncpa [#allocation4], 0
    // Predicated region
    $region2: #{unet_no_bridge_forward.1} parent=1 // pred_check
      _
    $region3: #{unet_no_bridge_forward.1} parent=1 // pred_check_branch
      %150 = sbr.rel (0) target = $region5
    $region4: #{unet_no_bridge_forward.1} parent=1 // pred_region
      _
    $region5: #{unet_no_bridge_forward.1} parent=1 // pred_fallthru
      _
    // Predicated region
    $region6: #{unet_no_bridge_forward.1} parent=1 // pred_check
      _
    $region7: #{unet_no_bridge_forward.1} parent=1 // pred_check_branch
      %152 = sbr.rel (0) target = $region9
    $region8: #{unet_no_bridge_forward.1} parent=1 // pred_region
      _
    $region9: #{unet_no_bridge_forward.1} parent=1 // pred_fallthru
      _
    // Predicated region
    $region10: #{unet_no_bridge_forward.1} parent=1 // pred_check
      _
    $region11: #{unet_no_bridge_forward.1} parent=1 // pred_check_branch
      %154 = sbr.rel (0) target = $region13
    $region12: #{unet_no_bridge_forward.1} parent=1 // pred_region
      _
    $region13: #{unet_no_bridge_forward.1} parent=1 // pred_fallthru
      _
    // Predicated region
    $region14: #{unet_no_bridge_forward.1} parent=1 // pred_check
      _
    $region15: #{unet_no_bridge_forward.1} parent=1 // pred_check_branch
      %156 = sbr.rel (0) target = $region17
    $region16: #{unet_no_bridge_forward.1} parent=1 // pred_region
      _
    $region17: #{unet_no_bridge_forward.1} parent=1 // pred_fallthru
      _
    // Predicated region
    $region18: #{unet_no_bridge_forward.1} parent=1 // pred_check
      _
    $region19: #{unet_no_bridge_forward.1} parent=1 // pred_check_branch
      %158 = sbr.rel (0) target = $region21
    $region20: #{unet_no_bridge_forward.1} parent=1 // pred_region
      _
    $region21: #{unet_no_bridge_forward.1} parent=1 // pred_fallthru
      _
    // Predicated region
    $region22: #{unet_no_bridge_forward.1} parent=1 // pred_check
      _
    $region23: #{unet_no_bridge_forward.1} parent=1 // pred_check_branch
      %160 = sbr.rel (0) target = $region25
    $region24: #{unet_no_bridge_forward.1} parent=1 // pred_region
      _
    $region25: #{unet_no_bridge_forward.1} parent=1 // pred_fallthru
      _
    // Predicated region
    $region26: #{unet_no_bridge_forward.1} parent=1 // pred_check
      _
    $region27: #{unet_no_bridge_forward.1} parent=1 // pred_check_branch
      %162 = sbr.rel (0) target = $region29
    $region28: #{unet_no_bridge_forward.1} parent=1 // pred_region
      _
    $region29: #{unet_no_bridge_forward.1} parent=1 // pred_fallthru
      _
    // Predicated region
    $region30: #{unet_no_bridge_forward.1} parent=1 // pred_check
      _
    $region31: #{unet_no_bridge_forward.1} parent=1 // pred_check_branch
      %164 = sbr.rel (0) target = $region33
    $region32: #{unet_no_bridge_forward.1} parent=1 // pred_region
      _
    $region33: #{unet_no_bridge_forward.1} parent=1 // pred_fallthru
      _
    // Predicated region
    $region34: #{unet_no_bridge_forward.1} parent=1 // pred_check
      _
    $region35: #{unet_no_bridge_forward.1} parent=1 // pred_check_branch
      %166 = sbr.rel (0) target = $region37
    $region36: #{unet_no_bridge_forward.1} parent=1 // pred_region
      _
    $region37: #{unet_no_bridge_forward.1} parent=1 // pred_fallthru
      _
    // Predicated region
    $region38: #{unet_no_bridge_forward.1} parent=1 // pred_check
      _
    $region39: #{unet_no_bridge_forward.1} parent=1 // pred_check_branch
      %168 = sbr.rel (0) target = $region41
    $region40: #{unet_no_bridge_forward.1} parent=1 // pred_region
      _
    $region41: #{unet_no_bridge_forward.1} parent=1 // pred_fallthru
      _
    // Predicated region
    $region42: #{unet_no_bridge_forward.1} parent=1 // pred_check
      _
    $region43: #{unet_no_bridge_forward.1} parent=1 // pred_check_branch
      %170 = sbr.rel (0) target = $region45
    $region44: #{unet_no_bridge_forward.1} parent=1 // pred_region
      _
    $region45: #{unet_no_bridge_forward.1} parent=1 // pred_fallthru
      _
    // Predicated region
    $region46: #{unet_no_bridge_forward.1} parent=1 // pred_check
      _
    $region47: #{unet_no_bridge_forward.1} parent=1 // pred_check_branch
      %172 = sbr.rel (0) target = $region49
    $region48: #{unet_no_bridge_forward.1} parent=1 // pred_region
      _
    $region49: #{unet_no_bridge_forward.1} parent=1 // pred_fallthru
      _
    // Predicated region
    $region50: #{unet_no_bridge_forward.1} parent=1 // pred_check
      _
    $region51: #{unet_no_bridge_forward.1} parent=1 // pred_check_branch
      %174 = sbr.rel (0) target = $region53
    $region52: #{unet_no_bridge_forward.1} parent=1 // pred_region
      _
    $region53: #{unet_no_bridge_forward.1} parent=1 // pred_fallthru
      _
    // Predicated region
    $region54: #{unet_no_bridge_forward.1} parent=1 // pred_check
      _
    $region55: #{unet_no_bridge_forward.1} parent=1 // pred_check_branch
      %176 = sbr.rel (0) target = $region57
    $region56: #{unet_no_bridge_forward.1} parent=1 // pred_region
      _
    $region57: #{unet_no_bridge_forward.1} parent=1 // pred_fallthru
      _
    // Predicated region
    $region58: #{unet_no_bridge_forward.1} parent=1 // pred_check
      _
    $region59: #{unet_no_bridge_forward.1} parent=1 // pred_check_branch
      %178 = sbr.rel (0) target = $region61
    $region60: #{unet_no_bridge_forward.1} parent=1 // pred_region
      _
    $region61: #{unet_no_bridge_forward.1} parent=1 // pred_fallthru
      _
    // Predicated region
    $region62: #{unet_no_bridge_forward.1} parent=1 // pred_check
      _
    $region63: #{unet_no_bridge_forward.1} parent=1 // pred_check_branch
      %180 = sbr.rel (0) target = $region65
    $region64: #{unet_no_bridge_forward.1} parent=1 // pred_region
      _
    $region65: #{unet_no_bridge_forward.1} parent=1 // pred_fallthru
      _
    // Predicated region
    $region66: #{unet_no_bridge_forward.1} parent=1 // pred_check
      _
    $region67: #{unet_no_bridge_forward.1} parent=1 // pred_check_branch
      %182 = sbr.rel (0) target = $region69
    $region68: #{unet_no_bridge_forward.1} parent=1 // pred_region
      _
    $region69: #{unet_no_bridge_forward.1} parent=1 // pred_fallthru
      _
    // Predicated region
    $region70: #{unet_no_bridge_forward.1} parent=1 // pred_check
      _
    $region71: #{unet_no_bridge_forward.1} parent=1 // pred_check_branch
      %184 = sbr.rel (0) target = $region73
    $region72: #{unet_no_bridge_forward.1} parent=1 // pred_region
      _
    $region73: #{unet_no_bridge_forward.1} parent=1 // pred_fallthru
      _
    // Predicated region
    $region74: #{unet_no_bridge_forward.1} parent=1 // pred_check
      _
    $region75: #{unet_no_bridge_forward.1} parent=1 // pred_check_branch
      %186 = sbr.rel (0) target = $region77
    $region76: #{unet_no_bridge_forward.1} parent=1 // pred_region
      _
    $region77: #{unet_no_bridge_forward.1} parent=1 // pred_fallthru
      _
    // Predicated region
    $region78: #{unet_no_bridge_forward.1} parent=1 // pred_check
      _
    $region79: #{unet_no_bridge_forward.1} parent=1 // pred_check_branch
      %188 = sbr.rel (0) target = $region81
    $region80: #{unet_no_bridge_forward.1} parent=1 // pred_region
      _
    $region81: #{unet_no_bridge_forward.1} parent=1 // pred_fallthru
      _
    // Predicated region
    $region82: #{unet_no_bridge_forward.1} parent=1 // pred_check
      _
    $region83: #{unet_no_bridge_forward.1} parent=1 // pred_check_branch
      %190 = sbr.rel (0) target = $region85
    $region84: #{unet_no_bridge_forward.1} parent=1 // pred_region
      _
    $region85: #{unet_no_bridge_forward.1} parent=1 // pred_fallthru
      _
    // Predicated region
    $region86: #{unet_no_bridge_forward.1} parent=1 // pred_check
      _
    $region87: #{unet_no_bridge_forward.1} parent=1 // pred_check_branch
      %192 = sbr.rel (0) target = $region89
    $region88: #{unet_no_bridge_forward.1} parent=1 // pred_region
      %s194 = ssub.s32 16, 16
      %195 = vsyncadd [#allocation3], %s194
      %s197 = sshll.u32 [#allocation2], 4
      %s198 = int_to_ptr.vmem [resolvable:$true] %s197
      %200 = dma.hbm_to_vmem [thread:$0]  %s43, 16, %s198, [#allocation3]
    $region89: #{unet_no_bridge_forward.1} parent=1 // pred_fallthru
      _
    // Predicated region
    $region90: #{unet_no_bridge_forward.1} parent=1 // pred_check
      _
    $region91: #{unet_no_bridge_forward.1} parent=1 // pred_check_branch
      %202 = sbr.rel (0) target = $region93
    $region92: #{unet_no_bridge_forward.1} parent=1 // pred_region
      _
    $region93: #{unet_no_bridge_forward.1} parent=1 // pred_fallthru
      _
    // Predicated region
    $region94: #{unet_no_bridge_forward.1} parent=1 // pred_check
      _
    $region95: #{unet_no_bridge_forward.1} parent=1 // pred_check_branch
      %204 = sbr.rel (0) target = $region97
    $region96: #{unet_no_bridge_forward.1} parent=1 // pred_region
      %s206 = ssub.s32 16, 16
      %207 = vsyncadd [#allocation6], %s206
      %s209 = sshll.u32 [#allocation5], 4
      %s210 = int_to_ptr.vmem [resolvable:$true] %s209
      %212 = dma.hbm_to_vmem [thread:$0]  %s47, 16, %s210, [#allocation6]
    $region97: #{unet_no_bridge_forward.1} parent=1 // pred_fallthru
      _
    // Predicated region
    $region98: #{unet_no_bridge_forward.1} parent=1 // pred_check
      _
    $region99: #{unet_no_bridge_forward.1} parent=1 // pred_check_branch
      %214 = sbr.rel (0) target = $region101
    $region100: #{unet_no_bridge_forward.1} parent=1 // pred_region
      _
    $region101: #{unet_no_bridge_forward.1} parent=1 // pred_fallthru
      _
    // Predicated region
    $region102: #{unet_no_bridge_forward.1} parent=1 // pred_check
      _
    $region103: #{unet_no_bridge_forward.1} parent=1 // pred_check_branch
      %216 = sbr.rel (0) target = $region105
    $region104: #{unet_no_bridge_forward.1} parent=1 // pred_region
      _
    $region105: #{unet_no_bridge_forward.1} parent=1 // pred_fallthru
      _
    // Predicated region
    $region106: #{unet_no_bridge_forward.1} parent=1 // pred_check
      _
    $region107: #{unet_no_bridge_forward.1} parent=1 // pred_check_branch
      %218 = sbr.rel (0) target = $region109
    $region108: #{unet_no_bridge_forward.1} parent=1 // pred_region
      _
    $region109: #{unet_no_bridge_forward.1} parent=1 // pred_fallthru
      _
    // Predicated region
    $region110: #{unet_no_bridge_forward.1} parent=1 // pred_check
      _
    $region111: #{unet_no_bridge_forward.1} parent=1 // pred_check_branch
      %220 = sbr.rel (0) target = $region113
    $region112: #{unet_no_bridge_forward.1} parent=1 // pred_region
      _
    $region113: #{unet_no_bridge_forward.1} parent=1 // pred_fallthru
      _
    // Predicated region
    $region114: #{unet_no_bridge_forward.1} parent=1 // pred_check
      _
    $region115: #{unet_no_bridge_forward.1} parent=1 // pred_check_branch
      %222 = sbr.rel (0) target = $region117
    $region116: #{unet_no_bridge_forward.1} parent=1 // pred_region
      _
    $region117: #{unet_no_bridge_forward.1} parent=1 // pred_fallthru
      _
    // Predicated region
    $region118: #{unet_no_bridge_forward.1} parent=1 // pred_check
      _
    $region119: #{unet_no_bridge_forward.1} parent=1 // pred_check_branch
      %224 = sbr.rel (0) target = $region121
    $region120: #{unet_no_bridge_forward.1} parent=1 // pred_region
      %s226 = ssub.s32 16, 16
      %227 = vsyncadd [#allocation6], %s226
      %s229 = sshll.u32 [#allocation7], 4
      %s230 = int_to_ptr.vmem [resolvable:$true] %s229
      %232 = dma.hbm_to_vmem [thread:$0]  %s59, 16, %s230, [#allocation6]
    $region121: #{unet_no_bridge_forward.1} parent=1 // pred_fallthru
      _
    // Predicated region
    $region122: #{unet_no_bridge_forward.1} parent=1 // pred_check
      _
    $region123: #{unet_no_bridge_forward.1} parent=1 // pred_check_branch
      %234 = sbr.rel (0) target = $region125
    $region124: #{unet_no_bridge_forward.1} parent=1 // pred_region
      _
    $region125: #{unet_no_bridge_forward.1} parent=1 // pred_fallthru
      _
    // Predicated region
    $region126: #{unet_no_bridge_forward.1} parent=1 // pred_check
      _
    $region127: #{unet_no_bridge_forward.1} parent=1 // pred_check_branch
      %236 = sbr.rel (0) target = $region129
    $region128: #{unet_no_bridge_forward.1} parent=1 // pred_region
      %s238 = ssub.s32 16, 16
      %239 = vsyncadd [#allocation9], %s238
      %s241 = sshll.u32 [#allocation8], 4
      %s242 = int_to_ptr.vmem [resolvable:$true] %s241
      %244 = dma.hbm_to_vmem [thread:$0]  %s63, 16, %s242, [#allocation9]
    $region129: #{unet_no_bridge_forward.1} parent=1 // pred_fallthru
      _
    // Predicated region
    $region130: #{unet_no_bridge_forward.1} parent=1 // pred_check
      _
    $region131: #{unet_no_bridge_forward.1} parent=1 // pred_check_branch
      %246 = sbr.rel (0) target = $region133
    $region132: #{unet_no_bridge_forward.1} parent=1 // pred_region
      _
    $region133: #{unet_no_bridge_forward.1} parent=1 // pred_fallthru
      _
    // Predicated region
    $region134: #{unet_no_bridge_forward.1} parent=1 // pred_check
      _
    $region135: #{unet_no_bridge_forward.1} parent=1 // pred_check_branch
      %248 = sbr.rel (0) target = $region137
    $region136: #{unet_no_bridge_forward.1} parent=1 // pred_region
      %s250 = ssub.s32 16, 16
      %251 = vsyncadd [#allocation9], %s250
      %s253 = sshll.u32 [#allocation10], 4
      %s254 = int_to_ptr.vmem [resolvable:$true] %s253
      %256 = dma.hbm_to_vmem [thread:$0]  %s67, 16, %s254, [#allocation9]
    $region137: #{unet_no_bridge_forward.1} parent=1 // pred_fallthru
      _
    // Predicated region
    $region138: #{unet_no_bridge_forward.1} parent=1 // pred_check
      _
    $region139: #{unet_no_bridge_forward.1} parent=1 // pred_check_branch
      %258 = sbr.rel (0) target = $region141
    $region140: #{unet_no_bridge_forward.1} parent=1 // pred_region
      _
    $region141: #{unet_no_bridge_forward.1} parent=1 // pred_fallthru
      _
    // Predicated region
    $region142: #{unet_no_bridge_forward.1} parent=1 // pred_check
      _
    $region143: #{unet_no_bridge_forward.1} parent=1 // pred_check_branch
      %260 = sbr.rel (0) target = $region145
    $region144: #{unet_no_bridge_forward.1} parent=1 // pred_region
      %s262 = ssub.s32 16, 16
      %263 = vsyncadd [#allocation12], %s262
      %s265 = sshll.u32 [#allocation11], 4
      %s266 = int_to_ptr.vmem [resolvable:$true] %s265
      %268 = dma.hbm_to_vmem [thread:$0]  %s71, 16, %s266, [#allocation12]
    $region145: #{unet_no_bridge_forward.1} parent=1 // pred_fallthru
      _
    // Predicated region
    $region146: #{unet_no_bridge_forward.1} parent=1 // pred_check
      _
    $region147: #{unet_no_bridge_forward.1} parent=1 // pred_check_branch
      %270 = sbr.rel (0) target = $region149
    $region148: #{unet_no_bridge_forward.1} parent=1 // pred_region
      _
    $region149: #{unet_no_bridge_forward.1} parent=1 // pred_fallthru
      _
    // Predicated region
    $region150: #{unet_no_bridge_forward.1} parent=1 // pred_check
      _
    $region151: #{unet_no_bridge_forward.1} parent=1 // pred_check_branch
      %272 = sbr.rel (0) target = $region153
    $region152: #{unet_no_bridge_forward.1} parent=1 // pred_region
      %s274 = ssub.s32 16, 16
      %275 = vsyncadd [#allocation12], %s274
      %s277 = sshll.u32 [#allocation13], 4
      %s278 = int_to_ptr.vmem [resolvable:$true] %s277
      %280 = dma.hbm_to_vmem [thread:$0]  %s75, 16, %s278, [#allocation12]
    $region153: #{unet_no_bridge_forward.1} parent=1 // pred_fallthru
      _
    // Predicated region
    $region154: #{unet_no_bridge_forward.1} parent=1 // pred_check
      _
    $region155: #{unet_no_bridge_forward.1} parent=1 // pred_check_branch
      %282 = sbr.rel (0) target = $region157
    $region156: #{unet_no_bridge_forward.1} parent=1 // pred_region
      _
    $region157: #{unet_no_bridge_forward.1} parent=1 // pred_fallthru
      _
    // Predicated region
    $region158: #{unet_no_bridge_forward.1} parent=1 // pred_check
      _
    $region159: #{unet_no_bridge_forward.1} parent=1 // pred_check_branch
      %284 = sbr.rel (0) target = $region161
    $region160: #{unet_no_bridge_forward.1} parent=1 // pred_region
      _
    $region161: #{unet_no_bridge_forward.1} parent=1 // pred_fallthru
      _
    // Predicated region
    $region162: #{unet_no_bridge_forward.1} parent=1 // pred_check
      _
    $region163: #{unet_no_bridge_forward.1} parent=1 // pred_check_branch
      %286 = sbr.rel (0) target = $region165
    $region164: #{unet_no_bridge_forward.1} parent=1 // pred_region
      _
    $region165: #{unet_no_bridge_forward.1} parent=1 // pred_fallthru
      _
    // Predicated region
    $region166: #{unet_no_bridge_forward.1} parent=1 // pred_check
      _
    $region167: #{unet_no_bridge_forward.1} parent=1 // pred_check_branch
      %288 = sbr.rel (0) target = $region169
    $region168: #{unet_no_bridge_forward.1} parent=1 // pred_region
      _
    $region169: #{unet_no_bridge_forward.1} parent=1 // pred_fallthru
      _
    // Predicated region
    $region170: #{unet_no_bridge_forward.1} parent=1 // pred_check
      _
    $region171: #{unet_no_bridge_forward.1} parent=1 // pred_check_branch
      %290 = sbr.rel (0) target = $region173
    $region172: #{unet_no_bridge_forward.1} parent=1 // pred_region
      _
    $region173: #{unet_no_bridge_forward.1} parent=1 // pred_fallthru
      _
    // Predicated region
    $region174: #{unet_no_bridge_forward.1} parent=1 // pred_check
      _
    $region175: #{unet_no_bridge_forward.1} parent=1 // pred_check_branch
      %292 = sbr.rel (0) target = $region177
    $region176: #{unet_no_bridge_forward.1} parent=1 // pred_region
      _
    $region177: #{unet_no_bridge_forward.1} parent=1 // pred_fallthru
      _
    // Predicated region
    $region178: #{unet_no_bridge_forward.1} parent=1 // pred_check
      _
    $region179: #{unet_no_bridge_forward.1} parent=1 // pred_check_branch
      %294 = sbr.rel (0) target = $region181
    $region180: #{unet_no_bridge_forward.1} parent=1 // pred_region
      _
    $region181: #{unet_no_bridge_forward.1} parent=1 // pred_fallthru
      _
    // Predicated region
    $region182: #{unet_no_bridge_forward.1} parent=1 // pred_check
      _
    $region183: #{unet_no_bridge_forward.1} parent=1 // pred_check_branch
      %296 = sbr.rel (0) target = $region185
    $region184: #{unet_no_bridge_forward.1} parent=1 // pred_region
      _
    $region185: #{unet_no_bridge_forward.1} parent=1 // pred_fallthru
      _
    // Predicated region
    $region186: #{unet_no_bridge_forward.1} parent=1 // pred_check
      _
    $region187: #{unet_no_bridge_forward.1} parent=1 // pred_check_branch
      %298 = sbr.rel (0) target = $region189
    $region188: #{unet_no_bridge_forward.1} parent=1 // pred_region
      _
    $region189: #{unet_no_bridge_forward.1} parent=1 // pred_fallthru
      _
    // Predicated region
    $region190: #{unet_no_bridge_forward.1} parent=1 // pred_check
      _
    $region191: #{unet_no_bridge_forward.1} parent=1 // pred_check_branch
      %300 = sbr.rel (0) target = $region193
    $region192: #{unet_no_bridge_forward.1} parent=1 // pred_region
      %s302 = ssub.s32 16, 16
      %303 = vsyncadd [#allocation15], %s302
      %s305 = sshll.u32 [#allocation14], 4
      %s306 = int_to_ptr.vmem [resolvable:$true] %s305
      %308 = dma.hbm_to_vmem [thread:$0]  %s95, 16, %s306, [#allocation15]
    $region193: #{unet_no_bridge_forward.1} parent=1 // pred_fallthru
      _
    // Predicated region
    $region194: #{unet_no_bridge_forward.1} parent=1 // pred_check
      _
    $region195: #{unet_no_bridge_forward.1} parent=1 // pred_check_branch
      %310 = sbr.rel (0) target = $region197
    $region196: #{unet_no_bridge_forward.1} parent=1 // pred_region
      _
    $region197: #{unet_no_bridge_forward.1} parent=1 // pred_fallthru
      _
    // Predicated region
    $region198: #{unet_no_bridge_forward.1} parent=1 // pred_check
      _
    $region199: #{unet_no_bridge_forward.1} parent=1 // pred_check_branch
      %312 = sbr.rel (0) target = $region201
    $region200: #{unet_no_bridge_forward.1} parent=1 // pred_region
      _
    $region201: #{unet_no_bridge_forward.1} parent=1 // pred_fallthru
      _
    // Predicated region
    $region202: #{unet_no_bridge_forward.1} parent=1 // pred_check
      _
    $region203: #{unet_no_bridge_forward.1} parent=1 // pred_check_branch
      %314 = sbr.rel (0) target = $region205
    $region204: #{unet_no_bridge_forward.1} parent=1 // pred_region
      _
    $region205: #{unet_no_bridge_forward.1} parent=1 // pred_fallthru
      _
    // Predicated region
    $region206: #{unet_no_bridge_forward.1} parent=1 // pred_check
      _
    $region207: #{unet_no_bridge_forward.1} parent=1 // pred_check_branch
      %316 = sbr.rel (0) target = $region209
    $region208: #{unet_no_bridge_forward.1} parent=1 // pred_region
      %s318 = ssub.s32 16, 16
      %319 = vsyncadd [#allocation15], %s318
      %s321 = sshll.u32 [#allocation16], 4
      %s322 = int_to_ptr.vmem [resolvable:$true] %s321
      %324 = dma.hbm_to_vmem [thread:$0]  %s103, 16, %s322, [#allocation15]
    $region209: #{unet_no_bridge_forward.1} parent=1 // pred_fallthru
      _
    // Predicated region
    $region210: #{unet_no_bridge_forward.1} parent=1 // pred_check
      _
    $region211: #{unet_no_bridge_forward.1} parent=1 // pred_check_branch
      %326 = sbr.rel (0) target = $region213
    $region212: #{unet_no_bridge_forward.1} parent=1 // pred_region
      _
    $region213: #{unet_no_bridge_forward.1} parent=1 // pred_fallthru
      _
    // Predicated region
    $region214: #{unet_no_bridge_forward.1} parent=1 // pred_check
      _
    $region215: #{unet_no_bridge_forward.1} parent=1 // pred_check_branch
      %328 = sbr.rel (0) target = $region217
    $region216: #{unet_no_bridge_forward.1} parent=1 // pred_region
      %s330 = ssub.s32 16, 16
      %331 = vsyncadd [#allocation18], %s330
      %s333 = sshll.u32 [#allocation17], 4
      %s334 = int_to_ptr.vmem [resolvable:$true] %s333
      %336 = dma.hbm_to_vmem [thread:$0]  %s107, 16, %s334, [#allocation18]
    $region217: #{unet_no_bridge_forward.1} parent=1 // pred_fallthru
      _
    // Predicated region
    $region218: #{unet_no_bridge_forward.1} parent=1 // pred_check
      _
    $region219: #{unet_no_bridge_forward.1} parent=1 // pred_check_branch
      %338 = sbr.rel (0) target = $region221
    $region220: #{unet_no_bridge_forward.1} parent=1 // pred_region
      _
    $region221: #{unet_no_bridge_forward.1} parent=1 // pred_fallthru
      _
    // Predicated region
    $region222: #{unet_no_bridge_forward.1} parent=1 // pred_check
      _
    $region223: #{unet_no_bridge_forward.1} parent=1 // pred_check_branch
      %340 = sbr.rel (0) target = $region225
    $region224: #{unet_no_bridge_forward.1} parent=1 // pred_region
      %s342 = ssub.s32 16, 16
      %343 = vsyncadd [#allocation18], %s342
      %s345 = sshll.u32 [#allocation19], 4
      %s346 = int_to_ptr.vmem [resolvable:$true] %s345
      %348 = dma.hbm_to_vmem [thread:$0]  %s111, 16, %s346, [#allocation18]
    $region225: #{unet_no_bridge_forward.1} parent=1 // pred_fallthru
      _
    // Predicated region
    $region226: #{unet_no_bridge_forward.1} parent=1 // pred_check
      _
    $region227: #{unet_no_bridge_forward.1} parent=1 // pred_check_branch
      %350 = sbr.rel (0) target = $region229
    $region228: #{unet_no_bridge_forward.1} parent=1 // pred_region
      _
    $region229: #{unet_no_bridge_forward.1} parent=1 // pred_fallthru
      _
    // Predicated region
    $region230: #{unet_no_bridge_forward.1} parent=1 // pred_check
      _
    $region231: #{unet_no_bridge_forward.1} parent=1 // pred_check_branch
      %352 = sbr.rel (0) target = $region233
    $region232: #{unet_no_bridge_forward.1} parent=1 // pred_region
      _
    $region233: #{unet_no_bridge_forward.1} parent=1 // pred_fallthru
      _
    // Predicated region
    $region234: #{unet_no_bridge_forward.1} parent=1 // pred_check
      _
    $region235: #{unet_no_bridge_forward.1} parent=1 // pred_check_branch
      %354 = sbr.rel (0) target = $region237
    $region236: #{unet_no_bridge_forward.1} parent=1 // pred_region
      _
    $region237: #{unet_no_bridge_forward.1} parent=1 // pred_fallthru
      _
    // Predicated region
    $region238: #{unet_no_bridge_forward.1} parent=1 // pred_check
      _
    $region239: #{unet_no_bridge_forward.1} parent=1 // pred_check_branch
      %356 = sbr.rel (0) target = $region241
    $region240: #{unet_no_bridge_forward.1} parent=1 // pred_region
      %s358 = ssub.s32 16, 16
      %359 = vsyncadd [#allocation21], %s358
      %s361 = sshll.u32 [#allocation20], 4
      %s362 = int_to_ptr.vmem [resolvable:$true] %s361
      %364 = dma.hbm_to_vmem [thread:$0]  %s119, 16, %s362, [#allocation21]
    $region241: #{unet_no_bridge_forward.1} parent=1 // pred_fallthru
      _
    // Predicated region
    $region242: #{unet_no_bridge_forward.1} parent=1 // pred_check
      _
    $region243: #{unet_no_bridge_forward.1} parent=1 // pred_check_branch
      %366 = sbr.rel (0) target = $region245
    $region244: #{unet_no_bridge_forward.1} parent=1 // pred_region
      _
    $region245: #{unet_no_bridge_forward.1} parent=1 // pred_fallthru
      _
    // Predicated region
    $region246: #{unet_no_bridge_forward.1} parent=1 // pred_check
      _
    $region247: #{unet_no_bridge_forward.1} parent=1 // pred_check_branch
      %368 = sbr.rel (0) target = $region249
    $region248: #{unet_no_bridge_forward.1} parent=1 // pred_region
      %s370 = ssub.s32 16, 16
      %371 = vsyncadd [#allocation21], %s370
      %s373 = sshll.u32 [#allocation22], 4
      %s374 = int_to_ptr.vmem [resolvable:$true] %s373
      %376 = dma.hbm_to_vmem [thread:$0]  %s123, 16, %s374, [#allocation21]
    $region249: #{unet_no_bridge_forward.1} parent=1 // pred_fallthru
      _
    // Predicated region
    $region250: #{unet_no_bridge_forward.1} parent=1 // pred_check
      _
    $region251: #{unet_no_bridge_forward.1} parent=1 // pred_check_branch
      %378 = sbr.rel (0) target = $region253
    $region252: #{unet_no_bridge_forward.1} parent=1 // pred_region
      _
    $region253: #{unet_no_bridge_forward.1} parent=1 // pred_fallthru
      _
    // Predicated region
    $region254: #{unet_no_bridge_forward.1} parent=1 // pred_check
      _
    $region255: #{unet_no_bridge_forward.1} parent=1 // pred_check_branch
      %380 = sbr.rel (0) target = $region257
    $region256: #{unet_no_bridge_forward.1} parent=1 // pred_region
      %s382 = ssub.s32 16, 16
      %383 = vsyncadd [#allocation24], %s382
      %s385 = sshll.u32 [#allocation23], 4
      %s386 = int_to_ptr.vmem [resolvable:$true] %s385
      %388 = dma.hbm_to_vmem [thread:$0]  %s127, 16, %s386, [#allocation24]
    $region257: #{unet_no_bridge_forward.1} parent=1 // pred_fallthru
      _
    // Predicated region
    $region258: #{unet_no_bridge_forward.1} parent=1 // pred_check
      _
    $region259: #{unet_no_bridge_forward.1} parent=1 // pred_check_branch
      %390 = sbr.rel (0) target = $region261
    $region260: #{unet_no_bridge_forward.1} parent=1 // pred_region
      _
    $region261: #{unet_no_bridge_forward.1} parent=1 // pred_fallthru
      _
    // Predicated region
    $region262: #{unet_no_bridge_forward.1} parent=1 // pred_check
      _
    $region263: #{unet_no_bridge_forward.1} parent=1 // pred_check_branch
      %392 = sbr.rel (0) target = $region265
    $region264: #{unet_no_bridge_forward.1} parent=1 // pred_region
      _
    $region265: #{unet_no_bridge_forward.1} parent=1 // pred_fallthru
      _
    // Predicated region
    $region266: #{unet_no_bridge_forward.1} parent=1 // pred_check
      _
    $region267: #{unet_no_bridge_forward.1} parent=1 // pred_check_branch
      %394 = sbr.rel (0) target = $region269
    $region268: #{unet_no_bridge_forward.1} parent=1 // pred_region
      _
    $region269: #{unet_no_bridge_forward.1} parent=1 // pred_fallthru
      _
    // Predicated region
    $region270: #{unet_no_bridge_forward.1} parent=1 // pred_check
      _
    $region271: #{unet_no_bridge_forward.1} parent=1 // pred_check_branch
      %396 = sbr.rel (0) target = $region273
    $region272: #{unet_no_bridge_forward.1} parent=1 // pred_region
      %397 = dma.done [#allocation3], 16
    $region273: #{unet_no_bridge_forward.1} parent=1 // pred_fallthru
      _
    // Predicated region
    $region274: #{unet_no_bridge_forward.1} parent=1 // pred_check
      _
    $region275: #{unet_no_bridge_forward.1} parent=1 // pred_check_branch
      %399 = sbr.rel (0) target = $region277
    $region276: #{unet_no_bridge_forward.1} parent=1 // pred_region
      %400 = dma.done [#allocation6], 16
    $region277: #{unet_no_bridge_forward.1} parent=1 // pred_fallthru
      _
    // Predicated region
    $region278: #{unet_no_bridge_forward.1} parent=1 // pred_check
      _
    $region279: #{unet_no_bridge_forward.1} parent=1 // pred_check_branch
      %402 = sbr.rel (0) target = $region281
    $region280: #{unet_no_bridge_forward.1} parent=1 // pred_region
      %403 = dma.done [#allocation6], 16
    $region281: #{unet_no_bridge_forward.1} parent=1 // pred_fallthru
      _
    // Predicated region
    $region282: #{unet_no_bridge_forward.1} parent=1 // pred_check
      _
    $region283: #{unet_no_bridge_forward.1} parent=1 // pred_check_branch
      %405 = sbr.rel (0) target = $region285
    $region284: #{unet_no_bridge_forward.1} parent=1 // pred_region
      %406 = dma.done [#allocation9], 16
    $region285: #{unet_no_bridge_forward.1} parent=1 // pred_fallthru
      _
    // Predicated region
    $region286: #{unet_no_bridge_forward.1} parent=1 // pred_check
      _
    $region287: #{unet_no_bridge_forward.1} parent=1 // pred_check_branch
      %408 = sbr.rel (0) target = $region289
    $region288: #{unet_no_bridge_forward.1} parent=1 // pred_region
      %409 = dma.done [#allocation9], 16
    $region289: #{unet_no_bridge_forward.1} parent=1 // pred_fallthru
      _
    // Predicated region
    $region290: #{unet_no_bridge_forward.1} parent=1 // pred_check
      _
    $region291: #{unet_no_bridge_forward.1} parent=1 // pred_check_branch
      %411 = sbr.rel (0) target = $region293
    $region292: #{unet_no_bridge_forward.1} parent=1 // pred_region
      %412 = dma.done [#allocation12], 16
    $region293: #{unet_no_bridge_forward.1} parent=1 // pred_fallthru
      _
    // Predicated region
    $region294: #{unet_no_bridge_forward.1} parent=1 // pred_check
      _
    $region295: #{unet_no_bridge_forward.1} parent=1 // pred_check_branch
      %414 = sbr.rel (0) target = $region297
    $region296: #{unet_no_bridge_forward.1} parent=1 // pred_region
      %415 = dma.done [#allocation12], 16
    $region297: #{unet_no_bridge_forward.1} parent=1 // pred_fallthru
      _
    // Predicated region
    $region298: #{unet_no_bridge_forward.1} parent=1 // pred_check
      _
    $region299: #{unet_no_bridge_forward.1} parent=1 // pred_check_branch
      %417 = sbr.rel (0) target = $region301
    $region300: #{unet_no_bridge_forward.1} parent=1 // pred_region
      %418 = dma.done [#allocation15], 16
    $region301: #{unet_no_bridge_forward.1} parent=1 // pred_fallthru
      _
    // Predicated region
    $region302: #{unet_no_bridge_forward.1} parent=1 // pred_check
      _
    $region303: #{unet_no_bridge_forward.1} parent=1 // pred_check_branch
      %420 = sbr.rel (0) target = $region305
    $region304: #{unet_no_bridge_forward.1} parent=1 // pred_region
      %421 = dma.done [#allocation15], 16
    $region305: #{unet_no_bridge_forward.1} parent=1 // pred_fallthru
      _
    // Predicated region
    $region306: #{unet_no_bridge_forward.1} parent=1 // pred_check
      _
    $region307: #{unet_no_bridge_forward.1} parent=1 // pred_check_branch
      %423 = sbr.rel (0) target = $region309
    $region308: #{unet_no_bridge_forward.1} parent=1 // pred_region
      %424 = dma.done [#allocation18], 16
    $region309: #{unet_no_bridge_forward.1} parent=1 // pred_fallthru
      _
    // Predicated region
    $region310: #{unet_no_bridge_forward.1} parent=1 // pred_check
      _
    $region311: #{unet_no_bridge_forward.1} parent=1 // pred_check_branch
      %426 = sbr.rel (0) target = $region313
    $region312: #{unet_no_bridge_forward.1} parent=1 // pred_region
      %427 = dma.done [#allocation18], 16
    $region313: #{unet_no_bridge_forward.1} parent=1 // pred_fallthru
      _
    // Predicated region
    $region314: #{unet_no_bridge_forward.1} parent=1 // pred_check
      _
    $region315: #{unet_no_bridge_forward.1} parent=1 // pred_check_branch
      %429 = sbr.rel (0) target = $region317
    $region316: #{unet_no_bridge_forward.1} parent=1 // pred_region
      %430 = dma.done [#allocation21], 16
    $region317: #{unet_no_bridge_forward.1} parent=1 // pred_fallthru
      _
    // Predicated region
    $region318: #{unet_no_bridge_forward.1} parent=1 // pred_check
      _
    $region319: #{unet_no_bridge_forward.1} parent=1 // pred_check_branch
      %432 = sbr.rel (0) target = $region321
    $region320: #{unet_no_bridge_forward.1} parent=1 // pred_region
      %433 = dma.done [#allocation21], 16
    $region321: #{unet_no_bridge_forward.1} parent=1 // pred_fallthru
      _
    // Predicated region
    $region322: #{unet_no_bridge_forward.1} parent=1 // pred_check
      _
    $region323: #{unet_no_bridge_forward.1} parent=1 // pred_check_branch
      %435 = sbr.rel (0) target = $region325
    $region324: #{unet_no_bridge_forward.1} parent=1 // pred_region
      %436 = dma.done [#allocation24], 16
    $region325: #{unet_no_bridge_forward.1} parent=1 // pred_fallthru
      _
    %v437 = vld [vmem:[%s1] sm:$0xff]
    %v438 = vld [vmem:[%s1 + $0x8] sm:$0xff]
    %v439 = vld [vmem:[%s1 + $0x10] sm:$0xff]
    %v440 = vld [vmem:[%s1 + $0x18] sm:$0xff]
    %v441 = vld [vmem:[%s79] sm:$0xff]
    %v442 = vld [vmem:[%s79 + $0x8] sm:$0xff]
    %v443 = vld [vmem:[%s79 + $0x10] sm:$0xff]
    %v444 = vld [vmem:[%s79 + $0x18] sm:$0xff]
    %vm445 = vcmask 261120
    %v447 = vsel %vm445, %v441, 0
    %v450 = vsel %vm445, %v442, 0
    %v453 = vsel %vm445, %v443, 0
    %v456 = vsel %vm445, %v444, 0
    %458 = vmatprep.subr.mxu0 0.0
    %459 = vmatpush1.msra.mxu0 0.0
    %460 = vmatprep.subr.mxu0 0.0
    %461 = vmatpush1.msra.mxu0 0.0
    %462 = vmatprep.subr.mxu0 0.0
    %463 = vmatpush1.msra.mxu0 0.0
    %464 = vmatprep.subr.mxu0 0.0
    %465 = vmatpush1.msra.mxu0 0.0
    %466 = vmatprep.subr.mxu0 0.0
    %467 = vmatpush1.msra.mxu0 0.0
    %468 = vmatprep.subr.mxu0 0.0
    %469 = vmatpush1.msra.mxu0 0.0
    %470 = vmatprep.subr.mxu0 0.0
    %471 = vmatpush1.msra.mxu0 0.0
    %472 = vmatprep.subr.mxu0 0.0
    %473 = vmatpush1.msra.mxu0 0.0
    %474 = vmatprep.subr.mxu0 0.0
    %475 = vmatpush1.msra.mxu0 0.0
    %476 = vmatprep.subr.mxu0 0.0
    %477 = vmatpush1.msra.mxu0 0.0
    %478 = vmatprep.subr.mxu0 0.0
    %479 = vmatpush1.msra.mxu0 0.0
    %480 = vmatprep.subr.mxu0 0.0
    %481 = vmatpush1.msra.mxu0 0.0
    %482 = vmatprep.subr.mxu0 0.0
    %483 = vmatpush1.msra.mxu0 %v440
    %484 = vmatprep.subr.mxu0 0.0
    %485 = vmatpush1.msra.mxu0 %v439
    %486 = vmatprep.subr.mxu0 0.0
    %487 = vmatpush1.msra.mxu0 %v438
    %488 = vmatprep.subr.mxu0 0.0
    %489 = vmatpush1.msra.mxu0 %v437
    %490 = vmatprep.subr.mxu0 0.0
    %491 = vmatpush2.msra.mxu0 0.0
    %492 = vmatprep.subr.mxu0 0.0
    %493 = vmatpush2.msra.mxu0 0.0
    %494 = vmatprep.subr.mxu0 0.0
    %495 = vmatpush2.msra.mxu0 0.0
    %496 = vmatprep.subr.mxu0 0.0
    %497 = vmatpush2.msra.mxu0 0.0
    %498 = vmatprep.subr.mxu0 0.0
    %499 = vmatpush2.msra.mxu0 0.0
    %500 = vmatprep.subr.mxu0 0.0
    %501 = vmatpush2.msra.mxu0 0.0
    %502 = vmatprep.subr.mxu0 0.0
    %503 = vmatpush2.msra.mxu0 0.0
    %504 = vmatprep.subr.mxu0 0.0
    %505 = vmatpush2.msra.mxu0 0.0
    %506 = vmatprep.subr.mxu0 0.0
    %507 = vmatpush2.msra.mxu0 0.0
    %508 = vmatprep.subr.mxu0 0.0
    %509 = vmatpush2.msra.mxu0 0.0
    %510 = vmatprep.subr.mxu0 0.0
    %511 = vmatpush2.msra.mxu0 0.0
    %512 = vmatprep.subr.mxu0 0.0
    %513 = vmatpush2.msra.mxu0 0.0
    %514 = vmatprep.subr.mxu0 0.0
    %515 = vmatpush2.msra.mxu0 0.0
    %516 = vmatprep.subr.mxu0 0.0
    %517 = vmatpush2.msra.mxu0 0.0
    %518 = vmatprep.subr.mxu0 0.0
    %519 = vmatpush2.msra.mxu0 0.0
    %520 = vmatprep.subr.mxu0 0.0
    %521 = vmatpush2.msra.mxu0 0.0
    %522 = vmatprep.mubr.f32.mxu0 0.0
    %523 = vmatmul.mubr.f32.gmra.mxu0 %v447
    %v524 = vpop.f32.mrf.mxu0
    %v525 = vadd.f32 0.0, %v524
    %v526 = vpop.f32.mrf.mxu0
    %527 = vmatprep.mubr.f32.mxu0 0.0
    %528 = vmatmul.mubr.f32.gmra.mxu0 %v450
    %v529 = vpop.f32.mrf.mxu0
    %v530 = vadd.f32 0.0, %v529
    %v531 = vpop.f32.mrf.mxu0
    %532 = vmatprep.mubr.f32.mxu0 0.0
    %533 = vmatmul.mubr.f32.gmra.mxu0 %v453
    %v534 = vpop.f32.mrf.mxu0
    %v535 = vadd.f32 0.0, %v534
    %v536 = vpop.f32.mrf.mxu0
    %537 = vmatprep.mubr.f32.mxu0 0.0
    %538 = vmatmul.mubr.f32.gmra.mxu0 %v456
    %v539 = vpop.f32.mrf.mxu0
    %v540 = vadd.f32 0.0, %v539
    %v541 = vpop.f32.mrf.mxu0
    %542 = vdwg.mxu0
    %v543 = vld [vmem:[%s81] sm:$0xff]
    %v544 = vld [vmem:[%s81 + $0x8] sm:$0xff]
    %v545 = vld [vmem:[%s81 + $0x10] sm:$0xff]
    %v546 = vld [vmem:[%s81 + $0x18] sm:$0xff]
    %v548 = vsel %vm445, %v543, 0
    %v551 = vsel %vm445, %v544, 0
    %v554 = vsel %vm445, %v545, 0
    %v557 = vsel %vm445, %v546, 0
    %559 = vmatprep.subr.mxu0 0.0
    %560 = vmatpush1.msra.mxu0 0.0
    %561 = vmatprep.subr.mxu0 0.0
    %562 = vmatpush1.msra.mxu0 0.0
    %563 = vmatprep.subr.mxu0 0.0
    %564 = vmatpush1.msra.mxu0 0.0
    %565 = vmatprep.subr.mxu0 0.0
    %566 = vmatpush1.msra.mxu0 0.0
    %567 = vmatprep.subr.mxu0 0.0
    %568 = vmatpush1.msra.mxu0 0.0
    %569 = vmatprep.subr.mxu0 0.0
    %570 = vmatpush1.msra.mxu0 0.0
    %571 = vmatprep.subr.mxu0 0.0
    %572 = vmatpush1.msra.mxu0 0.0
    %573 = vmatprep.subr.mxu0 0.0
    %574 = vmatpush1.msra.mxu0 0.0
    %575 = vmatprep.subr.mxu0 0.0
    %576 = vmatpush1.msra.mxu0 0.0
    %577 = vmatprep.subr.mxu0 0.0
    %578 = vmatpush1.msra.mxu0 0.0
    %579 = vmatprep.subr.mxu0 0.0
    %580 = vmatpush1.msra.mxu0 0.0
    %581 = vmatprep.subr.mxu0 0.0
    %582 = vmatpush1.msra.mxu0 0.0
    %583 = vmatprep.subr.mxu0 0.0
    %584 = vmatpush1.msra.mxu0 %v440
    %585 = vmatprep.subr.mxu0 0.0
    %586 = vmatpush1.msra.mxu0 %v439
    %587 = vmatprep.subr.mxu0 0.0
    %588 = vmatpush1.msra.mxu0 %v438
    %589 = vmatprep.subr.mxu0 0.0
    %590 = vmatpush1.msra.mxu0 %v437
    %591 = vmatprep.subr.mxu0 0.0
    %592 = vmatpush2.msra.mxu0 0.0
    %593 = vmatprep.subr.mxu0 0.0
    %594 = vmatpush2.msra.mxu0 0.0
    %595 = vmatprep.subr.mxu0 0.0
    %596 = vmatpush2.msra.mxu0 0.0
    %597 = vmatprep.subr.mxu0 0.0
    %598 = vmatpush2.msra.mxu0 0.0
    %599 = vmatprep.subr.mxu0 0.0
    %600 = vmatpush2.msra.mxu0 0.0
    %601 = vmatprep.subr.mxu0 0.0
    %602 = vmatpush2.msra.mxu0 0.0
    %603 = vmatprep.subr.mxu0 0.0
    %604 = vmatpush2.msra.mxu0 0.0
    %605 = vmatprep.subr.mxu0 0.0
    %606 = vmatpush2.msra.mxu0 0.0
    %607 = vmatprep.subr.mxu0 0.0
    %608 = vmatpush2.msra.mxu0 0.0
    %609 = vmatprep.subr.mxu0 0.0
    %610 = vmatpush2.msra.mxu0 0.0
    %611 = vmatprep.subr.mxu0 0.0
    %612 = vmatpush2.msra.mxu0 0.0
    %613 = vmatprep.subr.mxu0 0.0
    %614 = vmatpush2.msra.mxu0 0.0
    %615 = vmatprep.subr.mxu0 0.0
    %616 = vmatpush2.msra.mxu0 0.0
    %617 = vmatprep.subr.mxu0 0.0
    %618 = vmatpush2.msra.mxu0 0.0
    %619 = vmatprep.subr.mxu0 0.0
    %620 = vmatpush2.msra.mxu0 0.0
    %621 = vmatprep.subr.mxu0 0.0
    %622 = vmatpush2.msra.mxu0 0.0
    %623 = vmatprep.mubr.f32.mxu0 0.0
    %624 = vmatmul.mubr.f32.gmra.mxu0 %v548
    %v625 = vpop.f32.mrf.mxu0
    %v626 = vadd.f32 0.0, %v625
    %v627 = vpop.f32.mrf.mxu0
    %628 = vmatprep.mubr.f32.mxu0 0.0
    %629 = vmatmul.mubr.f32.gmra.mxu0 %v551
    %v630 = vpop.f32.mrf.mxu0
    %v631 = vadd.f32 0.0, %v630
    %v632 = vpop.f32.mrf.mxu0
    %633 = vmatprep.mubr.f32.mxu0 0.0
    %634 = vmatmul.mubr.f32.gmra.mxu0 %v554
    %v635 = vpop.f32.mrf.mxu0
    %v636 = vadd.f32 0.0, %v635
    %v637 = vpop.f32.mrf.mxu0
    %638 = vmatprep.mubr.f32.mxu0 0.0
    %639 = vmatmul.mubr.f32.gmra.mxu0 %v557
    %v640 = vpop.f32.mrf.mxu0
    %v641 = vadd.f32 0.0, %v640
    %v642 = vpop.f32.mrf.mxu0
    %643 = vdwg.mxu0
    %v644 = vld [vmem:[%s61] sm:$0xff]
    %v645 = vld [vmem:[%s61 + $0x8] sm:$0xff]
    %v646 = vld [vmem:[%s61 + $0x10] sm:$0xff]
    %v647 = vld [vmem:[%s61 + $0x18] sm:$0xff]
    %v648 = vld [vmem:[%s61 + $0x20] sm:$0xff]
    %v649 = vld [vmem:[%s61 + $0x28] sm:$0xff]
    %v650 = vld [vmem:[%s61 + $0x30] sm:$0xff]
    %v651 = vld [vmem:[%s61 + $0x38] sm:$0xff]
    %v652 = vld [vmem:[%s61 + $0x40] sm:$0xff]
    %v653 = vld [vmem:[%s61 + $0x48] sm:$0xff]
    %v654 = vld [vmem:[%s61 + $0x50] sm:$0xff]
    %v655 = vld [vmem:[%s61 + $0x58] sm:$0xff]
    %vm656 = vcmask 392192
    %v658 = vsel %vm656, %v437, 0
    %v661 = vsel %vm656, %v438, 0
    %v664 = vsel %vm656, %v439, 0
    %v667 = vsel %vm656, %v440, 0
    %669 = vmatprep.subr.mxu0 0.0
    %670 = vmatpush1.msra.mxu0 0.0
    %671 = vmatprep.subr.mxu0 0.0
    %672 = vmatpush1.msra.mxu0 0.0
    %673 = vmatprep.subr.mxu0 0.0
    %674 = vmatpush1.msra.mxu0 0.0
    %675 = vmatprep.subr.mxu0 0.0
    %676 = vmatpush1.msra.mxu0 0.0
    %677 = vmatprep.subr.mxu0 0.0
    %678 = vmatpush1.msra.mxu0 0.0
    %679 = vmatprep.subr.mxu0 0.0
    %680 = vmatpush1.msra.mxu0 0.0
    %681 = vmatprep.subr.mxu0 0.0
    %682 = vmatpush1.msra.mxu0 0.0
    %683 = vmatprep.subr.mxu0 0.0
    %684 = vmatpush1.msra.mxu0 0.0
    %685 = vmatprep.subr.mxu0 0.0
    %686 = vmatpush1.msra.mxu0 0.0
    %687 = vmatprep.subr.mxu0 0.0
    %688 = vmatpush1.msra.mxu0 0.0
    %689 = vmatprep.subr.mxu0 0.0
    %690 = vmatpush1.msra.mxu0 %v655
    %691 = vmatprep.subr.mxu0 0.0
    %692 = vmatpush1.msra.mxu0 %v654
    %693 = vmatprep.subr.mxu0 0.0
    %694 = vmatpush1.msra.mxu0 %v653
    %695 = vmatprep.subr.mxu0 0.0
    %696 = vmatpush1.msra.mxu0 %v652
    %697 = vmatprep.subr.mxu0 0.0
    %698 = vmatpush1.msra.mxu0 %v651
    %699 = vmatprep.subr.mxu0 0.0
    %700 = vmatpush1.msra.mxu0 %v650
    %701 = vmatprep.subr.mxu0 0.0
    %702 = vmatpush2.msra.mxu0 0.0
    %703 = vmatprep.subr.mxu0 0.0
    %704 = vmatpush2.msra.mxu0 0.0
    %705 = vmatprep.subr.mxu0 0.0
    %706 = vmatpush2.msra.mxu0 0.0
    %707 = vmatprep.subr.mxu0 0.0
    %708 = vmatpush2.msra.mxu0 0.0
    %709 = vmatprep.subr.mxu0 0.0
    %710 = vmatpush2.msra.mxu0 0.0
    %711 = vmatprep.subr.mxu0 0.0
    %712 = vmatpush2.msra.mxu0 0.0
    %713 = vmatprep.subr.mxu0 0.0
    %714 = vmatpush2.msra.mxu0 0.0
    %715 = vmatprep.subr.mxu0 0.0
    %716 = vmatpush2.msra.mxu0 0.0
    %717 = vmatprep.subr.mxu0 0.0
    %718 = vmatpush2.msra.mxu0 0.0
    %719 = vmatprep.subr.mxu0 0.0
    %720 = vmatpush2.msra.mxu0 0.0
    %721 = vmatprep.subr.mxu0 0.0
    %722 = vmatpush2.msra.mxu0 0.0
    %723 = vmatprep.subr.mxu0 0.0
    %724 = vmatpush2.msra.mxu0 0.0
    %725 = vmatprep.subr.mxu0 0.0
    %726 = vmatpush2.msra.mxu0 0.0
    %727 = vmatprep.subr.mxu0 0.0
    %728 = vmatpush2.msra.mxu0 0.0
    %729 = vmatprep.subr.mxu0 0.0
    %730 = vmatpush2.msra.mxu0 0.0
    %731 = vmatprep.subr.mxu0 0.0
    %732 = vmatpush2.msra.mxu0 0.0
    %733 = vmatprep.mubr.f32.mxu0 0.0
    %734 = vmatmul.mubr.f32.gmra.mxu0 %v658
    %v735 = vpop.f32.mrf.mxu0
    %v736 = vadd.f32 0.0, %v735
    %v737 = vpop.f32.mrf.mxu0
    %738 = vmatprep.mubr.f32.mxu0 0.0
    %739 = vmatmul.mubr.f32.gmra.mxu0 %v661
    %v740 = vpop.f32.mrf.mxu0
    %v741 = vadd.f32 0.0, %v740
    %v742 = vpop.f32.mrf.mxu0
    %743 = vmatprep.mubr.f32.mxu0 0.0
    %744 = vmatmul.mubr.f32.gmra.mxu0 %v664
    %v745 = vpop.f32.mrf.mxu0
    %v746 = vadd.f32 0.0, %v745
    %v747 = vpop.f32.mrf.mxu0
    %748 = vmatprep.mubr.f32.mxu0 0.0
    %749 = vmatmul.mubr.f32.gmra.mxu0 %v667
    %v750 = vpop.f32.mrf.mxu0
    %v751 = vadd.f32 0.0, %v750
    %v752 = vpop.f32.mrf.mxu0
    %753 = vdwg.mxu0
    %v755 = vsel %vm656, %v525, 0
    %v758 = vsel %vm656, %v530, 0
    %v761 = vsel %vm656, %v535, 0
    %v764 = vsel %vm656, %v540, 0
    %766 = vmatprep.subr.mxu0 0.0
    %767 = vmatpush1.msra.mxu0 0.0
    %768 = vmatprep.subr.mxu0 0.0
    %769 = vmatpush1.msra.mxu0 0.0
    %770 = vmatprep.subr.mxu0 0.0
    %771 = vmatpush1.msra.mxu0 0.0
    %772 = vmatprep.subr.mxu0 0.0
    %773 = vmatpush1.msra.mxu0 0.0
    %774 = vmatprep.subr.mxu0 0.0
    %775 = vmatpush1.msra.mxu0 0.0
    %776 = vmatprep.subr.mxu0 0.0
    %777 = vmatpush1.msra.mxu0 0.0
    %778 = vmatprep.subr.mxu0 0.0
    %779 = vmatpush1.msra.mxu0 0.0
    %780 = vmatprep.subr.mxu0 0.0
    %781 = vmatpush1.msra.mxu0 0.0
    %782 = vmatprep.subr.mxu0 0.0
    %783 = vmatpush1.msra.mxu0 0.0
    %784 = vmatprep.subr.mxu0 0.0
    %785 = vmatpush1.msra.mxu0 0.0
    %786 = vmatprep.subr.mxu0 0.0
    %787 = vmatpush1.msra.mxu0 %v649
    %788 = vmatprep.subr.mxu0 0.0
    %789 = vmatpush1.msra.mxu0 %v648
    %790 = vmatprep.subr.mxu0 0.0
    %791 = vmatpush1.msra.mxu0 %v647
    %792 = vmatprep.subr.mxu0 0.0
    %793 = vmatpush1.msra.mxu0 %v646
    %794 = vmatprep.subr.mxu0 0.0
    %795 = vmatpush1.msra.mxu0 %v645
    %796 = vmatprep.subr.mxu0 0.0
    %797 = vmatpush1.msra.mxu0 %v644
    %798 = vmatprep.subr.mxu0 0.0
    %799 = vmatpush2.msra.mxu0 0.0
    %800 = vmatprep.subr.mxu0 0.0
    %801 = vmatpush2.msra.mxu0 0.0
    %802 = vmatprep.subr.mxu0 0.0
    %803 = vmatpush2.msra.mxu0 0.0
    %804 = vmatprep.subr.mxu0 0.0
    %805 = vmatpush2.msra.mxu0 0.0
    %806 = vmatprep.subr.mxu0 0.0
    %807 = vmatpush2.msra.mxu0 0.0
    %808 = vmatprep.subr.mxu0 0.0
    %809 = vmatpush2.msra.mxu0 0.0
    %810 = vmatprep.subr.mxu0 0.0
    %811 = vmatpush2.msra.mxu0 0.0
    %812 = vmatprep.subr.mxu0 0.0
    %813 = vmatpush2.msra.mxu0 0.0
    %814 = vmatprep.subr.mxu0 0.0
    %815 = vmatpush2.msra.mxu0 0.0
    %816 = vmatprep.subr.mxu0 0.0
    %817 = vmatpush2.msra.mxu0 0.0
    %818 = vmatprep.subr.mxu0 0.0
    %819 = vmatpush2.msra.mxu0 0.0
    %820 = vmatprep.subr.mxu0 0.0
    %821 = vmatpush2.msra.mxu0 0.0
    %822 = vmatprep.subr.mxu0 0.0
    %823 = vmatpush2.msra.mxu0 0.0
    %824 = vmatprep.subr.mxu0 0.0
    %825 = vmatpush2.msra.mxu0 0.0
    %826 = vmatprep.subr.mxu0 0.0
    %827 = vmatpush2.msra.mxu0 0.0
    %828 = vmatprep.subr.mxu0 0.0
    %829 = vmatpush2.msra.mxu0 0.0
    %830 = vmatprep.mubr.f32.mxu0 0.0
    %831 = vmatmul.mubr.f32.gmra.mxu0 %v755
    %v832 = vpop.f32.mrf.mxu0
    %v833 = vadd.f32 %v736, %v832
    %v834 = vpop.f32.mrf.mxu0
    %835 = vmatprep.mubr.f32.mxu0 0.0
    %836 = vmatmul.mubr.f32.gmra.mxu0 %v758
    %v837 = vpop.f32.mrf.mxu0
    %v838 = vadd.f32 %v741, %v837
    %v839 = vpop.f32.mrf.mxu0
    %840 = vmatprep.mubr.f32.mxu0 0.0
    %841 = vmatmul.mubr.f32.gmra.mxu0 %v761
    %v842 = vpop.f32.mrf.mxu0
    %v843 = vadd.f32 %v746, %v842
    %v844 = vpop.f32.mrf.mxu0
    %845 = vmatprep.mubr.f32.mxu0 0.0
    %846 = vmatmul.mubr.f32.gmra.mxu0 %v764
    %v847 = vpop.f32.mrf.mxu0
    %v848 = vadd.f32 %v751, %v847
    %v849 = vpop.f32.mrf.mxu0
    %850 = vdwg.mxu0
    %v851 = vld [vmem:[%s61 + $0x60] sm:$0xff]
    %v852 = vld [vmem:[%s61 + $0x68] sm:$0xff]
    %v853 = vld [vmem:[%s61 + $0x70] sm:$0xff]
    %v854 = vld [vmem:[%s61 + $0x78] sm:$0xff]
    %v855 = vld [vmem:[%s61 + $0x80] sm:$0xff]
    %v856 = vld [vmem:[%s61 + $0x88] sm:$0xff]
    %v858 = vsel %vm656, %v626, 0
    %v861 = vsel %vm656, %v631, 0
    %v864 = vsel %vm656, %v636, 0
    %v867 = vsel %vm656, %v641, 0
    %869 = vmatprep.subr.mxu0 0.0
    %870 = vmatpush1.msra.mxu0 0.0
    %871 = vmatprep.subr.mxu0 0.0
    %872 = vmatpush1.msra.mxu0 0.0
    %873 = vmatprep.subr.mxu0 0.0
    %874 = vmatpush1.msra.mxu0 0.0
    %875 = vmatprep.subr.mxu0 0.0
    %876 = vmatpush1.msra.mxu0 0.0
    %877 = vmatprep.subr.mxu0 0.0
    %878 = vmatpush1.msra.mxu0 0.0
    %879 = vmatprep.subr.mxu0 0.0
    %880 = vmatpush1.msra.mxu0 0.0
    %881 = vmatprep.subr.mxu0 0.0
    %882 = vmatpush1.msra.mxu0 0.0
    %883 = vmatprep.subr.mxu0 0.0
    %884 = vmatpush1.msra.mxu0 0.0
    %885 = vmatprep.subr.mxu0 0.0
    %886 = vmatpush1.msra.mxu0 0.0
    %887 = vmatprep.subr.mxu0 0.0
    %888 = vmatpush1.msra.mxu0 0.0
    %889 = vmatprep.subr.mxu0 0.0
    %890 = vmatpush1.msra.mxu0 %v856
    %891 = vmatprep.subr.mxu0 0.0
    %892 = vmatpush1.msra.mxu0 %v855
    %893 = vmatprep.subr.mxu0 0.0
    %894 = vmatpush1.msra.mxu0 %v854
    %895 = vmatprep.subr.mxu0 0.0
    %896 = vmatpush1.msra.mxu0 %v853
    %897 = vmatprep.subr.mxu0 0.0
    %898 = vmatpush1.msra.mxu0 %v852
    %899 = vmatprep.subr.mxu0 0.0
    %900 = vmatpush1.msra.mxu0 %v851
    %901 = vmatprep.subr.mxu0 0.0
    %902 = vmatpush2.msra.mxu0 0.0
    %903 = vmatprep.subr.mxu0 0.0
    %904 = vmatpush2.msra.mxu0 0.0
    %905 = vmatprep.subr.mxu0 0.0
    %906 = vmatpush2.msra.mxu0 0.0
    %907 = vmatprep.subr.mxu0 0.0
    %908 = vmatpush2.msra.mxu0 0.0
    %909 = vmatprep.subr.mxu0 0.0
    %910 = vmatpush2.msra.mxu0 0.0
    %911 = vmatprep.subr.mxu0 0.0
    %912 = vmatpush2.msra.mxu0 0.0
    %913 = vmatprep.subr.mxu0 0.0
    %914 = vmatpush2.msra.mxu0 0.0
    %915 = vmatprep.subr.mxu0 0.0
    %916 = vmatpush2.msra.mxu0 0.0
    %917 = vmatprep.subr.mxu0 0.0
    %918 = vmatpush2.msra.mxu0 0.0
    %919 = vmatprep.subr.mxu0 0.0
    %920 = vmatpush2.msra.mxu0 0.0
    %921 = vmatprep.subr.mxu0 0.0
    %922 = vmatpush2.msra.mxu0 0.0
    %923 = vmatprep.subr.mxu0 0.0
    %924 = vmatpush2.msra.mxu0 0.0
    %925 = vmatprep.subr.mxu0 0.0
    %926 = vmatpush2.msra.mxu0 0.0
    %927 = vmatprep.subr.mxu0 0.0
    %928 = vmatpush2.msra.mxu0 0.0
    %929 = vmatprep.subr.mxu0 0.0
    %930 = vmatpush2.msra.mxu0 0.0
    %931 = vmatprep.subr.mxu0 0.0
    %932 = vmatpush2.msra.mxu0 0.0
    %933 = vmatprep.mubr.f32.mxu0 0.0
    %934 = vmatmul.mubr.f32.gmra.mxu0 %v858
    %v935 = vpop.f32.mrf.mxu0
    %v936 = vadd.f32 0.0, %v935
    %v937 = vpop.f32.mrf.mxu0
    %938 = vmatprep.mubr.f32.mxu0 0.0
    %939 = vmatmul.mubr.f32.gmra.mxu0 %v861
    %v940 = vpop.f32.mrf.mxu0
    %v941 = vadd.f32 0.0, %v940
    %v942 = vpop.f32.mrf.mxu0
    %943 = vmatprep.mubr.f32.mxu0 0.0
    %944 = vmatmul.mubr.f32.gmra.mxu0 %v864
    %v945 = vpop.f32.mrf.mxu0
    %v946 = vadd.f32 0.0, %v945
    %v947 = vpop.f32.mrf.mxu0
    %948 = vmatprep.mubr.f32.mxu0 0.0
    %949 = vmatmul.mubr.f32.gmra.mxu0 %v867
    %v950 = vpop.f32.mrf.mxu0
    %v951 = vadd.f32 0.0, %v950
    %v952 = vpop.f32.mrf.mxu0
    %953 = vdwg.mxu0
    %v954 = vadd.f32 %v833, %v936
    %v955 = vadd.f32 %v838, %v941
    %v956 = vadd.f32 %v843, %v946
    %v957 = vadd.f32 %v848, %v951
    %v958 = vld [vmem:[#allocation7] sm:$0x1]
    %v960 = vlaneseq
    %v961 = vshrl.u32 %v960, 7
    %v962 = vsub.s32 0, %v961
    %v963 = vrot.slane %v958, %v962
    %v965 = vadd.f32 %v954, %v963
    %v966 = vadd.f32 %v955, %v963
    %v967 = vadd.f32 %v956, %v963
    %v968 = vadd.f32 %v957, %v963
    %969 = vmatprep.subr.mxu0 0.0
    %970 = vmatpush1.msra.mxu0 0.0
    %971 = vmatprep.subr.mxu0 0.0
    %972 = vmatpush1.msra.mxu0 0.0
    %973 = vmatprep.subr.mxu0 0.0
    %974 = vmatpush1.msra.mxu0 0.0
    %975 = vmatprep.subr.mxu0 0.0
    %976 = vmatpush1.msra.mxu0 0.0
    %977 = vmatprep.subr.mxu0 0.0
    %978 = vmatpush1.msra.mxu0 0.0
    %979 = vmatprep.subr.mxu0 0.0
    %980 = vmatpush1.msra.mxu0 0.0
    %981 = vmatprep.subr.mxu0 0.0
    %982 = vmatpush1.msra.mxu0 0.0
    %983 = vmatprep.subr.mxu0 0.0
    %984 = vmatpush1.msra.mxu0 0.0
    %985 = vmatprep.subr.mxu0 0.0
    %986 = vmatpush1.msra.mxu0 0.0
    %987 = vmatprep.subr.mxu0 0.0
    %988 = vmatpush1.msra.mxu0 0.0
    %989 = vmatprep.subr.mxu0 0.0
    %990 = vmatpush1.msra.mxu0 0.0
    %991 = vmatprep.subr.mxu0 0.0
    %992 = vmatpush1.msra.mxu0 0.0
    %993 = vmatprep.subr.mxu0 0.0
    %994 = vmatpush1.msra.mxu0 %v968
    %995 = vmatprep.subr.mxu0 0.0
    %996 = vmatpush1.msra.mxu0 %v967
    %997 = vmatprep.subr.mxu0 0.0
    %998 = vmatpush1.msra.mxu0 %v966
    %999 = vmatprep.subr.mxu0 0.0
    %1000 = vmatpush1.msra.mxu0 %v965
    %1001 = vmatprep.subr.mxu0 0.0
    %1002 = vmatpush2.msra.mxu0 0.0
    %1003 = vmatprep.subr.mxu0 0.0
    %1004 = vmatpush2.msra.mxu0 0.0
    %1005 = vmatprep.subr.mxu0 0.0
    %1006 = vmatpush2.msra.mxu0 0.0
    %1007 = vmatprep.subr.mxu0 0.0
    %1008 = vmatpush2.msra.mxu0 0.0
    %1009 = vmatprep.subr.mxu0 0.0
    %1010 = vmatpush2.msra.mxu0 0.0
    %1011 = vmatprep.subr.mxu0 0.0
    %1012 = vmatpush2.msra.mxu0 0.0
    %1013 = vmatprep.subr.mxu0 0.0
    %1014 = vmatpush2.msra.mxu0 0.0
    %1015 = vmatprep.subr.mxu0 0.0
    %1016 = vmatpush2.msra.mxu0 0.0
    %1017 = vmatprep.subr.mxu0 0.0
    %1018 = vmatpush2.msra.mxu0 0.0
    %1019 = vmatprep.subr.mxu0 0.0
    %1020 = vmatpush2.msra.mxu0 0.0
    %1021 = vmatprep.subr.mxu0 0.0
    %1022 = vmatpush2.msra.mxu0 0.0
    %1023 = vmatprep.subr.mxu0 0.0
    %1024 = vmatpush2.msra.mxu0 0.0
    %1025 = vmatprep.subr.mxu0 0.0
    %1026 = vmatpush2.msra.mxu0 0.0
    %1027 = vmatprep.subr.mxu0 0.0
    %1028 = vmatpush2.msra.mxu0 0.0
    %1029 = vmatprep.subr.mxu0 0.0
    %1030 = vmatpush2.msra.mxu0 0.0
    %1031 = vmatprep.subr.mxu0 0.0
    %1032 = vmatpush2.msra.mxu0 0.0
    %1033 = vmatprep.mubr.f32.mxu0 0.0
    %1034 = vmatmul.mubr.f32.gmra.mxu0 %v447
    %v1035 = vpop.f32.mrf.mxu0
    %v1036 = vadd.f32 0.0, %v1035
    %v1037 = vpop.f32.mrf.mxu0
    %1038 = vmatprep.mubr.f32.mxu0 0.0
    %1039 = vmatmul.mubr.f32.gmra.mxu0 %v450
    %v1040 = vpop.f32.mrf.mxu0
    %v1041 = vadd.f32 0.0, %v1040
    %v1042 = vpop.f32.mrf.mxu0
    %1043 = vmatprep.mubr.f32.mxu0 0.0
    %1044 = vmatmul.mubr.f32.gmra.mxu0 %v453
    %v1045 = vpop.f32.mrf.mxu0
    %v1046 = vadd.f32 0.0, %v1045
    %v1047 = vpop.f32.mrf.mxu0
    %1048 = vmatprep.mubr.f32.mxu0 0.0
    %1049 = vmatmul.mubr.f32.gmra.mxu0 %v456
    %v1050 = vpop.f32.mrf.mxu0
    %v1051 = vadd.f32 0.0, %v1050
    %v1052 = vpop.f32.mrf.mxu0
    %1053 = vdwg.mxu0
    %1054 = vmatprep.subr.mxu0 0.0
    %1055 = vmatpush1.msra.mxu0 0.0
    %1056 = vmatprep.subr.mxu0 0.0
    %1057 = vmatpush1.msra.mxu0 0.0
    %1058 = vmatprep.subr.mxu0 0.0
    %1059 = vmatpush1.msra.mxu0 0.0
    %1060 = vmatprep.subr.mxu0 0.0
    %1061 = vmatpush1.msra.mxu0 0.0
    %1062 = vmatprep.subr.mxu0 0.0
    %1063 = vmatpush1.msra.mxu0 0.0
    %1064 = vmatprep.subr.mxu0 0.0
    %1065 = vmatpush1.msra.mxu0 0.0
    %1066 = vmatprep.subr.mxu0 0.0
    %1067 = vmatpush1.msra.mxu0 0.0
    %1068 = vmatprep.subr.mxu0 0.0
    %1069 = vmatpush1.msra.mxu0 0.0
    %1070 = vmatprep.subr.mxu0 0.0
    %1071 = vmatpush1.msra.mxu0 0.0
    %1072 = vmatprep.subr.mxu0 0.0
    %1073 = vmatpush1.msra.mxu0 0.0
    %1074 = vmatprep.subr.mxu0 0.0
    %1075 = vmatpush1.msra.mxu0 0.0
    %1076 = vmatprep.subr.mxu0 0.0
    %1077 = vmatpush1.msra.mxu0 0.0
    %1078 = vmatprep.subr.mxu0 0.0
    %1079 = vmatpush1.msra.mxu0 %v968
    %1080 = vmatprep.subr.mxu0 0.0
    %1081 = vmatpush1.msra.mxu0 %v967
    %1082 = vmatprep.subr.mxu0 0.0
    %1083 = vmatpush1.msra.mxu0 %v966
    %1084 = vmatprep.subr.mxu0 0.0
    %1085 = vmatpush1.msra.mxu0 %v965
    %1086 = vmatprep.subr.mxu0 0.0
    %1087 = vmatpush2.msra.mxu0 0.0
    %1088 = vmatprep.subr.mxu0 0.0
    %1089 = vmatpush2.msra.mxu0 0.0
    %1090 = vmatprep.subr.mxu0 0.0
    %1091 = vmatpush2.msra.mxu0 0.0
    %1092 = vmatprep.subr.mxu0 0.0
    %1093 = vmatpush2.msra.mxu0 0.0
    %1094 = vmatprep.subr.mxu0 0.0
    %1095 = vmatpush2.msra.mxu0 0.0
    %1096 = vmatprep.subr.mxu0 0.0
    %1097 = vmatpush2.msra.mxu0 0.0
    %1098 = vmatprep.subr.mxu0 0.0
    %1099 = vmatpush2.msra.mxu0 0.0
    %1100 = vmatprep.subr.mxu0 0.0
    %1101 = vmatpush2.msra.mxu0 0.0
    %1102 = vmatprep.subr.mxu0 0.0
    %1103 = vmatpush2.msra.mxu0 0.0
    %1104 = vmatprep.subr.mxu0 0.0
    %1105 = vmatpush2.msra.mxu0 0.0
    %1106 = vmatprep.subr.mxu0 0.0
    %1107 = vmatpush2.msra.mxu0 0.0
    %1108 = vmatprep.subr.mxu0 0.0
    %1109 = vmatpush2.msra.mxu0 0.0
    %1110 = vmatprep.subr.mxu0 0.0
    %1111 = vmatpush2.msra.mxu0 0.0
    %1112 = vmatprep.subr.mxu0 0.0
    %1113 = vmatpush2.msra.mxu0 0.0
    %1114 = vmatprep.subr.mxu0 0.0
    %1115 = vmatpush2.msra.mxu0 0.0
    %1116 = vmatprep.subr.mxu0 0.0
    %1117 = vmatpush2.msra.mxu0 0.0
    %1118 = vmatprep.mubr.f32.mxu0 0.0
    %1119 = vmatmul.mubr.f32.gmra.mxu0 %v548
    %v1120 = vpop.f32.mrf.mxu0
    %v1121 = vadd.f32 0.0, %v1120
    %v1122 = vpop.f32.mrf.mxu0
    %1123 = vmatprep.mubr.f32.mxu0 0.0
    %1124 = vmatmul.mubr.f32.gmra.mxu0 %v551
    %v1125 = vpop.f32.mrf.mxu0
    %v1126 = vadd.f32 0.0, %v1125
    %v1127 = vpop.f32.mrf.mxu0
    %1128 = vmatprep.mubr.f32.mxu0 0.0
    %1129 = vmatmul.mubr.f32.gmra.mxu0 %v554
    %v1130 = vpop.f32.mrf.mxu0
    %v1131 = vadd.f32 0.0, %v1130
    %v1132 = vpop.f32.mrf.mxu0
    %1133 = vmatprep.mubr.f32.mxu0 0.0
    %1134 = vmatmul.mubr.f32.gmra.mxu0 %v557
    %v1135 = vpop.f32.mrf.mxu0
    %v1136 = vadd.f32 0.0, %v1135
    %v1137 = vpop.f32.mrf.mxu0
    %1138 = vdwg.mxu0
    %v1139 = vld [vmem:[%s65] sm:$0xff]
    %v1140 = vld [vmem:[%s65 + $0x8] sm:$0xff]
    %v1141 = vld [vmem:[%s65 + $0x10] sm:$0xff]
    %v1142 = vld [vmem:[%s65 + $0x18] sm:$0xff]
    %v1143 = vld [vmem:[%s65 + $0x20] sm:$0xff]
    %v1144 = vld [vmem:[%s65 + $0x28] sm:$0xff]
    %v1145 = vld [vmem:[%s65 + $0x30] sm:$0xff]
    %v1146 = vld [vmem:[%s65 + $0x38] sm:$0xff]
    %v1147 = vld [vmem:[%s65 + $0x40] sm:$0xff]
    %v1148 = vld [vmem:[%s65 + $0x48] sm:$0xff]
    %v1149 = vld [vmem:[%s65 + $0x50] sm:$0xff]
    %v1150 = vld [vmem:[%s65 + $0x58] sm:$0xff]
    %v1151 = vld [vmem:[%s65 + $0x60] sm:$0xff]
    %v1152 = vld [vmem:[%s65 + $0x68] sm:$0xff]
    %v1153 = vld [vmem:[%s65 + $0x70] sm:$0xff]
    %v1154 = vld [vmem:[%s65 + $0x78] sm:$0xff]
    %v1155 = vld [vmem:[%s65 + $0x80] sm:$0xff]
    %v1156 = vld [vmem:[%s65 + $0x88] sm:$0xff]
    %v1157 = vld [vmem:[%s65 + $0x90] sm:$0xff]
    %v1158 = vld [vmem:[%s65 + $0x98] sm:$0xff]
    %v1159 = vld [vmem:[%s65 + $0xa0] sm:$0xff]
    %v1160 = vld [vmem:[%s65 + $0xa8] sm:$0xff]
    %v1161 = vld [vmem:[%s65 + $0xb0] sm:$0xff]
    %v1162 = vld [vmem:[%s65 + $0xb8] sm:$0xff]
    %v1163 = vld [vmem:[%s65 + $0xc0] sm:$0xff]
    %v1164 = vld [vmem:[%s65 + $0xc8] sm:$0xff]
    %v1165 = vld [vmem:[%s65 + $0xd0] sm:$0xff]
    %v1166 = vld [vmem:[%s65 + $0xd8] sm:$0xff]
    %v1167 = vld [vmem:[%s65 + $0xe0] sm:$0xff]
    %v1168 = vld [vmem:[%s65 + $0xe8] sm:$0xff]
    %v1169 = vld [vmem:[%s65 + $0xf0] sm:$0xff]
    %v1170 = vld [vmem:[%s65 + $0xf8] sm:$0xff]
    %1171 = vmatprep.subr.mxu0 0.0
    %1172 = vmatpush1.msra.mxu0 %v1170
    %1173 = vmatprep.subr.mxu0 0.0
    %1174 = vmatpush1.msra.mxu0 %v1169
    %1175 = vmatprep.subr.mxu0 0.0
    %1176 = vmatpush1.msra.mxu0 %v1168
    %1177 = vmatprep.subr.mxu0 0.0
    %1178 = vmatpush1.msra.mxu0 %v1167
    %1179 = vmatprep.subr.mxu0 0.0
    %1180 = vmatpush1.msra.mxu0 %v1166
    %1181 = vmatprep.subr.mxu0 0.0
    %1182 = vmatpush1.msra.mxu0 %v1165
    %1183 = vmatprep.subr.mxu0 0.0
    %1184 = vmatpush1.msra.mxu0 %v1164
    %1185 = vmatprep.subr.mxu0 0.0
    %1186 = vmatpush1.msra.mxu0 %v1163
    %1187 = vmatprep.subr.mxu0 0.0
    %1188 = vmatpush1.msra.mxu0 %v1162
    %1189 = vmatprep.subr.mxu0 0.0
    %1190 = vmatpush1.msra.mxu0 %v1161
    %1191 = vmatprep.subr.mxu0 0.0
    %1192 = vmatpush1.msra.mxu0 %v1160
    %1193 = vmatprep.subr.mxu0 0.0
    %1194 = vmatpush1.msra.mxu0 %v1159
    %1195 = vmatprep.subr.mxu0 0.0
    %1196 = vmatpush1.msra.mxu0 %v1158
    %1197 = vmatprep.subr.mxu0 0.0
    %1198 = vmatpush1.msra.mxu0 %v1157
    %1199 = vmatprep.subr.mxu0 0.0
    %1200 = vmatpush1.msra.mxu0 %v1156
    %1201 = vmatprep.subr.mxu0 0.0
    %1202 = vmatpush1.msra.mxu0 %v1155
    %1203 = vmatprep.subr.mxu0 0.0
    %1204 = vmatpush2.msra.mxu0 0.0
    %1205 = vmatprep.subr.mxu0 0.0
    %1206 = vmatpush2.msra.mxu0 0.0
    %1207 = vmatprep.subr.mxu0 0.0
    %1208 = vmatpush2.msra.mxu0 0.0
    %1209 = vmatprep.subr.mxu0 0.0
    %1210 = vmatpush2.msra.mxu0 0.0
    %1211 = vmatprep.subr.mxu0 0.0
    %1212 = vmatpush2.msra.mxu0 0.0
    %1213 = vmatprep.subr.mxu0 0.0
    %1214 = vmatpush2.msra.mxu0 0.0
    %1215 = vmatprep.subr.mxu0 0.0
    %1216 = vmatpush2.msra.mxu0 0.0
    %1217 = vmatprep.subr.mxu0 0.0
    %1218 = vmatpush2.msra.mxu0 0.0
    %1219 = vmatprep.subr.mxu0 0.0
    %1220 = vmatpush2.msra.mxu0 0.0
    %1221 = vmatprep.subr.mxu0 0.0
    %1222 = vmatpush2.msra.mxu0 0.0
    %1223 = vmatprep.subr.mxu0 0.0
    %1224 = vmatpush2.msra.mxu0 0.0
    %1225 = vmatprep.subr.mxu0 0.0
    %1226 = vmatpush2.msra.mxu0 0.0
    %1227 = vmatprep.subr.mxu0 0.0
    %1228 = vmatpush2.msra.mxu0 0.0
    %1229 = vmatprep.subr.mxu0 0.0
    %1230 = vmatpush2.msra.mxu0 0.0
    %1231 = vmatprep.subr.mxu0 0.0
    %1232 = vmatpush2.msra.mxu0 0.0
    %1233 = vmatprep.subr.mxu0 0.0
    %1234 = vmatpush2.msra.mxu0 0.0
    %1235 = vmatprep.mubr.f32.mxu0 0.0
    %1236 = vmatmul.mubr.f32.gmra.mxu0 %v965
    %v1237 = vpop.f32.mrf.mxu0
    %v1238 = vadd.f32 0.0, %v1237
    %v1239 = vpop.f32.mrf.mxu0
    %1240 = vmatprep.mubr.f32.mxu0 0.0
    %1241 = vmatmul.mubr.f32.gmra.mxu0 %v966
    %v1242 = vpop.f32.mrf.mxu0
    %v1243 = vadd.f32 0.0, %v1242
    %v1244 = vpop.f32.mrf.mxu0
    %1245 = vmatprep.mubr.f32.mxu0 0.0
    %1246 = vmatmul.mubr.f32.gmra.mxu0 %v967
    %v1247 = vpop.f32.mrf.mxu0
    %v1248 = vadd.f32 0.0, %v1247
    %v1249 = vpop.f32.mrf.mxu0
    %1250 = vmatprep.mubr.f32.mxu0 0.0
    %1251 = vmatmul.mubr.f32.gmra.mxu0 %v968
    %v1252 = vpop.f32.mrf.mxu0
    %v1253 = vadd.f32 0.0, %v1252
    %v1254 = vpop.f32.mrf.mxu0
    %1255 = vdwg.mxu0
    %1256 = vmatprep.subr.mxu0 0.0
    %1257 = vmatpush1.msra.mxu0 %v1154
    %1258 = vmatprep.subr.mxu0 0.0
    %1259 = vmatpush1.msra.mxu0 %v1153
    %1260 = vmatprep.subr.mxu0 0.0
    %1261 = vmatpush1.msra.mxu0 %v1152
    %1262 = vmatprep.subr.mxu0 0.0
    %1263 = vmatpush1.msra.mxu0 %v1151
    %1264 = vmatprep.subr.mxu0 0.0
    %1265 = vmatpush1.msra.mxu0 %v1150
    %1266 = vmatprep.subr.mxu0 0.0
    %1267 = vmatpush1.msra.mxu0 %v1149
    %1268 = vmatprep.subr.mxu0 0.0
    %1269 = vmatpush1.msra.mxu0 %v1148
    %1270 = vmatprep.subr.mxu0 0.0
    %1271 = vmatpush1.msra.mxu0 %v1147
    %1272 = vmatprep.subr.mxu0 0.0
    %1273 = vmatpush1.msra.mxu0 %v1146
    %1274 = vmatprep.subr.mxu0 0.0
    %1275 = vmatpush1.msra.mxu0 %v1145
    %1276 = vmatprep.subr.mxu0 0.0
    %1277 = vmatpush1.msra.mxu0 %v1144
    %1278 = vmatprep.subr.mxu0 0.0
    %1279 = vmatpush1.msra.mxu0 %v1143
    %1280 = vmatprep.subr.mxu0 0.0
    %1281 = vmatpush1.msra.mxu0 %v1142
    %1282 = vmatprep.subr.mxu0 0.0
    %1283 = vmatpush1.msra.mxu0 %v1141
    %1284 = vmatprep.subr.mxu0 0.0
    %1285 = vmatpush1.msra.mxu0 %v1140
    %1286 = vmatprep.subr.mxu0 0.0
    %1287 = vmatpush1.msra.mxu0 %v1139
    %1288 = vmatprep.subr.mxu0 0.0
    %1289 = vmatpush2.msra.mxu0 0.0
    %1290 = vmatprep.subr.mxu0 0.0
    %1291 = vmatpush2.msra.mxu0 0.0
    %1292 = vmatprep.subr.mxu0 0.0
    %1293 = vmatpush2.msra.mxu0 0.0
    %1294 = vmatprep.subr.mxu0 0.0
    %1295 = vmatpush2.msra.mxu0 0.0
    %1296 = vmatprep.subr.mxu0 0.0
    %1297 = vmatpush2.msra.mxu0 0.0
    %1298 = vmatprep.subr.mxu0 0.0
    %1299 = vmatpush2.msra.mxu0 0.0
    %1300 = vmatprep.subr.mxu0 0.0
    %1301 = vmatpush2.msra.mxu0 0.0
    %1302 = vmatprep.subr.mxu0 0.0
    %1303 = vmatpush2.msra.mxu0 0.0
    %1304 = vmatprep.subr.mxu0 0.0
    %1305 = vmatpush2.msra.mxu0 0.0
    %1306 = vmatprep.subr.mxu0 0.0
    %1307 = vmatpush2.msra.mxu0 0.0
    %1308 = vmatprep.subr.mxu0 0.0
    %1309 = vmatpush2.msra.mxu0 0.0
    %1310 = vmatprep.subr.mxu0 0.0
    %1311 = vmatpush2.msra.mxu0 0.0
    %1312 = vmatprep.subr.mxu0 0.0
    %1313 = vmatpush2.msra.mxu0 0.0
    %1314 = vmatprep.subr.mxu0 0.0
    %1315 = vmatpush2.msra.mxu0 0.0
    %1316 = vmatprep.subr.mxu0 0.0
    %1317 = vmatpush2.msra.mxu0 0.0
    %1318 = vmatprep.subr.mxu0 0.0
    %1319 = vmatpush2.msra.mxu0 0.0
    %1320 = vmatprep.mubr.f32.mxu0 0.0
    %1321 = vmatmul.mubr.f32.gmra.mxu0 %v1036
    %v1322 = vpop.f32.mrf.mxu0
    %v1323 = vadd.f32 %v1238, %v1322
    %v1324 = vpop.f32.mrf.mxu0
    %1325 = vmatprep.mubr.f32.mxu0 0.0
    %1326 = vmatmul.mubr.f32.gmra.mxu0 %v1041
    %v1327 = vpop.f32.mrf.mxu0
    %v1328 = vadd.f32 %v1243, %v1327
    %v1329 = vpop.f32.mrf.mxu0
    %1330 = vmatprep.mubr.f32.mxu0 0.0
    %1331 = vmatmul.mubr.f32.gmra.mxu0 %v1046
    %v1332 = vpop.f32.mrf.mxu0
    %v1333 = vadd.f32 %v1248, %v1332
    %v1334 = vpop.f32.mrf.mxu0
    %1335 = vmatprep.mubr.f32.mxu0 0.0
    %1336 = vmatmul.mubr.f32.gmra.mxu0 %v1051
    %v1337 = vpop.f32.mrf.mxu0
    %v1338 = vadd.f32 %v1253, %v1337
    %v1339 = vpop.f32.mrf.mxu0
    %1340 = vdwg.mxu0
    %v1341 = vld [vmem:[%s65 + $0x100] sm:$0xff]
    %v1342 = vld [vmem:[%s65 + $0x108] sm:$0xff]
    %v1343 = vld [vmem:[%s65 + $0x110] sm:$0xff]
    %v1344 = vld [vmem:[%s65 + $0x118] sm:$0xff]
    %v1345 = vld [vmem:[%s65 + $0x120] sm:$0xff]
    %v1346 = vld [vmem:[%s65 + $0x128] sm:$0xff]
    %v1347 = vld [vmem:[%s65 + $0x130] sm:$0xff]
    %v1348 = vld [vmem:[%s65 + $0x138] sm:$0xff]
    %v1349 = vld [vmem:[%s65 + $0x140] sm:$0xff]
    %v1350 = vld [vmem:[%s65 + $0x148] sm:$0xff]
    %v1351 = vld [vmem:[%s65 + $0x150] sm:$0xff]
    %v1352 = vld [vmem:[%s65 + $0x158] sm:$0xff]
    %v1353 = vld [vmem:[%s65 + $0x160] sm:$0xff]
    %v1354 = vld [vmem:[%s65 + $0x168] sm:$0xff]
    %v1355 = vld [vmem:[%s65 + $0x170] sm:$0xff]
    %v1356 = vld [vmem:[%s65 + $0x178] sm:$0xff]
    %1357 = vmatprep.subr.mxu0 0.0
    %1358 = vmatpush1.msra.mxu0 %v1356
    %1359 = vmatprep.subr.mxu0 0.0
    %1360 = vmatpush1.msra.mxu0 %v1355
    %1361 = vmatprep.subr.mxu0 0.0
    %1362 = vmatpush1.msra.mxu0 %v1354
    %1363 = vmatprep.subr.mxu0 0.0
    %1364 = vmatpush1.msra.mxu0 %v1353
    %1365 = vmatprep.subr.mxu0 0.0
    %1366 = vmatpush1.msra.mxu0 %v1352
    %1367 = vmatprep.subr.mxu0 0.0
    %1368 = vmatpush1.msra.mxu0 %v1351
    %1369 = vmatprep.subr.mxu0 0.0
    %1370 = vmatpush1.msra.mxu0 %v1350
    %1371 = vmatprep.subr.mxu0 0.0
    %1372 = vmatpush1.msra.mxu0 %v1349
    %1373 = vmatprep.subr.mxu0 0.0
    %1374 = vmatpush1.msra.mxu0 %v1348
    %1375 = vmatprep.subr.mxu0 0.0
    %1376 = vmatpush1.msra.mxu0 %v1347
    %1377 = vmatprep.subr.mxu0 0.0
    %1378 = vmatpush1.msra.mxu0 %v1346
    %1379 = vmatprep.subr.mxu0 0.0
    %1380 = vmatpush1.msra.mxu0 %v1345
    %1381 = vmatprep.subr.mxu0 0.0
    %1382 = vmatpush1.msra.mxu0 %v1344
    %1383 = vmatprep.subr.mxu0 0.0
    %1384 = vmatpush1.msra.mxu0 %v1343
    %1385 = vmatprep.subr.mxu0 0.0
    %1386 = vmatpush1.msra.mxu0 %v1342
    %1387 = vmatprep.subr.mxu0 0.0
    %1388 = vmatpush1.msra.mxu0 %v1341
    %1389 = vmatprep.subr.mxu0 0.0
    %1390 = vmatpush2.msra.mxu0 0.0
    %1391 = vmatprep.subr.mxu0 0.0
    %1392 = vmatpush2.msra.mxu0 0.0
    %1393 = vmatprep.subr.mxu0 0.0
    %1394 = vmatpush2.msra.mxu0 0.0
    %1395 = vmatprep.subr.mxu0 0.0
    %1396 = vmatpush2.msra.mxu0 0.0
    %1397 = vmatprep.subr.mxu0 0.0
    %1398 = vmatpush2.msra.mxu0 0.0
    %1399 = vmatprep.subr.mxu0 0.0
    %1400 = vmatpush2.msra.mxu0 0.0
    %1401 = vmatprep.subr.mxu0 0.0
    %1402 = vmatpush2.msra.mxu0 0.0
    %1403 = vmatprep.subr.mxu0 0.0
    %1404 = vmatpush2.msra.mxu0 0.0
    %1405 = vmatprep.subr.mxu0 0.0
    %1406 = vmatpush2.msra.mxu0 0.0
    %1407 = vmatprep.subr.mxu0 0.0
    %1408 = vmatpush2.msra.mxu0 0.0
    %1409 = vmatprep.subr.mxu0 0.0
    %1410 = vmatpush2.msra.mxu0 0.0
    %1411 = vmatprep.subr.mxu0 0.0
    %1412 = vmatpush2.msra.mxu0 0.0
    %1413 = vmatprep.subr.mxu0 0.0
    %1414 = vmatpush2.msra.mxu0 0.0
    %1415 = vmatprep.subr.mxu0 0.0
    %1416 = vmatpush2.msra.mxu0 0.0
    %1417 = vmatprep.subr.mxu0 0.0
    %1418 = vmatpush2.msra.mxu0 0.0
    %1419 = vmatprep.subr.mxu0 0.0
    %1420 = vmatpush2.msra.mxu0 0.0
    %1421 = vmatprep.mubr.f32.mxu0 0.0
    %1422 = vmatmul.mubr.f32.gmra.mxu0 %v1121
    %v1423 = vpop.f32.mrf.mxu0
    %v1424 = vadd.f32 0.0, %v1423
    %v1425 = vpop.f32.mrf.mxu0
    %1426 = vmatprep.mubr.f32.mxu0 0.0
    %1427 = vmatmul.mubr.f32.gmra.mxu0 %v1126
    %v1428 = vpop.f32.mrf.mxu0
    %v1429 = vadd.f32 0.0, %v1428
    %v1430 = vpop.f32.mrf.mxu0
    %1431 = vmatprep.mubr.f32.mxu0 0.0
    %1432 = vmatmul.mubr.f32.gmra.mxu0 %v1131
    %v1433 = vpop.f32.mrf.mxu0
    %v1434 = vadd.f32 0.0, %v1433
    %v1435 = vpop.f32.mrf.mxu0
    %1436 = vmatprep.mubr.f32.mxu0 0.0
    %1437 = vmatmul.mubr.f32.gmra.mxu0 %v1136
    %v1438 = vpop.f32.mrf.mxu0
    %v1439 = vadd.f32 0.0, %v1438
    %v1440 = vpop.f32.mrf.mxu0
    %1441 = vdwg.mxu0
    %v1442 = vadd.f32 %v1323, %v1424
    %v1443 = vadd.f32 %v1328, %v1429
    %v1444 = vadd.f32 %v1333, %v1434
    %v1445 = vadd.f32 %v1338, %v1439
    %v1446 = vld [vmem:[#allocation8] sm:$0x1]
    %v1448 = vlaneseq
    %v1449 = vshrl.u32 %v1448, 7
    %v1450 = vsub.s32 0, %v1449
    %v1451 = vrot.slane %v1446, %v1450
    %v1453 = vadd.f32 %v1442, %v1451
    %v1454 = vadd.f32 %v1443, %v1451
    %v1455 = vadd.f32 %v1444, %v1451
    %v1456 = vadd.f32 %v1445, %v1451
    %1457 = vmatprep.subr.mxu0 0.0
    %1458 = vmatpush1.msra.mxu0 0.0
    %1459 = vmatprep.subr.mxu0 0.0
    %1460 = vmatpush1.msra.mxu0 0.0
    %1461 = vmatprep.subr.mxu0 0.0
    %1462 = vmatpush1.msra.mxu0 0.0
    %1463 = vmatprep.subr.mxu0 0.0
    %1464 = vmatpush1.msra.mxu0 0.0
    %1465 = vmatprep.subr.mxu0 0.0
    %1466 = vmatpush1.msra.mxu0 0.0
    %1467 = vmatprep.subr.mxu0 0.0
    %1468 = vmatpush1.msra.mxu0 0.0
    %1469 = vmatprep.subr.mxu0 0.0
    %1470 = vmatpush1.msra.mxu0 0.0
    %1471 = vmatprep.subr.mxu0 0.0
    %1472 = vmatpush1.msra.mxu0 0.0
    %1473 = vmatprep.subr.mxu0 0.0
    %1474 = vmatpush1.msra.mxu0 0.0
    %1475 = vmatprep.subr.mxu0 0.0
    %1476 = vmatpush1.msra.mxu0 0.0
    %1477 = vmatprep.subr.mxu0 0.0
    %1478 = vmatpush1.msra.mxu0 0.0
    %1479 = vmatprep.subr.mxu0 0.0
    %1480 = vmatpush1.msra.mxu0 0.0
    %1481 = vmatprep.subr.mxu0 0.0
    %1482 = vmatpush1.msra.mxu0 %v1456
    %1483 = vmatprep.subr.mxu0 0.0
    %1484 = vmatpush1.msra.mxu0 %v1455
    %1485 = vmatprep.subr.mxu0 0.0
    %1486 = vmatpush1.msra.mxu0 %v1454
    %1487 = vmatprep.subr.mxu0 0.0
    %1488 = vmatpush1.msra.mxu0 %v1453
    %1489 = vmatprep.subr.mxu0 0.0
    %1490 = vmatpush2.msra.mxu0 0.0
    %1491 = vmatprep.subr.mxu0 0.0
    %1492 = vmatpush2.msra.mxu0 0.0
    %1493 = vmatprep.subr.mxu0 0.0
    %1494 = vmatpush2.msra.mxu0 0.0
    %1495 = vmatprep.subr.mxu0 0.0
    %1496 = vmatpush2.msra.mxu0 0.0
    %1497 = vmatprep.subr.mxu0 0.0
    %1498 = vmatpush2.msra.mxu0 0.0
    %1499 = vmatprep.subr.mxu0 0.0
    %1500 = vmatpush2.msra.mxu0 0.0
    %1501 = vmatprep.subr.mxu0 0.0
    %1502 = vmatpush2.msra.mxu0 0.0
    %1503 = vmatprep.subr.mxu0 0.0
    %1504 = vmatpush2.msra.mxu0 0.0
    %1505 = vmatprep.subr.mxu0 0.0
    %1506 = vmatpush2.msra.mxu0 0.0
    %1507 = vmatprep.subr.mxu0 0.0
    %1508 = vmatpush2.msra.mxu0 0.0
    %1509 = vmatprep.subr.mxu0 0.0
    %1510 = vmatpush2.msra.mxu0 0.0
    %1511 = vmatprep.subr.mxu0 0.0
    %1512 = vmatpush2.msra.mxu0 0.0
    %1513 = vmatprep.subr.mxu0 0.0
    %1514 = vmatpush2.msra.mxu0 0.0
    %1515 = vmatprep.subr.mxu0 0.0
    %1516 = vmatpush2.msra.mxu0 0.0
    %1517 = vmatprep.subr.mxu0 0.0
    %1518 = vmatpush2.msra.mxu0 0.0
    %1519 = vmatprep.subr.mxu0 0.0
    %1520 = vmatpush2.msra.mxu0 0.0
    %1521 = vmatprep.mubr.f32.mxu0 0.0
    %1522 = vmatmul.mubr.f32.gmra.mxu0 %v447
    %v1523 = vpop.f32.mrf.mxu0
    %v1524 = vadd.f32 0.0, %v1523
    %v1525 = vpop.f32.mrf.mxu0
    %1526 = vmatprep.mubr.f32.mxu0 0.0
    %1527 = vmatmul.mubr.f32.gmra.mxu0 %v450
    %v1528 = vpop.f32.mrf.mxu0
    %v1529 = vadd.f32 0.0, %v1528
    %v1530 = vpop.f32.mrf.mxu0
    %1531 = vmatprep.mubr.f32.mxu0 0.0
    %1532 = vmatmul.mubr.f32.gmra.mxu0 %v453
    %v1533 = vpop.f32.mrf.mxu0
    %v1534 = vadd.f32 0.0, %v1533
    %v1535 = vpop.f32.mrf.mxu0
    %1536 = vmatprep.mubr.f32.mxu0 0.0
    %1537 = vmatmul.mubr.f32.gmra.mxu0 %v456
    %v1538 = vpop.f32.mrf.mxu0
    %v1539 = vadd.f32 0.0, %v1538
    %v1540 = vpop.f32.mrf.mxu0
    %1541 = vdwg.mxu0
    %1542 = vmatprep.subr.mxu0 0.0
    %1543 = vmatpush1.msra.mxu0 0.0
    %1544 = vmatprep.subr.mxu0 0.0
    %1545 = vmatpush1.msra.mxu0 0.0
    %1546 = vmatprep.subr.mxu0 0.0
    %1547 = vmatpush1.msra.mxu0 0.0
    %1548 = vmatprep.subr.mxu0 0.0
    %1549 = vmatpush1.msra.mxu0 0.0
    %1550 = vmatprep.subr.mxu0 0.0
    %1551 = vmatpush1.msra.mxu0 0.0
    %1552 = vmatprep.subr.mxu0 0.0
    %1553 = vmatpush1.msra.mxu0 0.0
    %1554 = vmatprep.subr.mxu0 0.0
    %1555 = vmatpush1.msra.mxu0 0.0
    %1556 = vmatprep.subr.mxu0 0.0
    %1557 = vmatpush1.msra.mxu0 0.0
    %1558 = vmatprep.subr.mxu0 0.0
    %1559 = vmatpush1.msra.mxu0 0.0
    %1560 = vmatprep.subr.mxu0 0.0
    %1561 = vmatpush1.msra.mxu0 0.0
    %1562 = vmatprep.subr.mxu0 0.0
    %1563 = vmatpush1.msra.mxu0 0.0
    %1564 = vmatprep.subr.mxu0 0.0
    %1565 = vmatpush1.msra.mxu0 0.0
    %1566 = vmatprep.subr.mxu0 0.0
    %1567 = vmatpush1.msra.mxu0 %v1456
    %1568 = vmatprep.subr.mxu0 0.0
    %1569 = vmatpush1.msra.mxu0 %v1455
    %1570 = vmatprep.subr.mxu0 0.0
    %1571 = vmatpush1.msra.mxu0 %v1454
    %1572 = vmatprep.subr.mxu0 0.0
    %1573 = vmatpush1.msra.mxu0 %v1453
    %1574 = vmatprep.subr.mxu0 0.0
    %1575 = vmatpush2.msra.mxu0 0.0
    %1576 = vmatprep.subr.mxu0 0.0
    %1577 = vmatpush2.msra.mxu0 0.0
    %1578 = vmatprep.subr.mxu0 0.0
    %1579 = vmatpush2.msra.mxu0 0.0
    %1580 = vmatprep.subr.mxu0 0.0
    %1581 = vmatpush2.msra.mxu0 0.0
    %1582 = vmatprep.subr.mxu0 0.0
    %1583 = vmatpush2.msra.mxu0 0.0
    %1584 = vmatprep.subr.mxu0 0.0
    %1585 = vmatpush2.msra.mxu0 0.0
    %1586 = vmatprep.subr.mxu0 0.0
    %1587 = vmatpush2.msra.mxu0 0.0
    %1588 = vmatprep.subr.mxu0 0.0
    %1589 = vmatpush2.msra.mxu0 0.0
    %1590 = vmatprep.subr.mxu0 0.0
    %1591 = vmatpush2.msra.mxu0 0.0
    %1592 = vmatprep.subr.mxu0 0.0
    %1593 = vmatpush2.msra.mxu0 0.0
    %1594 = vmatprep.subr.mxu0 0.0
    %1595 = vmatpush2.msra.mxu0 0.0
    %1596 = vmatprep.subr.mxu0 0.0
    %1597 = vmatpush2.msra.mxu0 0.0
    %1598 = vmatprep.subr.mxu0 0.0
    %1599 = vmatpush2.msra.mxu0 0.0
    %1600 = vmatprep.subr.mxu0 0.0
    %1601 = vmatpush2.msra.mxu0 0.0
    %1602 = vmatprep.subr.mxu0 0.0
    %1603 = vmatpush2.msra.mxu0 0.0
    %1604 = vmatprep.subr.mxu0 0.0
    %1605 = vmatpush2.msra.mxu0 0.0
    %1606 = vmatprep.mubr.f32.mxu0 0.0
    %1607 = vmatmul.mubr.f32.gmra.mxu0 %v548
    %v1608 = vpop.f32.mrf.mxu0
    %v1609 = vadd.f32 0.0, %v1608
    %v1610 = vpop.f32.mrf.mxu0
    %1611 = vmatprep.mubr.f32.mxu0 0.0
    %1612 = vmatmul.mubr.f32.gmra.mxu0 %v551
    %v1613 = vpop.f32.mrf.mxu0
    %v1614 = vadd.f32 0.0, %v1613
    %v1615 = vpop.f32.mrf.mxu0
    %1616 = vmatprep.mubr.f32.mxu0 0.0
    %1617 = vmatmul.mubr.f32.gmra.mxu0 %v554
    %v1618 = vpop.f32.mrf.mxu0
    %v1619 = vadd.f32 0.0, %v1618
    %v1620 = vpop.f32.mrf.mxu0
    %1621 = vmatprep.mubr.f32.mxu0 0.0
    %1622 = vmatmul.mubr.f32.gmra.mxu0 %v557
    %v1623 = vpop.f32.mrf.mxu0
    %v1624 = vadd.f32 0.0, %v1623
    %v1625 = vpop.f32.mrf.mxu0
    %1626 = vdwg.mxu0
    %v1627 = vld [vmem:[%s69] sm:$0xff]
    %v1628 = vld [vmem:[%s69 + $0x8] sm:$0xff]
    %v1629 = vld [vmem:[%s69 + $0x10] sm:$0xff]
    %v1630 = vld [vmem:[%s69 + $0x18] sm:$0xff]
    %v1631 = vld [vmem:[%s69 + $0x20] sm:$0xff]
    %v1632 = vld [vmem:[%s69 + $0x28] sm:$0xff]
    %v1633 = vld [vmem:[%s69 + $0x30] sm:$0xff]
    %v1634 = vld [vmem:[%s69 + $0x38] sm:$0xff]
    %v1635 = vld [vmem:[%s69 + $0x40] sm:$0xff]
    %v1636 = vld [vmem:[%s69 + $0x48] sm:$0xff]
    %v1637 = vld [vmem:[%s69 + $0x50] sm:$0xff]
    %v1638 = vld [vmem:[%s69 + $0x58] sm:$0xff]
    %v1639 = vld [vmem:[%s69 + $0x60] sm:$0xff]
    %v1640 = vld [vmem:[%s69 + $0x68] sm:$0xff]
    %v1641 = vld [vmem:[%s69 + $0x70] sm:$0xff]
    %v1642 = vld [vmem:[%s69 + $0x78] sm:$0xff]
    %v1643 = vld [vmem:[%s69 + $0x80] sm:$0xff]
    %v1644 = vld [vmem:[%s69 + $0x88] sm:$0xff]
    %v1645 = vld [vmem:[%s69 + $0x90] sm:$0xff]
    %v1646 = vld [vmem:[%s69 + $0x98] sm:$0xff]
    %v1647 = vld [vmem:[%s69 + $0xa0] sm:$0xff]
    %v1648 = vld [vmem:[%s69 + $0xa8] sm:$0xff]
    %v1649 = vld [vmem:[%s69 + $0xb0] sm:$0xff]
    %v1650 = vld [vmem:[%s69 + $0xb8] sm:$0xff]
    %v1651 = vld [vmem:[%s69 + $0xc0] sm:$0xff]
    %v1652 = vld [vmem:[%s69 + $0xc8] sm:$0xff]
    %v1653 = vld [vmem:[%s69 + $0xd0] sm:$0xff]
    %v1654 = vld [vmem:[%s69 + $0xd8] sm:$0xff]
    %v1655 = vld [vmem:[%s69 + $0xe0] sm:$0xff]
    %v1656 = vld [vmem:[%s69 + $0xe8] sm:$0xff]
    %v1657 = vld [vmem:[%s69 + $0xf0] sm:$0xff]
    %v1658 = vld [vmem:[%s69 + $0xf8] sm:$0xff]
    %1659 = vmatprep.subr.mxu0 0.0
    %1660 = vmatpush1.msra.mxu0 %v1658
    %1661 = vmatprep.subr.mxu0 0.0
    %1662 = vmatpush1.msra.mxu0 %v1657
    %1663 = vmatprep.subr.mxu0 0.0
    %1664 = vmatpush1.msra.mxu0 %v1656
    %1665 = vmatprep.subr.mxu0 0.0
    %1666 = vmatpush1.msra.mxu0 %v1655
    %1667 = vmatprep.subr.mxu0 0.0
    %1668 = vmatpush1.msra.mxu0 %v1654
    %1669 = vmatprep.subr.mxu0 0.0
    %1670 = vmatpush1.msra.mxu0 %v1653
    %1671 = vmatprep.subr.mxu0 0.0
    %1672 = vmatpush1.msra.mxu0 %v1652
    %1673 = vmatprep.subr.mxu0 0.0
    %1674 = vmatpush1.msra.mxu0 %v1651
    %1675 = vmatprep.subr.mxu0 0.0
    %1676 = vmatpush1.msra.mxu0 %v1650
    %1677 = vmatprep.subr.mxu0 0.0
    %1678 = vmatpush1.msra.mxu0 %v1649
    %1679 = vmatprep.subr.mxu0 0.0
    %1680 = vmatpush1.msra.mxu0 %v1648
    %1681 = vmatprep.subr.mxu0 0.0
    %1682 = vmatpush1.msra.mxu0 %v1647
    %1683 = vmatprep.subr.mxu0 0.0
    %1684 = vmatpush1.msra.mxu0 %v1646
    %1685 = vmatprep.subr.mxu0 0.0
    %1686 = vmatpush1.msra.mxu0 %v1645
    %1687 = vmatprep.subr.mxu0 0.0
    %1688 = vmatpush1.msra.mxu0 %v1644
    %1689 = vmatprep.subr.mxu0 0.0
    %1690 = vmatpush1.msra.mxu0 %v1643
    %1691 = vmatprep.subr.mxu0 0.0
    %1692 = vmatpush2.msra.mxu0 0.0
    %1693 = vmatprep.subr.mxu0 0.0
    %1694 = vmatpush2.msra.mxu0 0.0
    %1695 = vmatprep.subr.mxu0 0.0
    %1696 = vmatpush2.msra.mxu0 0.0
    %1697 = vmatprep.subr.mxu0 0.0
    %1698 = vmatpush2.msra.mxu0 0.0
    %1699 = vmatprep.subr.mxu0 0.0
    %1700 = vmatpush2.msra.mxu0 0.0
    %1701 = vmatprep.subr.mxu0 0.0
    %1702 = vmatpush2.msra.mxu0 0.0
    %1703 = vmatprep.subr.mxu0 0.0
    %1704 = vmatpush2.msra.mxu0 0.0
    %1705 = vmatprep.subr.mxu0 0.0
    %1706 = vmatpush2.msra.mxu0 0.0
    %1707 = vmatprep.subr.mxu0 0.0
    %1708 = vmatpush2.msra.mxu0 0.0
    %1709 = vmatprep.subr.mxu0 0.0
    %1710 = vmatpush2.msra.mxu0 0.0
    %1711 = vmatprep.subr.mxu0 0.0
    %1712 = vmatpush2.msra.mxu0 0.0
    %1713 = vmatprep.subr.mxu0 0.0
    %1714 = vmatpush2.msra.mxu0 0.0
    %1715 = vmatprep.subr.mxu0 0.0
    %1716 = vmatpush2.msra.mxu0 0.0
    %1717 = vmatprep.subr.mxu0 0.0
    %1718 = vmatpush2.msra.mxu0 0.0
    %1719 = vmatprep.subr.mxu0 0.0
    %1720 = vmatpush2.msra.mxu0 0.0
    %1721 = vmatprep.subr.mxu0 0.0
    %1722 = vmatpush2.msra.mxu0 0.0
    %1723 = vmatprep.mubr.f32.mxu0 0.0
    %1724 = vmatmul.mubr.f32.gmra.mxu0 %v1453
    %v1725 = vpop.f32.mrf.mxu0
    %v1726 = vadd.f32 0.0, %v1725
    %v1727 = vpop.f32.mrf.mxu0
    %1728 = vmatprep.mubr.f32.mxu0 0.0
    %1729 = vmatmul.mubr.f32.gmra.mxu0 %v1454
    %v1730 = vpop.f32.mrf.mxu0
    %v1731 = vadd.f32 0.0, %v1730
    %v1732 = vpop.f32.mrf.mxu0
    %1733 = vmatprep.mubr.f32.mxu0 0.0
    %1734 = vmatmul.mubr.f32.gmra.mxu0 %v1455
    %v1735 = vpop.f32.mrf.mxu0
    %v1736 = vadd.f32 0.0, %v1735
    %v1737 = vpop.f32.mrf.mxu0
    %1738 = vmatprep.mubr.f32.mxu0 0.0
    %1739 = vmatmul.mubr.f32.gmra.mxu0 %v1456
    %v1740 = vpop.f32.mrf.mxu0
    %v1741 = vadd.f32 0.0, %v1740
    %v1742 = vpop.f32.mrf.mxu0
    %1743 = vdwg.mxu0
    %1744 = vmatprep.subr.mxu0 0.0
    %1745 = vmatpush1.msra.mxu0 %v1642
    %1746 = vmatprep.subr.mxu0 0.0
    %1747 = vmatpush1.msra.mxu0 %v1641
    %1748 = vmatprep.subr.mxu0 0.0
    %1749 = vmatpush1.msra.mxu0 %v1640
    %1750 = vmatprep.subr.mxu0 0.0
    %1751 = vmatpush1.msra.mxu0 %v1639
    %1752 = vmatprep.subr.mxu0 0.0
    %1753 = vmatpush1.msra.mxu0 %v1638
    %1754 = vmatprep.subr.mxu0 0.0
    %1755 = vmatpush1.msra.mxu0 %v1637
    %1756 = vmatprep.subr.mxu0 0.0
    %1757 = vmatpush1.msra.mxu0 %v1636
    %1758 = vmatprep.subr.mxu0 0.0
    %1759 = vmatpush1.msra.mxu0 %v1635
    %1760 = vmatprep.subr.mxu0 0.0
    %1761 = vmatpush1.msra.mxu0 %v1634
    %1762 = vmatprep.subr.mxu0 0.0
    %1763 = vmatpush1.msra.mxu0 %v1633
    %1764 = vmatprep.subr.mxu0 0.0
    %1765 = vmatpush1.msra.mxu0 %v1632
    %1766 = vmatprep.subr.mxu0 0.0
    %1767 = vmatpush1.msra.mxu0 %v1631
    %1768 = vmatprep.subr.mxu0 0.0
    %1769 = vmatpush1.msra.mxu0 %v1630
    %1770 = vmatprep.subr.mxu0 0.0
    %1771 = vmatpush1.msra.mxu0 %v1629
    %1772 = vmatprep.subr.mxu0 0.0
    %1773 = vmatpush1.msra.mxu0 %v1628
    %1774 = vmatprep.subr.mxu0 0.0
    %1775 = vmatpush1.msra.mxu0 %v1627
    %1776 = vmatprep.subr.mxu0 0.0
    %1777 = vmatpush2.msra.mxu0 0.0
    %1778 = vmatprep.subr.mxu0 0.0
    %1779 = vmatpush2.msra.mxu0 0.0
    %1780 = vmatprep.subr.mxu0 0.0
    %1781 = vmatpush2.msra.mxu0 0.0
    %1782 = vmatprep.subr.mxu0 0.0
    %1783 = vmatpush2.msra.mxu0 0.0
    %1784 = vmatprep.subr.mxu0 0.0
    %1785 = vmatpush2.msra.mxu0 0.0
    %1786 = vmatprep.subr.mxu0 0.0
    %1787 = vmatpush2.msra.mxu0 0.0
    %1788 = vmatprep.subr.mxu0 0.0
    %1789 = vmatpush2.msra.mxu0 0.0
    %1790 = vmatprep.subr.mxu0 0.0
    %1791 = vmatpush2.msra.mxu0 0.0
    %1792 = vmatprep.subr.mxu0 0.0
    %1793 = vmatpush2.msra.mxu0 0.0
    %1794 = vmatprep.subr.mxu0 0.0
    %1795 = vmatpush2.msra.mxu0 0.0
    %1796 = vmatprep.subr.mxu0 0.0
    %1797 = vmatpush2.msra.mxu0 0.0
    %1798 = vmatprep.subr.mxu0 0.0
    %1799 = vmatpush2.msra.mxu0 0.0
    %1800 = vmatprep.subr.mxu0 0.0
    %1801 = vmatpush2.msra.mxu0 0.0
    %1802 = vmatprep.subr.mxu0 0.0
    %1803 = vmatpush2.msra.mxu0 0.0
    %1804 = vmatprep.subr.mxu0 0.0
    %1805 = vmatpush2.msra.mxu0 0.0
    %1806 = vmatprep.subr.mxu0 0.0
    %1807 = vmatpush2.msra.mxu0 0.0
    %1808 = vmatprep.mubr.f32.mxu0 0.0
    %1809 = vmatmul.mubr.f32.gmra.mxu0 %v1524
    %v1810 = vpop.f32.mrf.mxu0
    %v1811 = vadd.f32 %v1726, %v1810
    %v1812 = vpop.f32.mrf.mxu0
    %1813 = vmatprep.mubr.f32.mxu0 0.0
    %1814 = vmatmul.mubr.f32.gmra.mxu0 %v1529
    %v1815 = vpop.f32.mrf.mxu0
    %v1816 = vadd.f32 %v1731, %v1815
    %v1817 = vpop.f32.mrf.mxu0
    %1818 = vmatprep.mubr.f32.mxu0 0.0
    %1819 = vmatmul.mubr.f32.gmra.mxu0 %v1534
    %v1820 = vpop.f32.mrf.mxu0
    %v1821 = vadd.f32 %v1736, %v1820
    %v1822 = vpop.f32.mrf.mxu0
    %1823 = vmatprep.mubr.f32.mxu0 0.0
    %1824 = vmatmul.mubr.f32.gmra.mxu0 %v1539
    %v1825 = vpop.f32.mrf.mxu0
    %v1826 = vadd.f32 %v1741, %v1825
    %v1827 = vpop.f32.mrf.mxu0
    %1828 = vdwg.mxu0
    %v1829 = vld [vmem:[%s69 + $0x100] sm:$0xff]
    %v1830 = vld [vmem:[%s69 + $0x108] sm:$0xff]
    %v1831 = vld [vmem:[%s69 + $0x110] sm:$0xff]
    %v1832 = vld [vmem:[%s69 + $0x118] sm:$0xff]
    %v1833 = vld [vmem:[%s69 + $0x120] sm:$0xff]
    %v1834 = vld [vmem:[%s69 + $0x128] sm:$0xff]
    %v1835 = vld [vmem:[%s69 + $0x130] sm:$0xff]
    %v1836 = vld [vmem:[%s69 + $0x138] sm:$0xff]
    %v1837 = vld [vmem:[%s69 + $0x140] sm:$0xff]
    %v1838 = vld [vmem:[%s69 + $0x148] sm:$0xff]
    %v1839 = vld [vmem:[%s69 + $0x150] sm:$0xff]
    %v1840 = vld [vmem:[%s69 + $0x158] sm:$0xff]
    %v1841 = vld [vmem:[%s69 + $0x160] sm:$0xff]
    %v1842 = vld [vmem:[%s69 + $0x168] sm:$0xff]
    %v1843 = vld [vmem:[%s69 + $0x170] sm:$0xff]
    %v1844 = vld [vmem:[%s69 + $0x178] sm:$0xff]
    %1845 = vmatprep.subr.mxu0 0.0
    %1846 = vmatpush1.msra.mxu0 %v1844
    %1847 = vmatprep.subr.mxu0 0.0
    %1848 = vmatpush1.msra.mxu0 %v1843
    %1849 = vmatprep.subr.mxu0 0.0
    %1850 = vmatpush1.msra.mxu0 %v1842
    %1851 = vmatprep.subr.mxu0 0.0
    %1852 = vmatpush1.msra.mxu0 %v1841
    %1853 = vmatprep.subr.mxu0 0.0
    %1854 = vmatpush1.msra.mxu0 %v1840
    %1855 = vmatprep.subr.mxu0 0.0
    %1856 = vmatpush1.msra.mxu0 %v1839
    %1857 = vmatprep.subr.mxu0 0.0
    %1858 = vmatpush1.msra.mxu0 %v1838
    %1859 = vmatprep.subr.mxu0 0.0
    %1860 = vmatpush1.msra.mxu0 %v1837
    %1861 = vmatprep.subr.mxu0 0.0
    %1862 = vmatpush1.msra.mxu0 %v1836
    %1863 = vmatprep.subr.mxu0 0.0
    %1864 = vmatpush1.msra.mxu0 %v1835
    %1865 = vmatprep.subr.mxu0 0.0
    %1866 = vmatpush1.msra.mxu0 %v1834
    %1867 = vmatprep.subr.mxu0 0.0
    %1868 = vmatpush1.msra.mxu0 %v1833
    %1869 = vmatprep.subr.mxu0 0.0
    %1870 = vmatpush1.msra.mxu0 %v1832
    %1871 = vmatprep.subr.mxu0 0.0
    %1872 = vmatpush1.msra.mxu0 %v1831
    %1873 = vmatprep.subr.mxu0 0.0
    %1874 = vmatpush1.msra.mxu0 %v1830
    %1875 = vmatprep.subr.mxu0 0.0
    %1876 = vmatpush1.msra.mxu0 %v1829
    %1877 = vmatprep.subr.mxu0 0.0
    %1878 = vmatpush2.msra.mxu0 0.0
    %1879 = vmatprep.subr.mxu0 0.0
    %1880 = vmatpush2.msra.mxu0 0.0
    %1881 = vmatprep.subr.mxu0 0.0
    %1882 = vmatpush2.msra.mxu0 0.0
    %1883 = vmatprep.subr.mxu0 0.0
    %1884 = vmatpush2.msra.mxu0 0.0
    %1885 = vmatprep.subr.mxu0 0.0
    %1886 = vmatpush2.msra.mxu0 0.0
    %1887 = vmatprep.subr.mxu0 0.0
    %1888 = vmatpush2.msra.mxu0 0.0
    %1889 = vmatprep.subr.mxu0 0.0
    %1890 = vmatpush2.msra.mxu0 0.0
    %1891 = vmatprep.subr.mxu0 0.0
    %1892 = vmatpush2.msra.mxu0 0.0
    %1893 = vmatprep.subr.mxu0 0.0
    %1894 = vmatpush2.msra.mxu0 0.0
    %1895 = vmatprep.subr.mxu0 0.0
    %1896 = vmatpush2.msra.mxu0 0.0
    %1897 = vmatprep.subr.mxu0 0.0
    %1898 = vmatpush2.msra.mxu0 0.0
    %1899 = vmatprep.subr.mxu0 0.0
    %1900 = vmatpush2.msra.mxu0 0.0
    %1901 = vmatprep.subr.mxu0 0.0
    %1902 = vmatpush2.msra.mxu0 0.0
    %1903 = vmatprep.subr.mxu0 0.0
    %1904 = vmatpush2.msra.mxu0 0.0
    %1905 = vmatprep.subr.mxu0 0.0
    %1906 = vmatpush2.msra.mxu0 0.0
    %1907 = vmatprep.subr.mxu0 0.0
    %1908 = vmatpush2.msra.mxu0 0.0
    %1909 = vmatprep.mubr.f32.mxu0 0.0
    %1910 = vmatmul.mubr.f32.gmra.mxu0 %v1609
    %v1911 = vpop.f32.mrf.mxu0
    %v1912 = vadd.f32 0.0, %v1911
    %v1913 = vpop.f32.mrf.mxu0
    %1914 = vmatprep.mubr.f32.mxu0 0.0
    %1915 = vmatmul.mubr.f32.gmra.mxu0 %v1614
    %v1916 = vpop.f32.mrf.mxu0
    %v1917 = vadd.f32 0.0, %v1916
    %v1918 = vpop.f32.mrf.mxu0
    %1919 = vmatprep.mubr.f32.mxu0 0.0
    %1920 = vmatmul.mubr.f32.gmra.mxu0 %v1619
    %v1921 = vpop.f32.mrf.mxu0
    %v1922 = vadd.f32 0.0, %v1921
    %v1923 = vpop.f32.mrf.mxu0
    %1924 = vmatprep.mubr.f32.mxu0 0.0
    %1925 = vmatmul.mubr.f32.gmra.mxu0 %v1624
    %v1926 = vpop.f32.mrf.mxu0
    %v1927 = vadd.f32 0.0, %v1926
    %v1928 = vpop.f32.mrf.mxu0
    %1929 = vdwg.mxu0
    %v1930 = vadd.f32 %v1811, %v1912
    %v1931 = vadd.f32 %v1816, %v1917
    %v1932 = vadd.f32 %v1821, %v1922
    %v1933 = vadd.f32 %v1826, %v1927
    %v1934 = vld [vmem:[#allocation10] sm:$0x1]
    %v1936 = vlaneseq
    %v1937 = vshrl.u32 %v1936, 7
    %v1938 = vsub.s32 0, %v1937
    %v1939 = vrot.slane %v1934, %v1938
    %v1941 = vadd.f32 %v1930, %v1939
    %v1942 = vadd.f32 %v1931, %v1939
    %v1943 = vadd.f32 %v1932, %v1939
    %v1944 = vadd.f32 %v1933, %v1939
    %v1945 = vld [vmem:[%s23] sm:$0xff]
    %v1946 = vld [vmem:[%s23 + $0x8] sm:$0xff]
    %v1948 = vsel %vm445, %v1945, 0
    %v1951 = vsel %vm445, %v1946, 0
    %1953 = vmatprep.subr.mxu0 0.0
    %1954 = vmatpush1.msra.mxu0 0.0
    %1955 = vmatprep.subr.mxu0 0.0
    %1956 = vmatpush1.msra.mxu0 0.0
    %1957 = vmatprep.subr.mxu0 0.0
    %1958 = vmatpush1.msra.mxu0 0.0
    %1959 = vmatprep.subr.mxu0 0.0
    %1960 = vmatpush1.msra.mxu0 0.0
    %1961 = vmatprep.subr.mxu0 0.0
    %1962 = vmatpush1.msra.mxu0 0.0
    %1963 = vmatprep.subr.mxu0 0.0
    %1964 = vmatpush1.msra.mxu0 0.0
    %1965 = vmatprep.subr.mxu0 0.0
    %1966 = vmatpush1.msra.mxu0 0.0
    %1967 = vmatprep.subr.mxu0 0.0
    %1968 = vmatpush1.msra.mxu0 0.0
    %1969 = vmatprep.subr.mxu0 0.0
    %1970 = vmatpush1.msra.mxu0 0.0
    %1971 = vmatprep.subr.mxu0 0.0
    %1972 = vmatpush1.msra.mxu0 0.0
    %1973 = vmatprep.subr.mxu0 0.0
    %1974 = vmatpush1.msra.mxu0 0.0
    %1975 = vmatprep.subr.mxu0 0.0
    %1976 = vmatpush1.msra.mxu0 0.0
    %1977 = vmatprep.subr.mxu0 0.0
    %1978 = vmatpush1.msra.mxu0 %v1944
    %1979 = vmatprep.subr.mxu0 0.0
    %1980 = vmatpush1.msra.mxu0 %v1943
    %1981 = vmatprep.subr.mxu0 0.0
    %1982 = vmatpush1.msra.mxu0 %v1942
    %1983 = vmatprep.subr.mxu0 0.0
    %1984 = vmatpush1.msra.mxu0 %v1941
    %1985 = vmatprep.subr.mxu0 0.0
    %1986 = vmatpush2.msra.mxu0 0.0
    %1987 = vmatprep.subr.mxu0 0.0
    %1988 = vmatpush2.msra.mxu0 0.0
    %1989 = vmatprep.subr.mxu0 0.0
    %1990 = vmatpush2.msra.mxu0 0.0
    %1991 = vmatprep.subr.mxu0 0.0
    %1992 = vmatpush2.msra.mxu0 0.0
    %1993 = vmatprep.subr.mxu0 0.0
    %1994 = vmatpush2.msra.mxu0 0.0
    %1995 = vmatprep.subr.mxu0 0.0
    %1996 = vmatpush2.msra.mxu0 0.0
    %1997 = vmatprep.subr.mxu0 0.0
    %1998 = vmatpush2.msra.mxu0 0.0
    %1999 = vmatprep.subr.mxu0 0.0
    %2000 = vmatpush2.msra.mxu0 0.0
    %2001 = vmatprep.subr.mxu0 0.0
    %2002 = vmatpush2.msra.mxu0 0.0
    %2003 = vmatprep.subr.mxu0 0.0
    %2004 = vmatpush2.msra.mxu0 0.0
    %2005 = vmatprep.subr.mxu0 0.0
    %2006 = vmatpush2.msra.mxu0 0.0
    %2007 = vmatprep.subr.mxu0 0.0
    %2008 = vmatpush2.msra.mxu0 0.0
    %2009 = vmatprep.subr.mxu0 0.0
    %2010 = vmatpush2.msra.mxu0 0.0
    %2011 = vmatprep.subr.mxu0 0.0
    %2012 = vmatpush2.msra.mxu0 0.0
    %2013 = vmatprep.subr.mxu0 0.0
    %2014 = vmatpush2.msra.mxu0 0.0
    %2015 = vmatprep.subr.mxu0 0.0
    %2016 = vmatpush2.msra.mxu0 0.0
    %2017 = vmatprep.mubr.f32.mxu0 0.0
    %2018 = vmatmul.mubr.f32.gmra.mxu0 %v1948
    %v2019 = vpop.f32.mrf.mxu0
    %v2020 = vadd.f32 0.0, %v2019
    %v2021 = vpop.f32.mrf.mxu0
    %2022 = vmatprep.mubr.f32.mxu0 0.0
    %2023 = vmatmul.mubr.f32.gmra.mxu0 %v1951
    %v2024 = vpop.f32.mrf.mxu0
    %v2025 = vadd.f32 0.0, %v2024
    %v2026 = vpop.f32.mrf.mxu0
    %2027 = vdwg.mxu0
    %v2028 = vld [vmem:[%s25] sm:$0xff]
    %v2029 = vld [vmem:[%s25 + $0x8] sm:$0xff]
    %v2031 = vsel %vm445, %v2028, 0
    %v2034 = vsel %vm445, %v2029, 0
    %2036 = vmatprep.subr.mxu0 0.0
    %2037 = vmatpush1.msra.mxu0 0.0
    %2038 = vmatprep.subr.mxu0 0.0
    %2039 = vmatpush1.msra.mxu0 0.0
    %2040 = vmatprep.subr.mxu0 0.0
    %2041 = vmatpush1.msra.mxu0 0.0
    %2042 = vmatprep.subr.mxu0 0.0
    %2043 = vmatpush1.msra.mxu0 0.0
    %2044 = vmatprep.subr.mxu0 0.0
    %2045 = vmatpush1.msra.mxu0 0.0
    %2046 = vmatprep.subr.mxu0 0.0
    %2047 = vmatpush1.msra.mxu0 0.0
    %2048 = vmatprep.subr.mxu0 0.0
    %2049 = vmatpush1.msra.mxu0 0.0
    %2050 = vmatprep.subr.mxu0 0.0
    %2051 = vmatpush1.msra.mxu0 0.0
    %2052 = vmatprep.subr.mxu0 0.0
    %2053 = vmatpush1.msra.mxu0 0.0
    %2054 = vmatprep.subr.mxu0 0.0
    %2055 = vmatpush1.msra.mxu0 0.0
    %2056 = vmatprep.subr.mxu0 0.0
    %2057 = vmatpush1.msra.mxu0 0.0
    %2058 = vmatprep.subr.mxu0 0.0
    %2059 = vmatpush1.msra.mxu0 0.0
    %2060 = vmatprep.subr.mxu0 0.0
    %2061 = vmatpush1.msra.mxu0 %v1944
    %2062 = vmatprep.subr.mxu0 0.0
    %2063 = vmatpush1.msra.mxu0 %v1943
    %2064 = vmatprep.subr.mxu0 0.0
    %2065 = vmatpush1.msra.mxu0 %v1942
    %2066 = vmatprep.subr.mxu0 0.0
    %2067 = vmatpush1.msra.mxu0 %v1941
    %2068 = vmatprep.subr.mxu0 0.0
    %2069 = vmatpush2.msra.mxu0 0.0
    %2070 = vmatprep.subr.mxu0 0.0
    %2071 = vmatpush2.msra.mxu0 0.0
    %2072 = vmatprep.subr.mxu0 0.0
    %2073 = vmatpush2.msra.mxu0 0.0
    %2074 = vmatprep.subr.mxu0 0.0
    %2075 = vmatpush2.msra.mxu0 0.0
    %2076 = vmatprep.subr.mxu0 0.0
    %2077 = vmatpush2.msra.mxu0 0.0
    %2078 = vmatprep.subr.mxu0 0.0
    %2079 = vmatpush2.msra.mxu0 0.0
    %2080 = vmatprep.subr.mxu0 0.0
    %2081 = vmatpush2.msra.mxu0 0.0
    %2082 = vmatprep.subr.mxu0 0.0
    %2083 = vmatpush2.msra.mxu0 0.0
    %2084 = vmatprep.subr.mxu0 0.0
    %2085 = vmatpush2.msra.mxu0 0.0
    %2086 = vmatprep.subr.mxu0 0.0
    %2087 = vmatpush2.msra.mxu0 0.0
    %2088 = vmatprep.subr.mxu0 0.0
    %2089 = vmatpush2.msra.mxu0 0.0
    %2090 = vmatprep.subr.mxu0 0.0
    %2091 = vmatpush2.msra.mxu0 0.0
    %2092 = vmatprep.subr.mxu0 0.0
    %2093 = vmatpush2.msra.mxu0 0.0
    %2094 = vmatprep.subr.mxu0 0.0
    %2095 = vmatpush2.msra.mxu0 0.0
    %2096 = vmatprep.subr.mxu0 0.0
    %2097 = vmatpush2.msra.mxu0 0.0
    %2098 = vmatprep.subr.mxu0 0.0
    %2099 = vmatpush2.msra.mxu0 0.0
    %2100 = vmatprep.mubr.f32.mxu0 0.0
    %2101 = vmatmul.mubr.f32.gmra.mxu0 %v2031
    %v2102 = vpop.f32.mrf.mxu0
    %v2103 = vadd.f32 0.0, %v2102
    %v2104 = vpop.f32.mrf.mxu0
    %2105 = vmatprep.mubr.f32.mxu0 0.0
    %2106 = vmatmul.mubr.f32.gmra.mxu0 %v2034
    %v2107 = vpop.f32.mrf.mxu0
    %v2108 = vadd.f32 0.0, %v2107
    %v2109 = vpop.f32.mrf.mxu0
    %2110 = vdwg.mxu0
    %v2111 = vmax.f32 %v2020, %v2103
    %v2112 = vmax.f32 %v2025, %v2108
    %v2113 = vld [vmem:[%s19] sm:$0xff]
    %v2114 = vld [vmem:[%s19 + $0x8] sm:$0xff]
    %v2115 = vld [vmem:[%s19 + $0x10] sm:$0xff]
    %v2116 = vld [vmem:[%s19 + $0x18] sm:$0xff]
    %v2117 = vld [vmem:[%s19 + $0x20] sm:$0xff]
    %v2118 = vld [vmem:[%s19 + $0x28] sm:$0xff]
    %v2119 = vld [vmem:[%s19 + $0x30] sm:$0xff]
    %v2120 = vld [vmem:[%s19 + $0x38] sm:$0xff]
    %v2121 = vld [vmem:[%s19 + $0x40] sm:$0xff]
    %v2122 = vld [vmem:[%s19 + $0x48] sm:$0xff]
    %v2123 = vld [vmem:[%s19 + $0x50] sm:$0xff]
    %v2124 = vld [vmem:[%s19 + $0x58] sm:$0xff]
    %v2125 = vld [vmem:[%s19 + $0x60] sm:$0xff]
    %v2126 = vld [vmem:[%s19 + $0x68] sm:$0xff]
    %v2127 = vld [vmem:[%s19 + $0x70] sm:$0xff]
    %v2128 = vld [vmem:[%s19 + $0x78] sm:$0xff]
    %2129 = vmatprep.subr.mxu0 0.0
    %2130 = vmatpush1.msra.mxu0 %v2128
    %2131 = vmatprep.subr.mxu0 0.0
    %2132 = vmatpush1.msra.mxu0 %v2127
    %2133 = vmatprep.subr.mxu0 0.0
    %2134 = vmatpush1.msra.mxu0 %v2126
    %2135 = vmatprep.subr.mxu0 0.0
    %2136 = vmatpush1.msra.mxu0 %v2125
    %2137 = vmatprep.subr.mxu0 0.0
    %2138 = vmatpush1.msra.mxu0 %v2124
    %2139 = vmatprep.subr.mxu0 0.0
    %2140 = vmatpush1.msra.mxu0 %v2123
    %2141 = vmatprep.subr.mxu0 0.0
    %2142 = vmatpush1.msra.mxu0 %v2122
    %2143 = vmatprep.subr.mxu0 0.0
    %2144 = vmatpush1.msra.mxu0 %v2121
    %2145 = vmatprep.subr.mxu0 0.0
    %2146 = vmatpush1.msra.mxu0 %v2120
    %2147 = vmatprep.subr.mxu0 0.0
    %2148 = vmatpush1.msra.mxu0 %v2119
    %2149 = vmatprep.subr.mxu0 0.0
    %2150 = vmatpush1.msra.mxu0 %v2118
    %2151 = vmatprep.subr.mxu0 0.0
    %2152 = vmatpush1.msra.mxu0 %v2117
    %2153 = vmatprep.subr.mxu0 0.0
    %2154 = vmatpush1.msra.mxu0 %v2116
    %2155 = vmatprep.subr.mxu0 0.0
    %2156 = vmatpush1.msra.mxu0 %v2115
    %2157 = vmatprep.subr.mxu0 0.0
    %2158 = vmatpush1.msra.mxu0 %v2114
    %2159 = vmatprep.subr.mxu0 0.0
    %2160 = vmatpush1.msra.mxu0 %v2113
    %2161 = vmatprep.subr.mxu0 0.0
    %2162 = vmatpush2.msra.mxu0 0.0
    %2163 = vmatprep.subr.mxu0 0.0
    %2164 = vmatpush2.msra.mxu0 0.0
    %2165 = vmatprep.subr.mxu0 0.0
    %2166 = vmatpush2.msra.mxu0 0.0
    %2167 = vmatprep.subr.mxu0 0.0
    %2168 = vmatpush2.msra.mxu0 0.0
    %2169 = vmatprep.subr.mxu0 0.0
    %2170 = vmatpush2.msra.mxu0 0.0
    %2171 = vmatprep.subr.mxu0 0.0
    %2172 = vmatpush2.msra.mxu0 0.0
    %2173 = vmatprep.subr.mxu0 0.0
    %2174 = vmatpush2.msra.mxu0 0.0
    %2175 = vmatprep.subr.mxu0 0.0
    %2176 = vmatpush2.msra.mxu0 0.0
    %2177 = vmatprep.subr.mxu0 0.0
    %2178 = vmatpush2.msra.mxu0 0.0
    %2179 = vmatprep.subr.mxu0 0.0
    %2180 = vmatpush2.msra.mxu0 0.0
    %2181 = vmatprep.subr.mxu0 0.0
    %2182 = vmatpush2.msra.mxu0 0.0
    %2183 = vmatprep.subr.mxu0 0.0
    %2184 = vmatpush2.msra.mxu0 0.0
    %2185 = vmatprep.subr.mxu0 0.0
    %2186 = vmatpush2.msra.mxu0 0.0
    %2187 = vmatprep.subr.mxu0 0.0
    %2188 = vmatpush2.msra.mxu0 0.0
    %2189 = vmatprep.subr.mxu0 0.0
    %2190 = vmatpush2.msra.mxu0 0.0
    %2191 = vmatprep.subr.mxu0 0.0
    %2192 = vmatpush2.msra.mxu0 0.0
    %2193 = vmatprep.mubr.f32.mxu0 0.0
    %2194 = vmatmul.mubr.f32.gmra.mxu0 %v2111
    %v2195 = vpop.f32.mrf.mxu0
    %v2196 = vadd.f32 0.0, %v2195
    %v2197 = vpop.f32.mrf.mxu0
    %2198 = vmatprep.mubr.f32.mxu0 0.0
    %2199 = vmatmul.mubr.f32.gmra.mxu0 %v2112
    %v2200 = vpop.f32.mrf.mxu0
    %v2201 = vadd.f32 0.0, %v2200
    %v2202 = vpop.f32.mrf.mxu0
    %2203 = vdwg.mxu0
    %v2204 = vld [vmem:[%s21] sm:$0xff]
    %v2205 = vld [vmem:[%s21 + $0x8] sm:$0xff]
    %v2206 = vld [vmem:[%s21 + $0x10] sm:$0xff]
    %v2207 = vld [vmem:[%s21 + $0x18] sm:$0xff]
    %v2208 = vld [vmem:[%s21 + $0x20] sm:$0xff]
    %v2209 = vld [vmem:[%s21 + $0x28] sm:$0xff]
    %v2210 = vld [vmem:[%s21 + $0x30] sm:$0xff]
    %v2211 = vld [vmem:[%s21 + $0x38] sm:$0xff]
    %v2212 = vld [vmem:[%s21 + $0x40] sm:$0xff]
    %v2213 = vld [vmem:[%s21 + $0x48] sm:$0xff]
    %v2214 = vld [vmem:[%s21 + $0x50] sm:$0xff]
    %v2215 = vld [vmem:[%s21 + $0x58] sm:$0xff]
    %v2216 = vld [vmem:[%s21 + $0x60] sm:$0xff]
    %v2217 = vld [vmem:[%s21 + $0x68] sm:$0xff]
    %v2218 = vld [vmem:[%s21 + $0x70] sm:$0xff]
    %v2219 = vld [vmem:[%s21 + $0x78] sm:$0xff]
    %2220 = vmatprep.subr.mxu0 0.0
    %2221 = vmatpush1.msra.mxu0 %v2219
    %2222 = vmatprep.subr.mxu0 0.0
    %2223 = vmatpush1.msra.mxu0 %v2218
    %2224 = vmatprep.subr.mxu0 0.0
    %2225 = vmatpush1.msra.mxu0 %v2217
    %2226 = vmatprep.subr.mxu0 0.0
    %2227 = vmatpush1.msra.mxu0 %v2216
    %2228 = vmatprep.subr.mxu0 0.0
    %2229 = vmatpush1.msra.mxu0 %v2215
    %2230 = vmatprep.subr.mxu0 0.0
    %2231 = vmatpush1.msra.mxu0 %v2214
    %2232 = vmatprep.subr.mxu0 0.0
    %2233 = vmatpush1.msra.mxu0 %v2213
    %2234 = vmatprep.subr.mxu0 0.0
    %2235 = vmatpush1.msra.mxu0 %v2212
    %2236 = vmatprep.subr.mxu0 0.0
    %2237 = vmatpush1.msra.mxu0 %v2211
    %2238 = vmatprep.subr.mxu0 0.0
    %2239 = vmatpush1.msra.mxu0 %v2210
    %2240 = vmatprep.subr.mxu0 0.0
    %2241 = vmatpush1.msra.mxu0 %v2209
    %2242 = vmatprep.subr.mxu0 0.0
    %2243 = vmatpush1.msra.mxu0 %v2208
    %2244 = vmatprep.subr.mxu0 0.0
    %2245 = vmatpush1.msra.mxu0 %v2207
    %2246 = vmatprep.subr.mxu0 0.0
    %2247 = vmatpush1.msra.mxu0 %v2206
    %2248 = vmatprep.subr.mxu0 0.0
    %2249 = vmatpush1.msra.mxu0 %v2205
    %2250 = vmatprep.subr.mxu0 0.0
    %2251 = vmatpush1.msra.mxu0 %v2204
    %2252 = vmatprep.subr.mxu0 0.0
    %2253 = vmatpush2.msra.mxu0 0.0
    %2254 = vmatprep.subr.mxu0 0.0
    %2255 = vmatpush2.msra.mxu0 0.0
    %2256 = vmatprep.subr.mxu0 0.0
    %2257 = vmatpush2.msra.mxu0 0.0
    %2258 = vmatprep.subr.mxu0 0.0
    %2259 = vmatpush2.msra.mxu0 0.0
    %2260 = vmatprep.subr.mxu0 0.0
    %2261 = vmatpush2.msra.mxu0 0.0
    %2262 = vmatprep.subr.mxu0 0.0
    %2263 = vmatpush2.msra.mxu0 0.0
    %2264 = vmatprep.subr.mxu0 0.0
    %2265 = vmatpush2.msra.mxu0 0.0
    %2266 = vmatprep.subr.mxu0 0.0
    %2267 = vmatpush2.msra.mxu0 0.0
    %2268 = vmatprep.subr.mxu0 0.0
    %2269 = vmatpush2.msra.mxu0 0.0
    %2270 = vmatprep.subr.mxu0 0.0
    %2271 = vmatpush2.msra.mxu0 0.0
    %2272 = vmatprep.subr.mxu0 0.0
    %2273 = vmatpush2.msra.mxu0 0.0
    %2274 = vmatprep.subr.mxu0 0.0
    %2275 = vmatpush2.msra.mxu0 0.0
    %2276 = vmatprep.subr.mxu0 0.0
    %2277 = vmatpush2.msra.mxu0 0.0
    %2278 = vmatprep.subr.mxu0 0.0
    %2279 = vmatpush2.msra.mxu0 0.0
    %2280 = vmatprep.subr.mxu0 0.0
    %2281 = vmatpush2.msra.mxu0 0.0
    %2282 = vmatprep.subr.mxu0 0.0
    %2283 = vmatpush2.msra.mxu0 0.0
    %2284 = vmatprep.mubr.f32.mxu0 0.0
    %2285 = vmatmul.mubr.f32.gmra.mxu0 %v2111
    %v2286 = vpop.f32.mrf.mxu0
    %v2287 = vadd.f32 0.0, %v2286
    %v2288 = vpop.f32.mrf.mxu0
    %2289 = vmatprep.mubr.f32.mxu0 0.0
    %2290 = vmatmul.mubr.f32.gmra.mxu0 %v2112
    %v2291 = vpop.f32.mrf.mxu0
    %v2292 = vadd.f32 0.0, %v2291
    %v2293 = vpop.f32.mrf.mxu0
    %2294 = vdwg.mxu0
    %v2295 = vmax.f32 %v2196, %v2287
    %v2296 = vmax.f32 %v2201, %v2292
    %v2297 = vld [vmem:[%s91] sm:$0xff]
    %v2298 = vld [vmem:[%s91 + $0x8] sm:$0xff]
    %vm2299 = vcmask 130048
    %v2301 = vsel %vm2299, %v2297, 0
    %v2304 = vsel %vm2299, %v2298, 0
    %2306 = vmatprep.subr.mxu0 0.0
    %2307 = vmatpush1.msra.mxu0 0.0
    %2308 = vmatprep.subr.mxu0 0.0
    %2309 = vmatpush1.msra.mxu0 0.0
    %2310 = vmatprep.subr.mxu0 0.0
    %2311 = vmatpush1.msra.mxu0 0.0
    %2312 = vmatprep.subr.mxu0 0.0
    %2313 = vmatpush1.msra.mxu0 0.0
    %2314 = vmatprep.subr.mxu0 0.0
    %2315 = vmatpush1.msra.mxu0 0.0
    %2316 = vmatprep.subr.mxu0 0.0
    %2317 = vmatpush1.msra.mxu0 0.0
    %2318 = vmatprep.subr.mxu0 0.0
    %2319 = vmatpush1.msra.mxu0 0.0
    %2320 = vmatprep.subr.mxu0 0.0
    %2321 = vmatpush1.msra.mxu0 0.0
    %2322 = vmatprep.subr.mxu0 0.0
    %2323 = vmatpush1.msra.mxu0 0.0
    %2324 = vmatprep.subr.mxu0 0.0
    %2325 = vmatpush1.msra.mxu0 0.0
    %2326 = vmatprep.subr.mxu0 0.0
    %2327 = vmatpush1.msra.mxu0 0.0
    %2328 = vmatprep.subr.mxu0 0.0
    %2329 = vmatpush1.msra.mxu0 0.0
    %2330 = vmatprep.subr.mxu0 0.0
    %2331 = vmatpush1.msra.mxu0 0.0
    %2332 = vmatprep.subr.mxu0 0.0
    %2333 = vmatpush1.msra.mxu0 0.0
    %2334 = vmatprep.subr.mxu0 0.0
    %2335 = vmatpush1.msra.mxu0 %v2296
    %2336 = vmatprep.subr.mxu0 0.0
    %2337 = vmatpush1.msra.mxu0 %v2295
    %2338 = vmatprep.subr.mxu0 0.0
    %2339 = vmatpush2.msra.mxu0 0.0
    %2340 = vmatprep.subr.mxu0 0.0
    %2341 = vmatpush2.msra.mxu0 0.0
    %2342 = vmatprep.subr.mxu0 0.0
    %2343 = vmatpush2.msra.mxu0 0.0
    %2344 = vmatprep.subr.mxu0 0.0
    %2345 = vmatpush2.msra.mxu0 0.0
    %2346 = vmatprep.subr.mxu0 0.0
    %2347 = vmatpush2.msra.mxu0 0.0
    %2348 = vmatprep.subr.mxu0 0.0
    %2349 = vmatpush2.msra.mxu0 0.0
    %2350 = vmatprep.subr.mxu0 0.0
    %2351 = vmatpush2.msra.mxu0 0.0
    %2352 = vmatprep.subr.mxu0 0.0
    %2353 = vmatpush2.msra.mxu0 0.0
    %2354 = vmatprep.subr.mxu0 0.0
    %2355 = vmatpush2.msra.mxu0 0.0
    %2356 = vmatprep.subr.mxu0 0.0
    %2357 = vmatpush2.msra.mxu0 0.0
    %2358 = vmatprep.subr.mxu0 0.0
    %2359 = vmatpush2.msra.mxu0 0.0
    %2360 = vmatprep.subr.mxu0 0.0
    %2361 = vmatpush2.msra.mxu0 0.0
    %2362 = vmatprep.subr.mxu0 0.0
    %2363 = vmatpush2.msra.mxu0 0.0
    %2364 = vmatprep.subr.mxu0 0.0
    %2365 = vmatpush2.msra.mxu0 0.0
    %2366 = vmatprep.subr.mxu0 0.0
    %2367 = vmatpush2.msra.mxu0 0.0
    %2368 = vmatprep.subr.mxu0 0.0
    %2369 = vmatpush2.msra.mxu0 0.0
    %2370 = vmatprep.mubr.f32.mxu0 0.0
    %2371 = vmatmul.mubr.f32.gmra.mxu0 %v2301
    %v2372 = vpop.f32.mrf.mxu0
    %v2373 = vadd.f32 0.0, %v2372
    %v2374 = vpop.f32.mrf.mxu0
    %2375 = vmatprep.mubr.f32.mxu0 0.0
    %2376 = vmatmul.mubr.f32.gmra.mxu0 %v2304
    %v2377 = vpop.f32.mrf.mxu0
    %v2378 = vadd.f32 0.0, %v2377
    %v2379 = vpop.f32.mrf.mxu0
    %2380 = vdwg.mxu0
    %v2381 = vld [vmem:[%s93] sm:$0xff]
    %v2382 = vld [vmem:[%s93 + $0x8] sm:$0xff]
    %v2384 = vsel %vm2299, %v2381, 0
    %v2387 = vsel %vm2299, %v2382, 0
    %2389 = vmatprep.subr.mxu0 0.0
    %2390 = vmatpush1.msra.mxu0 0.0
    %2391 = vmatprep.subr.mxu0 0.0
    %2392 = vmatpush1.msra.mxu0 0.0
    %2393 = vmatprep.subr.mxu0 0.0
    %2394 = vmatpush1.msra.mxu0 0.0
    %2395 = vmatprep.subr.mxu0 0.0
    %2396 = vmatpush1.msra.mxu0 0.0
    %2397 = vmatprep.subr.mxu0 0.0
    %2398 = vmatpush1.msra.mxu0 0.0
    %2399 = vmatprep.subr.mxu0 0.0
    %2400 = vmatpush1.msra.mxu0 0.0
    %2401 = vmatprep.subr.mxu0 0.0
    %2402 = vmatpush1.msra.mxu0 0.0
    %2403 = vmatprep.subr.mxu0 0.0
    %2404 = vmatpush1.msra.mxu0 0.0
    %2405 = vmatprep.subr.mxu0 0.0
    %2406 = vmatpush1.msra.mxu0 0.0
    %2407 = vmatprep.subr.mxu0 0.0
    %2408 = vmatpush1.msra.mxu0 0.0
    %2409 = vmatprep.subr.mxu0 0.0
    %2410 = vmatpush1.msra.mxu0 0.0
    %2411 = vmatprep.subr.mxu0 0.0
    %2412 = vmatpush1.msra.mxu0 0.0
    %2413 = vmatprep.subr.mxu0 0.0
    %2414 = vmatpush1.msra.mxu0 0.0
    %2415 = vmatprep.subr.mxu0 0.0
    %2416 = vmatpush1.msra.mxu0 0.0
    %2417 = vmatprep.subr.mxu0 0.0
    %2418 = vmatpush1.msra.mxu0 %v2296
    %2419 = vmatprep.subr.mxu0 0.0
    %2420 = vmatpush1.msra.mxu0 %v2295
    %2421 = vmatprep.subr.mxu0 0.0
    %2422 = vmatpush2.msra.mxu0 0.0
    %2423 = vmatprep.subr.mxu0 0.0
    %2424 = vmatpush2.msra.mxu0 0.0
    %2425 = vmatprep.subr.mxu0 0.0
    %2426 = vmatpush2.msra.mxu0 0.0
    %2427 = vmatprep.subr.mxu0 0.0
    %2428 = vmatpush2.msra.mxu0 0.0
    %2429 = vmatprep.subr.mxu0 0.0
    %2430 = vmatpush2.msra.mxu0 0.0
    %2431 = vmatprep.subr.mxu0 0.0
    %2432 = vmatpush2.msra.mxu0 0.0
    %2433 = vmatprep.subr.mxu0 0.0
    %2434 = vmatpush2.msra.mxu0 0.0
    %2435 = vmatprep.subr.mxu0 0.0
    %2436 = vmatpush2.msra.mxu0 0.0
    %2437 = vmatprep.subr.mxu0 0.0
    %2438 = vmatpush2.msra.mxu0 0.0
    %2439 = vmatprep.subr.mxu0 0.0
    %2440 = vmatpush2.msra.mxu0 0.0
    %2441 = vmatprep.subr.mxu0 0.0
    %2442 = vmatpush2.msra.mxu0 0.0
    %2443 = vmatprep.subr.mxu0 0.0
    %2444 = vmatpush2.msra.mxu0 0.0
    %2445 = vmatprep.subr.mxu0 0.0
    %2446 = vmatpush2.msra.mxu0 0.0
    %2447 = vmatprep.subr.mxu0 0.0
    %2448 = vmatpush2.msra.mxu0 0.0
    %2449 = vmatprep.subr.mxu0 0.0
    %2450 = vmatpush2.msra.mxu0 0.0
    %2451 = vmatprep.subr.mxu0 0.0
    %2452 = vmatpush2.msra.mxu0 0.0
    %2453 = vmatprep.mubr.f32.mxu0 0.0
    %2454 = vmatmul.mubr.f32.gmra.mxu0 %v2384
    %v2455 = vpop.f32.mrf.mxu0
    %v2456 = vadd.f32 0.0, %v2455
    %v2457 = vpop.f32.mrf.mxu0
    %2458 = vmatprep.mubr.f32.mxu0 0.0
    %2459 = vmatmul.mubr.f32.gmra.mxu0 %v2387
    %v2460 = vpop.f32.mrf.mxu0
    %v2461 = vadd.f32 0.0, %v2460
    %v2462 = vpop.f32.mrf.mxu0
    %2463 = vdwg.mxu0
    %v2464 = vld [vmem:[%s13] sm:$0xff]
    %v2465 = vld [vmem:[%s13 + $0x8] sm:$0xff]
    %v2466 = vld [vmem:[%s13 + $0x10] sm:$0xff]
    %v2467 = vld [vmem:[%s13 + $0x18] sm:$0xff]
    %v2468 = vld [vmem:[%s13 + $0x20] sm:$0xff]
    %v2469 = vld [vmem:[%s13 + $0x28] sm:$0xff]
    %v2470 = vld [vmem:[%s13 + $0x30] sm:$0xff]
    %v2471 = vld [vmem:[%s13 + $0x38] sm:$0xff]
    %v2472 = vld [vmem:[%s13 + $0x40] sm:$0xff]
    %v2473 = vld [vmem:[%s13 + $0x48] sm:$0xff]
    %v2474 = vld [vmem:[%s13 + $0x50] sm:$0xff]
    %v2475 = vld [vmem:[%s13 + $0x58] sm:$0xff]
    %v2476 = vld [vmem:[%s13 + $0x60] sm:$0xff]
    %v2477 = vld [vmem:[%s13 + $0x68] sm:$0xff]
    %v2478 = vld [vmem:[%s13 + $0x70] sm:$0xff]
    %v2479 = vld [vmem:[%s13 + $0x78] sm:$0xff]
    %vm2480 = vcmask 523264
    %v2482 = vsel %vm2480, %v2295, 0
    %v2485 = vsel %vm2480, %v2296, 0
    %2487 = vmatprep.subr.mxu0 0.0
    %2488 = vmatpush1.msra.mxu0 0.0
    %2489 = vmatprep.subr.mxu0 0.0
    %2490 = vmatpush1.msra.mxu0 0.0
    %2491 = vmatprep.subr.mxu0 0.0
    %2492 = vmatpush1.msra.mxu0 0.0
    %2493 = vmatprep.subr.mxu0 0.0
    %2494 = vmatpush1.msra.mxu0 0.0
    %2495 = vmatprep.subr.mxu0 0.0
    %2496 = vmatpush1.msra.mxu0 0.0
    %2497 = vmatprep.subr.mxu0 0.0
    %2498 = vmatpush1.msra.mxu0 0.0
    %2499 = vmatprep.subr.mxu0 0.0
    %2500 = vmatpush1.msra.mxu0 0.0
    %2501 = vmatprep.subr.mxu0 0.0
    %2502 = vmatpush1.msra.mxu0 0.0
    %2503 = vmatprep.subr.mxu0 0.0
    %2504 = vmatpush1.msra.mxu0 %v2479
    %2505 = vmatprep.subr.mxu0 0.0
    %2506 = vmatpush1.msra.mxu0 %v2478
    %2507 = vmatprep.subr.mxu0 0.0
    %2508 = vmatpush1.msra.mxu0 %v2477
    %2509 = vmatprep.subr.mxu0 0.0
    %2510 = vmatpush1.msra.mxu0 %v2476
    %2511 = vmatprep.subr.mxu0 0.0
    %2512 = vmatpush1.msra.mxu0 %v2475
    %2513 = vmatprep.subr.mxu0 0.0
    %2514 = vmatpush1.msra.mxu0 %v2474
    %2515 = vmatprep.subr.mxu0 0.0
    %2516 = vmatpush1.msra.mxu0 %v2473
    %2517 = vmatprep.subr.mxu0 0.0
    %2518 = vmatpush1.msra.mxu0 %v2472
    %2519 = vmatprep.subr.mxu0 0.0
    %2520 = vmatpush2.msra.mxu0 0.0
    %2521 = vmatprep.subr.mxu0 0.0
    %2522 = vmatpush2.msra.mxu0 0.0
    %2523 = vmatprep.subr.mxu0 0.0
    %2524 = vmatpush2.msra.mxu0 0.0
    %2525 = vmatprep.subr.mxu0 0.0
    %2526 = vmatpush2.msra.mxu0 0.0
    %2527 = vmatprep.subr.mxu0 0.0
    %2528 = vmatpush2.msra.mxu0 0.0
    %2529 = vmatprep.subr.mxu0 0.0
    %2530 = vmatpush2.msra.mxu0 0.0
    %2531 = vmatprep.subr.mxu0 0.0
    %2532 = vmatpush2.msra.mxu0 0.0
    %2533 = vmatprep.subr.mxu0 0.0
    %2534 = vmatpush2.msra.mxu0 0.0
    %2535 = vmatprep.subr.mxu0 0.0
    %2536 = vmatpush2.msra.mxu0 0.0
    %2537 = vmatprep.subr.mxu0 0.0
    %2538 = vmatpush2.msra.mxu0 0.0
    %2539 = vmatprep.subr.mxu0 0.0
    %2540 = vmatpush2.msra.mxu0 0.0
    %2541 = vmatprep.subr.mxu0 0.0
    %2542 = vmatpush2.msra.mxu0 0.0
    %2543 = vmatprep.subr.mxu0 0.0
    %2544 = vmatpush2.msra.mxu0 0.0
    %2545 = vmatprep.subr.mxu0 0.0
    %2546 = vmatpush2.msra.mxu0 0.0
    %2547 = vmatprep.subr.mxu0 0.0
    %2548 = vmatpush2.msra.mxu0 0.0
    %2549 = vmatprep.subr.mxu0 0.0
    %2550 = vmatpush2.msra.mxu0 0.0
    %2551 = vmatprep.mubr.f32.mxu0 0.0
    %2552 = vmatmul.mubr.f32.gmra.mxu0 %v2482
    %v2553 = vpop.f32.mrf.mxu0
    %v2554 = vadd.f32 0.0, %v2553
    %v2555 = vpop.f32.mrf.mxu0
    %2556 = vmatprep.mubr.f32.mxu0 0.0
    %2557 = vmatmul.mubr.f32.gmra.mxu0 %v2485
    %v2558 = vpop.f32.mrf.mxu0
    %v2559 = vadd.f32 0.0, %v2558
    %v2560 = vpop.f32.mrf.mxu0
    %2561 = vdwg.mxu0
    %v2563 = vsel %vm2480, %v2373, 0
    %v2566 = vsel %vm2480, %v2378, 0
    %2568 = vmatprep.subr.mxu0 0.0
    %2569 = vmatpush1.msra.mxu0 0.0
    %2570 = vmatprep.subr.mxu0 0.0
    %2571 = vmatpush1.msra.mxu0 0.0
    %2572 = vmatprep.subr.mxu0 0.0
    %2573 = vmatpush1.msra.mxu0 0.0
    %2574 = vmatprep.subr.mxu0 0.0
    %2575 = vmatpush1.msra.mxu0 0.0
    %2576 = vmatprep.subr.mxu0 0.0
    %2577 = vmatpush1.msra.mxu0 0.0
    %2578 = vmatprep.subr.mxu0 0.0
    %2579 = vmatpush1.msra.mxu0 0.0
    %2580 = vmatprep.subr.mxu0 0.0
    %2581 = vmatpush1.msra.mxu0 0.0
    %2582 = vmatprep.subr.mxu0 0.0
    %2583 = vmatpush1.msra.mxu0 0.0
    %2584 = vmatprep.subr.mxu0 0.0
    %2585 = vmatpush1.msra.mxu0 %v2471
    %2586 = vmatprep.subr.mxu0 0.0
    %2587 = vmatpush1.msra.mxu0 %v2470
    %2588 = vmatprep.subr.mxu0 0.0
    %2589 = vmatpush1.msra.mxu0 %v2469
    %2590 = vmatprep.subr.mxu0 0.0
    %2591 = vmatpush1.msra.mxu0 %v2468
    %2592 = vmatprep.subr.mxu0 0.0
    %2593 = vmatpush1.msra.mxu0 %v2467
    %2594 = vmatprep.subr.mxu0 0.0
    %2595 = vmatpush1.msra.mxu0 %v2466
    %2596 = vmatprep.subr.mxu0 0.0
    %2597 = vmatpush1.msra.mxu0 %v2465
    %2598 = vmatprep.subr.mxu0 0.0
    %2599 = vmatpush1.msra.mxu0 %v2464
    %2600 = vmatprep.subr.mxu0 0.0
    %2601 = vmatpush2.msra.mxu0 0.0
    %2602 = vmatprep.subr.mxu0 0.0
    %2603 = vmatpush2.msra.mxu0 0.0
    %2604 = vmatprep.subr.mxu0 0.0
    %2605 = vmatpush2.msra.mxu0 0.0
    %2606 = vmatprep.subr.mxu0 0.0
    %2607 = vmatpush2.msra.mxu0 0.0
    %2608 = vmatprep.subr.mxu0 0.0
    %2609 = vmatpush2.msra.mxu0 0.0
    %2610 = vmatprep.subr.mxu0 0.0
    %2611 = vmatpush2.msra.mxu0 0.0
    %2612 = vmatprep.subr.mxu0 0.0
    %2613 = vmatpush2.msra.mxu0 0.0
    %2614 = vmatprep.subr.mxu0 0.0
    %2615 = vmatpush2.msra.mxu0 0.0
    %2616 = vmatprep.subr.mxu0 0.0
    %2617 = vmatpush2.msra.mxu0 0.0
    %2618 = vmatprep.subr.mxu0 0.0
    %2619 = vmatpush2.msra.mxu0 0.0
    %2620 = vmatprep.subr.mxu0 0.0
    %2621 = vmatpush2.msra.mxu0 0.0
    %2622 = vmatprep.subr.mxu0 0.0
    %2623 = vmatpush2.msra.mxu0 0.0
    %2624 = vmatprep.subr.mxu0 0.0
    %2625 = vmatpush2.msra.mxu0 0.0
    %2626 = vmatprep.subr.mxu0 0.0
    %2627 = vmatpush2.msra.mxu0 0.0
    %2628 = vmatprep.subr.mxu0 0.0
    %2629 = vmatpush2.msra.mxu0 0.0
    %2630 = vmatprep.subr.mxu0 0.0
    %2631 = vmatpush2.msra.mxu0 0.0
    %2632 = vmatprep.mubr.f32.mxu0 0.0
    %2633 = vmatmul.mubr.f32.gmra.mxu0 %v2563
    %v2634 = vpop.f32.mrf.mxu0
    %v2635 = vadd.f32 %v2554, %v2634
    %v2636 = vpop.f32.mrf.mxu0
    %2637 = vmatprep.mubr.f32.mxu0 0.0
    %2638 = vmatmul.mubr.f32.gmra.mxu0 %v2566
    %v2639 = vpop.f32.mrf.mxu0
    %v2640 = vadd.f32 %v2559, %v2639
    %v2641 = vpop.f32.mrf.mxu0
    %2642 = vdwg.mxu0
    %v2643 = vld [vmem:[%s13 + $0x80] sm:$0xff]
    %v2644 = vld [vmem:[%s13 + $0x88] sm:$0xff]
    %v2645 = vld [vmem:[%s13 + $0x90] sm:$0xff]
    %v2646 = vld [vmem:[%s13 + $0x98] sm:$0xff]
    %v2647 = vld [vmem:[%s13 + $0xa0] sm:$0xff]
    %v2648 = vld [vmem:[%s13 + $0xa8] sm:$0xff]
    %v2649 = vld [vmem:[%s13 + $0xb0] sm:$0xff]
    %v2650 = vld [vmem:[%s13 + $0xb8] sm:$0xff]
    %v2652 = vsel %vm2480, %v2456, 0
    %v2655 = vsel %vm2480, %v2461, 0
    %2657 = vmatprep.subr.mxu0 0.0
    %2658 = vmatpush1.msra.mxu0 0.0
    %2659 = vmatprep.subr.mxu0 0.0
    %2660 = vmatpush1.msra.mxu0 0.0
    %2661 = vmatprep.subr.mxu0 0.0
    %2662 = vmatpush1.msra.mxu0 0.0
    %2663 = vmatprep.subr.mxu0 0.0
    %2664 = vmatpush1.msra.mxu0 0.0
    %2665 = vmatprep.subr.mxu0 0.0
    %2666 = vmatpush1.msra.mxu0 0.0
    %2667 = vmatprep.subr.mxu0 0.0
    %2668 = vmatpush1.msra.mxu0 0.0
    %2669 = vmatprep.subr.mxu0 0.0
    %2670 = vmatpush1.msra.mxu0 0.0
    %2671 = vmatprep.subr.mxu0 0.0
    %2672 = vmatpush1.msra.mxu0 0.0
    %2673 = vmatprep.subr.mxu0 0.0
    %2674 = vmatpush1.msra.mxu0 %v2650
    %2675 = vmatprep.subr.mxu0 0.0
    %2676 = vmatpush1.msra.mxu0 %v2649
    %2677 = vmatprep.subr.mxu0 0.0
    %2678 = vmatpush1.msra.mxu0 %v2648
    %2679 = vmatprep.subr.mxu0 0.0
    %2680 = vmatpush1.msra.mxu0 %v2647
    %2681 = vmatprep.subr.mxu0 0.0
    %2682 = vmatpush1.msra.mxu0 %v2646
    %2683 = vmatprep.subr.mxu0 0.0
    %2684 = vmatpush1.msra.mxu0 %v2645
    %2685 = vmatprep.subr.mxu0 0.0
    %2686 = vmatpush1.msra.mxu0 %v2644
    %2687 = vmatprep.subr.mxu0 0.0
    %2688 = vmatpush1.msra.mxu0 %v2643
    %2689 = vmatprep.subr.mxu0 0.0
    %2690 = vmatpush2.msra.mxu0 0.0
    %2691 = vmatprep.subr.mxu0 0.0
    %2692 = vmatpush2.msra.mxu0 0.0
    %2693 = vmatprep.subr.mxu0 0.0
    %2694 = vmatpush2.msra.mxu0 0.0
    %2695 = vmatprep.subr.mxu0 0.0
    %2696 = vmatpush2.msra.mxu0 0.0
    %2697 = vmatprep.subr.mxu0 0.0
    %2698 = vmatpush2.msra.mxu0 0.0
    %2699 = vmatprep.subr.mxu0 0.0
    %2700 = vmatpush2.msra.mxu0 0.0
    %2701 = vmatprep.subr.mxu0 0.0
    %2702 = vmatpush2.msra.mxu0 0.0
    %2703 = vmatprep.subr.mxu0 0.0
    %2704 = vmatpush2.msra.mxu0 0.0
    %2705 = vmatprep.subr.mxu0 0.0
    %2706 = vmatpush2.msra.mxu0 0.0
    %2707 = vmatprep.subr.mxu0 0.0
    %2708 = vmatpush2.msra.mxu0 0.0
    %2709 = vmatprep.subr.mxu0 0.0
    %2710 = vmatpush2.msra.mxu0 0.0
    %2711 = vmatprep.subr.mxu0 0.0
    %2712 = vmatpush2.msra.mxu0 0.0
    %2713 = vmatprep.subr.mxu0 0.0
    %2714 = vmatpush2.msra.mxu0 0.0
    %2715 = vmatprep.subr.mxu0 0.0
    %2716 = vmatpush2.msra.mxu0 0.0
    %2717 = vmatprep.subr.mxu0 0.0
    %2718 = vmatpush2.msra.mxu0 0.0
    %2719 = vmatprep.subr.mxu0 0.0
    %2720 = vmatpush2.msra.mxu0 0.0
    %2721 = vmatprep.mubr.f32.mxu0 0.0
    %2722 = vmatmul.mubr.f32.gmra.mxu0 %v2652
    %v2723 = vpop.f32.mrf.mxu0
    %v2724 = vadd.f32 0.0, %v2723
    %v2725 = vpop.f32.mrf.mxu0
    %2726 = vmatprep.mubr.f32.mxu0 0.0
    %2727 = vmatmul.mubr.f32.gmra.mxu0 %v2655
    %v2728 = vpop.f32.mrf.mxu0
    %v2729 = vadd.f32 0.0, %v2728
    %v2730 = vpop.f32.mrf.mxu0
    %2731 = vdwg.mxu0
    %v2732 = vadd.f32 %v2635, %v2724
    %v2733 = vadd.f32 %v2640, %v2729
    %v2734 = vld [vmem:[%s11] sm:$0x1]
    %v2736 = vlaneseq
    %v2737 = vshrl.u32 %v2736, 7
    %v2738 = vsub.s32 0, %v2737
    %v2739 = vrot.slane %v2734, %v2738
    %v2741 = vadd.f32 %v2732, %v2739
    %v2742 = vadd.f32 %v2733, %v2739
    %v2743 = vmul.f32 %v2741, 0.01
    %v2744 = vmul.f32 %v2742, 0.01
    %v2745 = vmax.f32 %v2741, %v2743
    %v2746 = vmax.f32 %v2742, %v2744
    %2747 = vmatprep.subr.mxu0 0.0
    %2748 = vmatpush1.msra.mxu0 0.0
    %2749 = vmatprep.subr.mxu0 0.0
    %2750 = vmatpush1.msra.mxu0 0.0
    %2751 = vmatprep.subr.mxu0 0.0
    %2752 = vmatpush1.msra.mxu0 0.0
    %2753 = vmatprep.subr.mxu0 0.0
    %2754 = vmatpush1.msra.mxu0 0.0
    %2755 = vmatprep.subr.mxu0 0.0
    %2756 = vmatpush1.msra.mxu0 0.0
    %2757 = vmatprep.subr.mxu0 0.0
    %2758 = vmatpush1.msra.mxu0 0.0
    %2759 = vmatprep.subr.mxu0 0.0
    %2760 = vmatpush1.msra.mxu0 0.0
    %2761 = vmatprep.subr.mxu0 0.0
    %2762 = vmatpush1.msra.mxu0 0.0
    %2763 = vmatprep.subr.mxu0 0.0
    %2764 = vmatpush1.msra.mxu0 0.0
    %2765 = vmatprep.subr.mxu0 0.0
    %2766 = vmatpush1.msra.mxu0 0.0
    %2767 = vmatprep.subr.mxu0 0.0
    %2768 = vmatpush1.msra.mxu0 0.0
    %2769 = vmatprep.subr.mxu0 0.0
    %2770 = vmatpush1.msra.mxu0 0.0
    %2771 = vmatprep.subr.mxu0 0.0
    %2772 = vmatpush1.msra.mxu0 0.0
    %2773 = vmatprep.subr.mxu0 0.0
    %2774 = vmatpush1.msra.mxu0 0.0
    %2775 = vmatprep.subr.mxu0 0.0
    %2776 = vmatpush1.msra.mxu0 %v2746
    %2777 = vmatprep.subr.mxu0 0.0
    %2778 = vmatpush1.msra.mxu0 %v2745
    %2779 = vmatprep.subr.mxu0 0.0
    %2780 = vmatpush2.msra.mxu0 0.0
    %2781 = vmatprep.subr.mxu0 0.0
    %2782 = vmatpush2.msra.mxu0 0.0
    %2783 = vmatprep.subr.mxu0 0.0
    %2784 = vmatpush2.msra.mxu0 0.0
    %2785 = vmatprep.subr.mxu0 0.0
    %2786 = vmatpush2.msra.mxu0 0.0
    %2787 = vmatprep.subr.mxu0 0.0
    %2788 = vmatpush2.msra.mxu0 0.0
    %2789 = vmatprep.subr.mxu0 0.0
    %2790 = vmatpush2.msra.mxu0 0.0
    %2791 = vmatprep.subr.mxu0 0.0
    %2792 = vmatpush2.msra.mxu0 0.0
    %2793 = vmatprep.subr.mxu0 0.0
    %2794 = vmatpush2.msra.mxu0 0.0
    %2795 = vmatprep.subr.mxu0 0.0
    %2796 = vmatpush2.msra.mxu0 0.0
    %2797 = vmatprep.subr.mxu0 0.0
    %2798 = vmatpush2.msra.mxu0 0.0
    %2799 = vmatprep.subr.mxu0 0.0
    %2800 = vmatpush2.msra.mxu0 0.0
    %2801 = vmatprep.subr.mxu0 0.0
    %2802 = vmatpush2.msra.mxu0 0.0
    %2803 = vmatprep.subr.mxu0 0.0
    %2804 = vmatpush2.msra.mxu0 0.0
    %2805 = vmatprep.subr.mxu0 0.0
    %2806 = vmatpush2.msra.mxu0 0.0
    %2807 = vmatprep.subr.mxu0 0.0
    %2808 = vmatpush2.msra.mxu0 0.0
    %2809 = vmatprep.subr.mxu0 0.0
    %2810 = vmatpush2.msra.mxu0 0.0
    %2811 = vmatprep.mubr.f32.mxu0 0.0
    %2812 = vmatmul.mubr.f32.gmra.mxu0 %v2301
    %v2813 = vpop.f32.mrf.mxu0
    %v2814 = vadd.f32 0.0, %v2813
    %v2815 = vpop.f32.mrf.mxu0
    %2816 = vmatprep.mubr.f32.mxu0 0.0
    %2817 = vmatmul.mubr.f32.gmra.mxu0 %v2304
    %v2818 = vpop.f32.mrf.mxu0
    %v2819 = vadd.f32 0.0, %v2818
    %v2820 = vpop.f32.mrf.mxu0
    %2821 = vdwg.mxu0
    %2822 = vmatprep.subr.mxu0 0.0
    %2823 = vmatpush1.msra.mxu0 0.0
    %2824 = vmatprep.subr.mxu0 0.0
    %2825 = vmatpush1.msra.mxu0 0.0
    %2826 = vmatprep.subr.mxu0 0.0
    %2827 = vmatpush1.msra.mxu0 0.0
    %2828 = vmatprep.subr.mxu0 0.0
    %2829 = vmatpush1.msra.mxu0 0.0
    %2830 = vmatprep.subr.mxu0 0.0
    %2831 = vmatpush1.msra.mxu0 0.0
    %2832 = vmatprep.subr.mxu0 0.0
    %2833 = vmatpush1.msra.mxu0 0.0
    %2834 = vmatprep.subr.mxu0 0.0
    %2835 = vmatpush1.msra.mxu0 0.0
    %2836 = vmatprep.subr.mxu0 0.0
    %2837 = vmatpush1.msra.mxu0 0.0
    %2838 = vmatprep.subr.mxu0 0.0
    %2839 = vmatpush1.msra.mxu0 0.0
    %2840 = vmatprep.subr.mxu0 0.0
    %2841 = vmatpush1.msra.mxu0 0.0
    %2842 = vmatprep.subr.mxu0 0.0
    %2843 = vmatpush1.msra.mxu0 0.0
    %2844 = vmatprep.subr.mxu0 0.0
    %2845 = vmatpush1.msra.mxu0 0.0
    %2846 = vmatprep.subr.mxu0 0.0
    %2847 = vmatpush1.msra.mxu0 0.0
    %2848 = vmatprep.subr.mxu0 0.0
    %2849 = vmatpush1.msra.mxu0 0.0
    %2850 = vmatprep.subr.mxu0 0.0
    %2851 = vmatpush1.msra.mxu0 %v2746
    %2852 = vmatprep.subr.mxu0 0.0
    %2853 = vmatpush1.msra.mxu0 %v2745
    %2854 = vmatprep.subr.mxu0 0.0
    %2855 = vmatpush2.msra.mxu0 0.0
    %2856 = vmatprep.subr.mxu0 0.0
    %2857 = vmatpush2.msra.mxu0 0.0
    %2858 = vmatprep.subr.mxu0 0.0
    %2859 = vmatpush2.msra.mxu0 0.0
    %2860 = vmatprep.subr.mxu0 0.0
    %2861 = vmatpush2.msra.mxu0 0.0
    %2862 = vmatprep.subr.mxu0 0.0
    %2863 = vmatpush2.msra.mxu0 0.0
    %2864 = vmatprep.subr.mxu0 0.0
    %2865 = vmatpush2.msra.mxu0 0.0
    %2866 = vmatprep.subr.mxu0 0.0
    %2867 = vmatpush2.msra.mxu0 0.0
    %2868 = vmatprep.subr.mxu0 0.0
    %2869 = vmatpush2.msra.mxu0 0.0
    %2870 = vmatprep.subr.mxu0 0.0
    %2871 = vmatpush2.msra.mxu0 0.0
    %2872 = vmatprep.subr.mxu0 0.0
    %2873 = vmatpush2.msra.mxu0 0.0
    %2874 = vmatprep.subr.mxu0 0.0
    %2875 = vmatpush2.msra.mxu0 0.0
    %2876 = vmatprep.subr.mxu0 0.0
    %2877 = vmatpush2.msra.mxu0 0.0
    %2878 = vmatprep.subr.mxu0 0.0
    %2879 = vmatpush2.msra.mxu0 0.0
    %2880 = vmatprep.subr.mxu0 0.0
    %2881 = vmatpush2.msra.mxu0 0.0
    %2882 = vmatprep.subr.mxu0 0.0
    %2883 = vmatpush2.msra.mxu0 0.0
    %2884 = vmatprep.subr.mxu0 0.0
    %2885 = vmatpush2.msra.mxu0 0.0
    %2886 = vmatprep.mubr.f32.mxu0 0.0
    %2887 = vmatmul.mubr.f32.gmra.mxu0 %v2384
    %v2888 = vpop.f32.mrf.mxu0
    %v2889 = vadd.f32 0.0, %v2888
    %v2890 = vpop.f32.mrf.mxu0
    %2891 = vmatprep.mubr.f32.mxu0 0.0
    %2892 = vmatmul.mubr.f32.gmra.mxu0 %v2387
    %v2893 = vpop.f32.mrf.mxu0
    %v2894 = vadd.f32 0.0, %v2893
    %v2895 = vpop.f32.mrf.mxu0
    %2896 = vdwg.mxu0
    %v2897 = vld [vmem:[%s17] sm:$0xff]
    %v2898 = vld [vmem:[%s17 + $0x8] sm:$0xff]
    %v2899 = vld [vmem:[%s17 + $0x10] sm:$0xff]
    %v2900 = vld [vmem:[%s17 + $0x18] sm:$0xff]
    %v2901 = vld [vmem:[%s17 + $0x20] sm:$0xff]
    %v2902 = vld [vmem:[%s17 + $0x28] sm:$0xff]
    %v2903 = vld [vmem:[%s17 + $0x30] sm:$0xff]
    %v2904 = vld [vmem:[%s17 + $0x38] sm:$0xff]
    %v2905 = vld [vmem:[%s17 + $0x40] sm:$0xff]
    %v2906 = vld [vmem:[%s17 + $0x48] sm:$0xff]
    %v2907 = vld [vmem:[%s17 + $0x50] sm:$0xff]
    %v2908 = vld [vmem:[%s17 + $0x58] sm:$0xff]
    %v2909 = vld [vmem:[%s17 + $0x60] sm:$0xff]
    %v2910 = vld [vmem:[%s17 + $0x68] sm:$0xff]
    %v2911 = vld [vmem:[%s17 + $0x70] sm:$0xff]
    %v2912 = vld [vmem:[%s17 + $0x78] sm:$0xff]
    %v2914 = vsel %vm2480, %v2745, 0
    %v2917 = vsel %vm2480, %v2746, 0
    %2919 = vmatprep.subr.mxu0 0.0
    %2920 = vmatpush1.msra.mxu0 0.0
    %2921 = vmatprep.subr.mxu0 0.0
    %2922 = vmatpush1.msra.mxu0 0.0
    %2923 = vmatprep.subr.mxu0 0.0
    %2924 = vmatpush1.msra.mxu0 0.0
    %2925 = vmatprep.subr.mxu0 0.0
    %2926 = vmatpush1.msra.mxu0 0.0
    %2927 = vmatprep.subr.mxu0 0.0
    %2928 = vmatpush1.msra.mxu0 0.0
    %2929 = vmatprep.subr.mxu0 0.0
    %2930 = vmatpush1.msra.mxu0 0.0
    %2931 = vmatprep.subr.mxu0 0.0
    %2932 = vmatpush1.msra.mxu0 0.0
    %2933 = vmatprep.subr.mxu0 0.0
    %2934 = vmatpush1.msra.mxu0 0.0
    %2935 = vmatprep.subr.mxu0 0.0
    %2936 = vmatpush1.msra.mxu0 %v2912
    %2937 = vmatprep.subr.mxu0 0.0
    %2938 = vmatpush1.msra.mxu0 %v2911
    %2939 = vmatprep.subr.mxu0 0.0
    %2940 = vmatpush1.msra.mxu0 %v2910
    %2941 = vmatprep.subr.mxu0 0.0
    %2942 = vmatpush1.msra.mxu0 %v2909
    %2943 = vmatprep.subr.mxu0 0.0
    %2944 = vmatpush1.msra.mxu0 %v2908
    %2945 = vmatprep.subr.mxu0 0.0
    %2946 = vmatpush1.msra.mxu0 %v2907
    %2947 = vmatprep.subr.mxu0 0.0
    %2948 = vmatpush1.msra.mxu0 %v2906
    %2949 = vmatprep.subr.mxu0 0.0
    %2950 = vmatpush1.msra.mxu0 %v2905
    %2951 = vmatprep.subr.mxu0 0.0
    %2952 = vmatpush2.msra.mxu0 0.0
    %2953 = vmatprep.subr.mxu0 0.0
    %2954 = vmatpush2.msra.mxu0 0.0
    %2955 = vmatprep.subr.mxu0 0.0
    %2956 = vmatpush2.msra.mxu0 0.0
    %2957 = vmatprep.subr.mxu0 0.0
    %2958 = vmatpush2.msra.mxu0 0.0
    %2959 = vmatprep.subr.mxu0 0.0
    %2960 = vmatpush2.msra.mxu0 0.0
    %2961 = vmatprep.subr.mxu0 0.0
    %2962 = vmatpush2.msra.mxu0 0.0
    %2963 = vmatprep.subr.mxu0 0.0
    %2964 = vmatpush2.msra.mxu0 0.0
    %2965 = vmatprep.subr.mxu0 0.0
    %2966 = vmatpush2.msra.mxu0 0.0
    %2967 = vmatprep.subr.mxu0 0.0
    %2968 = vmatpush2.msra.mxu0 0.0
    %2969 = vmatprep.subr.mxu0 0.0
    %2970 = vmatpush2.msra.mxu0 0.0
    %2971 = vmatprep.subr.mxu0 0.0
    %2972 = vmatpush2.msra.mxu0 0.0
    %2973 = vmatprep.subr.mxu0 0.0
    %2974 = vmatpush2.msra.mxu0 0.0
    %2975 = vmatprep.subr.mxu0 0.0
    %2976 = vmatpush2.msra.mxu0 0.0
    %2977 = vmatprep.subr.mxu0 0.0
    %2978 = vmatpush2.msra.mxu0 0.0
    %2979 = vmatprep.subr.mxu0 0.0
    %2980 = vmatpush2.msra.mxu0 0.0
    %2981 = vmatprep.subr.mxu0 0.0
    %2982 = vmatpush2.msra.mxu0 0.0
    %2983 = vmatprep.mubr.f32.mxu0 0.0
    %2984 = vmatmul.mubr.f32.gmra.mxu0 %v2914
    %v2985 = vpop.f32.mrf.mxu0
    %v2986 = vadd.f32 0.0, %v2985
    %v2987 = vpop.f32.mrf.mxu0
    %2988 = vmatprep.mubr.f32.mxu0 0.0
    %2989 = vmatmul.mubr.f32.gmra.mxu0 %v2917
    %v2990 = vpop.f32.mrf.mxu0
    %v2991 = vadd.f32 0.0, %v2990
    %v2992 = vpop.f32.mrf.mxu0
    %2993 = vdwg.mxu0
    %v2995 = vsel %vm2480, %v2814, 0
    %v2998 = vsel %vm2480, %v2819, 0
    %3000 = vmatprep.subr.mxu0 0.0
    %3001 = vmatpush1.msra.mxu0 0.0
    %3002 = vmatprep.subr.mxu0 0.0
    %3003 = vmatpush1.msra.mxu0 0.0
    %3004 = vmatprep.subr.mxu0 0.0
    %3005 = vmatpush1.msra.mxu0 0.0
    %3006 = vmatprep.subr.mxu0 0.0
    %3007 = vmatpush1.msra.mxu0 0.0
    %3008 = vmatprep.subr.mxu0 0.0
    %3009 = vmatpush1.msra.mxu0 0.0
    %3010 = vmatprep.subr.mxu0 0.0
    %3011 = vmatpush1.msra.mxu0 0.0
    %3012 = vmatprep.subr.mxu0 0.0
    %3013 = vmatpush1.msra.mxu0 0.0
    %3014 = vmatprep.subr.mxu0 0.0
    %3015 = vmatpush1.msra.mxu0 0.0
    %3016 = vmatprep.subr.mxu0 0.0
    %3017 = vmatpush1.msra.mxu0 %v2904
    %3018 = vmatprep.subr.mxu0 0.0
    %3019 = vmatpush1.msra.mxu0 %v2903
    %3020 = vmatprep.subr.mxu0 0.0
    %3021 = vmatpush1.msra.mxu0 %v2902
    %3022 = vmatprep.subr.mxu0 0.0
    %3023 = vmatpush1.msra.mxu0 %v2901
    %3024 = vmatprep.subr.mxu0 0.0
    %3025 = vmatpush1.msra.mxu0 %v2900
    %3026 = vmatprep.subr.mxu0 0.0
    %3027 = vmatpush1.msra.mxu0 %v2899
    %3028 = vmatprep.subr.mxu0 0.0
    %3029 = vmatpush1.msra.mxu0 %v2898
    %3030 = vmatprep.subr.mxu0 0.0
    %3031 = vmatpush1.msra.mxu0 %v2897
    %3032 = vmatprep.subr.mxu0 0.0
    %3033 = vmatpush2.msra.mxu0 0.0
    %3034 = vmatprep.subr.mxu0 0.0
    %3035 = vmatpush2.msra.mxu0 0.0
    %3036 = vmatprep.subr.mxu0 0.0
    %3037 = vmatpush2.msra.mxu0 0.0
    %3038 = vmatprep.subr.mxu0 0.0
    %3039 = vmatpush2.msra.mxu0 0.0
    %3040 = vmatprep.subr.mxu0 0.0
    %3041 = vmatpush2.msra.mxu0 0.0
    %3042 = vmatprep.subr.mxu0 0.0
    %3043 = vmatpush2.msra.mxu0 0.0
    %3044 = vmatprep.subr.mxu0 0.0
    %3045 = vmatpush2.msra.mxu0 0.0
    %3046 = vmatprep.subr.mxu0 0.0
    %3047 = vmatpush2.msra.mxu0 0.0
    %3048 = vmatprep.subr.mxu0 0.0
    %3049 = vmatpush2.msra.mxu0 0.0
    %3050 = vmatprep.subr.mxu0 0.0
    %3051 = vmatpush2.msra.mxu0 0.0
    %3052 = vmatprep.subr.mxu0 0.0
    %3053 = vmatpush2.msra.mxu0 0.0
    %3054 = vmatprep.subr.mxu0 0.0
    %3055 = vmatpush2.msra.mxu0 0.0
    %3056 = vmatprep.subr.mxu0 0.0
    %3057 = vmatpush2.msra.mxu0 0.0
    %3058 = vmatprep.subr.mxu0 0.0
    %3059 = vmatpush2.msra.mxu0 0.0
    %3060 = vmatprep.subr.mxu0 0.0
    %3061 = vmatpush2.msra.mxu0 0.0
    %3062 = vmatprep.subr.mxu0 0.0
    %3063 = vmatpush2.msra.mxu0 0.0
    %3064 = vmatprep.mubr.f32.mxu0 0.0
    %3065 = vmatmul.mubr.f32.gmra.mxu0 %v2995
    %v3066 = vpop.f32.mrf.mxu0
    %v3067 = vadd.f32 %v2986, %v3066
    %v3068 = vpop.f32.mrf.mxu0
    %3069 = vmatprep.mubr.f32.mxu0 0.0
    %3070 = vmatmul.mubr.f32.gmra.mxu0 %v2998
    %v3071 = vpop.f32.mrf.mxu0
    %v3072 = vadd.f32 %v2991, %v3071
    %v3073 = vpop.f32.mrf.mxu0
    %3074 = vdwg.mxu0
    %v3075 = vld [vmem:[%s17 + $0x80] sm:$0xff]
    %v3076 = vld [vmem:[%s17 + $0x88] sm:$0xff]
    %v3077 = vld [vmem:[%s17 + $0x90] sm:$0xff]
    %v3078 = vld [vmem:[%s17 + $0x98] sm:$0xff]
    %v3079 = vld [vmem:[%s17 + $0xa0] sm:$0xff]
    %v3080 = vld [vmem:[%s17 + $0xa8] sm:$0xff]
    %v3081 = vld [vmem:[%s17 + $0xb0] sm:$0xff]
    %v3082 = vld [vmem:[%s17 + $0xb8] sm:$0xff]
    %v3084 = vsel %vm2480, %v2889, 0
    %v3087 = vsel %vm2480, %v2894, 0
    %3089 = vmatprep.subr.mxu0 0.0
    %3090 = vmatpush1.msra.mxu0 0.0
    %3091 = vmatprep.subr.mxu0 0.0
    %3092 = vmatpush1.msra.mxu0 0.0
    %3093 = vmatprep.subr.mxu0 0.0
    %3094 = vmatpush1.msra.mxu0 0.0
    %3095 = vmatprep.subr.mxu0 0.0
    %3096 = vmatpush1.msra.mxu0 0.0
    %3097 = vmatprep.subr.mxu0 0.0
    %3098 = vmatpush1.msra.mxu0 0.0
    %3099 = vmatprep.subr.mxu0 0.0
    %3100 = vmatpush1.msra.mxu0 0.0
    %3101 = vmatprep.subr.mxu0 0.0
    %3102 = vmatpush1.msra.mxu0 0.0
    %3103 = vmatprep.subr.mxu0 0.0
    %3104 = vmatpush1.msra.mxu0 0.0
    %3105 = vmatprep.subr.mxu0 0.0
    %3106 = vmatpush1.msra.mxu0 %v3082
    %3107 = vmatprep.subr.mxu0 0.0
    %3108 = vmatpush1.msra.mxu0 %v3081
    %3109 = vmatprep.subr.mxu0 0.0
    %3110 = vmatpush1.msra.mxu0 %v3080
    %3111 = vmatprep.subr.mxu0 0.0
    %3112 = vmatpush1.msra.mxu0 %v3079
    %3113 = vmatprep.subr.mxu0 0.0
    %3114 = vmatpush1.msra.mxu0 %v3078
    %3115 = vmatprep.subr.mxu0 0.0
    %3116 = vmatpush1.msra.mxu0 %v3077
    %3117 = vmatprep.subr.mxu0 0.0
    %3118 = vmatpush1.msra.mxu0 %v3076
    %3119 = vmatprep.subr.mxu0 0.0
    %3120 = vmatpush1.msra.mxu0 %v3075
    %3121 = vmatprep.subr.mxu0 0.0
    %3122 = vmatpush2.msra.mxu0 0.0
    %3123 = vmatprep.subr.mxu0 0.0
    %3124 = vmatpush2.msra.mxu0 0.0
    %3125 = vmatprep.subr.mxu0 0.0
    %3126 = vmatpush2.msra.mxu0 0.0
    %3127 = vmatprep.subr.mxu0 0.0
    %3128 = vmatpush2.msra.mxu0 0.0
    %3129 = vmatprep.subr.mxu0 0.0
    %3130 = vmatpush2.msra.mxu0 0.0
    %3131 = vmatprep.subr.mxu0 0.0
    %3132 = vmatpush2.msra.mxu0 0.0
    %3133 = vmatprep.subr.mxu0 0.0
    %3134 = vmatpush2.msra.mxu0 0.0
    %3135 = vmatprep.subr.mxu0 0.0
    %3136 = vmatpush2.msra.mxu0 0.0
    %3137 = vmatprep.subr.mxu0 0.0
    %3138 = vmatpush2.msra.mxu0 0.0
    %3139 = vmatprep.subr.mxu0 0.0
    %3140 = vmatpush2.msra.mxu0 0.0
    %3141 = vmatprep.subr.mxu0 0.0
    %3142 = vmatpush2.msra.mxu0 0.0
    %3143 = vmatprep.subr.mxu0 0.0
    %3144 = vmatpush2.msra.mxu0 0.0
    %3145 = vmatprep.subr.mxu0 0.0
    %3146 = vmatpush2.msra.mxu0 0.0
    %3147 = vmatprep.subr.mxu0 0.0
    %3148 = vmatpush2.msra.mxu0 0.0
    %3149 = vmatprep.subr.mxu0 0.0
    %3150 = vmatpush2.msra.mxu0 0.0
    %3151 = vmatprep.subr.mxu0 0.0
    %3152 = vmatpush2.msra.mxu0 0.0
    %3153 = vmatprep.mubr.f32.mxu0 0.0
    %3154 = vmatmul.mubr.f32.gmra.mxu0 %v3084
    %v3155 = vpop.f32.mrf.mxu0
    %v3156 = vadd.f32 0.0, %v3155
    %v3157 = vpop.f32.mrf.mxu0
    %3158 = vmatprep.mubr.f32.mxu0 0.0
    %3159 = vmatmul.mubr.f32.gmra.mxu0 %v3087
    %v3160 = vpop.f32.mrf.mxu0
    %v3161 = vadd.f32 0.0, %v3160
    %v3162 = vpop.f32.mrf.mxu0
    %3163 = vdwg.mxu0
    %v3164 = vadd.f32 %v3067, %v3156
    %v3165 = vadd.f32 %v3072, %v3161
    %v3166 = vld [vmem:[%s15] sm:$0x1]
    %v3168 = vlaneseq
    %v3169 = vshrl.u32 %v3168, 7
    %v3170 = vsub.s32 0, %v3169
    %v3171 = vrot.slane %v3166, %v3170
    %v3173 = vadd.f32 %v3164, %v3171
    %v3174 = vadd.f32 %v3165, %v3171
    %v3175 = vmul.f32 %v3173, 0.01
    %v3176 = vmul.f32 %v3174, 0.01
    %v3177 = vmax.f32 %v3173, %v3175
    %v3178 = vmax.f32 %v3174, %v3176
    %v3179 = vld [vmem:[%s39] sm:$0xff]
    %v3181 = vsel %vm2299, %v3179, 0
    %3183 = vmatprep.subr.mxu0 0.0
    %3184 = vmatpush1.msra.mxu0 0.0
    %3185 = vmatprep.subr.mxu0 0.0
    %3186 = vmatpush1.msra.mxu0 0.0
    %3187 = vmatprep.subr.mxu0 0.0
    %3188 = vmatpush1.msra.mxu0 0.0
    %3189 = vmatprep.subr.mxu0 0.0
    %3190 = vmatpush1.msra.mxu0 0.0
    %3191 = vmatprep.subr.mxu0 0.0
    %3192 = vmatpush1.msra.mxu0 0.0
    %3193 = vmatprep.subr.mxu0 0.0
    %3194 = vmatpush1.msra.mxu0 0.0
    %3195 = vmatprep.subr.mxu0 0.0
    %3196 = vmatpush1.msra.mxu0 0.0
    %3197 = vmatprep.subr.mxu0 0.0
    %3198 = vmatpush1.msra.mxu0 0.0
    %3199 = vmatprep.subr.mxu0 0.0
    %3200 = vmatpush1.msra.mxu0 0.0
    %3201 = vmatprep.subr.mxu0 0.0
    %3202 = vmatpush1.msra.mxu0 0.0
    %3203 = vmatprep.subr.mxu0 0.0
    %3204 = vmatpush1.msra.mxu0 0.0
    %3205 = vmatprep.subr.mxu0 0.0
    %3206 = vmatpush1.msra.mxu0 0.0
    %3207 = vmatprep.subr.mxu0 0.0
    %3208 = vmatpush1.msra.mxu0 0.0
    %3209 = vmatprep.subr.mxu0 0.0
    %3210 = vmatpush1.msra.mxu0 0.0
    %3211 = vmatprep.subr.mxu0 0.0
    %3212 = vmatpush1.msra.mxu0 %v3178
    %3213 = vmatprep.subr.mxu0 0.0
    %3214 = vmatpush1.msra.mxu0 %v3177
    %3215 = vmatprep.subr.mxu0 0.0
    %3216 = vmatpush2.msra.mxu0 0.0
    %3217 = vmatprep.subr.mxu0 0.0
    %3218 = vmatpush2.msra.mxu0 0.0
    %3219 = vmatprep.subr.mxu0 0.0
    %3220 = vmatpush2.msra.mxu0 0.0
    %3221 = vmatprep.subr.mxu0 0.0
    %3222 = vmatpush2.msra.mxu0 0.0
    %3223 = vmatprep.subr.mxu0 0.0
    %3224 = vmatpush2.msra.mxu0 0.0
    %3225 = vmatprep.subr.mxu0 0.0
    %3226 = vmatpush2.msra.mxu0 0.0
    %3227 = vmatprep.subr.mxu0 0.0
    %3228 = vmatpush2.msra.mxu0 0.0
    %3229 = vmatprep.subr.mxu0 0.0
    %3230 = vmatpush2.msra.mxu0 0.0
    %3231 = vmatprep.subr.mxu0 0.0
    %3232 = vmatpush2.msra.mxu0 0.0
    %3233 = vmatprep.subr.mxu0 0.0
    %3234 = vmatpush2.msra.mxu0 0.0
    %3235 = vmatprep.subr.mxu0 0.0
    %3236 = vmatpush2.msra.mxu0 0.0
    %3237 = vmatprep.subr.mxu0 0.0
    %3238 = vmatpush2.msra.mxu0 0.0
    %3239 = vmatprep.subr.mxu0 0.0
    %3240 = vmatpush2.msra.mxu0 0.0
    %3241 = vmatprep.subr.mxu0 0.0
    %3242 = vmatpush2.msra.mxu0 0.0
    %3243 = vmatprep.subr.mxu0 0.0
    %3244 = vmatpush2.msra.mxu0 0.0
    %3245 = vmatprep.subr.mxu0 0.0
    %3246 = vmatpush2.msra.mxu0 0.0
    %3247 = vmatprep.mubr.f32.mxu0 0.0
    %3248 = vmatmul.mubr.f32.gmra.mxu0 %v3181
    %v3249 = vpop.f32.mrf.mxu0
    %v3250 = vadd.f32 0.0, %v3249
    %v3251 = vpop.f32.mrf.mxu0
    %3252 = vdwg.mxu0
    %v3253 = vld [vmem:[%s41] sm:$0xff]
    %v3255 = vsel %vm2299, %v3253, 0
    %3257 = vmatprep.subr.mxu0 0.0
    %3258 = vmatpush1.msra.mxu0 0.0
    %3259 = vmatprep.subr.mxu0 0.0
    %3260 = vmatpush1.msra.mxu0 0.0
    %3261 = vmatprep.subr.mxu0 0.0
    %3262 = vmatpush1.msra.mxu0 0.0
    %3263 = vmatprep.subr.mxu0 0.0
    %3264 = vmatpush1.msra.mxu0 0.0
    %3265 = vmatprep.subr.mxu0 0.0
    %3266 = vmatpush1.msra.mxu0 0.0
    %3267 = vmatprep.subr.mxu0 0.0
    %3268 = vmatpush1.msra.mxu0 0.0
    %3269 = vmatprep.subr.mxu0 0.0
    %3270 = vmatpush1.msra.mxu0 0.0
    %3271 = vmatprep.subr.mxu0 0.0
    %3272 = vmatpush1.msra.mxu0 0.0
    %3273 = vmatprep.subr.mxu0 0.0
    %3274 = vmatpush1.msra.mxu0 0.0
    %3275 = vmatprep.subr.mxu0 0.0
    %3276 = vmatpush1.msra.mxu0 0.0
    %3277 = vmatprep.subr.mxu0 0.0
    %3278 = vmatpush1.msra.mxu0 0.0
    %3279 = vmatprep.subr.mxu0 0.0
    %3280 = vmatpush1.msra.mxu0 0.0
    %3281 = vmatprep.subr.mxu0 0.0
    %3282 = vmatpush1.msra.mxu0 0.0
    %3283 = vmatprep.subr.mxu0 0.0
    %3284 = vmatpush1.msra.mxu0 0.0
    %3285 = vmatprep.subr.mxu0 0.0
    %3286 = vmatpush1.msra.mxu0 %v3178
    %3287 = vmatprep.subr.mxu0 0.0
    %3288 = vmatpush1.msra.mxu0 %v3177
    %3289 = vmatprep.subr.mxu0 0.0
    %3290 = vmatpush2.msra.mxu0 0.0
    %3291 = vmatprep.subr.mxu0 0.0
    %3292 = vmatpush2.msra.mxu0 0.0
    %3293 = vmatprep.subr.mxu0 0.0
    %3294 = vmatpush2.msra.mxu0 0.0
    %3295 = vmatprep.subr.mxu0 0.0
    %3296 = vmatpush2.msra.mxu0 0.0
    %3297 = vmatprep.subr.mxu0 0.0
    %3298 = vmatpush2.msra.mxu0 0.0
    %3299 = vmatprep.subr.mxu0 0.0
    %3300 = vmatpush2.msra.mxu0 0.0
    %3301 = vmatprep.subr.mxu0 0.0
    %3302 = vmatpush2.msra.mxu0 0.0
    %3303 = vmatprep.subr.mxu0 0.0
    %3304 = vmatpush2.msra.mxu0 0.0
    %3305 = vmatprep.subr.mxu0 0.0
    %3306 = vmatpush2.msra.mxu0 0.0
    %3307 = vmatprep.subr.mxu0 0.0
    %3308 = vmatpush2.msra.mxu0 0.0
    %3309 = vmatprep.subr.mxu0 0.0
    %3310 = vmatpush2.msra.mxu0 0.0
    %3311 = vmatprep.subr.mxu0 0.0
    %3312 = vmatpush2.msra.mxu0 0.0
    %3313 = vmatprep.subr.mxu0 0.0
    %3314 = vmatpush2.msra.mxu0 0.0
    %3315 = vmatprep.subr.mxu0 0.0
    %3316 = vmatpush2.msra.mxu0 0.0
    %3317 = vmatprep.subr.mxu0 0.0
    %3318 = vmatpush2.msra.mxu0 0.0
    %3319 = vmatprep.subr.mxu0 0.0
    %3320 = vmatpush2.msra.mxu0 0.0
    %3321 = vmatprep.mubr.f32.mxu0 0.0
    %3322 = vmatmul.mubr.f32.gmra.mxu0 %v3255
    %v3323 = vpop.f32.mrf.mxu0
    %v3324 = vadd.f32 0.0, %v3323
    %v3325 = vpop.f32.mrf.mxu0
    %3326 = vdwg.mxu0
    %v3327 = vmax.f32 %v3250, %v3324
    %v3328 = vld [vmem:[%s35] sm:$0xff]
    %v3329 = vld [vmem:[%s35 + $0x8] sm:$0xff]
    %v3330 = vld [vmem:[%s35 + $0x10] sm:$0xff]
    %v3331 = vld [vmem:[%s35 + $0x18] sm:$0xff]
    %v3332 = vld [vmem:[%s35 + $0x20] sm:$0xff]
    %v3333 = vld [vmem:[%s35 + $0x28] sm:$0xff]
    %v3334 = vld [vmem:[%s35 + $0x30] sm:$0xff]
    %v3335 = vld [vmem:[%s35 + $0x38] sm:$0xff]
    %v3337 = vsel %vm2480, %v3327, 0
    %3339 = vmatprep.subr.mxu0 0.0
    %3340 = vmatpush1.msra.mxu0 0.0
    %3341 = vmatprep.subr.mxu0 0.0
    %3342 = vmatpush1.msra.mxu0 0.0
    %3343 = vmatprep.subr.mxu0 0.0
    %3344 = vmatpush1.msra.mxu0 0.0
    %3345 = vmatprep.subr.mxu0 0.0
    %3346 = vmatpush1.msra.mxu0 0.0
    %3347 = vmatprep.subr.mxu0 0.0
    %3348 = vmatpush1.msra.mxu0 0.0
    %3349 = vmatprep.subr.mxu0 0.0
    %3350 = vmatpush1.msra.mxu0 0.0
    %3351 = vmatprep.subr.mxu0 0.0
    %3352 = vmatpush1.msra.mxu0 0.0
    %3353 = vmatprep.subr.mxu0 0.0
    %3354 = vmatpush1.msra.mxu0 0.0
    %3355 = vmatprep.subr.mxu0 0.0
    %3356 = vmatpush1.msra.mxu0 %v3335
    %3357 = vmatprep.subr.mxu0 0.0
    %3358 = vmatpush1.msra.mxu0 %v3334
    %3359 = vmatprep.subr.mxu0 0.0
    %3360 = vmatpush1.msra.mxu0 %v3333
    %3361 = vmatprep.subr.mxu0 0.0
    %3362 = vmatpush1.msra.mxu0 %v3332
    %3363 = vmatprep.subr.mxu0 0.0
    %3364 = vmatpush1.msra.mxu0 %v3331
    %3365 = vmatprep.subr.mxu0 0.0
    %3366 = vmatpush1.msra.mxu0 %v3330
    %3367 = vmatprep.subr.mxu0 0.0
    %3368 = vmatpush1.msra.mxu0 %v3329
    %3369 = vmatprep.subr.mxu0 0.0
    %3370 = vmatpush1.msra.mxu0 %v3328
    %3371 = vmatprep.subr.mxu0 0.0
    %3372 = vmatpush2.msra.mxu0 0.0
    %3373 = vmatprep.subr.mxu0 0.0
    %3374 = vmatpush2.msra.mxu0 0.0
    %3375 = vmatprep.subr.mxu0 0.0
    %3376 = vmatpush2.msra.mxu0 0.0
    %3377 = vmatprep.subr.mxu0 0.0
    %3378 = vmatpush2.msra.mxu0 0.0
    %3379 = vmatprep.subr.mxu0 0.0
    %3380 = vmatpush2.msra.mxu0 0.0
    %3381 = vmatprep.subr.mxu0 0.0
    %3382 = vmatpush2.msra.mxu0 0.0
    %3383 = vmatprep.subr.mxu0 0.0
    %3384 = vmatpush2.msra.mxu0 0.0
    %3385 = vmatprep.subr.mxu0 0.0
    %3386 = vmatpush2.msra.mxu0 0.0
    %3387 = vmatprep.subr.mxu0 0.0
    %3388 = vmatpush2.msra.mxu0 0.0
    %3389 = vmatprep.subr.mxu0 0.0
    %3390 = vmatpush2.msra.mxu0 0.0
    %3391 = vmatprep.subr.mxu0 0.0
    %3392 = vmatpush2.msra.mxu0 0.0
    %3393 = vmatprep.subr.mxu0 0.0
    %3394 = vmatpush2.msra.mxu0 0.0
    %3395 = vmatprep.subr.mxu0 0.0
    %3396 = vmatpush2.msra.mxu0 0.0
    %3397 = vmatprep.subr.mxu0 0.0
    %3398 = vmatpush2.msra.mxu0 0.0
    %3399 = vmatprep.subr.mxu0 0.0
    %3400 = vmatpush2.msra.mxu0 0.0
    %3401 = vmatprep.subr.mxu0 0.0
    %3402 = vmatpush2.msra.mxu0 0.0
    %3403 = vmatprep.mubr.f32.mxu0 0.0
    %3404 = vmatmul.mubr.f32.gmra.mxu0 %v3337
    %v3405 = vpop.f32.mrf.mxu0
    %v3406 = vadd.f32 0.0, %v3405
    %v3407 = vpop.f32.mrf.mxu0
    %3408 = vdwg.mxu0
    %v3409 = vld [vmem:[%s37] sm:$0xff]
    %v3410 = vld [vmem:[%s37 + $0x8] sm:$0xff]
    %v3411 = vld [vmem:[%s37 + $0x10] sm:$0xff]
    %v3412 = vld [vmem:[%s37 + $0x18] sm:$0xff]
    %v3413 = vld [vmem:[%s37 + $0x20] sm:$0xff]
    %v3414 = vld [vmem:[%s37 + $0x28] sm:$0xff]
    %v3415 = vld [vmem:[%s37 + $0x30] sm:$0xff]
    %v3416 = vld [vmem:[%s37 + $0x38] sm:$0xff]
    %3417 = vmatprep.subr.mxu0 0.0
    %3418 = vmatpush1.msra.mxu0 0.0
    %3419 = vmatprep.subr.mxu0 0.0
    %3420 = vmatpush1.msra.mxu0 0.0
    %3421 = vmatprep.subr.mxu0 0.0
    %3422 = vmatpush1.msra.mxu0 0.0
    %3423 = vmatprep.subr.mxu0 0.0
    %3424 = vmatpush1.msra.mxu0 0.0
    %3425 = vmatprep.subr.mxu0 0.0
    %3426 = vmatpush1.msra.mxu0 0.0
    %3427 = vmatprep.subr.mxu0 0.0
    %3428 = vmatpush1.msra.mxu0 0.0
    %3429 = vmatprep.subr.mxu0 0.0
    %3430 = vmatpush1.msra.mxu0 0.0
    %3431 = vmatprep.subr.mxu0 0.0
    %3432 = vmatpush1.msra.mxu0 0.0
    %3433 = vmatprep.subr.mxu0 0.0
    %3434 = vmatpush1.msra.mxu0 %v3416
    %3435 = vmatprep.subr.mxu0 0.0
    %3436 = vmatpush1.msra.mxu0 %v3415
    %3437 = vmatprep.subr.mxu0 0.0
    %3438 = vmatpush1.msra.mxu0 %v3414
    %3439 = vmatprep.subr.mxu0 0.0
    %3440 = vmatpush1.msra.mxu0 %v3413
    %3441 = vmatprep.subr.mxu0 0.0
    %3442 = vmatpush1.msra.mxu0 %v3412
    %3443 = vmatprep.subr.mxu0 0.0
    %3444 = vmatpush1.msra.mxu0 %v3411
    %3445 = vmatprep.subr.mxu0 0.0
    %3446 = vmatpush1.msra.mxu0 %v3410
    %3447 = vmatprep.subr.mxu0 0.0
    %3448 = vmatpush1.msra.mxu0 %v3409
    %3449 = vmatprep.subr.mxu0 0.0
    %3450 = vmatpush2.msra.mxu0 0.0
    %3451 = vmatprep.subr.mxu0 0.0
    %3452 = vmatpush2.msra.mxu0 0.0
    %3453 = vmatprep.subr.mxu0 0.0
    %3454 = vmatpush2.msra.mxu0 0.0
    %3455 = vmatprep.subr.mxu0 0.0
    %3456 = vmatpush2.msra.mxu0 0.0
    %3457 = vmatprep.subr.mxu0 0.0
    %3458 = vmatpush2.msra.mxu0 0.0
    %3459 = vmatprep.subr.mxu0 0.0
    %3460 = vmatpush2.msra.mxu0 0.0
    %3461 = vmatprep.subr.mxu0 0.0
    %3462 = vmatpush2.msra.mxu0 0.0
    %3463 = vmatprep.subr.mxu0 0.0
    %3464 = vmatpush2.msra.mxu0 0.0
    %3465 = vmatprep.subr.mxu0 0.0
    %3466 = vmatpush2.msra.mxu0 0.0
    %3467 = vmatprep.subr.mxu0 0.0
    %3468 = vmatpush2.msra.mxu0 0.0
    %3469 = vmatprep.subr.mxu0 0.0
    %3470 = vmatpush2.msra.mxu0 0.0
    %3471 = vmatprep.subr.mxu0 0.0
    %3472 = vmatpush2.msra.mxu0 0.0
    %3473 = vmatprep.subr.mxu0 0.0
    %3474 = vmatpush2.msra.mxu0 0.0
    %3475 = vmatprep.subr.mxu0 0.0
    %3476 = vmatpush2.msra.mxu0 0.0
    %3477 = vmatprep.subr.mxu0 0.0
    %3478 = vmatpush2.msra.mxu0 0.0
    %3479 = vmatprep.subr.mxu0 0.0
    %3480 = vmatpush2.msra.mxu0 0.0
    %3481 = vmatprep.mubr.f32.mxu0 0.0
    %3482 = vmatmul.mubr.f32.gmra.mxu0 %v3337
    %v3483 = vpop.f32.mrf.mxu0
    %v3484 = vadd.f32 0.0, %v3483
    %v3485 = vpop.f32.mrf.mxu0
    %3486 = vdwg.mxu0
    %v3487 = vmax.f32 %v3406, %v3484
    %v3488 = vld [vmem:[%s87] sm:$0xff]
    %vm3489 = vcmask 64512
    %v3491 = vsel %vm3489, %v3488, 0
    %3493 = vmatprep.subr.mxu0 0.0
    %3494 = vmatpush1.msra.mxu0 0.0
    %3495 = vmatprep.subr.mxu0 0.0
    %3496 = vmatpush1.msra.mxu0 0.0
    %3497 = vmatprep.subr.mxu0 0.0
    %3498 = vmatpush1.msra.mxu0 0.0
    %3499 = vmatprep.subr.mxu0 0.0
    %3500 = vmatpush1.msra.mxu0 0.0
    %3501 = vmatprep.subr.mxu0 0.0
    %3502 = vmatpush1.msra.mxu0 0.0
    %3503 = vmatprep.subr.mxu0 0.0
    %3504 = vmatpush1.msra.mxu0 0.0
    %3505 = vmatprep.subr.mxu0 0.0
    %3506 = vmatpush1.msra.mxu0 0.0
    %3507 = vmatprep.subr.mxu0 0.0
    %3508 = vmatpush1.msra.mxu0 0.0
    %3509 = vmatprep.subr.mxu0 0.0
    %3510 = vmatpush1.msra.mxu0 0.0
    %3511 = vmatprep.subr.mxu0 0.0
    %3512 = vmatpush1.msra.mxu0 0.0
    %3513 = vmatprep.subr.mxu0 0.0
    %3514 = vmatpush1.msra.mxu0 0.0
    %3515 = vmatprep.subr.mxu0 0.0
    %3516 = vmatpush1.msra.mxu0 0.0
    %3517 = vmatprep.subr.mxu0 0.0
    %3518 = vmatpush1.msra.mxu0 0.0
    %3519 = vmatprep.subr.mxu0 0.0
    %3520 = vmatpush1.msra.mxu0 0.0
    %3521 = vmatprep.subr.mxu0 0.0
    %3522 = vmatpush1.msra.mxu0 0.0
    %3523 = vmatprep.subr.mxu0 0.0
    %3524 = vmatpush1.msra.mxu0 %v3487
    %3525 = vmatprep.subr.mxu0 0.0
    %3526 = vmatpush2.msra.mxu0 0.0
    %3527 = vmatprep.subr.mxu0 0.0
    %3528 = vmatpush2.msra.mxu0 0.0
    %3529 = vmatprep.subr.mxu0 0.0
    %3530 = vmatpush2.msra.mxu0 0.0
    %3531 = vmatprep.subr.mxu0 0.0
    %3532 = vmatpush2.msra.mxu0 0.0
    %3533 = vmatprep.subr.mxu0 0.0
    %3534 = vmatpush2.msra.mxu0 0.0
    %3535 = vmatprep.subr.mxu0 0.0
    %3536 = vmatpush2.msra.mxu0 0.0
    %3537 = vmatprep.subr.mxu0 0.0
    %3538 = vmatpush2.msra.mxu0 0.0
    %3539 = vmatprep.subr.mxu0 0.0
    %3540 = vmatpush2.msra.mxu0 0.0
    %3541 = vmatprep.subr.mxu0 0.0
    %3542 = vmatpush2.msra.mxu0 0.0
    %3543 = vmatprep.subr.mxu0 0.0
    %3544 = vmatpush2.msra.mxu0 0.0
    %3545 = vmatprep.subr.mxu0 0.0
    %3546 = vmatpush2.msra.mxu0 0.0
    %3547 = vmatprep.subr.mxu0 0.0
    %3548 = vmatpush2.msra.mxu0 0.0
    %3549 = vmatprep.subr.mxu0 0.0
    %3550 = vmatpush2.msra.mxu0 0.0
    %3551 = vmatprep.subr.mxu0 0.0
    %3552 = vmatpush2.msra.mxu0 0.0
    %3553 = vmatprep.subr.mxu0 0.0
    %3554 = vmatpush2.msra.mxu0 0.0
    %3555 = vmatprep.subr.mxu0 0.0
    %3556 = vmatpush2.msra.mxu0 0.0
    %3557 = vmatprep.mubr.f32.mxu0 0.0
    %3558 = vmatmul.mubr.f32.gmra.mxu0 %v3491
    %v3559 = vpop.f32.mrf.mxu0
    %v3560 = vadd.f32 0.0, %v3559
    %v3561 = vpop.f32.mrf.mxu0
    %3562 = vdwg.mxu0
    %v3563 = vld [vmem:[%s89] sm:$0xff]
    %v3565 = vsel %vm3489, %v3563, 0
    %3567 = vmatprep.subr.mxu0 0.0
    %3568 = vmatpush1.msra.mxu0 0.0
    %3569 = vmatprep.subr.mxu0 0.0
    %3570 = vmatpush1.msra.mxu0 0.0
    %3571 = vmatprep.subr.mxu0 0.0
    %3572 = vmatpush1.msra.mxu0 0.0
    %3573 = vmatprep.subr.mxu0 0.0
    %3574 = vmatpush1.msra.mxu0 0.0
    %3575 = vmatprep.subr.mxu0 0.0
    %3576 = vmatpush1.msra.mxu0 0.0
    %3577 = vmatprep.subr.mxu0 0.0
    %3578 = vmatpush1.msra.mxu0 0.0
    %3579 = vmatprep.subr.mxu0 0.0
    %3580 = vmatpush1.msra.mxu0 0.0
    %3581 = vmatprep.subr.mxu0 0.0
    %3582 = vmatpush1.msra.mxu0 0.0
    %3583 = vmatprep.subr.mxu0 0.0
    %3584 = vmatpush1.msra.mxu0 0.0
    %3585 = vmatprep.subr.mxu0 0.0
    %3586 = vmatpush1.msra.mxu0 0.0
    %3587 = vmatprep.subr.mxu0 0.0
    %3588 = vmatpush1.msra.mxu0 0.0
    %3589 = vmatprep.subr.mxu0 0.0
    %3590 = vmatpush1.msra.mxu0 0.0
    %3591 = vmatprep.subr.mxu0 0.0
    %3592 = vmatpush1.msra.mxu0 0.0
    %3593 = vmatprep.subr.mxu0 0.0
    %3594 = vmatpush1.msra.mxu0 0.0
    %3595 = vmatprep.subr.mxu0 0.0
    %3596 = vmatpush1.msra.mxu0 0.0
    %3597 = vmatprep.subr.mxu0 0.0
    %3598 = vmatpush1.msra.mxu0 %v3487
    %3599 = vmatprep.subr.mxu0 0.0
    %3600 = vmatpush2.msra.mxu0 0.0
    %3601 = vmatprep.subr.mxu0 0.0
    %3602 = vmatpush2.msra.mxu0 0.0
    %3603 = vmatprep.subr.mxu0 0.0
    %3604 = vmatpush2.msra.mxu0 0.0
    %3605 = vmatprep.subr.mxu0 0.0
    %3606 = vmatpush2.msra.mxu0 0.0
    %3607 = vmatprep.subr.mxu0 0.0
    %3608 = vmatpush2.msra.mxu0 0.0
    %3609 = vmatprep.subr.mxu0 0.0
    %3610 = vmatpush2.msra.mxu0 0.0
    %3611 = vmatprep.subr.mxu0 0.0
    %3612 = vmatpush2.msra.mxu0 0.0
    %3613 = vmatprep.subr.mxu0 0.0
    %3614 = vmatpush2.msra.mxu0 0.0
    %3615 = vmatprep.subr.mxu0 0.0
    %3616 = vmatpush2.msra.mxu0 0.0
    %3617 = vmatprep.subr.mxu0 0.0
    %3618 = vmatpush2.msra.mxu0 0.0
    %3619 = vmatprep.subr.mxu0 0.0
    %3620 = vmatpush2.msra.mxu0 0.0
    %3621 = vmatprep.subr.mxu0 0.0
    %3622 = vmatpush2.msra.mxu0 0.0
    %3623 = vmatprep.subr.mxu0 0.0
    %3624 = vmatpush2.msra.mxu0 0.0
    %3625 = vmatprep.subr.mxu0 0.0
    %3626 = vmatpush2.msra.mxu0 0.0
    %3627 = vmatprep.subr.mxu0 0.0
    %3628 = vmatpush2.msra.mxu0 0.0
    %3629 = vmatprep.subr.mxu0 0.0
    %3630 = vmatpush2.msra.mxu0 0.0
    %3631 = vmatprep.mubr.f32.mxu0 0.0
    %3632 = vmatmul.mubr.f32.gmra.mxu0 %v3565
    %v3633 = vpop.f32.mrf.mxu0
    %v3634 = vadd.f32 0.0, %v3633
    %v3635 = vpop.f32.mrf.mxu0
    %3636 = vdwg.mxu0
    %v3637 = vld [vmem:[%s29] sm:$0xff]
    %v3638 = vld [vmem:[%s29 + $0x8] sm:$0xff]
    %v3639 = vld [vmem:[%s29 + $0x10] sm:$0xff]
    %v3640 = vld [vmem:[%s29 + $0x18] sm:$0xff]
    %v3641 = vld [vmem:[%s29 + $0x20] sm:$0xff]
    %v3642 = vld [vmem:[%s29 + $0x28] sm:$0xff]
    %v3643 = vld [vmem:[%s29 + $0x30] sm:$0xff]
    %v3644 = vld [vmem:[%s29 + $0x38] sm:$0xff]
    %v3646 = vsel %vm445, %v3487, 0
    %3648 = vmatprep.subr.mxu0 0.0
    %3649 = vmatpush1.msra.mxu0 0.0
    %3650 = vmatprep.subr.mxu0 0.0
    %3651 = vmatpush1.msra.mxu0 0.0
    %3652 = vmatprep.subr.mxu0 0.0
    %3653 = vmatpush1.msra.mxu0 0.0
    %3654 = vmatprep.subr.mxu0 0.0
    %3655 = vmatpush1.msra.mxu0 0.0
    %3656 = vmatprep.subr.mxu0 0.0
    %3657 = vmatpush1.msra.mxu0 0.0
    %3658 = vmatprep.subr.mxu0 0.0
    %3659 = vmatpush1.msra.mxu0 0.0
    %3660 = vmatprep.subr.mxu0 0.0
    %3661 = vmatpush1.msra.mxu0 0.0
    %3662 = vmatprep.subr.mxu0 0.0
    %3663 = vmatpush1.msra.mxu0 0.0
    %3664 = vmatprep.subr.mxu0 0.0
    %3665 = vmatpush1.msra.mxu0 0.0
    %3666 = vmatprep.subr.mxu0 0.0
    %3667 = vmatpush1.msra.mxu0 0.0
    %3668 = vmatprep.subr.mxu0 0.0
    %3669 = vmatpush1.msra.mxu0 0.0
    %3670 = vmatprep.subr.mxu0 0.0
    %3671 = vmatpush1.msra.mxu0 0.0
    %3672 = vmatprep.subr.mxu0 0.0
    %3673 = vmatpush1.msra.mxu0 %v3644
    %3674 = vmatprep.subr.mxu0 0.0
    %3675 = vmatpush1.msra.mxu0 %v3643
    %3676 = vmatprep.subr.mxu0 0.0
    %3677 = vmatpush1.msra.mxu0 %v3642
    %3678 = vmatprep.subr.mxu0 0.0
    %3679 = vmatpush1.msra.mxu0 %v3641
    %3680 = vmatprep.subr.mxu0 0.0
    %3681 = vmatpush2.msra.mxu0 0.0
    %3682 = vmatprep.subr.mxu0 0.0
    %3683 = vmatpush2.msra.mxu0 0.0
    %3684 = vmatprep.subr.mxu0 0.0
    %3685 = vmatpush2.msra.mxu0 0.0
    %3686 = vmatprep.subr.mxu0 0.0
    %3687 = vmatpush2.msra.mxu0 0.0
    %3688 = vmatprep.subr.mxu0 0.0
    %3689 = vmatpush2.msra.mxu0 0.0
    %3690 = vmatprep.subr.mxu0 0.0
    %3691 = vmatpush2.msra.mxu0 0.0
    %3692 = vmatprep.subr.mxu0 0.0
    %3693 = vmatpush2.msra.mxu0 0.0
    %3694 = vmatprep.subr.mxu0 0.0
    %3695 = vmatpush2.msra.mxu0 0.0
    %3696 = vmatprep.subr.mxu0 0.0
    %3697 = vmatpush2.msra.mxu0 0.0
    %3698 = vmatprep.subr.mxu0 0.0
    %3699 = vmatpush2.msra.mxu0 0.0
    %3700 = vmatprep.subr.mxu0 0.0
    %3701 = vmatpush2.msra.mxu0 0.0
    %3702 = vmatprep.subr.mxu0 0.0
    %3703 = vmatpush2.msra.mxu0 0.0
    %3704 = vmatprep.subr.mxu0 0.0
    %3705 = vmatpush2.msra.mxu0 0.0
    %3706 = vmatprep.subr.mxu0 0.0
    %3707 = vmatpush2.msra.mxu0 0.0
    %3708 = vmatprep.subr.mxu0 0.0
    %3709 = vmatpush2.msra.mxu0 0.0
    %3710 = vmatprep.subr.mxu0 0.0
    %3711 = vmatpush2.msra.mxu0 0.0
    %3712 = vmatprep.mubr.f32.mxu0 0.0
    %3713 = vmatmul.mubr.f32.gmra.mxu0 %v3646
    %v3714 = vpop.f32.mrf.mxu0
    %v3715 = vadd.f32 0.0, %v3714
    %v3716 = vpop.f32.mrf.mxu0
    %3717 = vdwg.mxu0
    %v3719 = vsel %vm445, %v3560, 0
    %3721 = vmatprep.subr.mxu0 0.0
    %3722 = vmatpush1.msra.mxu0 0.0
    %3723 = vmatprep.subr.mxu0 0.0
    %3724 = vmatpush1.msra.mxu0 0.0
    %3725 = vmatprep.subr.mxu0 0.0
    %3726 = vmatpush1.msra.mxu0 0.0
    %3727 = vmatprep.subr.mxu0 0.0
    %3728 = vmatpush1.msra.mxu0 0.0
    %3729 = vmatprep.subr.mxu0 0.0
    %3730 = vmatpush1.msra.mxu0 0.0
    %3731 = vmatprep.subr.mxu0 0.0
    %3732 = vmatpush1.msra.mxu0 0.0
    %3733 = vmatprep.subr.mxu0 0.0
    %3734 = vmatpush1.msra.mxu0 0.0
    %3735 = vmatprep.subr.mxu0 0.0
    %3736 = vmatpush1.msra.mxu0 0.0
    %3737 = vmatprep.subr.mxu0 0.0
    %3738 = vmatpush1.msra.mxu0 0.0
    %3739 = vmatprep.subr.mxu0 0.0
    %3740 = vmatpush1.msra.mxu0 0.0
    %3741 = vmatprep.subr.mxu0 0.0
    %3742 = vmatpush1.msra.mxu0 0.0
    %3743 = vmatprep.subr.mxu0 0.0
    %3744 = vmatpush1.msra.mxu0 0.0
    %3745 = vmatprep.subr.mxu0 0.0
    %3746 = vmatpush1.msra.mxu0 %v3640
    %3747 = vmatprep.subr.mxu0 0.0
    %3748 = vmatpush1.msra.mxu0 %v3639
    %3749 = vmatprep.subr.mxu0 0.0
    %3750 = vmatpush1.msra.mxu0 %v3638
    %3751 = vmatprep.subr.mxu0 0.0
    %3752 = vmatpush1.msra.mxu0 %v3637
    %3753 = vmatprep.subr.mxu0 0.0
    %3754 = vmatpush2.msra.mxu0 0.0
    %3755 = vmatprep.subr.mxu0 0.0
    %3756 = vmatpush2.msra.mxu0 0.0
    %3757 = vmatprep.subr.mxu0 0.0
    %3758 = vmatpush2.msra.mxu0 0.0
    %3759 = vmatprep.subr.mxu0 0.0
    %3760 = vmatpush2.msra.mxu0 0.0
    %3761 = vmatprep.subr.mxu0 0.0
    %3762 = vmatpush2.msra.mxu0 0.0
    %3763 = vmatprep.subr.mxu0 0.0
    %3764 = vmatpush2.msra.mxu0 0.0
    %3765 = vmatprep.subr.mxu0 0.0
    %3766 = vmatpush2.msra.mxu0 0.0
    %3767 = vmatprep.subr.mxu0 0.0
    %3768 = vmatpush2.msra.mxu0 0.0
    %3769 = vmatprep.subr.mxu0 0.0
    %3770 = vmatpush2.msra.mxu0 0.0
    %3771 = vmatprep.subr.mxu0 0.0
    %3772 = vmatpush2.msra.mxu0 0.0
    %3773 = vmatprep.subr.mxu0 0.0
    %3774 = vmatpush2.msra.mxu0 0.0
    %3775 = vmatprep.subr.mxu0 0.0
    %3776 = vmatpush2.msra.mxu0 0.0
    %3777 = vmatprep.subr.mxu0 0.0
    %3778 = vmatpush2.msra.mxu0 0.0
    %3779 = vmatprep.subr.mxu0 0.0
    %3780 = vmatpush2.msra.mxu0 0.0
    %3781 = vmatprep.subr.mxu0 0.0
    %3782 = vmatpush2.msra.mxu0 0.0
    %3783 = vmatprep.subr.mxu0 0.0
    %3784 = vmatpush2.msra.mxu0 0.0
    %3785 = vmatprep.mubr.f32.mxu0 0.0
    %3786 = vmatmul.mubr.f32.gmra.mxu0 %v3719
    %v3787 = vpop.f32.mrf.mxu0
    %v3788 = vadd.f32 %v3715, %v3787
    %v3789 = vpop.f32.mrf.mxu0
    %3790 = vdwg.mxu0
    %v3791 = vld [vmem:[%s29 + $0x40] sm:$0xff]
    %v3792 = vld [vmem:[%s29 + $0x48] sm:$0xff]
    %v3793 = vld [vmem:[%s29 + $0x50] sm:$0xff]
    %v3794 = vld [vmem:[%s29 + $0x58] sm:$0xff]
    %v3796 = vsel %vm445, %v3634, 0
    %3798 = vmatprep.subr.mxu0 0.0
    %3799 = vmatpush1.msra.mxu0 0.0
    %3800 = vmatprep.subr.mxu0 0.0
    %3801 = vmatpush1.msra.mxu0 0.0
    %3802 = vmatprep.subr.mxu0 0.0
    %3803 = vmatpush1.msra.mxu0 0.0
    %3804 = vmatprep.subr.mxu0 0.0
    %3805 = vmatpush1.msra.mxu0 0.0
    %3806 = vmatprep.subr.mxu0 0.0
    %3807 = vmatpush1.msra.mxu0 0.0
    %3808 = vmatprep.subr.mxu0 0.0
    %3809 = vmatpush1.msra.mxu0 0.0
    %3810 = vmatprep.subr.mxu0 0.0
    %3811 = vmatpush1.msra.mxu0 0.0
    %3812 = vmatprep.subr.mxu0 0.0
    %3813 = vmatpush1.msra.mxu0 0.0
    %3814 = vmatprep.subr.mxu0 0.0
    %3815 = vmatpush1.msra.mxu0 0.0
    %3816 = vmatprep.subr.mxu0 0.0
    %3817 = vmatpush1.msra.mxu0 0.0
    %3818 = vmatprep.subr.mxu0 0.0
    %3819 = vmatpush1.msra.mxu0 0.0
    %3820 = vmatprep.subr.mxu0 0.0
    %3821 = vmatpush1.msra.mxu0 0.0
    %3822 = vmatprep.subr.mxu0 0.0
    %3823 = vmatpush1.msra.mxu0 %v3794
    %3824 = vmatprep.subr.mxu0 0.0
    %3825 = vmatpush1.msra.mxu0 %v3793
    %3826 = vmatprep.subr.mxu0 0.0
    %3827 = vmatpush1.msra.mxu0 %v3792
    %3828 = vmatprep.subr.mxu0 0.0
    %3829 = vmatpush1.msra.mxu0 %v3791
    %3830 = vmatprep.subr.mxu0 0.0
    %3831 = vmatpush2.msra.mxu0 0.0
    %3832 = vmatprep.subr.mxu0 0.0
    %3833 = vmatpush2.msra.mxu0 0.0
    %3834 = vmatprep.subr.mxu0 0.0
    %3835 = vmatpush2.msra.mxu0 0.0
    %3836 = vmatprep.subr.mxu0 0.0
    %3837 = vmatpush2.msra.mxu0 0.0
    %3838 = vmatprep.subr.mxu0 0.0
    %3839 = vmatpush2.msra.mxu0 0.0
    %3840 = vmatprep.subr.mxu0 0.0
    %3841 = vmatpush2.msra.mxu0 0.0
    %3842 = vmatprep.subr.mxu0 0.0
    %3843 = vmatpush2.msra.mxu0 0.0
    %3844 = vmatprep.subr.mxu0 0.0
    %3845 = vmatpush2.msra.mxu0 0.0
    %3846 = vmatprep.subr.mxu0 0.0
    %3847 = vmatpush2.msra.mxu0 0.0
    %3848 = vmatprep.subr.mxu0 0.0
    %3849 = vmatpush2.msra.mxu0 0.0
    %3850 = vmatprep.subr.mxu0 0.0
    %3851 = vmatpush2.msra.mxu0 0.0
    %3852 = vmatprep.subr.mxu0 0.0
    %3853 = vmatpush2.msra.mxu0 0.0
    %3854 = vmatprep.subr.mxu0 0.0
    %3855 = vmatpush2.msra.mxu0 0.0
    %3856 = vmatprep.subr.mxu0 0.0
    %3857 = vmatpush2.msra.mxu0 0.0
    %3858 = vmatprep.subr.mxu0 0.0
    %3859 = vmatpush2.msra.mxu0 0.0
    %3860 = vmatprep.subr.mxu0 0.0
    %3861 = vmatpush2.msra.mxu0 0.0
    %3862 = vmatprep.mubr.f32.mxu0 0.0
    %3863 = vmatmul.mubr.f32.gmra.mxu0 %v3796
    %v3864 = vpop.f32.mrf.mxu0
    %v3865 = vadd.f32 0.0, %v3864
    %v3866 = vpop.f32.mrf.mxu0
    %3867 = vdwg.mxu0
    %v3868 = vadd.f32 %v3788, %v3865
    %v3869 = vld [vmem:[%s27] sm:$0x1]
    %v3871 = vlaneseq
    %v3872 = vshrl.u32 %v3871, 7
    %v3873 = vsub.s32 0, %v3872
    %v3874 = vrot.slane %v3869, %v3873
    %v3876 = vadd.f32 %v3868, %v3874
    %v3877 = vmul.f32 %v3876, 0.01
    %v3878 = vmax.f32 %v3876, %v3877
    %3879 = vmatprep.subr.mxu0 0.0
    %3880 = vmatpush1.msra.mxu0 0.0
    %3881 = vmatprep.subr.mxu0 0.0
    %3882 = vmatpush1.msra.mxu0 0.0
    %3883 = vmatprep.subr.mxu0 0.0
    %3884 = vmatpush1.msra.mxu0 0.0
    %3885 = vmatprep.subr.mxu0 0.0
    %3886 = vmatpush1.msra.mxu0 0.0
    %3887 = vmatprep.subr.mxu0 0.0
    %3888 = vmatpush1.msra.mxu0 0.0
    %3889 = vmatprep.subr.mxu0 0.0
    %3890 = vmatpush1.msra.mxu0 0.0
    %3891 = vmatprep.subr.mxu0 0.0
    %3892 = vmatpush1.msra.mxu0 0.0
    %3893 = vmatprep.subr.mxu0 0.0
    %3894 = vmatpush1.msra.mxu0 0.0
    %3895 = vmatprep.subr.mxu0 0.0
    %3896 = vmatpush1.msra.mxu0 0.0
    %3897 = vmatprep.subr.mxu0 0.0
    %3898 = vmatpush1.msra.mxu0 0.0
    %3899 = vmatprep.subr.mxu0 0.0
    %3900 = vmatpush1.msra.mxu0 0.0
    %3901 = vmatprep.subr.mxu0 0.0
    %3902 = vmatpush1.msra.mxu0 0.0
    %3903 = vmatprep.subr.mxu0 0.0
    %3904 = vmatpush1.msra.mxu0 0.0
    %3905 = vmatprep.subr.mxu0 0.0
    %3906 = vmatpush1.msra.mxu0 0.0
    %3907 = vmatprep.subr.mxu0 0.0
    %3908 = vmatpush1.msra.mxu0 0.0
    %3909 = vmatprep.subr.mxu0 0.0
    %3910 = vmatpush1.msra.mxu0 %v3878
    %3911 = vmatprep.subr.mxu0 0.0
    %3912 = vmatpush2.msra.mxu0 0.0
    %3913 = vmatprep.subr.mxu0 0.0
    %3914 = vmatpush2.msra.mxu0 0.0
    %3915 = vmatprep.subr.mxu0 0.0
    %3916 = vmatpush2.msra.mxu0 0.0
    %3917 = vmatprep.subr.mxu0 0.0
    %3918 = vmatpush2.msra.mxu0 0.0
    %3919 = vmatprep.subr.mxu0 0.0
    %3920 = vmatpush2.msra.mxu0 0.0
    %3921 = vmatprep.subr.mxu0 0.0
    %3922 = vmatpush2.msra.mxu0 0.0
    %3923 = vmatprep.subr.mxu0 0.0
    %3924 = vmatpush2.msra.mxu0 0.0
    %3925 = vmatprep.subr.mxu0 0.0
    %3926 = vmatpush2.msra.mxu0 0.0
    %3927 = vmatprep.subr.mxu0 0.0
    %3928 = vmatpush2.msra.mxu0 0.0
    %3929 = vmatprep.subr.mxu0 0.0
    %3930 = vmatpush2.msra.mxu0 0.0
    %3931 = vmatprep.subr.mxu0 0.0
    %3932 = vmatpush2.msra.mxu0 0.0
    %3933 = vmatprep.subr.mxu0 0.0
    %3934 = vmatpush2.msra.mxu0 0.0
    %3935 = vmatprep.subr.mxu0 0.0
    %3936 = vmatpush2.msra.mxu0 0.0
    %3937 = vmatprep.subr.mxu0 0.0
    %3938 = vmatpush2.msra.mxu0 0.0
    %3939 = vmatprep.subr.mxu0 0.0
    %3940 = vmatpush2.msra.mxu0 0.0
    %3941 = vmatprep.subr.mxu0 0.0
    %3942 = vmatpush2.msra.mxu0 0.0
    %3943 = vmatprep.mubr.f32.mxu0 0.0
    %3944 = vmatmul.mubr.f32.gmra.mxu0 %v3491
    %v3945 = vpop.f32.mrf.mxu0
    %v3946 = vadd.f32 0.0, %v3945
    %v3947 = vpop.f32.mrf.mxu0
    %3948 = vdwg.mxu0
    %3949 = vmatprep.subr.mxu0 0.0
    %3950 = vmatpush1.msra.mxu0 0.0
    %3951 = vmatprep.subr.mxu0 0.0
    %3952 = vmatpush1.msra.mxu0 0.0
    %3953 = vmatprep.subr.mxu0 0.0
    %3954 = vmatpush1.msra.mxu0 0.0
    %3955 = vmatprep.subr.mxu0 0.0
    %3956 = vmatpush1.msra.mxu0 0.0
    %3957 = vmatprep.subr.mxu0 0.0
    %3958 = vmatpush1.msra.mxu0 0.0
    %3959 = vmatprep.subr.mxu0 0.0
    %3960 = vmatpush1.msra.mxu0 0.0
    %3961 = vmatprep.subr.mxu0 0.0
    %3962 = vmatpush1.msra.mxu0 0.0
    %3963 = vmatprep.subr.mxu0 0.0
    %3964 = vmatpush1.msra.mxu0 0.0
    %3965 = vmatprep.subr.mxu0 0.0
    %3966 = vmatpush1.msra.mxu0 0.0
    %3967 = vmatprep.subr.mxu0 0.0
    %3968 = vmatpush1.msra.mxu0 0.0
    %3969 = vmatprep.subr.mxu0 0.0
    %3970 = vmatpush1.msra.mxu0 0.0
    %3971 = vmatprep.subr.mxu0 0.0
    %3972 = vmatpush1.msra.mxu0 0.0
    %3973 = vmatprep.subr.mxu0 0.0
    %3974 = vmatpush1.msra.mxu0 0.0
    %3975 = vmatprep.subr.mxu0 0.0
    %3976 = vmatpush1.msra.mxu0 0.0
    %3977 = vmatprep.subr.mxu0 0.0
    %3978 = vmatpush1.msra.mxu0 0.0
    %3979 = vmatprep.subr.mxu0 0.0
    %3980 = vmatpush1.msra.mxu0 %v3878
    %3981 = vmatprep.subr.mxu0 0.0
    %3982 = vmatpush2.msra.mxu0 0.0
    %3983 = vmatprep.subr.mxu0 0.0
    %3984 = vmatpush2.msra.mxu0 0.0
    %3985 = vmatprep.subr.mxu0 0.0
    %3986 = vmatpush2.msra.mxu0 0.0
    %3987 = vmatprep.subr.mxu0 0.0
    %3988 = vmatpush2.msra.mxu0 0.0
    %3989 = vmatprep.subr.mxu0 0.0
    %3990 = vmatpush2.msra.mxu0 0.0
    %3991 = vmatprep.subr.mxu0 0.0
    %3992 = vmatpush2.msra.mxu0 0.0
    %3993 = vmatprep.subr.mxu0 0.0
    %3994 = vmatpush2.msra.mxu0 0.0
    %3995 = vmatprep.subr.mxu0 0.0
    %3996 = vmatpush2.msra.mxu0 0.0
    %3997 = vmatprep.subr.mxu0 0.0
    %3998 = vmatpush2.msra.mxu0 0.0
    %3999 = vmatprep.subr.mxu0 0.0
    %4000 = vmatpush2.msra.mxu0 0.0
    %4001 = vmatprep.subr.mxu0 0.0
    %4002 = vmatpush2.msra.mxu0 0.0
    %4003 = vmatprep.subr.mxu0 0.0
    %4004 = vmatpush2.msra.mxu0 0.0
    %4005 = vmatprep.subr.mxu0 0.0
    %4006 = vmatpush2.msra.mxu0 0.0
    %4007 = vmatprep.subr.mxu0 0.0
    %4008 = vmatpush2.msra.mxu0 0.0
    %4009 = vmatprep.subr.mxu0 0.0
    %4010 = vmatpush2.msra.mxu0 0.0
    %4011 = vmatprep.subr.mxu0 0.0
    %4012 = vmatpush2.msra.mxu0 0.0
    %4013 = vmatprep.mubr.f32.mxu0 0.0
    %4014 = vmatmul.mubr.f32.gmra.mxu0 %v3565
    %v4015 = vpop.f32.mrf.mxu0
    %v4016 = vadd.f32 0.0, %v4015
    %v4017 = vpop.f32.mrf.mxu0
    %4018 = vdwg.mxu0
    %v4019 = vld [vmem:[%s33] sm:$0xff]
    %v4020 = vld [vmem:[%s33 + $0x8] sm:$0xff]
    %v4021 = vld [vmem:[%s33 + $0x10] sm:$0xff]
    %v4022 = vld [vmem:[%s33 + $0x18] sm:$0xff]
    %v4023 = vld [vmem:[%s33 + $0x20] sm:$0xff]
    %v4024 = vld [vmem:[%s33 + $0x28] sm:$0xff]
    %v4025 = vld [vmem:[%s33 + $0x30] sm:$0xff]
    %v4026 = vld [vmem:[%s33 + $0x38] sm:$0xff]
    %v4028 = vsel %vm445, %v3878, 0
    %4030 = vmatprep.subr.mxu0 0.0
    %4031 = vmatpush1.msra.mxu0 0.0
    %4032 = vmatprep.subr.mxu0 0.0
    %4033 = vmatpush1.msra.mxu0 0.0
    %4034 = vmatprep.subr.mxu0 0.0
    %4035 = vmatpush1.msra.mxu0 0.0
    %4036 = vmatprep.subr.mxu0 0.0
    %4037 = vmatpush1.msra.mxu0 0.0
    %4038 = vmatprep.subr.mxu0 0.0
    %4039 = vmatpush1.msra.mxu0 0.0
    %4040 = vmatprep.subr.mxu0 0.0
    %4041 = vmatpush1.msra.mxu0 0.0
    %4042 = vmatprep.subr.mxu0 0.0
    %4043 = vmatpush1.msra.mxu0 0.0
    %4044 = vmatprep.subr.mxu0 0.0
    %4045 = vmatpush1.msra.mxu0 0.0
    %4046 = vmatprep.subr.mxu0 0.0
    %4047 = vmatpush1.msra.mxu0 0.0
    %4048 = vmatprep.subr.mxu0 0.0
    %4049 = vmatpush1.msra.mxu0 0.0
    %4050 = vmatprep.subr.mxu0 0.0
    %4051 = vmatpush1.msra.mxu0 0.0
    %4052 = vmatprep.subr.mxu0 0.0
    %4053 = vmatpush1.msra.mxu0 0.0
    %4054 = vmatprep.subr.mxu0 0.0
    %4055 = vmatpush1.msra.mxu0 %v4026
    %4056 = vmatprep.subr.mxu0 0.0
    %4057 = vmatpush1.msra.mxu0 %v4025
    %4058 = vmatprep.subr.mxu0 0.0
    %4059 = vmatpush1.msra.mxu0 %v4024
    %4060 = vmatprep.subr.mxu0 0.0
    %4061 = vmatpush1.msra.mxu0 %v4023
    %4062 = vmatprep.subr.mxu0 0.0
    %4063 = vmatpush2.msra.mxu0 0.0
    %4064 = vmatprep.subr.mxu0 0.0
    %4065 = vmatpush2.msra.mxu0 0.0
    %4066 = vmatprep.subr.mxu0 0.0
    %4067 = vmatpush2.msra.mxu0 0.0
    %4068 = vmatprep.subr.mxu0 0.0
    %4069 = vmatpush2.msra.mxu0 0.0
    %4070 = vmatprep.subr.mxu0 0.0
    %4071 = vmatpush2.msra.mxu0 0.0
    %4072 = vmatprep.subr.mxu0 0.0
    %4073 = vmatpush2.msra.mxu0 0.0
    %4074 = vmatprep.subr.mxu0 0.0
    %4075 = vmatpush2.msra.mxu0 0.0
    %4076 = vmatprep.subr.mxu0 0.0
    %4077 = vmatpush2.msra.mxu0 0.0
    %4078 = vmatprep.subr.mxu0 0.0
    %4079 = vmatpush2.msra.mxu0 0.0
    %4080 = vmatprep.subr.mxu0 0.0
    %4081 = vmatpush2.msra.mxu0 0.0
    %4082 = vmatprep.subr.mxu0 0.0
    %4083 = vmatpush2.msra.mxu0 0.0
    %4084 = vmatprep.subr.mxu0 0.0
    %4085 = vmatpush2.msra.mxu0 0.0
    %4086 = vmatprep.subr.mxu0 0.0
    %4087 = vmatpush2.msra.mxu0 0.0
    %4088 = vmatprep.subr.mxu0 0.0
    %4089 = vmatpush2.msra.mxu0 0.0
    %4090 = vmatprep.subr.mxu0 0.0
    %4091 = vmatpush2.msra.mxu0 0.0
    %4092 = vmatprep.subr.mxu0 0.0
    %4093 = vmatpush2.msra.mxu0 0.0
    %4094 = vmatprep.mubr.f32.mxu0 0.0
    %4095 = vmatmul.mubr.f32.gmra.mxu0 %v4028
    %v4096 = vpop.f32.mrf.mxu0
    %v4097 = vadd.f32 0.0, %v4096
    %v4098 = vpop.f32.mrf.mxu0
    %4099 = vdwg.mxu0
    %v4101 = vsel %vm445, %v3946, 0
    %4103 = vmatprep.subr.mxu0 0.0
    %4104 = vmatpush1.msra.mxu0 0.0
    %4105 = vmatprep.subr.mxu0 0.0
    %4106 = vmatpush1.msra.mxu0 0.0
    %4107 = vmatprep.subr.mxu0 0.0
    %4108 = vmatpush1.msra.mxu0 0.0
    %4109 = vmatprep.subr.mxu0 0.0
    %4110 = vmatpush1.msra.mxu0 0.0
    %4111 = vmatprep.subr.mxu0 0.0
    %4112 = vmatpush1.msra.mxu0 0.0
    %4113 = vmatprep.subr.mxu0 0.0
    %4114 = vmatpush1.msra.mxu0 0.0
    %4115 = vmatprep.subr.mxu0 0.0
    %4116 = vmatpush1.msra.mxu0 0.0
    %4117 = vmatprep.subr.mxu0 0.0
    %4118 = vmatpush1.msra.mxu0 0.0
    %4119 = vmatprep.subr.mxu0 0.0
    %4120 = vmatpush1.msra.mxu0 0.0
    %4121 = vmatprep.subr.mxu0 0.0
    %4122 = vmatpush1.msra.mxu0 0.0
    %4123 = vmatprep.subr.mxu0 0.0
    %4124 = vmatpush1.msra.mxu0 0.0
    %4125 = vmatprep.subr.mxu0 0.0
    %4126 = vmatpush1.msra.mxu0 0.0
    %4127 = vmatprep.subr.mxu0 0.0
    %4128 = vmatpush1.msra.mxu0 %v4022
    %4129 = vmatprep.subr.mxu0 0.0
    %4130 = vmatpush1.msra.mxu0 %v4021
    %4131 = vmatprep.subr.mxu0 0.0
    %4132 = vmatpush1.msra.mxu0 %v4020
    %4133 = vmatprep.subr.mxu0 0.0
    %4134 = vmatpush1.msra.mxu0 %v4019
    %4135 = vmatprep.subr.mxu0 0.0
    %4136 = vmatpush2.msra.mxu0 0.0
    %4137 = vmatprep.subr.mxu0 0.0
    %4138 = vmatpush2.msra.mxu0 0.0
    %4139 = vmatprep.subr.mxu0 0.0
    %4140 = vmatpush2.msra.mxu0 0.0
    %4141 = vmatprep.subr.mxu0 0.0
    %4142 = vmatpush2.msra.mxu0 0.0
    %4143 = vmatprep.subr.mxu0 0.0
    %4144 = vmatpush2.msra.mxu0 0.0
    %4145 = vmatprep.subr.mxu0 0.0
    %4146 = vmatpush2.msra.mxu0 0.0
    %4147 = vmatprep.subr.mxu0 0.0
    %4148 = vmatpush2.msra.mxu0 0.0
    %4149 = vmatprep.subr.mxu0 0.0
    %4150 = vmatpush2.msra.mxu0 0.0
    %4151 = vmatprep.subr.mxu0 0.0
    %4152 = vmatpush2.msra.mxu0 0.0
    %4153 = vmatprep.subr.mxu0 0.0
    %4154 = vmatpush2.msra.mxu0 0.0
    %4155 = vmatprep.subr.mxu0 0.0
    %4156 = vmatpush2.msra.mxu0 0.0
    %4157 = vmatprep.subr.mxu0 0.0
    %4158 = vmatpush2.msra.mxu0 0.0
    %4159 = vmatprep.subr.mxu0 0.0
    %4160 = vmatpush2.msra.mxu0 0.0
    %4161 = vmatprep.subr.mxu0 0.0
    %4162 = vmatpush2.msra.mxu0 0.0
    %4163 = vmatprep.subr.mxu0 0.0
    %4164 = vmatpush2.msra.mxu0 0.0
    %4165 = vmatprep.subr.mxu0 0.0
    %4166 = vmatpush2.msra.mxu0 0.0
    %4167 = vmatprep.mubr.f32.mxu0 0.0
    %4168 = vmatmul.mubr.f32.gmra.mxu0 %v4101
    %v4169 = vpop.f32.mrf.mxu0
    %v4170 = vadd.f32 %v4097, %v4169
    %v4171 = vpop.f32.mrf.mxu0
    %4172 = vdwg.mxu0
    %v4173 = vld [vmem:[%s33 + $0x40] sm:$0xff]
    %v4174 = vld [vmem:[%s33 + $0x48] sm:$0xff]
    %v4175 = vld [vmem:[%s33 + $0x50] sm:$0xff]
    %v4176 = vld [vmem:[%s33 + $0x58] sm:$0xff]
    %v4178 = vsel %vm445, %v4016, 0
    %4180 = vmatprep.subr.mxu0 0.0
    %4181 = vmatpush1.msra.mxu0 0.0
    %4182 = vmatprep.subr.mxu0 0.0
    %4183 = vmatpush1.msra.mxu0 0.0
    %4184 = vmatprep.subr.mxu0 0.0
    %4185 = vmatpush1.msra.mxu0 0.0
    %4186 = vmatprep.subr.mxu0 0.0
    %4187 = vmatpush1.msra.mxu0 0.0
    %4188 = vmatprep.subr.mxu0 0.0
    %4189 = vmatpush1.msra.mxu0 0.0
    %4190 = vmatprep.subr.mxu0 0.0
    %4191 = vmatpush1.msra.mxu0 0.0
    %4192 = vmatprep.subr.mxu0 0.0
    %4193 = vmatpush1.msra.mxu0 0.0
    %4194 = vmatprep.subr.mxu0 0.0
    %4195 = vmatpush1.msra.mxu0 0.0
    %4196 = vmatprep.subr.mxu0 0.0
    %4197 = vmatpush1.msra.mxu0 0.0
    %4198 = vmatprep.subr.mxu0 0.0
    %4199 = vmatpush1.msra.mxu0 0.0
    %4200 = vmatprep.subr.mxu0 0.0
    %4201 = vmatpush1.msra.mxu0 0.0
    %4202 = vmatprep.subr.mxu0 0.0
    %4203 = vmatpush1.msra.mxu0 0.0
    %4204 = vmatprep.subr.mxu0 0.0
    %4205 = vmatpush1.msra.mxu0 %v4176
    %4206 = vmatprep.subr.mxu0 0.0
    %4207 = vmatpush1.msra.mxu0 %v4175
    %4208 = vmatprep.subr.mxu0 0.0
    %4209 = vmatpush1.msra.mxu0 %v4174
    %4210 = vmatprep.subr.mxu0 0.0
    %4211 = vmatpush1.msra.mxu0 %v4173
    %4212 = vmatprep.subr.mxu0 0.0
    %4213 = vmatpush2.msra.mxu0 0.0
    %4214 = vmatprep.subr.mxu0 0.0
    %4215 = vmatpush2.msra.mxu0 0.0
    %4216 = vmatprep.subr.mxu0 0.0
    %4217 = vmatpush2.msra.mxu0 0.0
    %4218 = vmatprep.subr.mxu0 0.0
    %4219 = vmatpush2.msra.mxu0 0.0
    %4220 = vmatprep.subr.mxu0 0.0
    %4221 = vmatpush2.msra.mxu0 0.0
    %4222 = vmatprep.subr.mxu0 0.0
    %4223 = vmatpush2.msra.mxu0 0.0
    %4224 = vmatprep.subr.mxu0 0.0
    %4225 = vmatpush2.msra.mxu0 0.0
    %4226 = vmatprep.subr.mxu0 0.0
    %4227 = vmatpush2.msra.mxu0 0.0
    %4228 = vmatprep.subr.mxu0 0.0
    %4229 = vmatpush2.msra.mxu0 0.0
    %4230 = vmatprep.subr.mxu0 0.0
    %4231 = vmatpush2.msra.mxu0 0.0
    %4232 = vmatprep.subr.mxu0 0.0
    %4233 = vmatpush2.msra.mxu0 0.0
    %4234 = vmatprep.subr.mxu0 0.0
    %4235 = vmatpush2.msra.mxu0 0.0
    %4236 = vmatprep.subr.mxu0 0.0
    %4237 = vmatpush2.msra.mxu0 0.0
    %4238 = vmatprep.subr.mxu0 0.0
    %4239 = vmatpush2.msra.mxu0 0.0
    %4240 = vmatprep.subr.mxu0 0.0
    %4241 = vmatpush2.msra.mxu0 0.0
    %4242 = vmatprep.subr.mxu0 0.0
    %4243 = vmatpush2.msra.mxu0 0.0
    %4244 = vmatprep.mubr.f32.mxu0 0.0
    %4245 = vmatmul.mubr.f32.gmra.mxu0 %v4178
    %v4246 = vpop.f32.mrf.mxu0
    %v4247 = vadd.f32 0.0, %v4246
    %v4248 = vpop.f32.mrf.mxu0
    %4249 = vdwg.mxu0
    %v4250 = vadd.f32 %v4170, %v4247
    %v4251 = vld [vmem:[%s31] sm:$0x1]
    %v4253 = vlaneseq
    %v4254 = vshrl.u32 %v4253, 7
    %v4255 = vsub.s32 0, %v4254
    %v4256 = vrot.slane %v4251, %v4255
    %v4258 = vadd.f32 %v4250, %v4256
    %v4259 = vmul.f32 %v4258, 0.01
    %v4260 = vmax.f32 %v4258, %v4259
    %v4261 = vld [vmem:[%s55] sm:$0xf]
    %v4263 = vsel %vm3489, %v4261, 0
    %4265 = vmatprep.subr.mxu0 0.0
    %4266 = vmatpush1.msra.mxu0 0.0
    %4267 = vmatprep.subr.mxu0 0.0
    %4268 = vmatpush1.msra.mxu0 0.0
    %4269 = vmatprep.subr.mxu0 0.0
    %4270 = vmatpush1.msra.mxu0 0.0
    %4271 = vmatprep.subr.mxu0 0.0
    %4272 = vmatpush1.msra.mxu0 0.0
    %4273 = vmatprep.subr.mxu0 0.0
    %4274 = vmatpush1.msra.mxu0 0.0
    %4275 = vmatprep.subr.mxu0 0.0
    %4276 = vmatpush1.msra.mxu0 0.0
    %4277 = vmatprep.subr.mxu0 0.0
    %4278 = vmatpush1.msra.mxu0 0.0
    %4279 = vmatprep.subr.mxu0 0.0
    %4280 = vmatpush1.msra.mxu0 0.0
    %4281 = vmatprep.subr.mxu0 0.0
    %4282 = vmatpush1.msra.mxu0 0.0
    %4283 = vmatprep.subr.mxu0 0.0
    %4284 = vmatpush1.msra.mxu0 0.0
    %4285 = vmatprep.subr.mxu0 0.0
    %4286 = vmatpush1.msra.mxu0 0.0
    %4287 = vmatprep.subr.mxu0 0.0
    %4288 = vmatpush1.msra.mxu0 0.0
    %4289 = vmatprep.subr.mxu0 0.0
    %4290 = vmatpush1.msra.mxu0 0.0
    %4291 = vmatprep.subr.mxu0 0.0
    %4292 = vmatpush1.msra.mxu0 0.0
    %4293 = vmatprep.subr.mxu0 0.0
    %4294 = vmatpush1.msra.mxu0 0.0
    %4295 = vmatprep.subr.mxu0 0.0
    %4296 = vmatpush1.msra.mxu0 %v4260
    %4297 = vmatprep.subr.mxu0 0.0
    %4298 = vmatpush2.msra.mxu0 0.0
    %4299 = vmatprep.subr.mxu0 0.0
    %4300 = vmatpush2.msra.mxu0 0.0
    %4301 = vmatprep.subr.mxu0 0.0
    %4302 = vmatpush2.msra.mxu0 0.0
    %4303 = vmatprep.subr.mxu0 0.0
    %4304 = vmatpush2.msra.mxu0 0.0
    %4305 = vmatprep.subr.mxu0 0.0
    %4306 = vmatpush2.msra.mxu0 0.0
    %4307 = vmatprep.subr.mxu0 0.0
    %4308 = vmatpush2.msra.mxu0 0.0
    %4309 = vmatprep.subr.mxu0 0.0
    %4310 = vmatpush2.msra.mxu0 0.0
    %4311 = vmatprep.subr.mxu0 0.0
    %4312 = vmatpush2.msra.mxu0 0.0
    %4313 = vmatprep.subr.mxu0 0.0
    %4314 = vmatpush2.msra.mxu0 0.0
    %4315 = vmatprep.subr.mxu0 0.0
    %4316 = vmatpush2.msra.mxu0 0.0
    %4317 = vmatprep.subr.mxu0 0.0
    %4318 = vmatpush2.msra.mxu0 0.0
    %4319 = vmatprep.subr.mxu0 0.0
    %4320 = vmatpush2.msra.mxu0 0.0
    %4321 = vmatprep.subr.mxu0 0.0
    %4322 = vmatpush2.msra.mxu0 0.0
    %4323 = vmatprep.subr.mxu0 0.0
    %4324 = vmatpush2.msra.mxu0 0.0
    %4325 = vmatprep.subr.mxu0 0.0
    %4326 = vmatpush2.msra.mxu0 0.0
    %4327 = vmatprep.subr.mxu0 0.0
    %4328 = vmatpush2.msra.mxu0 0.0
    %4329 = vmatprep.mubr.f32.mxu0 0.0
    %4330 = vmatmul.mubr.f32.gmra.mxu0 %v4263
    %v4331 = vpop.f32.mrf.mxu0
    %v4332 = vadd.f32 0.0, %v4331
    %v4333 = vpop.f32.mrf.mxu0
    %4334 = vdwg.mxu0
    %v4335 = vld [vmem:[%s57] sm:$0xf]
    %v4337 = vsel %vm3489, %v4335, 0
    %4339 = vmatprep.subr.mxu0 0.0
    %4340 = vmatpush1.msra.mxu0 0.0
    %4341 = vmatprep.subr.mxu0 0.0
    %4342 = vmatpush1.msra.mxu0 0.0
    %4343 = vmatprep.subr.mxu0 0.0
    %4344 = vmatpush1.msra.mxu0 0.0
    %4345 = vmatprep.subr.mxu0 0.0
    %4346 = vmatpush1.msra.mxu0 0.0
    %4347 = vmatprep.subr.mxu0 0.0
    %4348 = vmatpush1.msra.mxu0 0.0
    %4349 = vmatprep.subr.mxu0 0.0
    %4350 = vmatpush1.msra.mxu0 0.0
    %4351 = vmatprep.subr.mxu0 0.0
    %4352 = vmatpush1.msra.mxu0 0.0
    %4353 = vmatprep.subr.mxu0 0.0
    %4354 = vmatpush1.msra.mxu0 0.0
    %4355 = vmatprep.subr.mxu0 0.0
    %4356 = vmatpush1.msra.mxu0 0.0
    %4357 = vmatprep.subr.mxu0 0.0
    %4358 = vmatpush1.msra.mxu0 0.0
    %4359 = vmatprep.subr.mxu0 0.0
    %4360 = vmatpush1.msra.mxu0 0.0
    %4361 = vmatprep.subr.mxu0 0.0
    %4362 = vmatpush1.msra.mxu0 0.0
    %4363 = vmatprep.subr.mxu0 0.0
    %4364 = vmatpush1.msra.mxu0 0.0
    %4365 = vmatprep.subr.mxu0 0.0
    %4366 = vmatpush1.msra.mxu0 0.0
    %4367 = vmatprep.subr.mxu0 0.0
    %4368 = vmatpush1.msra.mxu0 0.0
    %4369 = vmatprep.subr.mxu0 0.0
    %4370 = vmatpush1.msra.mxu0 %v4260
    %4371 = vmatprep.subr.mxu0 0.0
    %4372 = vmatpush2.msra.mxu0 0.0
    %4373 = vmatprep.subr.mxu0 0.0
    %4374 = vmatpush2.msra.mxu0 0.0
    %4375 = vmatprep.subr.mxu0 0.0
    %4376 = vmatpush2.msra.mxu0 0.0
    %4377 = vmatprep.subr.mxu0 0.0
    %4378 = vmatpush2.msra.mxu0 0.0
    %4379 = vmatprep.subr.mxu0 0.0
    %4380 = vmatpush2.msra.mxu0 0.0
    %4381 = vmatprep.subr.mxu0 0.0
    %4382 = vmatpush2.msra.mxu0 0.0
    %4383 = vmatprep.subr.mxu0 0.0
    %4384 = vmatpush2.msra.mxu0 0.0
    %4385 = vmatprep.subr.mxu0 0.0
    %4386 = vmatpush2.msra.mxu0 0.0
    %4387 = vmatprep.subr.mxu0 0.0
    %4388 = vmatpush2.msra.mxu0 0.0
    %4389 = vmatprep.subr.mxu0 0.0
    %4390 = vmatpush2.msra.mxu0 0.0
    %4391 = vmatprep.subr.mxu0 0.0
    %4392 = vmatpush2.msra.mxu0 0.0
    %4393 = vmatprep.subr.mxu0 0.0
    %4394 = vmatpush2.msra.mxu0 0.0
    %4395 = vmatprep.subr.mxu0 0.0
    %4396 = vmatpush2.msra.mxu0 0.0
    %4397 = vmatprep.subr.mxu0 0.0
    %4398 = vmatpush2.msra.mxu0 0.0
    %4399 = vmatprep.subr.mxu0 0.0
    %4400 = vmatpush2.msra.mxu0 0.0
    %4401 = vmatprep.subr.mxu0 0.0
    %4402 = vmatpush2.msra.mxu0 0.0
    %4403 = vmatprep.mubr.f32.mxu0 0.0
    %4404 = vmatmul.mubr.f32.gmra.mxu0 %v4337
    %v4405 = vpop.f32.mrf.mxu0
    %v4406 = vadd.f32 0.0, %v4405
    %v4407 = vpop.f32.mrf.mxu0
    %4408 = vdwg.mxu0
    %v4409 = vmax.f32 %v4332, %v4406
    %v4410 = vld [vmem:[%s51] sm:$0xff]
    %v4411 = vld [vmem:[%s51 + $0x8] sm:$0xff]
    %v4412 = vld [vmem:[%s51 + $0x10] sm:$0xff]
    %v4413 = vld [vmem:[%s51 + $0x18] sm:$0xff]
    %v4415 = vsel %vm445, %v4409, 0
    %4417 = vmatprep.subr.mxu0 0.0
    %4418 = vmatpush1.msra.mxu0 0.0
    %4419 = vmatprep.subr.mxu0 0.0
    %4420 = vmatpush1.msra.mxu0 0.0
    %4421 = vmatprep.subr.mxu0 0.0
    %4422 = vmatpush1.msra.mxu0 0.0
    %4423 = vmatprep.subr.mxu0 0.0
    %4424 = vmatpush1.msra.mxu0 0.0
    %4425 = vmatprep.subr.mxu0 0.0
    %4426 = vmatpush1.msra.mxu0 0.0
    %4427 = vmatprep.subr.mxu0 0.0
    %4428 = vmatpush1.msra.mxu0 0.0
    %4429 = vmatprep.subr.mxu0 0.0
    %4430 = vmatpush1.msra.mxu0 0.0
    %4431 = vmatprep.subr.mxu0 0.0
    %4432 = vmatpush1.msra.mxu0 0.0
    %4433 = vmatprep.subr.mxu0 0.0
    %4434 = vmatpush1.msra.mxu0 0.0
    %4435 = vmatprep.subr.mxu0 0.0
    %4436 = vmatpush1.msra.mxu0 0.0
    %4437 = vmatprep.subr.mxu0 0.0
    %4438 = vmatpush1.msra.mxu0 0.0
    %4439 = vmatprep.subr.mxu0 0.0
    %4440 = vmatpush1.msra.mxu0 0.0
    %4441 = vmatprep.subr.mxu0 0.0
    %4442 = vmatpush1.msra.mxu0 %v4413
    %4443 = vmatprep.subr.mxu0 0.0
    %4444 = vmatpush1.msra.mxu0 %v4412
    %4445 = vmatprep.subr.mxu0 0.0
    %4446 = vmatpush1.msra.mxu0 %v4411
    %4447 = vmatprep.subr.mxu0 0.0
    %4448 = vmatpush1.msra.mxu0 %v4410
    %4449 = vmatprep.subr.mxu0 0.0
    %4450 = vmatpush2.msra.mxu0 0.0
    %4451 = vmatprep.subr.mxu0 0.0
    %4452 = vmatpush2.msra.mxu0 0.0
    %4453 = vmatprep.subr.mxu0 0.0
    %4454 = vmatpush2.msra.mxu0 0.0
    %4455 = vmatprep.subr.mxu0 0.0
    %4456 = vmatpush2.msra.mxu0 0.0
    %4457 = vmatprep.subr.mxu0 0.0
    %4458 = vmatpush2.msra.mxu0 0.0
    %4459 = vmatprep.subr.mxu0 0.0
    %4460 = vmatpush2.msra.mxu0 0.0
    %4461 = vmatprep.subr.mxu0 0.0
    %4462 = vmatpush2.msra.mxu0 0.0
    %4463 = vmatprep.subr.mxu0 0.0
    %4464 = vmatpush2.msra.mxu0 0.0
    %4465 = vmatprep.subr.mxu0 0.0
    %4466 = vmatpush2.msra.mxu0 0.0
    %4467 = vmatprep.subr.mxu0 0.0
    %4468 = vmatpush2.msra.mxu0 0.0
    %4469 = vmatprep.subr.mxu0 0.0
    %4470 = vmatpush2.msra.mxu0 0.0
    %4471 = vmatprep.subr.mxu0 0.0
    %4472 = vmatpush2.msra.mxu0 0.0
    %4473 = vmatprep.subr.mxu0 0.0
    %4474 = vmatpush2.msra.mxu0 0.0
    %4475 = vmatprep.subr.mxu0 0.0
    %4476 = vmatpush2.msra.mxu0 0.0
    %4477 = vmatprep.subr.mxu0 0.0
    %4478 = vmatpush2.msra.mxu0 0.0
    %4479 = vmatprep.subr.mxu0 0.0
    %4480 = vmatpush2.msra.mxu0 0.0
    %4481 = vmatprep.mubr.f32.mxu0 0.0
    %4482 = vmatmul.mubr.f32.gmra.mxu0 %v4415
    %v4483 = vpop.f32.mrf.mxu0
    %v4484 = vadd.f32 0.0, %v4483
    %v4485 = vpop.f32.mrf.mxu0
    %4486 = vdwg.mxu0
    %v4487 = vld [vmem:[%s53] sm:$0xff]
    %v4488 = vld [vmem:[%s53 + $0x8] sm:$0xff]
    %v4489 = vld [vmem:[%s53 + $0x10] sm:$0xff]
    %v4490 = vld [vmem:[%s53 + $0x18] sm:$0xff]
    %4491 = vmatprep.subr.mxu0 0.0
    %4492 = vmatpush1.msra.mxu0 0.0
    %4493 = vmatprep.subr.mxu0 0.0
    %4494 = vmatpush1.msra.mxu0 0.0
    %4495 = vmatprep.subr.mxu0 0.0
    %4496 = vmatpush1.msra.mxu0 0.0
    %4497 = vmatprep.subr.mxu0 0.0
    %4498 = vmatpush1.msra.mxu0 0.0
    %4499 = vmatprep.subr.mxu0 0.0
    %4500 = vmatpush1.msra.mxu0 0.0
    %4501 = vmatprep.subr.mxu0 0.0
    %4502 = vmatpush1.msra.mxu0 0.0
    %4503 = vmatprep.subr.mxu0 0.0
    %4504 = vmatpush1.msra.mxu0 0.0
    %4505 = vmatprep.subr.mxu0 0.0
    %4506 = vmatpush1.msra.mxu0 0.0
    %4507 = vmatprep.subr.mxu0 0.0
    %4508 = vmatpush1.msra.mxu0 0.0
    %4509 = vmatprep.subr.mxu0 0.0
    %4510 = vmatpush1.msra.mxu0 0.0
    %4511 = vmatprep.subr.mxu0 0.0
    %4512 = vmatpush1.msra.mxu0 0.0
    %4513 = vmatprep.subr.mxu0 0.0
    %4514 = vmatpush1.msra.mxu0 0.0
    %4515 = vmatprep.subr.mxu0 0.0
    %4516 = vmatpush1.msra.mxu0 %v4490
    %4517 = vmatprep.subr.mxu0 0.0
    %4518 = vmatpush1.msra.mxu0 %v4489
    %4519 = vmatprep.subr.mxu0 0.0
    %4520 = vmatpush1.msra.mxu0 %v4488
    %4521 = vmatprep.subr.mxu0 0.0
    %4522 = vmatpush1.msra.mxu0 %v4487
    %4523 = vmatprep.subr.mxu0 0.0
    %4524 = vmatpush2.msra.mxu0 0.0
    %4525 = vmatprep.subr.mxu0 0.0
    %4526 = vmatpush2.msra.mxu0 0.0
    %4527 = vmatprep.subr.mxu0 0.0
    %4528 = vmatpush2.msra.mxu0 0.0
    %4529 = vmatprep.subr.mxu0 0.0
    %4530 = vmatpush2.msra.mxu0 0.0
    %4531 = vmatprep.subr.mxu0 0.0
    %4532 = vmatpush2.msra.mxu0 0.0
    %4533 = vmatprep.subr.mxu0 0.0
    %4534 = vmatpush2.msra.mxu0 0.0
    %4535 = vmatprep.subr.mxu0 0.0
    %4536 = vmatpush2.msra.mxu0 0.0
    %4537 = vmatprep.subr.mxu0 0.0
    %4538 = vmatpush2.msra.mxu0 0.0
    %4539 = vmatprep.subr.mxu0 0.0
    %4540 = vmatpush2.msra.mxu0 0.0
    %4541 = vmatprep.subr.mxu0 0.0
    %4542 = vmatpush2.msra.mxu0 0.0
    %4543 = vmatprep.subr.mxu0 0.0
    %4544 = vmatpush2.msra.mxu0 0.0
    %4545 = vmatprep.subr.mxu0 0.0
    %4546 = vmatpush2.msra.mxu0 0.0
    %4547 = vmatprep.subr.mxu0 0.0
    %4548 = vmatpush2.msra.mxu0 0.0
    %4549 = vmatprep.subr.mxu0 0.0
    %4550 = vmatpush2.msra.mxu0 0.0
    %4551 = vmatprep.subr.mxu0 0.0
    %4552 = vmatpush2.msra.mxu0 0.0
    %4553 = vmatprep.subr.mxu0 0.0
    %4554 = vmatpush2.msra.mxu0 0.0
    %4555 = vmatprep.mubr.f32.mxu0 0.0
    %4556 = vmatmul.mubr.f32.gmra.mxu0 %v4415
    %v4557 = vpop.f32.mrf.mxu0
    %v4558 = vadd.f32 0.0, %v4557
    %v4559 = vpop.f32.mrf.mxu0
    %4560 = vdwg.mxu0
    %v4561 = vmax.f32 %v4484, %v4558
    %v4562 = vld [vmem:[%s83] sm:$0xf]
    %vm4563 = vcmask 31744
    %v4565 = vsel %vm4563, %v4562, 0
    %vm4567 = vcmask 1043456
    %v4569 = vsel %vm4567, %v4561, 0
    %4571 = vmatprep.subr.mxu0 0.0
    %4572 = vmatpush1.msra.mxu0 0.0
    %4573 = vmatprep.subr.mxu0 0.0
    %4574 = vmatpush1.msra.mxu0 0.0
    %4575 = vmatprep.subr.mxu0 0.0
    %4576 = vmatpush1.msra.mxu0 0.0
    %4577 = vmatprep.subr.mxu0 0.0
    %4578 = vmatpush1.msra.mxu0 0.0
    %4579 = vmatprep.subr.mxu0 0.0
    %4580 = vmatpush1.msra.mxu0 0.0
    %4581 = vmatprep.subr.mxu0 0.0
    %4582 = vmatpush1.msra.mxu0 0.0
    %4583 = vmatprep.subr.mxu0 0.0
    %4584 = vmatpush1.msra.mxu0 0.0
    %4585 = vmatprep.subr.mxu0 0.0
    %4586 = vmatpush1.msra.mxu0 0.0
    %4587 = vmatprep.subr.mxu0 0.0
    %4588 = vmatpush1.msra.mxu0 0.0
    %4589 = vmatprep.subr.mxu0 0.0
    %4590 = vmatpush1.msra.mxu0 0.0
    %4591 = vmatprep.subr.mxu0 0.0
    %4592 = vmatpush1.msra.mxu0 0.0
    %4593 = vmatprep.subr.mxu0 0.0
    %4594 = vmatpush1.msra.mxu0 0.0
    %4595 = vmatprep.subr.mxu0 0.0
    %4596 = vmatpush1.msra.mxu0 0.0
    %4597 = vmatprep.subr.mxu0 0.0
    %4598 = vmatpush1.msra.mxu0 0.0
    %4599 = vmatprep.subr.mxu0 0.0
    %4600 = vmatpush1.msra.mxu0 0.0
    %4601 = vmatprep.subr.mxu0 0.0
    %4602 = vmatpush1.msra.mxu0 %v4569
    %4603 = vmatprep.subr.mxu0 0.0
    %4604 = vmatpush2.msra.mxu0 0.0
    %4605 = vmatprep.subr.mxu0 0.0
    %4606 = vmatpush2.msra.mxu0 0.0
    %4607 = vmatprep.subr.mxu0 0.0
    %4608 = vmatpush2.msra.mxu0 0.0
    %4609 = vmatprep.subr.mxu0 0.0
    %4610 = vmatpush2.msra.mxu0 0.0
    %4611 = vmatprep.subr.mxu0 0.0
    %4612 = vmatpush2.msra.mxu0 0.0
    %4613 = vmatprep.subr.mxu0 0.0
    %4614 = vmatpush2.msra.mxu0 0.0
    %4615 = vmatprep.subr.mxu0 0.0
    %4616 = vmatpush2.msra.mxu0 0.0
    %4617 = vmatprep.subr.mxu0 0.0
    %4618 = vmatpush2.msra.mxu0 0.0
    %4619 = vmatprep.subr.mxu0 0.0
    %4620 = vmatpush2.msra.mxu0 0.0
    %4621 = vmatprep.subr.mxu0 0.0
    %4622 = vmatpush2.msra.mxu0 0.0
    %4623 = vmatprep.subr.mxu0 0.0
    %4624 = vmatpush2.msra.mxu0 0.0
    %4625 = vmatprep.subr.mxu0 0.0
    %4626 = vmatpush2.msra.mxu0 0.0
    %4627 = vmatprep.subr.mxu0 0.0
    %4628 = vmatpush2.msra.mxu0 0.0
    %4629 = vmatprep.subr.mxu0 0.0
    %4630 = vmatpush2.msra.mxu0 0.0
    %4631 = vmatprep.subr.mxu0 0.0
    %4632 = vmatpush2.msra.mxu0 0.0
    %4633 = vmatprep.subr.mxu0 0.0
    %4634 = vmatpush2.msra.mxu0 0.0
    %4635 = vmatprep.mubr.f32.mxu0 0.0
    %4636 = vmatmul.mubr.f32.gmra.mxu0 %v4565
    %v4637 = vpop.f32.mrf.mxu0
    %v4638 = vadd.f32 0.0, %v4637
    %v4639 = vpop.f32.mrf.mxu0
    %4640 = vdwg.mxu0
    %v4641 = vld [vmem:[%s85] sm:$0xf]
    %v4643 = vsel %vm4563, %v4641, 0
    %4645 = vmatprep.subr.mxu0 0.0
    %4646 = vmatpush1.msra.mxu0 0.0
    %4647 = vmatprep.subr.mxu0 0.0
    %4648 = vmatpush1.msra.mxu0 0.0
    %4649 = vmatprep.subr.mxu0 0.0
    %4650 = vmatpush1.msra.mxu0 0.0
    %4651 = vmatprep.subr.mxu0 0.0
    %4652 = vmatpush1.msra.mxu0 0.0
    %4653 = vmatprep.subr.mxu0 0.0
    %4654 = vmatpush1.msra.mxu0 0.0
    %4655 = vmatprep.subr.mxu0 0.0
    %4656 = vmatpush1.msra.mxu0 0.0
    %4657 = vmatprep.subr.mxu0 0.0
    %4658 = vmatpush1.msra.mxu0 0.0
    %4659 = vmatprep.subr.mxu0 0.0
    %4660 = vmatpush1.msra.mxu0 0.0
    %4661 = vmatprep.subr.mxu0 0.0
    %4662 = vmatpush1.msra.mxu0 0.0
    %4663 = vmatprep.subr.mxu0 0.0
    %4664 = vmatpush1.msra.mxu0 0.0
    %4665 = vmatprep.subr.mxu0 0.0
    %4666 = vmatpush1.msra.mxu0 0.0
    %4667 = vmatprep.subr.mxu0 0.0
    %4668 = vmatpush1.msra.mxu0 0.0
    %4669 = vmatprep.subr.mxu0 0.0
    %4670 = vmatpush1.msra.mxu0 0.0
    %4671 = vmatprep.subr.mxu0 0.0
    %4672 = vmatpush1.msra.mxu0 0.0
    %4673 = vmatprep.subr.mxu0 0.0
    %4674 = vmatpush1.msra.mxu0 0.0
    %4675 = vmatprep.subr.mxu0 0.0
    %4676 = vmatpush1.msra.mxu0 %v4569
    %4677 = vmatprep.subr.mxu0 0.0
    %4678 = vmatpush2.msra.mxu0 0.0
    %4679 = vmatprep.subr.mxu0 0.0
    %4680 = vmatpush2.msra.mxu0 0.0
    %4681 = vmatprep.subr.mxu0 0.0
    %4682 = vmatpush2.msra.mxu0 0.0
    %4683 = vmatprep.subr.mxu0 0.0
    %4684 = vmatpush2.msra.mxu0 0.0
    %4685 = vmatprep.subr.mxu0 0.0
    %4686 = vmatpush2.msra.mxu0 0.0
    %4687 = vmatprep.subr.mxu0 0.0
    %4688 = vmatpush2.msra.mxu0 0.0
    %4689 = vmatprep.subr.mxu0 0.0
    %4690 = vmatpush2.msra.mxu0 0.0
    %4691 = vmatprep.subr.mxu0 0.0
    %4692 = vmatpush2.msra.mxu0 0.0
    %4693 = vmatprep.subr.mxu0 0.0
    %4694 = vmatpush2.msra.mxu0 0.0
    %4695 = vmatprep.subr.mxu0 0.0
    %4696 = vmatpush2.msra.mxu0 0.0
    %4697 = vmatprep.subr.mxu0 0.0
    %4698 = vmatpush2.msra.mxu0 0.0
    %4699 = vmatprep.subr.mxu0 0.0
    %4700 = vmatpush2.msra.mxu0 0.0
    %4701 = vmatprep.subr.mxu0 0.0
    %4702 = vmatpush2.msra.mxu0 0.0
    %4703 = vmatprep.subr.mxu0 0.0
    %4704 = vmatpush2.msra.mxu0 0.0
    %4705 = vmatprep.subr.mxu0 0.0
    %4706 = vmatpush2.msra.mxu0 0.0
    %4707 = vmatprep.subr.mxu0 0.0
    %4708 = vmatpush2.msra.mxu0 0.0
    %4709 = vmatprep.mubr.f32.mxu0 0.0
    %4710 = vmatmul.mubr.f32.gmra.mxu0 %v4643
    %v4711 = vpop.f32.mrf.mxu0
    %v4712 = vadd.f32 0.0, %v4711
    %v4713 = vpop.f32.mrf.mxu0
    %4714 = vdwg.mxu0
    %v4715 = vld [vmem:[%s45] sm:$0xff]
    %v4716 = vld [vmem:[%s45 + $0x8] sm:$0xff]
    %v4717 = vld [vmem:[%s45 + $0x10] sm:$0xff]
    %v4718 = vld [vmem:[%s45 + $0x18] sm:$0xff]
    %v4719 = vsel %vm2299, %v4561, 0
    %4721 = vmatprep.subr.mxu0 0.0
    %4722 = vmatpush1.msra.mxu0 0.0
    %4723 = vmatprep.subr.mxu0 0.0
    %4724 = vmatpush1.msra.mxu0 0.0
    %4725 = vmatprep.subr.mxu0 0.0
    %4726 = vmatpush1.msra.mxu0 0.0
    %4727 = vmatprep.subr.mxu0 0.0
    %4728 = vmatpush1.msra.mxu0 0.0
    %4729 = vmatprep.subr.mxu0 0.0
    %4730 = vmatpush1.msra.mxu0 0.0
    %4731 = vmatprep.subr.mxu0 0.0
    %4732 = vmatpush1.msra.mxu0 0.0
    %4733 = vmatprep.subr.mxu0 0.0
    %4734 = vmatpush1.msra.mxu0 0.0
    %4735 = vmatprep.subr.mxu0 0.0
    %4736 = vmatpush1.msra.mxu0 0.0
    %4737 = vmatprep.subr.mxu0 0.0
    %4738 = vmatpush1.msra.mxu0 0.0
    %4739 = vmatprep.subr.mxu0 0.0
    %4740 = vmatpush1.msra.mxu0 0.0
    %4741 = vmatprep.subr.mxu0 0.0
    %4742 = vmatpush1.msra.mxu0 0.0
    %4743 = vmatprep.subr.mxu0 0.0
    %4744 = vmatpush1.msra.mxu0 0.0
    %4745 = vmatprep.subr.mxu0 0.0
    %4746 = vmatpush1.msra.mxu0 0.0
    %4747 = vmatprep.subr.mxu0 0.0
    %4748 = vmatpush1.msra.mxu0 0.0
    %4749 = vmatprep.subr.mxu0 0.0
    %4750 = vmatpush1.msra.mxu0 %v4718
    %4751 = vmatprep.subr.mxu0 0.0
    %4752 = vmatpush1.msra.mxu0 %v4717
    %4753 = vmatprep.subr.mxu0 0.0
    %4754 = vmatpush2.msra.mxu0 0.0
    %4755 = vmatprep.subr.mxu0 0.0
    %4756 = vmatpush2.msra.mxu0 0.0
    %4757 = vmatprep.subr.mxu0 0.0
    %4758 = vmatpush2.msra.mxu0 0.0
    %4759 = vmatprep.subr.mxu0 0.0
    %4760 = vmatpush2.msra.mxu0 0.0
    %4761 = vmatprep.subr.mxu0 0.0
    %4762 = vmatpush2.msra.mxu0 0.0
    %4763 = vmatprep.subr.mxu0 0.0
    %4764 = vmatpush2.msra.mxu0 0.0
    %4765 = vmatprep.subr.mxu0 0.0
    %4766 = vmatpush2.msra.mxu0 0.0
    %4767 = vmatprep.subr.mxu0 0.0
    %4768 = vmatpush2.msra.mxu0 0.0
    %4769 = vmatprep.subr.mxu0 0.0
    %4770 = vmatpush2.msra.mxu0 0.0
    %4771 = vmatprep.subr.mxu0 0.0
    %4772 = vmatpush2.msra.mxu0 0.0
    %4773 = vmatprep.subr.mxu0 0.0
    %4774 = vmatpush2.msra.mxu0 0.0
    %4775 = vmatprep.subr.mxu0 0.0
    %4776 = vmatpush2.msra.mxu0 0.0
    %4777 = vmatprep.subr.mxu0 0.0
    %4778 = vmatpush2.msra.mxu0 0.0
    %4779 = vmatprep.subr.mxu0 0.0
    %4780 = vmatpush2.msra.mxu0 0.0
    %4781 = vmatprep.subr.mxu0 0.0
    %4782 = vmatpush2.msra.mxu0 0.0
    %4783 = vmatprep.subr.mxu0 0.0
    %4784 = vmatpush2.msra.mxu0 0.0
    %4785 = vmatprep.mubr.f32.mxu0 0.0
    %4786 = vmatmul.mubr.f32.gmra.mxu0 %v4719
    %v4787 = vpop.f32.mrf.mxu0
    %v4788 = vadd.f32 0.0, %v4787
    %v4789 = vpop.f32.mrf.mxu0
    %4790 = vdwg.mxu0
    %v4792 = vsel %vm2299, %v4638, 0
    %4794 = vmatprep.subr.mxu0 0.0
    %4795 = vmatpush1.msra.mxu0 0.0
    %4796 = vmatprep.subr.mxu0 0.0
    %4797 = vmatpush1.msra.mxu0 0.0
    %4798 = vmatprep.subr.mxu0 0.0
    %4799 = vmatpush1.msra.mxu0 0.0
    %4800 = vmatprep.subr.mxu0 0.0
    %4801 = vmatpush1.msra.mxu0 0.0
    %4802 = vmatprep.subr.mxu0 0.0
    %4803 = vmatpush1.msra.mxu0 0.0
    %4804 = vmatprep.subr.mxu0 0.0
    %4805 = vmatpush1.msra.mxu0 0.0
    %4806 = vmatprep.subr.mxu0 0.0
    %4807 = vmatpush1.msra.mxu0 0.0
    %4808 = vmatprep.subr.mxu0 0.0
    %4809 = vmatpush1.msra.mxu0 0.0
    %4810 = vmatprep.subr.mxu0 0.0
    %4811 = vmatpush1.msra.mxu0 0.0
    %4812 = vmatprep.subr.mxu0 0.0
    %4813 = vmatpush1.msra.mxu0 0.0
    %4814 = vmatprep.subr.mxu0 0.0
    %4815 = vmatpush1.msra.mxu0 0.0
    %4816 = vmatprep.subr.mxu0 0.0
    %4817 = vmatpush1.msra.mxu0 0.0
    %4818 = vmatprep.subr.mxu0 0.0
    %4819 = vmatpush1.msra.mxu0 0.0
    %4820 = vmatprep.subr.mxu0 0.0
    %4821 = vmatpush1.msra.mxu0 0.0
    %4822 = vmatprep.subr.mxu0 0.0
    %4823 = vmatpush1.msra.mxu0 %v4716
    %4824 = vmatprep.subr.mxu0 0.0
    %4825 = vmatpush1.msra.mxu0 %v4715
    %4826 = vmatprep.subr.mxu0 0.0
    %4827 = vmatpush2.msra.mxu0 0.0
    %4828 = vmatprep.subr.mxu0 0.0
    %4829 = vmatpush2.msra.mxu0 0.0
    %4830 = vmatprep.subr.mxu0 0.0
    %4831 = vmatpush2.msra.mxu0 0.0
    %4832 = vmatprep.subr.mxu0 0.0
    %4833 = vmatpush2.msra.mxu0 0.0
    %4834 = vmatprep.subr.mxu0 0.0
    %4835 = vmatpush2.msra.mxu0 0.0
    %4836 = vmatprep.subr.mxu0 0.0
    %4837 = vmatpush2.msra.mxu0 0.0
    %4838 = vmatprep.subr.mxu0 0.0
    %4839 = vmatpush2.msra.mxu0 0.0
    %4840 = vmatprep.subr.mxu0 0.0
    %4841 = vmatpush2.msra.mxu0 0.0
    %4842 = vmatprep.subr.mxu0 0.0
    %4843 = vmatpush2.msra.mxu0 0.0
    %4844 = vmatprep.subr.mxu0 0.0
    %4845 = vmatpush2.msra.mxu0 0.0
    %4846 = vmatprep.subr.mxu0 0.0
    %4847 = vmatpush2.msra.mxu0 0.0
    %4848 = vmatprep.subr.mxu0 0.0
    %4849 = vmatpush2.msra.mxu0 0.0
    %4850 = vmatprep.subr.mxu0 0.0
    %4851 = vmatpush2.msra.mxu0 0.0
    %4852 = vmatprep.subr.mxu0 0.0
    %4853 = vmatpush2.msra.mxu0 0.0
    %4854 = vmatprep.subr.mxu0 0.0
    %4855 = vmatpush2.msra.mxu0 0.0
    %4856 = vmatprep.subr.mxu0 0.0
    %4857 = vmatpush2.msra.mxu0 0.0
    %4858 = vmatprep.mubr.f32.mxu0 0.0
    %4859 = vmatmul.mubr.f32.gmra.mxu0 %v4792
    %v4860 = vpop.f32.mrf.mxu0
    %v4861 = vadd.f32 %v4788, %v4860
    %v4862 = vpop.f32.mrf.mxu0
    %4863 = vdwg.mxu0
    %v4864 = vld [vmem:[%s45 + $0x20] sm:$0xff]
    %v4865 = vld [vmem:[%s45 + $0x28] sm:$0xff]
    %v4867 = vsel %vm2299, %v4712, 0
    %4869 = vmatprep.subr.mxu0 0.0
    %4870 = vmatpush1.msra.mxu0 0.0
    %4871 = vmatprep.subr.mxu0 0.0
    %4872 = vmatpush1.msra.mxu0 0.0
    %4873 = vmatprep.subr.mxu0 0.0
    %4874 = vmatpush1.msra.mxu0 0.0
    %4875 = vmatprep.subr.mxu0 0.0
    %4876 = vmatpush1.msra.mxu0 0.0
    %4877 = vmatprep.subr.mxu0 0.0
    %4878 = vmatpush1.msra.mxu0 0.0
    %4879 = vmatprep.subr.mxu0 0.0
    %4880 = vmatpush1.msra.mxu0 0.0
    %4881 = vmatprep.subr.mxu0 0.0
    %4882 = vmatpush1.msra.mxu0 0.0
    %4883 = vmatprep.subr.mxu0 0.0
    %4884 = vmatpush1.msra.mxu0 0.0
    %4885 = vmatprep.subr.mxu0 0.0
    %4886 = vmatpush1.msra.mxu0 0.0
    %4887 = vmatprep.subr.mxu0 0.0
    %4888 = vmatpush1.msra.mxu0 0.0
    %4889 = vmatprep.subr.mxu0 0.0
    %4890 = vmatpush1.msra.mxu0 0.0
    %4891 = vmatprep.subr.mxu0 0.0
    %4892 = vmatpush1.msra.mxu0 0.0
    %4893 = vmatprep.subr.mxu0 0.0
    %4894 = vmatpush1.msra.mxu0 0.0
    %4895 = vmatprep.subr.mxu0 0.0
    %4896 = vmatpush1.msra.mxu0 0.0
    %4897 = vmatprep.subr.mxu0 0.0
    %4898 = vmatpush1.msra.mxu0 %v4865
    %4899 = vmatprep.subr.mxu0 0.0
    %4900 = vmatpush1.msra.mxu0 %v4864
    %4901 = vmatprep.subr.mxu0 0.0
    %4902 = vmatpush2.msra.mxu0 0.0
    %4903 = vmatprep.subr.mxu0 0.0
    %4904 = vmatpush2.msra.mxu0 0.0
    %4905 = vmatprep.subr.mxu0 0.0
    %4906 = vmatpush2.msra.mxu0 0.0
    %4907 = vmatprep.subr.mxu0 0.0
    %4908 = vmatpush2.msra.mxu0 0.0
    %4909 = vmatprep.subr.mxu0 0.0
    %4910 = vmatpush2.msra.mxu0 0.0
    %4911 = vmatprep.subr.mxu0 0.0
    %4912 = vmatpush2.msra.mxu0 0.0
    %4913 = vmatprep.subr.mxu0 0.0
    %4914 = vmatpush2.msra.mxu0 0.0
    %4915 = vmatprep.subr.mxu0 0.0
    %4916 = vmatpush2.msra.mxu0 0.0
    %4917 = vmatprep.subr.mxu0 0.0
    %4918 = vmatpush2.msra.mxu0 0.0
    %4919 = vmatprep.subr.mxu0 0.0
    %4920 = vmatpush2.msra.mxu0 0.0
    %4921 = vmatprep.subr.mxu0 0.0
    %4922 = vmatpush2.msra.mxu0 0.0
    %4923 = vmatprep.subr.mxu0 0.0
    %4924 = vmatpush2.msra.mxu0 0.0
    %4925 = vmatprep.subr.mxu0 0.0
    %4926 = vmatpush2.msra.mxu0 0.0
    %4927 = vmatprep.subr.mxu0 0.0
    %4928 = vmatpush2.msra.mxu0 0.0
    %4929 = vmatprep.subr.mxu0 0.0
    %4930 = vmatpush2.msra.mxu0 0.0
    %4931 = vmatprep.subr.mxu0 0.0
    %4932 = vmatpush2.msra.mxu0 0.0
    %4933 = vmatprep.mubr.f32.mxu0 0.0
    %4934 = vmatmul.mubr.f32.gmra.mxu0 %v4867
    %v4935 = vpop.f32.mrf.mxu0
    %v4936 = vadd.f32 0.0, %v4935
    %v4937 = vpop.f32.mrf.mxu0
    %4938 = vdwg.mxu0
    %v4939 = vadd.f32 %v4861, %v4936
    %v4940 = vld [vmem:[#allocation2] sm:$0x1]
    %v4942 = vlaneseq
    %v4943 = vshrl.u32 %v4942, 7
    %v4944 = vsub.s32 0, %v4943
    %v4945 = vrot.slane %v4940, %v4944
    %v4947 = vadd.f32 %v4939, %v4945
    %v4948 = vmul.f32 %v4947, 0.01
    %v4949 = vmax.f32 %v4947, %v4948
    %v4951 = vsel %vm4567, %v4949, 0
    %4953 = vmatprep.subr.mxu0 0.0
    %4954 = vmatpush1.msra.mxu0 0.0
    %4955 = vmatprep.subr.mxu0 0.0
    %4956 = vmatpush1.msra.mxu0 0.0
    %4957 = vmatprep.subr.mxu0 0.0
    %4958 = vmatpush1.msra.mxu0 0.0
    %4959 = vmatprep.subr.mxu0 0.0
    %4960 = vmatpush1.msra.mxu0 0.0
    %4961 = vmatprep.subr.mxu0 0.0
    %4962 = vmatpush1.msra.mxu0 0.0
    %4963 = vmatprep.subr.mxu0 0.0
    %4964 = vmatpush1.msra.mxu0 0.0
    %4965 = vmatprep.subr.mxu0 0.0
    %4966 = vmatpush1.msra.mxu0 0.0
    %4967 = vmatprep.subr.mxu0 0.0
    %4968 = vmatpush1.msra.mxu0 0.0
    %4969 = vmatprep.subr.mxu0 0.0
    %4970 = vmatpush1.msra.mxu0 0.0
    %4971 = vmatprep.subr.mxu0 0.0
    %4972 = vmatpush1.msra.mxu0 0.0
    %4973 = vmatprep.subr.mxu0 0.0
    %4974 = vmatpush1.msra.mxu0 0.0
    %4975 = vmatprep.subr.mxu0 0.0
    %4976 = vmatpush1.msra.mxu0 0.0
    %4977 = vmatprep.subr.mxu0 0.0
    %4978 = vmatpush1.msra.mxu0 0.0
    %4979 = vmatprep.subr.mxu0 0.0
    %4980 = vmatpush1.msra.mxu0 0.0
    %4981 = vmatprep.subr.mxu0 0.0
    %4982 = vmatpush1.msra.mxu0 0.0
    %4983 = vmatprep.subr.mxu0 0.0
    %4984 = vmatpush1.msra.mxu0 %v4951
    %4985 = vmatprep.subr.mxu0 0.0
    %4986 = vmatpush2.msra.mxu0 0.0
    %4987 = vmatprep.subr.mxu0 0.0
    %4988 = vmatpush2.msra.mxu0 0.0
    %4989 = vmatprep.subr.mxu0 0.0
    %4990 = vmatpush2.msra.mxu0 0.0
    %4991 = vmatprep.subr.mxu0 0.0
    %4992 = vmatpush2.msra.mxu0 0.0
    %4993 = vmatprep.subr.mxu0 0.0
    %4994 = vmatpush2.msra.mxu0 0.0
    %4995 = vmatprep.subr.mxu0 0.0
    %4996 = vmatpush2.msra.mxu0 0.0
    %4997 = vmatprep.subr.mxu0 0.0
    %4998 = vmatpush2.msra.mxu0 0.0
    %4999 = vmatprep.subr.mxu0 0.0
    %5000 = vmatpush2.msra.mxu0 0.0
    %5001 = vmatprep.subr.mxu0 0.0
    %5002 = vmatpush2.msra.mxu0 0.0
    %5003 = vmatprep.subr.mxu0 0.0
    %5004 = vmatpush2.msra.mxu0 0.0
    %5005 = vmatprep.subr.mxu0 0.0
    %5006 = vmatpush2.msra.mxu0 0.0
    %5007 = vmatprep.subr.mxu0 0.0
    %5008 = vmatpush2.msra.mxu0 0.0
    %5009 = vmatprep.subr.mxu0 0.0
    %5010 = vmatpush2.msra.mxu0 0.0
    %5011 = vmatprep.subr.mxu0 0.0
    %5012 = vmatpush2.msra.mxu0 0.0
    %5013 = vmatprep.subr.mxu0 0.0
    %5014 = vmatpush2.msra.mxu0 0.0
    %5015 = vmatprep.subr.mxu0 0.0
    %5016 = vmatpush2.msra.mxu0 0.0
    %5017 = vmatprep.mubr.f32.mxu0 0.0
    %5018 = vmatmul.mubr.f32.gmra.mxu0 %v4565
    %v5019 = vpop.f32.mrf.mxu0
    %v5020 = vadd.f32 0.0, %v5019
    %v5021 = vpop.f32.mrf.mxu0
    %5022 = vdwg.mxu0
    %5023 = vmatprep.subr.mxu0 0.0
    %5024 = vmatpush1.msra.mxu0 0.0
    %5025 = vmatprep.subr.mxu0 0.0
    %5026 = vmatpush1.msra.mxu0 0.0
    %5027 = vmatprep.subr.mxu0 0.0
    %5028 = vmatpush1.msra.mxu0 0.0
    %5029 = vmatprep.subr.mxu0 0.0
    %5030 = vmatpush1.msra.mxu0 0.0
    %5031 = vmatprep.subr.mxu0 0.0
    %5032 = vmatpush1.msra.mxu0 0.0
    %5033 = vmatprep.subr.mxu0 0.0
    %5034 = vmatpush1.msra.mxu0 0.0
    %5035 = vmatprep.subr.mxu0 0.0
    %5036 = vmatpush1.msra.mxu0 0.0
    %5037 = vmatprep.subr.mxu0 0.0
    %5038 = vmatpush1.msra.mxu0 0.0
    %5039 = vmatprep.subr.mxu0 0.0
    %5040 = vmatpush1.msra.mxu0 0.0
    %5041 = vmatprep.subr.mxu0 0.0
    %5042 = vmatpush1.msra.mxu0 0.0
    %5043 = vmatprep.subr.mxu0 0.0
    %5044 = vmatpush1.msra.mxu0 0.0
    %5045 = vmatprep.subr.mxu0 0.0
    %5046 = vmatpush1.msra.mxu0 0.0
    %5047 = vmatprep.subr.mxu0 0.0
    %5048 = vmatpush1.msra.mxu0 0.0
    %5049 = vmatprep.subr.mxu0 0.0
    %5050 = vmatpush1.msra.mxu0 0.0
    %5051 = vmatprep.subr.mxu0 0.0
    %5052 = vmatpush1.msra.mxu0 0.0
    %5053 = vmatprep.subr.mxu0 0.0
    %5054 = vmatpush1.msra.mxu0 %v4951
    %5055 = vmatprep.subr.mxu0 0.0
    %5056 = vmatpush2.msra.mxu0 0.0
    %5057 = vmatprep.subr.mxu0 0.0
    %5058 = vmatpush2.msra.mxu0 0.0
    %5059 = vmatprep.subr.mxu0 0.0
    %5060 = vmatpush2.msra.mxu0 0.0
    %5061 = vmatprep.subr.mxu0 0.0
    %5062 = vmatpush2.msra.mxu0 0.0
    %5063 = vmatprep.subr.mxu0 0.0
    %5064 = vmatpush2.msra.mxu0 0.0
    %5065 = vmatprep.subr.mxu0 0.0
    %5066 = vmatpush2.msra.mxu0 0.0
    %5067 = vmatprep.subr.mxu0 0.0
    %5068 = vmatpush2.msra.mxu0 0.0
    %5069 = vmatprep.subr.mxu0 0.0
    %5070 = vmatpush2.msra.mxu0 0.0
    %5071 = vmatprep.subr.mxu0 0.0
    %5072 = vmatpush2.msra.mxu0 0.0
    %5073 = vmatprep.subr.mxu0 0.0
    %5074 = vmatpush2.msra.mxu0 0.0
    %5075 = vmatprep.subr.mxu0 0.0
    %5076 = vmatpush2.msra.mxu0 0.0
    %5077 = vmatprep.subr.mxu0 0.0
    %5078 = vmatpush2.msra.mxu0 0.0
    %5079 = vmatprep.subr.mxu0 0.0
    %5080 = vmatpush2.msra.mxu0 0.0
    %5081 = vmatprep.subr.mxu0 0.0
    %5082 = vmatpush2.msra.mxu0 0.0
    %5083 = vmatprep.subr.mxu0 0.0
    %5084 = vmatpush2.msra.mxu0 0.0
    %5085 = vmatprep.subr.mxu0 0.0
    %5086 = vmatpush2.msra.mxu0 0.0
    %5087 = vmatprep.mubr.f32.mxu0 0.0
    %5088 = vmatmul.mubr.f32.gmra.mxu0 %v4643
    %v5089 = vpop.f32.mrf.mxu0
    %v5090 = vadd.f32 0.0, %v5089
    %v5091 = vpop.f32.mrf.mxu0
    %5092 = vdwg.mxu0
    %v5093 = vld [vmem:[%s49] sm:$0xff]
    %v5094 = vld [vmem:[%s49 + $0x8] sm:$0xff]
    %v5095 = vld [vmem:[%s49 + $0x10] sm:$0xff]
    %v5096 = vld [vmem:[%s49 + $0x18] sm:$0xff]
    %v5097 = vsel %vm2299, %v4949, 0
    %5099 = vmatprep.subr.mxu0 0.0
    %5100 = vmatpush1.msra.mxu0 0.0
    %5101 = vmatprep.subr.mxu0 0.0
    %5102 = vmatpush1.msra.mxu0 0.0
    %5103 = vmatprep.subr.mxu0 0.0
    %5104 = vmatpush1.msra.mxu0 0.0
    %5105 = vmatprep.subr.mxu0 0.0
    %5106 = vmatpush1.msra.mxu0 0.0
    %5107 = vmatprep.subr.mxu0 0.0
    %5108 = vmatpush1.msra.mxu0 0.0
    %5109 = vmatprep.subr.mxu0 0.0
    %5110 = vmatpush1.msra.mxu0 0.0
    %5111 = vmatprep.subr.mxu0 0.0
    %5112 = vmatpush1.msra.mxu0 0.0
    %5113 = vmatprep.subr.mxu0 0.0
    %5114 = vmatpush1.msra.mxu0 0.0
    %5115 = vmatprep.subr.mxu0 0.0
    %5116 = vmatpush1.msra.mxu0 0.0
    %5117 = vmatprep.subr.mxu0 0.0
    %5118 = vmatpush1.msra.mxu0 0.0
    %5119 = vmatprep.subr.mxu0 0.0
    %5120 = vmatpush1.msra.mxu0 0.0
    %5121 = vmatprep.subr.mxu0 0.0
    %5122 = vmatpush1.msra.mxu0 0.0
    %5123 = vmatprep.subr.mxu0 0.0
    %5124 = vmatpush1.msra.mxu0 0.0
    %5125 = vmatprep.subr.mxu0 0.0
    %5126 = vmatpush1.msra.mxu0 0.0
    %5127 = vmatprep.subr.mxu0 0.0
    %5128 = vmatpush1.msra.mxu0 %v5096
    %5129 = vmatprep.subr.mxu0 0.0
    %5130 = vmatpush1.msra.mxu0 %v5095
    %5131 = vmatprep.subr.mxu0 0.0
    %5132 = vmatpush2.msra.mxu0 0.0
    %5133 = vmatprep.subr.mxu0 0.0
    %5134 = vmatpush2.msra.mxu0 0.0
    %5135 = vmatprep.subr.mxu0 0.0
    %5136 = vmatpush2.msra.mxu0 0.0
    %5137 = vmatprep.subr.mxu0 0.0
    %5138 = vmatpush2.msra.mxu0 0.0
    %5139 = vmatprep.subr.mxu0 0.0
    %5140 = vmatpush2.msra.mxu0 0.0
    %5141 = vmatprep.subr.mxu0 0.0
    %5142 = vmatpush2.msra.mxu0 0.0
    %5143 = vmatprep.subr.mxu0 0.0
    %5144 = vmatpush2.msra.mxu0 0.0
    %5145 = vmatprep.subr.mxu0 0.0
    %5146 = vmatpush2.msra.mxu0 0.0
    %5147 = vmatprep.subr.mxu0 0.0
    %5148 = vmatpush2.msra.mxu0 0.0
    %5149 = vmatprep.subr.mxu0 0.0
    %5150 = vmatpush2.msra.mxu0 0.0
    %5151 = vmatprep.subr.mxu0 0.0
    %5152 = vmatpush2.msra.mxu0 0.0
    %5153 = vmatprep.subr.mxu0 0.0
    %5154 = vmatpush2.msra.mxu0 0.0
    %5155 = vmatprep.subr.mxu0 0.0
    %5156 = vmatpush2.msra.mxu0 0.0
    %5157 = vmatprep.subr.mxu0 0.0
    %5158 = vmatpush2.msra.mxu0 0.0
    %5159 = vmatprep.subr.mxu0 0.0
    %5160 = vmatpush2.msra.mxu0 0.0
    %5161 = vmatprep.subr.mxu0 0.0
    %5162 = vmatpush2.msra.mxu0 0.0
    %5163 = vmatprep.mubr.f32.mxu0 0.0
    %5164 = vmatmul.mubr.f32.gmra.mxu0 %v5097
    %v5165 = vpop.f32.mrf.mxu0
    %v5166 = vadd.f32 0.0, %v5165
    %v5167 = vpop.f32.mrf.mxu0
    %5168 = vdwg.mxu0
    %v5170 = vsel %vm2299, %v5020, 0
    %5172 = vmatprep.subr.mxu0 0.0
    %5173 = vmatpush1.msra.mxu0 0.0
    %5174 = vmatprep.subr.mxu0 0.0
    %5175 = vmatpush1.msra.mxu0 0.0
    %5176 = vmatprep.subr.mxu0 0.0
    %5177 = vmatpush1.msra.mxu0 0.0
    %5178 = vmatprep.subr.mxu0 0.0
    %5179 = vmatpush1.msra.mxu0 0.0
    %5180 = vmatprep.subr.mxu0 0.0
    %5181 = vmatpush1.msra.mxu0 0.0
    %5182 = vmatprep.subr.mxu0 0.0
    %5183 = vmatpush1.msra.mxu0 0.0
    %5184 = vmatprep.subr.mxu0 0.0
    %5185 = vmatpush1.msra.mxu0 0.0
    %5186 = vmatprep.subr.mxu0 0.0
    %5187 = vmatpush1.msra.mxu0 0.0
    %5188 = vmatprep.subr.mxu0 0.0
    %5189 = vmatpush1.msra.mxu0 0.0
    %5190 = vmatprep.subr.mxu0 0.0
    %5191 = vmatpush1.msra.mxu0 0.0
    %5192 = vmatprep.subr.mxu0 0.0
    %5193 = vmatpush1.msra.mxu0 0.0
    %5194 = vmatprep.subr.mxu0 0.0
    %5195 = vmatpush1.msra.mxu0 0.0
    %5196 = vmatprep.subr.mxu0 0.0
    %5197 = vmatpush1.msra.mxu0 0.0
    %5198 = vmatprep.subr.mxu0 0.0
    %5199 = vmatpush1.msra.mxu0 0.0
    %5200 = vmatprep.subr.mxu0 0.0
    %5201 = vmatpush1.msra.mxu0 %v5094
    %5202 = vmatprep.subr.mxu0 0.0
    %5203 = vmatpush1.msra.mxu0 %v5093
    %5204 = vmatprep.subr.mxu0 0.0
    %5205 = vmatpush2.msra.mxu0 0.0
    %5206 = vmatprep.subr.mxu0 0.0
    %5207 = vmatpush2.msra.mxu0 0.0
    %5208 = vmatprep.subr.mxu0 0.0
    %5209 = vmatpush2.msra.mxu0 0.0
    %5210 = vmatprep.subr.mxu0 0.0
    %5211 = vmatpush2.msra.mxu0 0.0
    %5212 = vmatprep.subr.mxu0 0.0
    %5213 = vmatpush2.msra.mxu0 0.0
    %5214 = vmatprep.subr.mxu0 0.0
    %5215 = vmatpush2.msra.mxu0 0.0
    %5216 = vmatprep.subr.mxu0 0.0
    %5217 = vmatpush2.msra.mxu0 0.0
    %5218 = vmatprep.subr.mxu0 0.0
    %5219 = vmatpush2.msra.mxu0 0.0
    %5220 = vmatprep.subr.mxu0 0.0
    %5221 = vmatpush2.msra.mxu0 0.0
    %5222 = vmatprep.subr.mxu0 0.0
    %5223 = vmatpush2.msra.mxu0 0.0
    %5224 = vmatprep.subr.mxu0 0.0
    %5225 = vmatpush2.msra.mxu0 0.0
    %5226 = vmatprep.subr.mxu0 0.0
    %5227 = vmatpush2.msra.mxu0 0.0
    %5228 = vmatprep.subr.mxu0 0.0
    %5229 = vmatpush2.msra.mxu0 0.0
    %5230 = vmatprep.subr.mxu0 0.0
    %5231 = vmatpush2.msra.mxu0 0.0
    %5232 = vmatprep.subr.mxu0 0.0
    %5233 = vmatpush2.msra.mxu0 0.0
    %5234 = vmatprep.subr.mxu0 0.0
    %5235 = vmatpush2.msra.mxu0 0.0
    %5236 = vmatprep.mubr.f32.mxu0 0.0
    %5237 = vmatmul.mubr.f32.gmra.mxu0 %v5170
    %v5238 = vpop.f32.mrf.mxu0
    %v5239 = vadd.f32 %v5166, %v5238
    %v5240 = vpop.f32.mrf.mxu0
    %5241 = vdwg.mxu0
    %v5242 = vld [vmem:[%s49 + $0x20] sm:$0xff]
    %v5243 = vld [vmem:[%s49 + $0x28] sm:$0xff]
    %v5245 = vsel %vm2299, %v5090, 0
    %5247 = vmatprep.subr.mxu0 0.0
    %5248 = vmatpush1.msra.mxu0 0.0
    %5249 = vmatprep.subr.mxu0 0.0
    %5250 = vmatpush1.msra.mxu0 0.0
    %5251 = vmatprep.subr.mxu0 0.0
    %5252 = vmatpush1.msra.mxu0 0.0
    %5253 = vmatprep.subr.mxu0 0.0
    %5254 = vmatpush1.msra.mxu0 0.0
    %5255 = vmatprep.subr.mxu0 0.0
    %5256 = vmatpush1.msra.mxu0 0.0
    %5257 = vmatprep.subr.mxu0 0.0
    %5258 = vmatpush1.msra.mxu0 0.0
    %5259 = vmatprep.subr.mxu0 0.0
    %5260 = vmatpush1.msra.mxu0 0.0
    %5261 = vmatprep.subr.mxu0 0.0
    %5262 = vmatpush1.msra.mxu0 0.0
    %5263 = vmatprep.subr.mxu0 0.0
    %5264 = vmatpush1.msra.mxu0 0.0
    %5265 = vmatprep.subr.mxu0 0.0
    %5266 = vmatpush1.msra.mxu0 0.0
    %5267 = vmatprep.subr.mxu0 0.0
    %5268 = vmatpush1.msra.mxu0 0.0
    %5269 = vmatprep.subr.mxu0 0.0
    %5270 = vmatpush1.msra.mxu0 0.0
    %5271 = vmatprep.subr.mxu0 0.0
    %5272 = vmatpush1.msra.mxu0 0.0
    %5273 = vmatprep.subr.mxu0 0.0
    %5274 = vmatpush1.msra.mxu0 0.0
    %5275 = vmatprep.subr.mxu0 0.0
    %5276 = vmatpush1.msra.mxu0 %v5243
    %5277 = vmatprep.subr.mxu0 0.0
    %5278 = vmatpush1.msra.mxu0 %v5242
    %5279 = vmatprep.subr.mxu0 0.0
    %5280 = vmatpush2.msra.mxu0 0.0
    %5281 = vmatprep.subr.mxu0 0.0
    %5282 = vmatpush2.msra.mxu0 0.0
    %5283 = vmatprep.subr.mxu0 0.0
    %5284 = vmatpush2.msra.mxu0 0.0
    %5285 = vmatprep.subr.mxu0 0.0
    %5286 = vmatpush2.msra.mxu0 0.0
    %5287 = vmatprep.subr.mxu0 0.0
    %5288 = vmatpush2.msra.mxu0 0.0
    %5289 = vmatprep.subr.mxu0 0.0
    %5290 = vmatpush2.msra.mxu0 0.0
    %5291 = vmatprep.subr.mxu0 0.0
    %5292 = vmatpush2.msra.mxu0 0.0
    %5293 = vmatprep.subr.mxu0 0.0
    %5294 = vmatpush2.msra.mxu0 0.0
    %5295 = vmatprep.subr.mxu0 0.0
    %5296 = vmatpush2.msra.mxu0 0.0
    %5297 = vmatprep.subr.mxu0 0.0
    %5298 = vmatpush2.msra.mxu0 0.0
    %5299 = vmatprep.subr.mxu0 0.0
    %5300 = vmatpush2.msra.mxu0 0.0
    %5301 = vmatprep.subr.mxu0 0.0
    %5302 = vmatpush2.msra.mxu0 0.0
    %5303 = vmatprep.subr.mxu0 0.0
    %5304 = vmatpush2.msra.mxu0 0.0
    %5305 = vmatprep.subr.mxu0 0.0
    %5306 = vmatpush2.msra.mxu0 0.0
    %5307 = vmatprep.subr.mxu0 0.0
    %5308 = vmatpush2.msra.mxu0 0.0
    %5309 = vmatprep.subr.mxu0 0.0
    %5310 = vmatpush2.msra.mxu0 0.0
    %5311 = vmatprep.mubr.f32.mxu0 0.0
    %5312 = vmatmul.mubr.f32.gmra.mxu0 %v5245
    %v5313 = vpop.f32.mrf.mxu0
    %v5314 = vadd.f32 0.0, %v5313
    %v5315 = vpop.f32.mrf.mxu0
    %5316 = vdwg.mxu0
    %v5317 = vadd.f32 %v5239, %v5314
    %v5318 = vld [vmem:[#allocation5] sm:$0x1]
    %v5320 = vlaneseq
    %v5321 = vshrl.u32 %v5320, 7
    %v5322 = vsub.s32 0, %v5321
    %v5323 = vrot.slane %v5318, %v5322
    %v5325 = vadd.f32 %v5317, %v5323
    %v5326 = vmul.f32 %v5325, 0.01
    %v5327 = vmax.f32 %v5325, %v5326
    %v5329 = vsel %vm4567, %v5327, 0
    %5331 = vmatprep.subr.mxu0 0.0
    %5332 = vmatpush1.msra.mxu0 0.0
    %5333 = vmatprep.subr.mxu0 0.0
    %5334 = vmatpush1.msra.mxu0 0.0
    %5335 = vmatprep.subr.mxu0 0.0
    %5336 = vmatpush1.msra.mxu0 0.0
    %5337 = vmatprep.subr.mxu0 0.0
    %5338 = vmatpush1.msra.mxu0 0.0
    %5339 = vmatprep.subr.mxu0 0.0
    %5340 = vmatpush1.msra.mxu0 0.0
    %5341 = vmatprep.subr.mxu0 0.0
    %5342 = vmatpush1.msra.mxu0 0.0
    %5343 = vmatprep.subr.mxu0 0.0
    %5344 = vmatpush1.msra.mxu0 0.0
    %5345 = vmatprep.subr.mxu0 0.0
    %5346 = vmatpush1.msra.mxu0 0.0
    %5347 = vmatprep.subr.mxu0 0.0
    %5348 = vmatpush1.msra.mxu0 0.0
    %5349 = vmatprep.subr.mxu0 0.0
    %5350 = vmatpush1.msra.mxu0 0.0
    %5351 = vmatprep.subr.mxu0 0.0
    %5352 = vmatpush1.msra.mxu0 0.0
    %5353 = vmatprep.subr.mxu0 0.0
    %5354 = vmatpush1.msra.mxu0 0.0
    %5355 = vmatprep.subr.mxu0 0.0
    %5356 = vmatpush1.msra.mxu0 0.0
    %5357 = vmatprep.subr.mxu0 0.0
    %5358 = vmatpush1.msra.mxu0 0.0
    %5359 = vmatprep.subr.mxu0 0.0
    %5360 = vmatpush1.msra.mxu0 0.0
    %5361 = vmatprep.subr.mxu0 0.0
    %5362 = vmatpush1.msra.mxu0 %v5329
    %5363 = vmatprep.subr.mxu0 0.0
    %5364 = vmatpush2.msra.mxu0 0.0
    %5365 = vmatprep.subr.mxu0 0.0
    %5366 = vmatpush2.msra.mxu0 0.0
    %5367 = vmatprep.subr.mxu0 0.0
    %5368 = vmatpush2.msra.mxu0 0.0
    %5369 = vmatprep.subr.mxu0 0.0
    %5370 = vmatpush2.msra.mxu0 0.0
    %5371 = vmatprep.subr.mxu0 0.0
    %5372 = vmatpush2.msra.mxu0 0.0
    %5373 = vmatprep.subr.mxu0 0.0
    %5374 = vmatpush2.msra.mxu0 0.0
    %5375 = vmatprep.subr.mxu0 0.0
    %5376 = vmatpush2.msra.mxu0 0.0
    %5377 = vmatprep.subr.mxu0 0.0
    %5378 = vmatpush2.msra.mxu0 0.0
    %5379 = vmatprep.subr.mxu0 0.0
    %5380 = vmatpush2.msra.mxu0 0.0
    %5381 = vmatprep.subr.mxu0 0.0
    %5382 = vmatpush2.msra.mxu0 0.0
    %5383 = vmatprep.subr.mxu0 0.0
    %5384 = vmatpush2.msra.mxu0 0.0
    %5385 = vmatprep.subr.mxu0 0.0
    %5386 = vmatpush2.msra.mxu0 0.0
    %5387 = vmatprep.subr.mxu0 0.0
    %5388 = vmatpush2.msra.mxu0 0.0
    %5389 = vmatprep.subr.mxu0 0.0
    %5390 = vmatpush2.msra.mxu0 0.0
    %5391 = vmatprep.subr.mxu0 0.0
    %5392 = vmatpush2.msra.mxu0 0.0
    %5393 = vmatprep.subr.mxu0 0.0
    %5394 = vmatpush2.msra.mxu0 0.0
    %5395 = vmatprep.mubr.f32.mxu0 0.0
    %5396 = vmatmul.mubr.f32.gmra.mxu0 %v4565
    %v5397 = vpop.f32.mrf.mxu0
    %v5398 = vadd.f32 0.0, %v5397
    %v5399 = vpop.f32.mrf.mxu0
    %5400 = vdwg.mxu0
    %5401 = vmatprep.subr.mxu0 0.0
    %5402 = vmatpush1.msra.mxu0 0.0
    %5403 = vmatprep.subr.mxu0 0.0
    %5404 = vmatpush1.msra.mxu0 0.0
    %5405 = vmatprep.subr.mxu0 0.0
    %5406 = vmatpush1.msra.mxu0 0.0
    %5407 = vmatprep.subr.mxu0 0.0
    %5408 = vmatpush1.msra.mxu0 0.0
    %5409 = vmatprep.subr.mxu0 0.0
    %5410 = vmatpush1.msra.mxu0 0.0
    %5411 = vmatprep.subr.mxu0 0.0
    %5412 = vmatpush1.msra.mxu0 0.0
    %5413 = vmatprep.subr.mxu0 0.0
    %5414 = vmatpush1.msra.mxu0 0.0
    %5415 = vmatprep.subr.mxu0 0.0
    %5416 = vmatpush1.msra.mxu0 0.0
    %5417 = vmatprep.subr.mxu0 0.0
    %5418 = vmatpush1.msra.mxu0 0.0
    %5419 = vmatprep.subr.mxu0 0.0
    %5420 = vmatpush1.msra.mxu0 0.0
    %5421 = vmatprep.subr.mxu0 0.0
    %5422 = vmatpush1.msra.mxu0 0.0
    %5423 = vmatprep.subr.mxu0 0.0
    %5424 = vmatpush1.msra.mxu0 0.0
    %5425 = vmatprep.subr.mxu0 0.0
    %5426 = vmatpush1.msra.mxu0 0.0
    %5427 = vmatprep.subr.mxu0 0.0
    %5428 = vmatpush1.msra.mxu0 0.0
    %5429 = vmatprep.subr.mxu0 0.0
    %5430 = vmatpush1.msra.mxu0 0.0
    %5431 = vmatprep.subr.mxu0 0.0
    %5432 = vmatpush1.msra.mxu0 %v5329
    %5433 = vmatprep.subr.mxu0 0.0
    %5434 = vmatpush2.msra.mxu0 0.0
    %5435 = vmatprep.subr.mxu0 0.0
    %5436 = vmatpush2.msra.mxu0 0.0
    %5437 = vmatprep.subr.mxu0 0.0
    %5438 = vmatpush2.msra.mxu0 0.0
    %5439 = vmatprep.subr.mxu0 0.0
    %5440 = vmatpush2.msra.mxu0 0.0
    %5441 = vmatprep.subr.mxu0 0.0
    %5442 = vmatpush2.msra.mxu0 0.0
    %5443 = vmatprep.subr.mxu0 0.0
    %5444 = vmatpush2.msra.mxu0 0.0
    %5445 = vmatprep.subr.mxu0 0.0
    %5446 = vmatpush2.msra.mxu0 0.0
    %5447 = vmatprep.subr.mxu0 0.0
    %5448 = vmatpush2.msra.mxu0 0.0
    %5449 = vmatprep.subr.mxu0 0.0
    %5450 = vmatpush2.msra.mxu0 0.0
    %5451 = vmatprep.subr.mxu0 0.0
    %5452 = vmatpush2.msra.mxu0 0.0
    %5453 = vmatprep.subr.mxu0 0.0
    %5454 = vmatpush2.msra.mxu0 0.0
    %5455 = vmatprep.subr.mxu0 0.0
    %5456 = vmatpush2.msra.mxu0 0.0
    %5457 = vmatprep.subr.mxu0 0.0
    %5458 = vmatpush2.msra.mxu0 0.0
    %5459 = vmatprep.subr.mxu0 0.0
    %5460 = vmatpush2.msra.mxu0 0.0
    %5461 = vmatprep.subr.mxu0 0.0
    %5462 = vmatpush2.msra.mxu0 0.0
    %5463 = vmatprep.subr.mxu0 0.0
    %5464 = vmatpush2.msra.mxu0 0.0
    %5465 = vmatprep.mubr.f32.mxu0 0.0
    %5466 = vmatmul.mubr.f32.gmra.mxu0 %v4643
    %v5467 = vpop.f32.mrf.mxu0
    %v5468 = vadd.f32 0.0, %v5467
    %v5469 = vpop.f32.mrf.mxu0
    %5470 = vdwg.mxu0
    %v5471 = vld [vmem:[%s5] sm:$0xff]
    %v5472 = vld [vmem:[%s5 + $0x8] sm:$0xff]
    %v5473 = vld [vmem:[%s5 + $0x10] sm:$0xff]
    %v5474 = vld [vmem:[%s5 + $0x18] sm:$0xff]
    %v5475 = vsel %vm2299, %v5327, 0
    %5477 = vmatprep.subr.mxu0 0.0
    %5478 = vmatpush1.msra.mxu0 0.0
    %5479 = vmatprep.subr.mxu0 0.0
    %5480 = vmatpush1.msra.mxu0 0.0
    %5481 = vmatprep.subr.mxu0 0.0
    %5482 = vmatpush1.msra.mxu0 0.0
    %5483 = vmatprep.subr.mxu0 0.0
    %5484 = vmatpush1.msra.mxu0 0.0
    %5485 = vmatprep.subr.mxu0 0.0
    %5486 = vmatpush1.msra.mxu0 0.0
    %5487 = vmatprep.subr.mxu0 0.0
    %5488 = vmatpush1.msra.mxu0 0.0
    %5489 = vmatprep.subr.mxu0 0.0
    %5490 = vmatpush1.msra.mxu0 0.0
    %5491 = vmatprep.subr.mxu0 0.0
    %5492 = vmatpush1.msra.mxu0 0.0
    %5493 = vmatprep.subr.mxu0 0.0
    %5494 = vmatpush1.msra.mxu0 0.0
    %5495 = vmatprep.subr.mxu0 0.0
    %5496 = vmatpush1.msra.mxu0 0.0
    %5497 = vmatprep.subr.mxu0 0.0
    %5498 = vmatpush1.msra.mxu0 0.0
    %5499 = vmatprep.subr.mxu0 0.0
    %5500 = vmatpush1.msra.mxu0 0.0
    %5501 = vmatprep.subr.mxu0 0.0
    %5502 = vmatpush1.msra.mxu0 0.0
    %5503 = vmatprep.subr.mxu0 0.0
    %5504 = vmatpush1.msra.mxu0 0.0
    %5505 = vmatprep.subr.mxu0 0.0
    %5506 = vmatpush1.msra.mxu0 %v5474
    %5507 = vmatprep.subr.mxu0 0.0
    %5508 = vmatpush1.msra.mxu0 %v5473
    %5509 = vmatprep.subr.mxu0 0.0
    %5510 = vmatpush2.msra.mxu0 0.0
    %5511 = vmatprep.subr.mxu0 0.0
    %5512 = vmatpush2.msra.mxu0 0.0
    %5513 = vmatprep.subr.mxu0 0.0
    %5514 = vmatpush2.msra.mxu0 0.0
    %5515 = vmatprep.subr.mxu0 0.0
    %5516 = vmatpush2.msra.mxu0 0.0
    %5517 = vmatprep.subr.mxu0 0.0
    %5518 = vmatpush2.msra.mxu0 0.0
    %5519 = vmatprep.subr.mxu0 0.0
    %5520 = vmatpush2.msra.mxu0 0.0
    %5521 = vmatprep.subr.mxu0 0.0
    %5522 = vmatpush2.msra.mxu0 0.0
    %5523 = vmatprep.subr.mxu0 0.0
    %5524 = vmatpush2.msra.mxu0 0.0
    %5525 = vmatprep.subr.mxu0 0.0
    %5526 = vmatpush2.msra.mxu0 0.0
    %5527 = vmatprep.subr.mxu0 0.0
    %5528 = vmatpush2.msra.mxu0 0.0
    %5529 = vmatprep.subr.mxu0 0.0
    %5530 = vmatpush2.msra.mxu0 0.0
    %5531 = vmatprep.subr.mxu0 0.0
    %5532 = vmatpush2.msra.mxu0 0.0
    %5533 = vmatprep.subr.mxu0 0.0
    %5534 = vmatpush2.msra.mxu0 0.0
    %5535 = vmatprep.subr.mxu0 0.0
    %5536 = vmatpush2.msra.mxu0 0.0
    %5537 = vmatprep.subr.mxu0 0.0
    %5538 = vmatpush2.msra.mxu0 0.0
    %5539 = vmatprep.subr.mxu0 0.0
    %5540 = vmatpush2.msra.mxu0 0.0
    %5541 = vmatprep.mubr.f32.mxu0 0.0
    %5542 = vmatmul.mubr.f32.gmra.mxu0 %v5475
    %v5543 = vpop.f32.mrf.mxu0
    %v5544 = vadd.f32 0.0, %v5543
    %v5545 = vpop.f32.mrf.mxu0
    %5546 = vdwg.mxu0
    %v5548 = vsel %vm2299, %v5398, 0
    %5550 = vmatprep.subr.mxu0 0.0
    %5551 = vmatpush1.msra.mxu0 0.0
    %5552 = vmatprep.subr.mxu0 0.0
    %5553 = vmatpush1.msra.mxu0 0.0
    %5554 = vmatprep.subr.mxu0 0.0
    %5555 = vmatpush1.msra.mxu0 0.0
    %5556 = vmatprep.subr.mxu0 0.0
    %5557 = vmatpush1.msra.mxu0 0.0
    %5558 = vmatprep.subr.mxu0 0.0
    %5559 = vmatpush1.msra.mxu0 0.0
    %5560 = vmatprep.subr.mxu0 0.0
    %5561 = vmatpush1.msra.mxu0 0.0
    %5562 = vmatprep.subr.mxu0 0.0
    %5563 = vmatpush1.msra.mxu0 0.0
    %5564 = vmatprep.subr.mxu0 0.0
    %5565 = vmatpush1.msra.mxu0 0.0
    %5566 = vmatprep.subr.mxu0 0.0
    %5567 = vmatpush1.msra.mxu0 0.0
    %5568 = vmatprep.subr.mxu0 0.0
    %5569 = vmatpush1.msra.mxu0 0.0
    %5570 = vmatprep.subr.mxu0 0.0
    %5571 = vmatpush1.msra.mxu0 0.0
    %5572 = vmatprep.subr.mxu0 0.0
    %5573 = vmatpush1.msra.mxu0 0.0
    %5574 = vmatprep.subr.mxu0 0.0
    %5575 = vmatpush1.msra.mxu0 0.0
    %5576 = vmatprep.subr.mxu0 0.0
    %5577 = vmatpush1.msra.mxu0 0.0
    %5578 = vmatprep.subr.mxu0 0.0
    %5579 = vmatpush1.msra.mxu0 %v5472
    %5580 = vmatprep.subr.mxu0 0.0
    %5581 = vmatpush1.msra.mxu0 %v5471
    %5582 = vmatprep.subr.mxu0 0.0
    %5583 = vmatpush2.msra.mxu0 0.0
    %5584 = vmatprep.subr.mxu0 0.0
    %5585 = vmatpush2.msra.mxu0 0.0
    %5586 = vmatprep.subr.mxu0 0.0
    %5587 = vmatpush2.msra.mxu0 0.0
    %5588 = vmatprep.subr.mxu0 0.0
    %5589 = vmatpush2.msra.mxu0 0.0
    %5590 = vmatprep.subr.mxu0 0.0
    %5591 = vmatpush2.msra.mxu0 0.0
    %5592 = vmatprep.subr.mxu0 0.0
    %5593 = vmatpush2.msra.mxu0 0.0
    %5594 = vmatprep.subr.mxu0 0.0
    %5595 = vmatpush2.msra.mxu0 0.0
    %5596 = vmatprep.subr.mxu0 0.0
    %5597 = vmatpush2.msra.mxu0 0.0
    %5598 = vmatprep.subr.mxu0 0.0
    %5599 = vmatpush2.msra.mxu0 0.0
    %5600 = vmatprep.subr.mxu0 0.0
    %5601 = vmatpush2.msra.mxu0 0.0
    %5602 = vmatprep.subr.mxu0 0.0
    %5603 = vmatpush2.msra.mxu0 0.0
    %5604 = vmatprep.subr.mxu0 0.0
    %5605 = vmatpush2.msra.mxu0 0.0
    %5606 = vmatprep.subr.mxu0 0.0
    %5607 = vmatpush2.msra.mxu0 0.0
    %5608 = vmatprep.subr.mxu0 0.0
    %5609 = vmatpush2.msra.mxu0 0.0
    %5610 = vmatprep.subr.mxu0 0.0
    %5611 = vmatpush2.msra.mxu0 0.0
    %5612 = vmatprep.subr.mxu0 0.0
    %5613 = vmatpush2.msra.mxu0 0.0
    %5614 = vmatprep.mubr.f32.mxu0 0.0
    %5615 = vmatmul.mubr.f32.gmra.mxu0 %v5548
    %v5616 = vpop.f32.mrf.mxu0
    %v5617 = vadd.f32 %v5544, %v5616
    %v5618 = vpop.f32.mrf.mxu0
    %5619 = vdwg.mxu0
    %v5620 = vld [vmem:[%s5 + $0x20] sm:$0xff]
    %v5621 = vld [vmem:[%s5 + $0x28] sm:$0xff]
    %v5623 = vsel %vm2299, %v5468, 0
    %5625 = vmatprep.subr.mxu0 0.0
    %5626 = vmatpush1.msra.mxu0 0.0
    %5627 = vmatprep.subr.mxu0 0.0
    %5628 = vmatpush1.msra.mxu0 0.0
    %5629 = vmatprep.subr.mxu0 0.0
    %5630 = vmatpush1.msra.mxu0 0.0
    %5631 = vmatprep.subr.mxu0 0.0
    %5632 = vmatpush1.msra.mxu0 0.0
    %5633 = vmatprep.subr.mxu0 0.0
    %5634 = vmatpush1.msra.mxu0 0.0
    %5635 = vmatprep.subr.mxu0 0.0
    %5636 = vmatpush1.msra.mxu0 0.0
    %5637 = vmatprep.subr.mxu0 0.0
    %5638 = vmatpush1.msra.mxu0 0.0
    %5639 = vmatprep.subr.mxu0 0.0
    %5640 = vmatpush1.msra.mxu0 0.0
    %5641 = vmatprep.subr.mxu0 0.0
    %5642 = vmatpush1.msra.mxu0 0.0
    %5643 = vmatprep.subr.mxu0 0.0
    %5644 = vmatpush1.msra.mxu0 0.0
    %5645 = vmatprep.subr.mxu0 0.0
    %5646 = vmatpush1.msra.mxu0 0.0
    %5647 = vmatprep.subr.mxu0 0.0
    %5648 = vmatpush1.msra.mxu0 0.0
    %5649 = vmatprep.subr.mxu0 0.0
    %5650 = vmatpush1.msra.mxu0 0.0
    %5651 = vmatprep.subr.mxu0 0.0
    %5652 = vmatpush1.msra.mxu0 0.0
    %5653 = vmatprep.subr.mxu0 0.0
    %5654 = vmatpush1.msra.mxu0 %v5621
    %5655 = vmatprep.subr.mxu0 0.0
    %5656 = vmatpush1.msra.mxu0 %v5620
    %5657 = vmatprep.subr.mxu0 0.0
    %5658 = vmatpush2.msra.mxu0 0.0
    %5659 = vmatprep.subr.mxu0 0.0
    %5660 = vmatpush2.msra.mxu0 0.0
    %5661 = vmatprep.subr.mxu0 0.0
    %5662 = vmatpush2.msra.mxu0 0.0
    %5663 = vmatprep.subr.mxu0 0.0
    %5664 = vmatpush2.msra.mxu0 0.0
    %5665 = vmatprep.subr.mxu0 0.0
    %5666 = vmatpush2.msra.mxu0 0.0
    %5667 = vmatprep.subr.mxu0 0.0
    %5668 = vmatpush2.msra.mxu0 0.0
    %5669 = vmatprep.subr.mxu0 0.0
    %5670 = vmatpush2.msra.mxu0 0.0
    %5671 = vmatprep.subr.mxu0 0.0
    %5672 = vmatpush2.msra.mxu0 0.0
    %5673 = vmatprep.subr.mxu0 0.0
    %5674 = vmatpush2.msra.mxu0 0.0
    %5675 = vmatprep.subr.mxu0 0.0
    %5676 = vmatpush2.msra.mxu0 0.0
    %5677 = vmatprep.subr.mxu0 0.0
    %5678 = vmatpush2.msra.mxu0 0.0
    %5679 = vmatprep.subr.mxu0 0.0
    %5680 = vmatpush2.msra.mxu0 0.0
    %5681 = vmatprep.subr.mxu0 0.0
    %5682 = vmatpush2.msra.mxu0 0.0
    %5683 = vmatprep.subr.mxu0 0.0
    %5684 = vmatpush2.msra.mxu0 0.0
    %5685 = vmatprep.subr.mxu0 0.0
    %5686 = vmatpush2.msra.mxu0 0.0
    %5687 = vmatprep.subr.mxu0 0.0
    %5688 = vmatpush2.msra.mxu0 0.0
    %5689 = vmatprep.mubr.f32.mxu0 0.0
    %5690 = vmatmul.mubr.f32.gmra.mxu0 %v5623
    %v5691 = vpop.f32.mrf.mxu0
    %v5692 = vadd.f32 0.0, %v5691
    %v5693 = vpop.f32.mrf.mxu0
    %5694 = vdwg.mxu0
    %v5695 = vadd.f32 %v5617, %v5692
    %v5696 = vld [vmem:[%s3] sm:$0x1]
    %v5698 = vlaneseq
    %v5699 = vshrl.u32 %v5698, 7
    %v5700 = vsub.s32 0, %v5699
    %v5701 = vrot.slane %v5696, %v5700
    %v5703 = vadd.f32 %v5695, %v5701
    %v5704 = vmul.f32 %v5703, 0.01
    %v5705 = vmax.f32 %v5703, %v5704
    %v5707 = vsel %vm4567, %v5705, 0
    %5709 = vmatprep.subr.mxu0 0.0
    %5710 = vmatpush1.msra.mxu0 0.0
    %5711 = vmatprep.subr.mxu0 0.0
    %5712 = vmatpush1.msra.mxu0 0.0
    %5713 = vmatprep.subr.mxu0 0.0
    %5714 = vmatpush1.msra.mxu0 0.0
    %5715 = vmatprep.subr.mxu0 0.0
    %5716 = vmatpush1.msra.mxu0 0.0
    %5717 = vmatprep.subr.mxu0 0.0
    %5718 = vmatpush1.msra.mxu0 0.0
    %5719 = vmatprep.subr.mxu0 0.0
    %5720 = vmatpush1.msra.mxu0 0.0
    %5721 = vmatprep.subr.mxu0 0.0
    %5722 = vmatpush1.msra.mxu0 0.0
    %5723 = vmatprep.subr.mxu0 0.0
    %5724 = vmatpush1.msra.mxu0 0.0
    %5725 = vmatprep.subr.mxu0 0.0
    %5726 = vmatpush1.msra.mxu0 0.0
    %5727 = vmatprep.subr.mxu0 0.0
    %5728 = vmatpush1.msra.mxu0 0.0
    %5729 = vmatprep.subr.mxu0 0.0
    %5730 = vmatpush1.msra.mxu0 0.0
    %5731 = vmatprep.subr.mxu0 0.0
    %5732 = vmatpush1.msra.mxu0 0.0
    %5733 = vmatprep.subr.mxu0 0.0
    %5734 = vmatpush1.msra.mxu0 0.0
    %5735 = vmatprep.subr.mxu0 0.0
    %5736 = vmatpush1.msra.mxu0 0.0
    %5737 = vmatprep.subr.mxu0 0.0
    %5738 = vmatpush1.msra.mxu0 0.0
    %5739 = vmatprep.subr.mxu0 0.0
    %5740 = vmatpush1.msra.mxu0 %v5707
    %5741 = vmatprep.subr.mxu0 0.0
    %5742 = vmatpush2.msra.mxu0 0.0
    %5743 = vmatprep.subr.mxu0 0.0
    %5744 = vmatpush2.msra.mxu0 0.0
    %5745 = vmatprep.subr.mxu0 0.0
    %5746 = vmatpush2.msra.mxu0 0.0
    %5747 = vmatprep.subr.mxu0 0.0
    %5748 = vmatpush2.msra.mxu0 0.0
    %5749 = vmatprep.subr.mxu0 0.0
    %5750 = vmatpush2.msra.mxu0 0.0
    %5751 = vmatprep.subr.mxu0 0.0
    %5752 = vmatpush2.msra.mxu0 0.0
    %5753 = vmatprep.subr.mxu0 0.0
    %5754 = vmatpush2.msra.mxu0 0.0
    %5755 = vmatprep.subr.mxu0 0.0
    %5756 = vmatpush2.msra.mxu0 0.0
    %5757 = vmatprep.subr.mxu0 0.0
    %5758 = vmatpush2.msra.mxu0 0.0
    %5759 = vmatprep.subr.mxu0 0.0
    %5760 = vmatpush2.msra.mxu0 0.0
    %5761 = vmatprep.subr.mxu0 0.0
    %5762 = vmatpush2.msra.mxu0 0.0
    %5763 = vmatprep.subr.mxu0 0.0
    %5764 = vmatpush2.msra.mxu0 0.0
    %5765 = vmatprep.subr.mxu0 0.0
    %5766 = vmatpush2.msra.mxu0 0.0
    %5767 = vmatprep.subr.mxu0 0.0
    %5768 = vmatpush2.msra.mxu0 0.0
    %5769 = vmatprep.subr.mxu0 0.0
    %5770 = vmatpush2.msra.mxu0 0.0
    %5771 = vmatprep.subr.mxu0 0.0
    %5772 = vmatpush2.msra.mxu0 0.0
    %5773 = vmatprep.mubr.f32.mxu0 0.0
    %5774 = vmatmul.mubr.f32.gmra.mxu0 %v4565
    %v5775 = vpop.f32.mrf.mxu0
    %v5776 = vadd.f32 0.0, %v5775
    %v5777 = vpop.f32.mrf.mxu0
    %5778 = vdwg.mxu0
    %5779 = vmatprep.subr.mxu0 0.0
    %5780 = vmatpush1.msra.mxu0 0.0
    %5781 = vmatprep.subr.mxu0 0.0
    %5782 = vmatpush1.msra.mxu0 0.0
    %5783 = vmatprep.subr.mxu0 0.0
    %5784 = vmatpush1.msra.mxu0 0.0
    %5785 = vmatprep.subr.mxu0 0.0
    %5786 = vmatpush1.msra.mxu0 0.0
    %5787 = vmatprep.subr.mxu0 0.0
    %5788 = vmatpush1.msra.mxu0 0.0
    %5789 = vmatprep.subr.mxu0 0.0
    %5790 = vmatpush1.msra.mxu0 0.0
    %5791 = vmatprep.subr.mxu0 0.0
    %5792 = vmatpush1.msra.mxu0 0.0
    %5793 = vmatprep.subr.mxu0 0.0
    %5794 = vmatpush1.msra.mxu0 0.0
    %5795 = vmatprep.subr.mxu0 0.0
    %5796 = vmatpush1.msra.mxu0 0.0
    %5797 = vmatprep.subr.mxu0 0.0
    %5798 = vmatpush1.msra.mxu0 0.0
    %5799 = vmatprep.subr.mxu0 0.0
    %5800 = vmatpush1.msra.mxu0 0.0
    %5801 = vmatprep.subr.mxu0 0.0
    %5802 = vmatpush1.msra.mxu0 0.0
    %5803 = vmatprep.subr.mxu0 0.0
    %5804 = vmatpush1.msra.mxu0 0.0
    %5805 = vmatprep.subr.mxu0 0.0
    %5806 = vmatpush1.msra.mxu0 0.0
    %5807 = vmatprep.subr.mxu0 0.0
    %5808 = vmatpush1.msra.mxu0 0.0
    %5809 = vmatprep.subr.mxu0 0.0
    %5810 = vmatpush1.msra.mxu0 %v5707
    %5811 = vmatprep.subr.mxu0 0.0
    %5812 = vmatpush2.msra.mxu0 0.0
    %5813 = vmatprep.subr.mxu0 0.0
    %5814 = vmatpush2.msra.mxu0 0.0
    %5815 = vmatprep.subr.mxu0 0.0
    %5816 = vmatpush2.msra.mxu0 0.0
    %5817 = vmatprep.subr.mxu0 0.0
    %5818 = vmatpush2.msra.mxu0 0.0
    %5819 = vmatprep.subr.mxu0 0.0
    %5820 = vmatpush2.msra.mxu0 0.0
    %5821 = vmatprep.subr.mxu0 0.0
    %5822 = vmatpush2.msra.mxu0 0.0
    %5823 = vmatprep.subr.mxu0 0.0
    %5824 = vmatpush2.msra.mxu0 0.0
    %5825 = vmatprep.subr.mxu0 0.0
    %5826 = vmatpush2.msra.mxu0 0.0
    %5827 = vmatprep.subr.mxu0 0.0
    %5828 = vmatpush2.msra.mxu0 0.0
    %5829 = vmatprep.subr.mxu0 0.0
    %5830 = vmatpush2.msra.mxu0 0.0
    %5831 = vmatprep.subr.mxu0 0.0
    %5832 = vmatpush2.msra.mxu0 0.0
    %5833 = vmatprep.subr.mxu0 0.0
    %5834 = vmatpush2.msra.mxu0 0.0
    %5835 = vmatprep.subr.mxu0 0.0
    %5836 = vmatpush2.msra.mxu0 0.0
    %5837 = vmatprep.subr.mxu0 0.0
    %5838 = vmatpush2.msra.mxu0 0.0
    %5839 = vmatprep.subr.mxu0 0.0
    %5840 = vmatpush2.msra.mxu0 0.0
    %5841 = vmatprep.subr.mxu0 0.0
    %5842 = vmatpush2.msra.mxu0 0.0
    %5843 = vmatprep.mubr.f32.mxu0 0.0
    %5844 = vmatmul.mubr.f32.gmra.mxu0 %v4643
    %v5845 = vpop.f32.mrf.mxu0
    %v5846 = vadd.f32 0.0, %v5845
    %v5847 = vpop.f32.mrf.mxu0
    %5848 = vdwg.mxu0
    %v5849 = vld [vmem:[%s9] sm:$0xff]
    %v5850 = vld [vmem:[%s9 + $0x8] sm:$0xff]
    %v5851 = vld [vmem:[%s9 + $0x10] sm:$0xff]
    %v5852 = vld [vmem:[%s9 + $0x18] sm:$0xff]
    %v5853 = vld [vmem:[%s9 + $0x20] sm:$0xff]
    %v5854 = vld [vmem:[%s9 + $0x28] sm:$0xff]
    %v5855 = vld [vmem:[%s9 + $0x30] sm:$0xff]
    %v5856 = vld [vmem:[%s9 + $0x38] sm:$0xff]
    %v5857 = vld [vmem:[%s9 + $0x40] sm:$0xff]
    %v5858 = vld [vmem:[%s9 + $0x48] sm:$0xff]
    %v5859 = vld [vmem:[%s9 + $0x50] sm:$0xff]
    %v5860 = vld [vmem:[%s9 + $0x58] sm:$0xff]
    %v5861 = vld [vmem:[%s9 + $0x60] sm:$0xff]
    %v5862 = vld [vmem:[%s9 + $0x68] sm:$0xff]
    %v5863 = vld [vmem:[%s9 + $0x70] sm:$0xff]
    %v5864 = vld [vmem:[%s9 + $0x78] sm:$0xff]
    %v5865 = vld [vmem:[%s9 + $0x80] sm:$0xff]
    %v5866 = vld [vmem:[%s9 + $0x88] sm:$0xff]
    %v5867 = vld [vmem:[%s9 + $0x90] sm:$0xff]
    %v5868 = vld [vmem:[%s9 + $0x98] sm:$0xff]
    %v5869 = vld [vmem:[%s9 + $0xa0] sm:$0xff]
    %v5870 = vld [vmem:[%s9 + $0xa8] sm:$0xff]
    %v5871 = vld [vmem:[%s9 + $0xb0] sm:$0xff]
    %v5872 = vld [vmem:[%s9 + $0xb8] sm:$0xff]
    %vm5873 = vcmask 785408
    %v5874 = vsel %vm5873, %v5705, 0
    %5876 = vmatprep.subr.mxu0 0.0
    %5877 = vmatpush1.msra.mxu0 0.0
    %5878 = vmatprep.subr.mxu0 0.0
    %5879 = vmatpush1.msra.mxu0 0.0
    %5880 = vmatprep.subr.mxu0 0.0
    %5881 = vmatpush1.msra.mxu0 0.0
    %5882 = vmatprep.subr.mxu0 0.0
    %5883 = vmatpush1.msra.mxu0 0.0
    %5884 = vmatprep.subr.mxu0 0.0
    %5885 = vmatpush1.msra.mxu0 %v5872
    %5886 = vmatprep.subr.mxu0 0.0
    %5887 = vmatpush1.msra.mxu0 %v5871
    %5888 = vmatprep.subr.mxu0 0.0
    %5889 = vmatpush1.msra.mxu0 %v5870
    %5890 = vmatprep.subr.mxu0 0.0
    %5891 = vmatpush1.msra.mxu0 %v5869
    %5892 = vmatprep.subr.mxu0 0.0
    %5893 = vmatpush1.msra.mxu0 %v5868
    %5894 = vmatprep.subr.mxu0 0.0
    %5895 = vmatpush1.msra.mxu0 %v5867
    %5896 = vmatprep.subr.mxu0 0.0
    %5897 = vmatpush1.msra.mxu0 %v5866
    %5898 = vmatprep.subr.mxu0 0.0
    %5899 = vmatpush1.msra.mxu0 %v5865
    %5900 = vmatprep.subr.mxu0 0.0
    %5901 = vmatpush1.msra.mxu0 %v5864
    %5902 = vmatprep.subr.mxu0 0.0
    %5903 = vmatpush1.msra.mxu0 %v5863
    %5904 = vmatprep.subr.mxu0 0.0
    %5905 = vmatpush1.msra.mxu0 %v5862
    %5906 = vmatprep.subr.mxu0 0.0
    %5907 = vmatpush1.msra.mxu0 %v5861
    %5908 = vmatprep.subr.mxu0 0.0
    %5909 = vmatpush2.msra.mxu0 0.0
    %5910 = vmatprep.subr.mxu0 0.0
    %5911 = vmatpush2.msra.mxu0 0.0
    %5912 = vmatprep.subr.mxu0 0.0
    %5913 = vmatpush2.msra.mxu0 0.0
    %5914 = vmatprep.subr.mxu0 0.0
    %5915 = vmatpush2.msra.mxu0 0.0
    %5916 = vmatprep.subr.mxu0 0.0
    %5917 = vmatpush2.msra.mxu0 0.0
    %5918 = vmatprep.subr.mxu0 0.0
    %5919 = vmatpush2.msra.mxu0 0.0
    %5920 = vmatprep.subr.mxu0 0.0
    %5921 = vmatpush2.msra.mxu0 0.0
    %5922 = vmatprep.subr.mxu0 0.0
    %5923 = vmatpush2.msra.mxu0 0.0
    %5924 = vmatprep.subr.mxu0 0.0
    %5925 = vmatpush2.msra.mxu0 0.0
    %5926 = vmatprep.subr.mxu0 0.0
    %5927 = vmatpush2.msra.mxu0 0.0
    %5928 = vmatprep.subr.mxu0 0.0
    %5929 = vmatpush2.msra.mxu0 0.0
    %5930 = vmatprep.subr.mxu0 0.0
    %5931 = vmatpush2.msra.mxu0 0.0
    %5932 = vmatprep.subr.mxu0 0.0
    %5933 = vmatpush2.msra.mxu0 0.0
    %5934 = vmatprep.subr.mxu0 0.0
    %5935 = vmatpush2.msra.mxu0 0.0
    %5936 = vmatprep.subr.mxu0 0.0
    %5937 = vmatpush2.msra.mxu0 0.0
    %5938 = vmatprep.subr.mxu0 0.0
    %5939 = vmatpush2.msra.mxu0 0.0
    %5940 = vmatprep.mubr.f32.mxu0 0.0
    %5941 = vmatmul.mubr.f32.gmra.mxu0 %v5874
    %v5942 = vpop.f32.mrf.mxu0
    %v5943 = vadd.f32 0.0, %v5942
    %v5944 = vpop.f32.mrf.mxu0
    %5945 = vdwg.mxu0
    %v5947 = vsel %vm5873, %v5776, 0
    %5949 = vmatprep.subr.mxu0 0.0
    %5950 = vmatpush1.msra.mxu0 0.0
    %5951 = vmatprep.subr.mxu0 0.0
    %5952 = vmatpush1.msra.mxu0 0.0
    %5953 = vmatprep.subr.mxu0 0.0
    %5954 = vmatpush1.msra.mxu0 0.0
    %5955 = vmatprep.subr.mxu0 0.0
    %5956 = vmatpush1.msra.mxu0 0.0
    %5957 = vmatprep.subr.mxu0 0.0
    %5958 = vmatpush1.msra.mxu0 %v5860
    %5959 = vmatprep.subr.mxu0 0.0
    %5960 = vmatpush1.msra.mxu0 %v5859
    %5961 = vmatprep.subr.mxu0 0.0
    %5962 = vmatpush1.msra.mxu0 %v5858
    %5963 = vmatprep.subr.mxu0 0.0
    %5964 = vmatpush1.msra.mxu0 %v5857
    %5965 = vmatprep.subr.mxu0 0.0
    %5966 = vmatpush1.msra.mxu0 %v5856
    %5967 = vmatprep.subr.mxu0 0.0
    %5968 = vmatpush1.msra.mxu0 %v5855
    %5969 = vmatprep.subr.mxu0 0.0
    %5970 = vmatpush1.msra.mxu0 %v5854
    %5971 = vmatprep.subr.mxu0 0.0
    %5972 = vmatpush1.msra.mxu0 %v5853
    %5973 = vmatprep.subr.mxu0 0.0
    %5974 = vmatpush1.msra.mxu0 %v5852
    %5975 = vmatprep.subr.mxu0 0.0
    %5976 = vmatpush1.msra.mxu0 %v5851
    %5977 = vmatprep.subr.mxu0 0.0
    %5978 = vmatpush1.msra.mxu0 %v5850
    %5979 = vmatprep.subr.mxu0 0.0
    %5980 = vmatpush1.msra.mxu0 %v5849
    %5981 = vmatprep.subr.mxu0 0.0
    %5982 = vmatpush2.msra.mxu0 0.0
    %5983 = vmatprep.subr.mxu0 0.0
    %5984 = vmatpush2.msra.mxu0 0.0
    %5985 = vmatprep.subr.mxu0 0.0
    %5986 = vmatpush2.msra.mxu0 0.0
    %5987 = vmatprep.subr.mxu0 0.0
    %5988 = vmatpush2.msra.mxu0 0.0
    %5989 = vmatprep.subr.mxu0 0.0
    %5990 = vmatpush2.msra.mxu0 0.0
    %5991 = vmatprep.subr.mxu0 0.0
    %5992 = vmatpush2.msra.mxu0 0.0
    %5993 = vmatprep.subr.mxu0 0.0
    %5994 = vmatpush2.msra.mxu0 0.0
    %5995 = vmatprep.subr.mxu0 0.0
    %5996 = vmatpush2.msra.mxu0 0.0
    %5997 = vmatprep.subr.mxu0 0.0
    %5998 = vmatpush2.msra.mxu0 0.0
    %5999 = vmatprep.subr.mxu0 0.0
    %6000 = vmatpush2.msra.mxu0 0.0
    %6001 = vmatprep.subr.mxu0 0.0
    %6002 = vmatpush2.msra.mxu0 0.0
    %6003 = vmatprep.subr.mxu0 0.0
    %6004 = vmatpush2.msra.mxu0 0.0
    %6005 = vmatprep.subr.mxu0 0.0
    %6006 = vmatpush2.msra.mxu0 0.0
    %6007 = vmatprep.subr.mxu0 0.0
    %6008 = vmatpush2.msra.mxu0 0.0
    %6009 = vmatprep.subr.mxu0 0.0
    %6010 = vmatpush2.msra.mxu0 0.0
    %6011 = vmatprep.subr.mxu0 0.0
    %6012 = vmatpush2.msra.mxu0 0.0
    %6013 = vmatprep.mubr.f32.mxu0 0.0
    %6014 = vmatmul.mubr.f32.gmra.mxu0 %v5947
    %v6015 = vpop.f32.mrf.mxu0
    %v6016 = vadd.f32 %v5943, %v6015
    %v6017 = vpop.f32.mrf.mxu0
    %6018 = vdwg.mxu0
    %v6019 = vld [vmem:[%s9 + $0xc0] sm:$0xff]
    %v6020 = vld [vmem:[%s9 + $0xc8] sm:$0xff]
    %v6021 = vld [vmem:[%s9 + $0xd0] sm:$0xff]
    %v6022 = vld [vmem:[%s9 + $0xd8] sm:$0xff]
    %v6023 = vld [vmem:[%s9 + $0xe0] sm:$0xff]
    %v6024 = vld [vmem:[%s9 + $0xe8] sm:$0xff]
    %v6025 = vld [vmem:[%s9 + $0xf0] sm:$0xff]
    %v6026 = vld [vmem:[%s9 + $0xf8] sm:$0xff]
    %v6027 = vld [vmem:[%s9 + $0x100] sm:$0xff]
    %v6028 = vld [vmem:[%s9 + $0x108] sm:$0xff]
    %v6029 = vld [vmem:[%s9 + $0x110] sm:$0xff]
    %v6030 = vld [vmem:[%s9 + $0x118] sm:$0xff]
    %v6032 = vsel %vm5873, %v5846, 0
    %6034 = vmatprep.subr.mxu0 0.0
    %6035 = vmatpush1.msra.mxu0 0.0
    %6036 = vmatprep.subr.mxu0 0.0
    %6037 = vmatpush1.msra.mxu0 0.0
    %6038 = vmatprep.subr.mxu0 0.0
    %6039 = vmatpush1.msra.mxu0 0.0
    %6040 = vmatprep.subr.mxu0 0.0
    %6041 = vmatpush1.msra.mxu0 0.0
    %6042 = vmatprep.subr.mxu0 0.0
    %6043 = vmatpush1.msra.mxu0 %v6030
    %6044 = vmatprep.subr.mxu0 0.0
    %6045 = vmatpush1.msra.mxu0 %v6029
    %6046 = vmatprep.subr.mxu0 0.0
    %6047 = vmatpush1.msra.mxu0 %v6028
    %6048 = vmatprep.subr.mxu0 0.0
    %6049 = vmatpush1.msra.mxu0 %v6027
    %6050 = vmatprep.subr.mxu0 0.0
    %6051 = vmatpush1.msra.mxu0 %v6026
    %6052 = vmatprep.subr.mxu0 0.0
    %6053 = vmatpush1.msra.mxu0 %v6025
    %6054 = vmatprep.subr.mxu0 0.0
    %6055 = vmatpush1.msra.mxu0 %v6024
    %6056 = vmatprep.subr.mxu0 0.0
    %6057 = vmatpush1.msra.mxu0 %v6023
    %6058 = vmatprep.subr.mxu0 0.0
    %6059 = vmatpush1.msra.mxu0 %v6022
    %6060 = vmatprep.subr.mxu0 0.0
    %6061 = vmatpush1.msra.mxu0 %v6021
    %6062 = vmatprep.subr.mxu0 0.0
    %6063 = vmatpush1.msra.mxu0 %v6020
    %6064 = vmatprep.subr.mxu0 0.0
    %6065 = vmatpush1.msra.mxu0 %v6019
    %6066 = vmatprep.subr.mxu0 0.0
    %6067 = vmatpush2.msra.mxu0 0.0
    %6068 = vmatprep.subr.mxu0 0.0
    %6069 = vmatpush2.msra.mxu0 0.0
    %6070 = vmatprep.subr.mxu0 0.0
    %6071 = vmatpush2.msra.mxu0 0.0
    %6072 = vmatprep.subr.mxu0 0.0
    %6073 = vmatpush2.msra.mxu0 0.0
    %6074 = vmatprep.subr.mxu0 0.0
    %6075 = vmatpush2.msra.mxu0 0.0
    %6076 = vmatprep.subr.mxu0 0.0
    %6077 = vmatpush2.msra.mxu0 0.0
    %6078 = vmatprep.subr.mxu0 0.0
    %6079 = vmatpush2.msra.mxu0 0.0
    %6080 = vmatprep.subr.mxu0 0.0
    %6081 = vmatpush2.msra.mxu0 0.0
    %6082 = vmatprep.subr.mxu0 0.0
    %6083 = vmatpush2.msra.mxu0 0.0
    %6084 = vmatprep.subr.mxu0 0.0
    %6085 = vmatpush2.msra.mxu0 0.0
    %6086 = vmatprep.subr.mxu0 0.0
    %6087 = vmatpush2.msra.mxu0 0.0
    %6088 = vmatprep.subr.mxu0 0.0
    %6089 = vmatpush2.msra.mxu0 0.0
    %6090 = vmatprep.subr.mxu0 0.0
    %6091 = vmatpush2.msra.mxu0 0.0
    %6092 = vmatprep.subr.mxu0 0.0
    %6093 = vmatpush2.msra.mxu0 0.0
    %6094 = vmatprep.subr.mxu0 0.0
    %6095 = vmatpush2.msra.mxu0 0.0
    %6096 = vmatprep.subr.mxu0 0.0
    %6097 = vmatpush2.msra.mxu0 0.0
    %6098 = vmatprep.mubr.f32.mxu0 0.0
    %6099 = vmatmul.mubr.f32.gmra.mxu0 %v6032
    %v6100 = vpop.f32.mrf.mxu0
    %v6101 = vadd.f32 0.0, %v6100
    %v6102 = vpop.f32.mrf.mxu0
    %6103 = vdwg.mxu0
    %v6104 = vadd.f32 %v6016, %v6101
    %v6105 = vld [vmem:[%s7] sm:$0x1]
    %v6107 = vlaneseq
    %v6108 = vshrl.u32 %v6107, 7
    %v6109 = vsub.s32 0, %v6108
    %v6110 = vrot.slane %v6105, %v6109
    %v6112 = vadd.f32 %v6104, %v6110
    %v6113 = vmul.f32 %v6112, 0.01
    %v6114 = vmax.f32 %v6112, %v6113
    %v6115 = vld [vmem:[%s97] sm:$0xff]
    %v6116 = vld [vmem:[%s97 + $0x8] sm:$0xff]
    %v6117 = vld [vmem:[%s97 + $0x10] sm:$0xff]
    %v6118 = vld [vmem:[%s97 + $0x18] sm:$0xff]
    %v6119 = vld [vmem:[%s97 + $0x20] sm:$0xff]
    %v6120 = vld [vmem:[%s97 + $0x28] sm:$0xff]
    %v6121 = vld [vmem:[%s97 + $0x30] sm:$0xff]
    %v6122 = vld [vmem:[%s97 + $0x38] sm:$0xff]
    %v6123 = vld [vmem:[%s97 + $0x40] sm:$0xff]
    %v6124 = vld [vmem:[%s97 + $0x48] sm:$0xff]
    %v6125 = vld [vmem:[%s97 + $0x50] sm:$0xff]
    %v6126 = vld [vmem:[%s97 + $0x58] sm:$0xff]
    %v6127 = vld [vmem:[#allocation14] sm:$0x1]
    %v6129 = vlaneseq
    %v6130 = vshrl.u32 %v6129, 7
    %v6131 = vsub.s32 0, %v6130
    %v6132 = vrot.slane %v6127, %v6131
    %v6135 = vsel %vm5873, %v6114, 0
    %6137 = vmatprep.subr.mxu0 0.0
    %6138 = vmatpush1.msra.mxu0 0.0
    %6139 = vmatprep.subr.mxu0 0.0
    %6140 = vmatpush1.msra.mxu0 0.0
    %6141 = vmatprep.subr.mxu0 0.0
    %6142 = vmatpush1.msra.mxu0 0.0
    %6143 = vmatprep.subr.mxu0 0.0
    %6144 = vmatpush1.msra.mxu0 0.0
    %6145 = vmatprep.subr.mxu0 0.0
    %6146 = vmatpush1.msra.mxu0 %v6126
    %6147 = vmatprep.subr.mxu0 0.0
    %6148 = vmatpush1.msra.mxu0 %v6125
    %6149 = vmatprep.subr.mxu0 0.0
    %6150 = vmatpush1.msra.mxu0 %v6124
    %6151 = vmatprep.subr.mxu0 0.0
    %6152 = vmatpush1.msra.mxu0 %v6123
    %6153 = vmatprep.subr.mxu0 0.0
    %6154 = vmatpush1.msra.mxu0 %v6122
    %6155 = vmatprep.subr.mxu0 0.0
    %6156 = vmatpush1.msra.mxu0 %v6121
    %6157 = vmatprep.subr.mxu0 0.0
    %6158 = vmatpush1.msra.mxu0 %v6120
    %6159 = vmatprep.subr.mxu0 0.0
    %6160 = vmatpush1.msra.mxu0 %v6119
    %6161 = vmatprep.subr.mxu0 0.0
    %6162 = vmatpush1.msra.mxu0 %v6118
    %6163 = vmatprep.subr.mxu0 0.0
    %6164 = vmatpush1.msra.mxu0 %v6117
    %6165 = vmatprep.subr.mxu0 0.0
    %6166 = vmatpush1.msra.mxu0 %v6116
    %6167 = vmatprep.subr.mxu0 0.0
    %6168 = vmatpush1.msra.mxu0 %v6115
    %6169 = vmatprep.subr.mxu0 0.0
    %6170 = vmatpush2.msra.mxu0 0.0
    %6171 = vmatprep.subr.mxu0 0.0
    %6172 = vmatpush2.msra.mxu0 0.0
    %6173 = vmatprep.subr.mxu0 0.0
    %6174 = vmatpush2.msra.mxu0 0.0
    %6175 = vmatprep.subr.mxu0 0.0
    %6176 = vmatpush2.msra.mxu0 0.0
    %6177 = vmatprep.subr.mxu0 0.0
    %6178 = vmatpush2.msra.mxu0 0.0
    %6179 = vmatprep.subr.mxu0 0.0
    %6180 = vmatpush2.msra.mxu0 0.0
    %6181 = vmatprep.subr.mxu0 0.0
    %6182 = vmatpush2.msra.mxu0 0.0
    %6183 = vmatprep.subr.mxu0 0.0
    %6184 = vmatpush2.msra.mxu0 0.0
    %6185 = vmatprep.subr.mxu0 0.0
    %6186 = vmatpush2.msra.mxu0 0.0
    %6187 = vmatprep.subr.mxu0 0.0
    %6188 = vmatpush2.msra.mxu0 0.0
    %6189 = vmatprep.subr.mxu0 0.0
    %6190 = vmatpush2.msra.mxu0 0.0
    %6191 = vmatprep.subr.mxu0 0.0
    %6192 = vmatpush2.msra.mxu0 0.0
    %6193 = vmatprep.subr.mxu0 0.0
    %6194 = vmatpush2.msra.mxu0 0.0
    %6195 = vmatprep.subr.mxu0 0.0
    %6196 = vmatpush2.msra.mxu0 0.0
    %6197 = vmatprep.subr.mxu0 0.0
    %6198 = vmatpush2.msra.mxu0 0.0
    %6199 = vmatprep.subr.mxu0 0.0
    %6200 = vmatpush2.msra.mxu0 0.0
    %6201 = vmatprep.mubr.f32.mxu0 0.0
    %6202 = vmatmul.mubr.f32.gmra.mxu0 %v6135
    %v6203 = vpop.f32.mrf.mxu0
    %v6204 = vadd.f32 %v6132, %v6203
    %v6205 = vpop.f32.mrf.mxu0
    %6206 = vdwg.mxu0
    %v6207 = vld [vmem:[%s97 + $0x60] sm:$0xff]
    %v6208 = vld [vmem:[%s97 + $0x68] sm:$0xff]
    %v6209 = vld [vmem:[%s97 + $0x70] sm:$0xff]
    %v6210 = vld [vmem:[%s97 + $0x78] sm:$0xff]
    %v6211 = vld [vmem:[%s97 + $0x80] sm:$0xff]
    %v6212 = vld [vmem:[%s97 + $0x88] sm:$0xff]
    %v6213 = vld [vmem:[%s97 + $0x90] sm:$0xff]
    %v6214 = vld [vmem:[%s97 + $0x98] sm:$0xff]
    %v6215 = vld [vmem:[%s97 + $0xa0] sm:$0xff]
    %v6216 = vld [vmem:[%s97 + $0xa8] sm:$0xff]
    %v6217 = vld [vmem:[%s97 + $0xb0] sm:$0xff]
    %v6218 = vld [vmem:[%s97 + $0xb8] sm:$0xff]
    %6219 = vmatprep.subr.mxu0 0.0
    %6220 = vmatpush1.msra.mxu0 0.0
    %6221 = vmatprep.subr.mxu0 0.0
    %6222 = vmatpush1.msra.mxu0 0.0
    %6223 = vmatprep.subr.mxu0 0.0
    %6224 = vmatpush1.msra.mxu0 0.0
    %6225 = vmatprep.subr.mxu0 0.0
    %6226 = vmatpush1.msra.mxu0 0.0
    %6227 = vmatprep.subr.mxu0 0.0
    %6228 = vmatpush1.msra.mxu0 %v6218
    %6229 = vmatprep.subr.mxu0 0.0
    %6230 = vmatpush1.msra.mxu0 %v6217
    %6231 = vmatprep.subr.mxu0 0.0
    %6232 = vmatpush1.msra.mxu0 %v6216
    %6233 = vmatprep.subr.mxu0 0.0
    %6234 = vmatpush1.msra.mxu0 %v6215
    %6235 = vmatprep.subr.mxu0 0.0
    %6236 = vmatpush1.msra.mxu0 %v6214
    %6237 = vmatprep.subr.mxu0 0.0
    %6238 = vmatpush1.msra.mxu0 %v6213
    %6239 = vmatprep.subr.mxu0 0.0
    %6240 = vmatpush1.msra.mxu0 %v6212
    %6241 = vmatprep.subr.mxu0 0.0
    %6242 = vmatpush1.msra.mxu0 %v6211
    %6243 = vmatprep.subr.mxu0 0.0
    %6244 = vmatpush1.msra.mxu0 %v6210
    %6245 = vmatprep.subr.mxu0 0.0
    %6246 = vmatpush1.msra.mxu0 %v6209
    %6247 = vmatprep.subr.mxu0 0.0
    %6248 = vmatpush1.msra.mxu0 %v6208
    %6249 = vmatprep.subr.mxu0 0.0
    %6250 = vmatpush1.msra.mxu0 %v6207
    %6251 = vmatprep.subr.mxu0 0.0
    %6252 = vmatpush2.msra.mxu0 0.0
    %6253 = vmatprep.subr.mxu0 0.0
    %6254 = vmatpush2.msra.mxu0 0.0
    %6255 = vmatprep.subr.mxu0 0.0
    %6256 = vmatpush2.msra.mxu0 0.0
    %6257 = vmatprep.subr.mxu0 0.0
    %6258 = vmatpush2.msra.mxu0 0.0
    %6259 = vmatprep.subr.mxu0 0.0
    %6260 = vmatpush2.msra.mxu0 0.0
    %6261 = vmatprep.subr.mxu0 0.0
    %6262 = vmatpush2.msra.mxu0 0.0
    %6263 = vmatprep.subr.mxu0 0.0
    %6264 = vmatpush2.msra.mxu0 0.0
    %6265 = vmatprep.subr.mxu0 0.0
    %6266 = vmatpush2.msra.mxu0 0.0
    %6267 = vmatprep.subr.mxu0 0.0
    %6268 = vmatpush2.msra.mxu0 0.0
    %6269 = vmatprep.subr.mxu0 0.0
    %6270 = vmatpush2.msra.mxu0 0.0
    %6271 = vmatprep.subr.mxu0 0.0
    %6272 = vmatpush2.msra.mxu0 0.0
    %6273 = vmatprep.subr.mxu0 0.0
    %6274 = vmatpush2.msra.mxu0 0.0
    %6275 = vmatprep.subr.mxu0 0.0
    %6276 = vmatpush2.msra.mxu0 0.0
    %6277 = vmatprep.subr.mxu0 0.0
    %6278 = vmatpush2.msra.mxu0 0.0
    %6279 = vmatprep.subr.mxu0 0.0
    %6280 = vmatpush2.msra.mxu0 0.0
    %6281 = vmatprep.subr.mxu0 0.0
    %6282 = vmatpush2.msra.mxu0 0.0
    %6283 = vmatprep.mubr.f32.mxu0 0.0
    %6284 = vmatmul.mubr.f32.gmra.mxu0 %v6135
    %v6285 = vpop.f32.mrf.mxu0
    %v6286 = vadd.f32 %v6132, %v6285
    %v6287 = vpop.f32.mrf.mxu0
    %6288 = vdwg.mxu0
    %v6289 = vld [vmem:[%s99] sm:$0xff]
    %v6290 = vld [vmem:[%s101] sm:$0xff]
    %v6292 = vsel %vm4563, %v6290, 0
    %v6295 = vsel %vm4567, %v6286, 0
    %6297 = vmatprep.subr.mxu0 0.0
    %6298 = vmatpush1.msra.mxu0 0.0
    %6299 = vmatprep.subr.mxu0 0.0
    %6300 = vmatpush1.msra.mxu0 0.0
    %6301 = vmatprep.subr.mxu0 0.0
    %6302 = vmatpush1.msra.mxu0 0.0
    %6303 = vmatprep.subr.mxu0 0.0
    %6304 = vmatpush1.msra.mxu0 0.0
    %6305 = vmatprep.subr.mxu0 0.0
    %6306 = vmatpush1.msra.mxu0 0.0
    %6307 = vmatprep.subr.mxu0 0.0
    %6308 = vmatpush1.msra.mxu0 0.0
    %6309 = vmatprep.subr.mxu0 0.0
    %6310 = vmatpush1.msra.mxu0 0.0
    %6311 = vmatprep.subr.mxu0 0.0
    %6312 = vmatpush1.msra.mxu0 0.0
    %6313 = vmatprep.subr.mxu0 0.0
    %6314 = vmatpush1.msra.mxu0 0.0
    %6315 = vmatprep.subr.mxu0 0.0
    %6316 = vmatpush1.msra.mxu0 0.0
    %6317 = vmatprep.subr.mxu0 0.0
    %6318 = vmatpush1.msra.mxu0 0.0
    %6319 = vmatprep.subr.mxu0 0.0
    %6320 = vmatpush1.msra.mxu0 0.0
    %6321 = vmatprep.subr.mxu0 0.0
    %6322 = vmatpush1.msra.mxu0 0.0
    %6323 = vmatprep.subr.mxu0 0.0
    %6324 = vmatpush1.msra.mxu0 0.0
    %6325 = vmatprep.subr.mxu0 0.0
    %6326 = vmatpush1.msra.mxu0 0.0
    %6327 = vmatprep.subr.mxu0 0.0
    %6328 = vmatpush1.msra.mxu0 %v6295
    %6329 = vmatprep.subr.mxu0 0.0
    %6330 = vmatpush2.msra.mxu0 0.0
    %6331 = vmatprep.subr.mxu0 0.0
    %6332 = vmatpush2.msra.mxu0 0.0
    %6333 = vmatprep.subr.mxu0 0.0
    %6334 = vmatpush2.msra.mxu0 0.0
    %6335 = vmatprep.subr.mxu0 0.0
    %6336 = vmatpush2.msra.mxu0 0.0
    %6337 = vmatprep.subr.mxu0 0.0
    %6338 = vmatpush2.msra.mxu0 0.0
    %6339 = vmatprep.subr.mxu0 0.0
    %6340 = vmatpush2.msra.mxu0 0.0
    %6341 = vmatprep.subr.mxu0 0.0
    %6342 = vmatpush2.msra.mxu0 0.0
    %6343 = vmatprep.subr.mxu0 0.0
    %6344 = vmatpush2.msra.mxu0 0.0
    %6345 = vmatprep.subr.mxu0 0.0
    %6346 = vmatpush2.msra.mxu0 0.0
    %6347 = vmatprep.subr.mxu0 0.0
    %6348 = vmatpush2.msra.mxu0 0.0
    %6349 = vmatprep.subr.mxu0 0.0
    %6350 = vmatpush2.msra.mxu0 0.0
    %6351 = vmatprep.subr.mxu0 0.0
    %6352 = vmatpush2.msra.mxu0 0.0
    %6353 = vmatprep.subr.mxu0 0.0
    %6354 = vmatpush2.msra.mxu0 0.0
    %6355 = vmatprep.subr.mxu0 0.0
    %6356 = vmatpush2.msra.mxu0 0.0
    %6357 = vmatprep.subr.mxu0 0.0
    %6358 = vmatpush2.msra.mxu0 0.0
    %6359 = vmatprep.subr.mxu0 0.0
    %6360 = vmatpush2.msra.mxu0 0.0
    %6361 = vmatprep.mubr.f32.mxu0 0.0
    %6362 = vmatmul.mubr.f32.gmra.mxu0 %v6292
    %v6363 = vpop.f32.mrf.mxu0
    %v6364 = vadd.f32 0.0, %v6363
    %v6365 = vpop.f32.mrf.mxu0
    %6366 = vdwg.mxu0
    %v6368 = vsel %vm4563, %v6289, 0
    %v6371 = vsel %vm4567, %v6204, 0
    %6373 = vmatprep.subr.mxu0 0.0
    %6374 = vmatpush1.msra.mxu0 0.0
    %6375 = vmatprep.subr.mxu0 0.0
    %6376 = vmatpush1.msra.mxu0 0.0
    %6377 = vmatprep.subr.mxu0 0.0
    %6378 = vmatpush1.msra.mxu0 0.0
    %6379 = vmatprep.subr.mxu0 0.0
    %6380 = vmatpush1.msra.mxu0 0.0
    %6381 = vmatprep.subr.mxu0 0.0
    %6382 = vmatpush1.msra.mxu0 0.0
    %6383 = vmatprep.subr.mxu0 0.0
    %6384 = vmatpush1.msra.mxu0 0.0
    %6385 = vmatprep.subr.mxu0 0.0
    %6386 = vmatpush1.msra.mxu0 0.0
    %6387 = vmatprep.subr.mxu0 0.0
    %6388 = vmatpush1.msra.mxu0 0.0
    %6389 = vmatprep.subr.mxu0 0.0
    %6390 = vmatpush1.msra.mxu0 0.0
    %6391 = vmatprep.subr.mxu0 0.0
    %6392 = vmatpush1.msra.mxu0 0.0
    %6393 = vmatprep.subr.mxu0 0.0
    %6394 = vmatpush1.msra.mxu0 0.0
    %6395 = vmatprep.subr.mxu0 0.0
    %6396 = vmatpush1.msra.mxu0 0.0
    %6397 = vmatprep.subr.mxu0 0.0
    %6398 = vmatpush1.msra.mxu0 0.0
    %6399 = vmatprep.subr.mxu0 0.0
    %6400 = vmatpush1.msra.mxu0 0.0
    %6401 = vmatprep.subr.mxu0 0.0
    %6402 = vmatpush1.msra.mxu0 0.0
    %6403 = vmatprep.subr.mxu0 0.0
    %6404 = vmatpush1.msra.mxu0 %v6371
    %6405 = vmatprep.subr.mxu0 0.0
    %6406 = vmatpush2.msra.mxu0 0.0
    %6407 = vmatprep.subr.mxu0 0.0
    %6408 = vmatpush2.msra.mxu0 0.0
    %6409 = vmatprep.subr.mxu0 0.0
    %6410 = vmatpush2.msra.mxu0 0.0
    %6411 = vmatprep.subr.mxu0 0.0
    %6412 = vmatpush2.msra.mxu0 0.0
    %6413 = vmatprep.subr.mxu0 0.0
    %6414 = vmatpush2.msra.mxu0 0.0
    %6415 = vmatprep.subr.mxu0 0.0
    %6416 = vmatpush2.msra.mxu0 0.0
    %6417 = vmatprep.subr.mxu0 0.0
    %6418 = vmatpush2.msra.mxu0 0.0
    %6419 = vmatprep.subr.mxu0 0.0
    %6420 = vmatpush2.msra.mxu0 0.0
    %6421 = vmatprep.subr.mxu0 0.0
    %6422 = vmatpush2.msra.mxu0 0.0
    %6423 = vmatprep.subr.mxu0 0.0
    %6424 = vmatpush2.msra.mxu0 0.0
    %6425 = vmatprep.subr.mxu0 0.0
    %6426 = vmatpush2.msra.mxu0 0.0
    %6427 = vmatprep.subr.mxu0 0.0
    %6428 = vmatpush2.msra.mxu0 0.0
    %6429 = vmatprep.subr.mxu0 0.0
    %6430 = vmatpush2.msra.mxu0 0.0
    %6431 = vmatprep.subr.mxu0 0.0
    %6432 = vmatpush2.msra.mxu0 0.0
    %6433 = vmatprep.subr.mxu0 0.0
    %6434 = vmatpush2.msra.mxu0 0.0
    %6435 = vmatprep.subr.mxu0 0.0
    %6436 = vmatpush2.msra.mxu0 0.0
    %6437 = vmatprep.mubr.f32.mxu0 0.0
    %6438 = vmatmul.mubr.f32.gmra.mxu0 %v6368
    %v6439 = vpop.f32.mrf.mxu0
    %v6440 = vadd.f32 %v6364, %v6439
    %v6441 = vpop.f32.mrf.mxu0
    %6442 = vdwg.mxu0
    %6443 = vmatprep.subr.mxu0 0.0
    %6444 = vmatpush1.msra.mxu0 0.0
    %6445 = vmatprep.subr.mxu0 0.0
    %6446 = vmatpush1.msra.mxu0 0.0
    %6447 = vmatprep.subr.mxu0 0.0
    %6448 = vmatpush1.msra.mxu0 0.0
    %6449 = vmatprep.subr.mxu0 0.0
    %6450 = vmatpush1.msra.mxu0 0.0
    %6451 = vmatprep.subr.mxu0 0.0
    %6452 = vmatpush1.msra.mxu0 0.0
    %6453 = vmatprep.subr.mxu0 0.0
    %6454 = vmatpush1.msra.mxu0 0.0
    %6455 = vmatprep.subr.mxu0 0.0
    %6456 = vmatpush1.msra.mxu0 0.0
    %6457 = vmatprep.subr.mxu0 0.0
    %6458 = vmatpush1.msra.mxu0 0.0
    %6459 = vmatprep.subr.mxu0 0.0
    %6460 = vmatpush1.msra.mxu0 0.0
    %6461 = vmatprep.subr.mxu0 0.0
    %6462 = vmatpush1.msra.mxu0 0.0
    %6463 = vmatprep.subr.mxu0 0.0
    %6464 = vmatpush1.msra.mxu0 0.0
    %6465 = vmatprep.subr.mxu0 0.0
    %6466 = vmatpush1.msra.mxu0 0.0
    %6467 = vmatprep.subr.mxu0 0.0
    %6468 = vmatpush1.msra.mxu0 0.0
    %6469 = vmatprep.subr.mxu0 0.0
    %6470 = vmatpush1.msra.mxu0 0.0
    %6471 = vmatprep.subr.mxu0 0.0
    %6472 = vmatpush1.msra.mxu0 0.0
    %6473 = vmatprep.subr.mxu0 0.0
    %6474 = vmatpush1.msra.mxu0 %v6440
    %6475 = vmatprep.subr.mxu0 0.0
    %6476 = vmatpush2.msra.mxu0 0.0
    %6477 = vmatprep.subr.mxu0 0.0
    %6478 = vmatpush2.msra.mxu0 0.0
    %6479 = vmatprep.subr.mxu0 0.0
    %6480 = vmatpush2.msra.mxu0 0.0
    %6481 = vmatprep.subr.mxu0 0.0
    %6482 = vmatpush2.msra.mxu0 0.0
    %6483 = vmatprep.subr.mxu0 0.0
    %6484 = vmatpush2.msra.mxu0 0.0
    %6485 = vmatprep.subr.mxu0 0.0
    %6486 = vmatpush2.msra.mxu0 0.0
    %6487 = vmatprep.subr.mxu0 0.0
    %6488 = vmatpush2.msra.mxu0 0.0
    %6489 = vmatprep.subr.mxu0 0.0
    %6490 = vmatpush2.msra.mxu0 0.0
    %6491 = vmatprep.subr.mxu0 0.0
    %6492 = vmatpush2.msra.mxu0 0.0
    %6493 = vmatprep.subr.mxu0 0.0
    %6494 = vmatpush2.msra.mxu0 0.0
    %6495 = vmatprep.subr.mxu0 0.0
    %6496 = vmatpush2.msra.mxu0 0.0
    %6497 = vmatprep.subr.mxu0 0.0
    %6498 = vmatpush2.msra.mxu0 0.0
    %6499 = vmatprep.subr.mxu0 0.0
    %6500 = vmatpush2.msra.mxu0 0.0
    %6501 = vmatprep.subr.mxu0 0.0
    %6502 = vmatpush2.msra.mxu0 0.0
    %6503 = vmatprep.subr.mxu0 0.0
    %6504 = vmatpush2.msra.mxu0 0.0
    %6505 = vmatprep.subr.mxu0 0.0
    %6506 = vmatpush2.msra.mxu0 0.0
    %6507 = vmatprep.mubr.f32.mxu0 0.0
    %6508 = vmatmul.mubr.f32.gmra.mxu0 %v3491
    %v6509 = vpop.f32.mrf.mxu0
    %v6510 = vadd.f32 0.0, %v6509
    %v6511 = vpop.f32.mrf.mxu0
    %6512 = vdwg.mxu0
    %6513 = vmatprep.subr.mxu0 0.0
    %6514 = vmatpush1.msra.mxu0 0.0
    %6515 = vmatprep.subr.mxu0 0.0
    %6516 = vmatpush1.msra.mxu0 0.0
    %6517 = vmatprep.subr.mxu0 0.0
    %6518 = vmatpush1.msra.mxu0 0.0
    %6519 = vmatprep.subr.mxu0 0.0
    %6520 = vmatpush1.msra.mxu0 0.0
    %6521 = vmatprep.subr.mxu0 0.0
    %6522 = vmatpush1.msra.mxu0 0.0
    %6523 = vmatprep.subr.mxu0 0.0
    %6524 = vmatpush1.msra.mxu0 0.0
    %6525 = vmatprep.subr.mxu0 0.0
    %6526 = vmatpush1.msra.mxu0 0.0
    %6527 = vmatprep.subr.mxu0 0.0
    %6528 = vmatpush1.msra.mxu0 0.0
    %6529 = vmatprep.subr.mxu0 0.0
    %6530 = vmatpush1.msra.mxu0 0.0
    %6531 = vmatprep.subr.mxu0 0.0
    %6532 = vmatpush1.msra.mxu0 0.0
    %6533 = vmatprep.subr.mxu0 0.0
    %6534 = vmatpush1.msra.mxu0 0.0
    %6535 = vmatprep.subr.mxu0 0.0
    %6536 = vmatpush1.msra.mxu0 0.0
    %6537 = vmatprep.subr.mxu0 0.0
    %6538 = vmatpush1.msra.mxu0 0.0
    %6539 = vmatprep.subr.mxu0 0.0
    %6540 = vmatpush1.msra.mxu0 0.0
    %6541 = vmatprep.subr.mxu0 0.0
    %6542 = vmatpush1.msra.mxu0 0.0
    %6543 = vmatprep.subr.mxu0 0.0
    %6544 = vmatpush1.msra.mxu0 %v6440
    %6545 = vmatprep.subr.mxu0 0.0
    %6546 = vmatpush2.msra.mxu0 0.0
    %6547 = vmatprep.subr.mxu0 0.0
    %6548 = vmatpush2.msra.mxu0 0.0
    %6549 = vmatprep.subr.mxu0 0.0
    %6550 = vmatpush2.msra.mxu0 0.0
    %6551 = vmatprep.subr.mxu0 0.0
    %6552 = vmatpush2.msra.mxu0 0.0
    %6553 = vmatprep.subr.mxu0 0.0
    %6554 = vmatpush2.msra.mxu0 0.0
    %6555 = vmatprep.subr.mxu0 0.0
    %6556 = vmatpush2.msra.mxu0 0.0
    %6557 = vmatprep.subr.mxu0 0.0
    %6558 = vmatpush2.msra.mxu0 0.0
    %6559 = vmatprep.subr.mxu0 0.0
    %6560 = vmatpush2.msra.mxu0 0.0
    %6561 = vmatprep.subr.mxu0 0.0
    %6562 = vmatpush2.msra.mxu0 0.0
    %6563 = vmatprep.subr.mxu0 0.0
    %6564 = vmatpush2.msra.mxu0 0.0
    %6565 = vmatprep.subr.mxu0 0.0
    %6566 = vmatpush2.msra.mxu0 0.0
    %6567 = vmatprep.subr.mxu0 0.0
    %6568 = vmatpush2.msra.mxu0 0.0
    %6569 = vmatprep.subr.mxu0 0.0
    %6570 = vmatpush2.msra.mxu0 0.0
    %6571 = vmatprep.subr.mxu0 0.0
    %6572 = vmatpush2.msra.mxu0 0.0
    %6573 = vmatprep.subr.mxu0 0.0
    %6574 = vmatpush2.msra.mxu0 0.0
    %6575 = vmatprep.subr.mxu0 0.0
    %6576 = vmatpush2.msra.mxu0 0.0
    %6577 = vmatprep.mubr.f32.mxu0 0.0
    %6578 = vmatmul.mubr.f32.gmra.mxu0 %v3565
    %v6579 = vpop.f32.mrf.mxu0
    %v6580 = vadd.f32 0.0, %v6579
    %v6581 = vpop.f32.mrf.mxu0
    %6582 = vdwg.mxu0
    %v6583 = vld [vmem:[%s105] sm:$0xff]
    %v6584 = vld [vmem:[%s105 + $0x8] sm:$0xff]
    %v6585 = vld [vmem:[%s105 + $0x10] sm:$0xff]
    %v6586 = vld [vmem:[%s105 + $0x18] sm:$0xff]
    %v6587 = vld [vmem:[%s105 + $0x20] sm:$0xff]
    %v6588 = vld [vmem:[%s105 + $0x28] sm:$0xff]
    %v6589 = vld [vmem:[%s105 + $0x30] sm:$0xff]
    %v6590 = vld [vmem:[%s105 + $0x38] sm:$0xff]
    %v6592 = vsel %vm445, %v6440, 0
    %6594 = vmatprep.subr.mxu0 0.0
    %6595 = vmatpush1.msra.mxu0 0.0
    %6596 = vmatprep.subr.mxu0 0.0
    %6597 = vmatpush1.msra.mxu0 0.0
    %6598 = vmatprep.subr.mxu0 0.0
    %6599 = vmatpush1.msra.mxu0 0.0
    %6600 = vmatprep.subr.mxu0 0.0
    %6601 = vmatpush1.msra.mxu0 0.0
    %6602 = vmatprep.subr.mxu0 0.0
    %6603 = vmatpush1.msra.mxu0 0.0
    %6604 = vmatprep.subr.mxu0 0.0
    %6605 = vmatpush1.msra.mxu0 0.0
    %6606 = vmatprep.subr.mxu0 0.0
    %6607 = vmatpush1.msra.mxu0 0.0
    %6608 = vmatprep.subr.mxu0 0.0
    %6609 = vmatpush1.msra.mxu0 0.0
    %6610 = vmatprep.subr.mxu0 0.0
    %6611 = vmatpush1.msra.mxu0 0.0
    %6612 = vmatprep.subr.mxu0 0.0
    %6613 = vmatpush1.msra.mxu0 0.0
    %6614 = vmatprep.subr.mxu0 0.0
    %6615 = vmatpush1.msra.mxu0 0.0
    %6616 = vmatprep.subr.mxu0 0.0
    %6617 = vmatpush1.msra.mxu0 0.0
    %6618 = vmatprep.subr.mxu0 0.0
    %6619 = vmatpush1.msra.mxu0 %v6590
    %6620 = vmatprep.subr.mxu0 0.0
    %6621 = vmatpush1.msra.mxu0 %v6589
    %6622 = vmatprep.subr.mxu0 0.0
    %6623 = vmatpush1.msra.mxu0 %v6588
    %6624 = vmatprep.subr.mxu0 0.0
    %6625 = vmatpush1.msra.mxu0 %v6587
    %6626 = vmatprep.subr.mxu0 0.0
    %6627 = vmatpush2.msra.mxu0 0.0
    %6628 = vmatprep.subr.mxu0 0.0
    %6629 = vmatpush2.msra.mxu0 0.0
    %6630 = vmatprep.subr.mxu0 0.0
    %6631 = vmatpush2.msra.mxu0 0.0
    %6632 = vmatprep.subr.mxu0 0.0
    %6633 = vmatpush2.msra.mxu0 0.0
    %6634 = vmatprep.subr.mxu0 0.0
    %6635 = vmatpush2.msra.mxu0 0.0
    %6636 = vmatprep.subr.mxu0 0.0
    %6637 = vmatpush2.msra.mxu0 0.0
    %6638 = vmatprep.subr.mxu0 0.0
    %6639 = vmatpush2.msra.mxu0 0.0
    %6640 = vmatprep.subr.mxu0 0.0
    %6641 = vmatpush2.msra.mxu0 0.0
    %6642 = vmatprep.subr.mxu0 0.0
    %6643 = vmatpush2.msra.mxu0 0.0
    %6644 = vmatprep.subr.mxu0 0.0
    %6645 = vmatpush2.msra.mxu0 0.0
    %6646 = vmatprep.subr.mxu0 0.0
    %6647 = vmatpush2.msra.mxu0 0.0
    %6648 = vmatprep.subr.mxu0 0.0
    %6649 = vmatpush2.msra.mxu0 0.0
    %6650 = vmatprep.subr.mxu0 0.0
    %6651 = vmatpush2.msra.mxu0 0.0
    %6652 = vmatprep.subr.mxu0 0.0
    %6653 = vmatpush2.msra.mxu0 0.0
    %6654 = vmatprep.subr.mxu0 0.0
    %6655 = vmatpush2.msra.mxu0 0.0
    %6656 = vmatprep.subr.mxu0 0.0
    %6657 = vmatpush2.msra.mxu0 0.0
    %6658 = vmatprep.mubr.f32.mxu0 0.0
    %6659 = vmatmul.mubr.f32.gmra.mxu0 %v6592
    %v6660 = vpop.f32.mrf.mxu0
    %v6661 = vadd.f32 0.0, %v6660
    %v6662 = vpop.f32.mrf.mxu0
    %6663 = vdwg.mxu0
    %v6665 = vsel %vm445, %v6510, 0
    %6667 = vmatprep.subr.mxu0 0.0
    %6668 = vmatpush1.msra.mxu0 0.0
    %6669 = vmatprep.subr.mxu0 0.0
    %6670 = vmatpush1.msra.mxu0 0.0
    %6671 = vmatprep.subr.mxu0 0.0
    %6672 = vmatpush1.msra.mxu0 0.0
    %6673 = vmatprep.subr.mxu0 0.0
    %6674 = vmatpush1.msra.mxu0 0.0
    %6675 = vmatprep.subr.mxu0 0.0
    %6676 = vmatpush1.msra.mxu0 0.0
    %6677 = vmatprep.subr.mxu0 0.0
    %6678 = vmatpush1.msra.mxu0 0.0
    %6679 = vmatprep.subr.mxu0 0.0
    %6680 = vmatpush1.msra.mxu0 0.0
    %6681 = vmatprep.subr.mxu0 0.0
    %6682 = vmatpush1.msra.mxu0 0.0
    %6683 = vmatprep.subr.mxu0 0.0
    %6684 = vmatpush1.msra.mxu0 0.0
    %6685 = vmatprep.subr.mxu0 0.0
    %6686 = vmatpush1.msra.mxu0 0.0
    %6687 = vmatprep.subr.mxu0 0.0
    %6688 = vmatpush1.msra.mxu0 0.0
    %6689 = vmatprep.subr.mxu0 0.0
    %6690 = vmatpush1.msra.mxu0 0.0
    %6691 = vmatprep.subr.mxu0 0.0
    %6692 = vmatpush1.msra.mxu0 %v6586
    %6693 = vmatprep.subr.mxu0 0.0
    %6694 = vmatpush1.msra.mxu0 %v6585
    %6695 = vmatprep.subr.mxu0 0.0
    %6696 = vmatpush1.msra.mxu0 %v6584
    %6697 = vmatprep.subr.mxu0 0.0
    %6698 = vmatpush1.msra.mxu0 %v6583
    %6699 = vmatprep.subr.mxu0 0.0
    %6700 = vmatpush2.msra.mxu0 0.0
    %6701 = vmatprep.subr.mxu0 0.0
    %6702 = vmatpush2.msra.mxu0 0.0
    %6703 = vmatprep.subr.mxu0 0.0
    %6704 = vmatpush2.msra.mxu0 0.0
    %6705 = vmatprep.subr.mxu0 0.0
    %6706 = vmatpush2.msra.mxu0 0.0
    %6707 = vmatprep.subr.mxu0 0.0
    %6708 = vmatpush2.msra.mxu0 0.0
    %6709 = vmatprep.subr.mxu0 0.0
    %6710 = vmatpush2.msra.mxu0 0.0
    %6711 = vmatprep.subr.mxu0 0.0
    %6712 = vmatpush2.msra.mxu0 0.0
    %6713 = vmatprep.subr.mxu0 0.0
    %6714 = vmatpush2.msra.mxu0 0.0
    %6715 = vmatprep.subr.mxu0 0.0
    %6716 = vmatpush2.msra.mxu0 0.0
    %6717 = vmatprep.subr.mxu0 0.0
    %6718 = vmatpush2.msra.mxu0 0.0
    %6719 = vmatprep.subr.mxu0 0.0
    %6720 = vmatpush2.msra.mxu0 0.0
    %6721 = vmatprep.subr.mxu0 0.0
    %6722 = vmatpush2.msra.mxu0 0.0
    %6723 = vmatprep.subr.mxu0 0.0
    %6724 = vmatpush2.msra.mxu0 0.0
    %6725 = vmatprep.subr.mxu0 0.0
    %6726 = vmatpush2.msra.mxu0 0.0
    %6727 = vmatprep.subr.mxu0 0.0
    %6728 = vmatpush2.msra.mxu0 0.0
    %6729 = vmatprep.subr.mxu0 0.0
    %6730 = vmatpush2.msra.mxu0 0.0
    %6731 = vmatprep.mubr.f32.mxu0 0.0
    %6732 = vmatmul.mubr.f32.gmra.mxu0 %v6665
    %v6733 = vpop.f32.mrf.mxu0
    %v6734 = vadd.f32 %v6661, %v6733
    %v6735 = vpop.f32.mrf.mxu0
    %6736 = vdwg.mxu0
    %v6737 = vld [vmem:[%s105 + $0x40] sm:$0xff]
    %v6738 = vld [vmem:[%s105 + $0x48] sm:$0xff]
    %v6739 = vld [vmem:[%s105 + $0x50] sm:$0xff]
    %v6740 = vld [vmem:[%s105 + $0x58] sm:$0xff]
    %v6742 = vsel %vm445, %v6580, 0
    %6744 = vmatprep.subr.mxu0 0.0
    %6745 = vmatpush1.msra.mxu0 0.0
    %6746 = vmatprep.subr.mxu0 0.0
    %6747 = vmatpush1.msra.mxu0 0.0
    %6748 = vmatprep.subr.mxu0 0.0
    %6749 = vmatpush1.msra.mxu0 0.0
    %6750 = vmatprep.subr.mxu0 0.0
    %6751 = vmatpush1.msra.mxu0 0.0
    %6752 = vmatprep.subr.mxu0 0.0
    %6753 = vmatpush1.msra.mxu0 0.0
    %6754 = vmatprep.subr.mxu0 0.0
    %6755 = vmatpush1.msra.mxu0 0.0
    %6756 = vmatprep.subr.mxu0 0.0
    %6757 = vmatpush1.msra.mxu0 0.0
    %6758 = vmatprep.subr.mxu0 0.0
    %6759 = vmatpush1.msra.mxu0 0.0
    %6760 = vmatprep.subr.mxu0 0.0
    %6761 = vmatpush1.msra.mxu0 0.0
    %6762 = vmatprep.subr.mxu0 0.0
    %6763 = vmatpush1.msra.mxu0 0.0
    %6764 = vmatprep.subr.mxu0 0.0
    %6765 = vmatpush1.msra.mxu0 0.0
    %6766 = vmatprep.subr.mxu0 0.0
    %6767 = vmatpush1.msra.mxu0 0.0
    %6768 = vmatprep.subr.mxu0 0.0
    %6769 = vmatpush1.msra.mxu0 %v6740
    %6770 = vmatprep.subr.mxu0 0.0
    %6771 = vmatpush1.msra.mxu0 %v6739
    %6772 = vmatprep.subr.mxu0 0.0
    %6773 = vmatpush1.msra.mxu0 %v6738
    %6774 = vmatprep.subr.mxu0 0.0
    %6775 = vmatpush1.msra.mxu0 %v6737
    %6776 = vmatprep.subr.mxu0 0.0
    %6777 = vmatpush2.msra.mxu0 0.0
    %6778 = vmatprep.subr.mxu0 0.0
    %6779 = vmatpush2.msra.mxu0 0.0
    %6780 = vmatprep.subr.mxu0 0.0
    %6781 = vmatpush2.msra.mxu0 0.0
    %6782 = vmatprep.subr.mxu0 0.0
    %6783 = vmatpush2.msra.mxu0 0.0
    %6784 = vmatprep.subr.mxu0 0.0
    %6785 = vmatpush2.msra.mxu0 0.0
    %6786 = vmatprep.subr.mxu0 0.0
    %6787 = vmatpush2.msra.mxu0 0.0
    %6788 = vmatprep.subr.mxu0 0.0
    %6789 = vmatpush2.msra.mxu0 0.0
    %6790 = vmatprep.subr.mxu0 0.0
    %6791 = vmatpush2.msra.mxu0 0.0
    %6792 = vmatprep.subr.mxu0 0.0
    %6793 = vmatpush2.msra.mxu0 0.0
    %6794 = vmatprep.subr.mxu0 0.0
    %6795 = vmatpush2.msra.mxu0 0.0
    %6796 = vmatprep.subr.mxu0 0.0
    %6797 = vmatpush2.msra.mxu0 0.0
    %6798 = vmatprep.subr.mxu0 0.0
    %6799 = vmatpush2.msra.mxu0 0.0
    %6800 = vmatprep.subr.mxu0 0.0
    %6801 = vmatpush2.msra.mxu0 0.0
    %6802 = vmatprep.subr.mxu0 0.0
    %6803 = vmatpush2.msra.mxu0 0.0
    %6804 = vmatprep.subr.mxu0 0.0
    %6805 = vmatpush2.msra.mxu0 0.0
    %6806 = vmatprep.subr.mxu0 0.0
    %6807 = vmatpush2.msra.mxu0 0.0
    %6808 = vmatprep.mubr.f32.mxu0 0.0
    %6809 = vmatmul.mubr.f32.gmra.mxu0 %v6742
    %v6810 = vpop.f32.mrf.mxu0
    %v6811 = vadd.f32 0.0, %v6810
    %v6812 = vpop.f32.mrf.mxu0
    %6813 = vdwg.mxu0
    %v6814 = vadd.f32 %v6734, %v6811
    %v6815 = vld [vmem:[#allocation16] sm:$0x1]
    %v6817 = vlaneseq
    %v6818 = vshrl.u32 %v6817, 7
    %v6819 = vsub.s32 0, %v6818
    %v6820 = vrot.slane %v6815, %v6819
    %v6822 = vadd.f32 %v6814, %v6820
    %v6823 = vmul.f32 %v6822, 0.01
    %v6824 = vmax.f32 %v6822, %v6823
    %6825 = vmatprep.subr.mxu0 0.0
    %6826 = vmatpush1.msra.mxu0 0.0
    %6827 = vmatprep.subr.mxu0 0.0
    %6828 = vmatpush1.msra.mxu0 0.0
    %6829 = vmatprep.subr.mxu0 0.0
    %6830 = vmatpush1.msra.mxu0 0.0
    %6831 = vmatprep.subr.mxu0 0.0
    %6832 = vmatpush1.msra.mxu0 0.0
    %6833 = vmatprep.subr.mxu0 0.0
    %6834 = vmatpush1.msra.mxu0 0.0
    %6835 = vmatprep.subr.mxu0 0.0
    %6836 = vmatpush1.msra.mxu0 0.0
    %6837 = vmatprep.subr.mxu0 0.0
    %6838 = vmatpush1.msra.mxu0 0.0
    %6839 = vmatprep.subr.mxu0 0.0
    %6840 = vmatpush1.msra.mxu0 0.0
    %6841 = vmatprep.subr.mxu0 0.0
    %6842 = vmatpush1.msra.mxu0 0.0
    %6843 = vmatprep.subr.mxu0 0.0
    %6844 = vmatpush1.msra.mxu0 0.0
    %6845 = vmatprep.subr.mxu0 0.0
    %6846 = vmatpush1.msra.mxu0 0.0
    %6847 = vmatprep.subr.mxu0 0.0
    %6848 = vmatpush1.msra.mxu0 0.0
    %6849 = vmatprep.subr.mxu0 0.0
    %6850 = vmatpush1.msra.mxu0 0.0
    %6851 = vmatprep.subr.mxu0 0.0
    %6852 = vmatpush1.msra.mxu0 0.0
    %6853 = vmatprep.subr.mxu0 0.0
    %6854 = vmatpush1.msra.mxu0 0.0
    %6855 = vmatprep.subr.mxu0 0.0
    %6856 = vmatpush1.msra.mxu0 %v6824
    %6857 = vmatprep.subr.mxu0 0.0
    %6858 = vmatpush2.msra.mxu0 0.0
    %6859 = vmatprep.subr.mxu0 0.0
    %6860 = vmatpush2.msra.mxu0 0.0
    %6861 = vmatprep.subr.mxu0 0.0
    %6862 = vmatpush2.msra.mxu0 0.0
    %6863 = vmatprep.subr.mxu0 0.0
    %6864 = vmatpush2.msra.mxu0 0.0
    %6865 = vmatprep.subr.mxu0 0.0
    %6866 = vmatpush2.msra.mxu0 0.0
    %6867 = vmatprep.subr.mxu0 0.0
    %6868 = vmatpush2.msra.mxu0 0.0
    %6869 = vmatprep.subr.mxu0 0.0
    %6870 = vmatpush2.msra.mxu0 0.0
    %6871 = vmatprep.subr.mxu0 0.0
    %6872 = vmatpush2.msra.mxu0 0.0
    %6873 = vmatprep.subr.mxu0 0.0
    %6874 = vmatpush2.msra.mxu0 0.0
    %6875 = vmatprep.subr.mxu0 0.0
    %6876 = vmatpush2.msra.mxu0 0.0
    %6877 = vmatprep.subr.mxu0 0.0
    %6878 = vmatpush2.msra.mxu0 0.0
    %6879 = vmatprep.subr.mxu0 0.0
    %6880 = vmatpush2.msra.mxu0 0.0
    %6881 = vmatprep.subr.mxu0 0.0
    %6882 = vmatpush2.msra.mxu0 0.0
    %6883 = vmatprep.subr.mxu0 0.0
    %6884 = vmatpush2.msra.mxu0 0.0
    %6885 = vmatprep.subr.mxu0 0.0
    %6886 = vmatpush2.msra.mxu0 0.0
    %6887 = vmatprep.subr.mxu0 0.0
    %6888 = vmatpush2.msra.mxu0 0.0
    %6889 = vmatprep.mubr.f32.mxu0 0.0
    %6890 = vmatmul.mubr.f32.gmra.mxu0 %v3491
    %v6891 = vpop.f32.mrf.mxu0
    %v6892 = vadd.f32 0.0, %v6891
    %v6893 = vpop.f32.mrf.mxu0
    %6894 = vdwg.mxu0
    %6895 = vmatprep.subr.mxu0 0.0
    %6896 = vmatpush1.msra.mxu0 0.0
    %6897 = vmatprep.subr.mxu0 0.0
    %6898 = vmatpush1.msra.mxu0 0.0
    %6899 = vmatprep.subr.mxu0 0.0
    %6900 = vmatpush1.msra.mxu0 0.0
    %6901 = vmatprep.subr.mxu0 0.0
    %6902 = vmatpush1.msra.mxu0 0.0
    %6903 = vmatprep.subr.mxu0 0.0
    %6904 = vmatpush1.msra.mxu0 0.0
    %6905 = vmatprep.subr.mxu0 0.0
    %6906 = vmatpush1.msra.mxu0 0.0
    %6907 = vmatprep.subr.mxu0 0.0
    %6908 = vmatpush1.msra.mxu0 0.0
    %6909 = vmatprep.subr.mxu0 0.0
    %6910 = vmatpush1.msra.mxu0 0.0
    %6911 = vmatprep.subr.mxu0 0.0
    %6912 = vmatpush1.msra.mxu0 0.0
    %6913 = vmatprep.subr.mxu0 0.0
    %6914 = vmatpush1.msra.mxu0 0.0
    %6915 = vmatprep.subr.mxu0 0.0
    %6916 = vmatpush1.msra.mxu0 0.0
    %6917 = vmatprep.subr.mxu0 0.0
    %6918 = vmatpush1.msra.mxu0 0.0
    %6919 = vmatprep.subr.mxu0 0.0
    %6920 = vmatpush1.msra.mxu0 0.0
    %6921 = vmatprep.subr.mxu0 0.0
    %6922 = vmatpush1.msra.mxu0 0.0
    %6923 = vmatprep.subr.mxu0 0.0
    %6924 = vmatpush1.msra.mxu0 0.0
    %6925 = vmatprep.subr.mxu0 0.0
    %6926 = vmatpush1.msra.mxu0 %v6824
    %6927 = vmatprep.subr.mxu0 0.0
    %6928 = vmatpush2.msra.mxu0 0.0
    %6929 = vmatprep.subr.mxu0 0.0
    %6930 = vmatpush2.msra.mxu0 0.0
    %6931 = vmatprep.subr.mxu0 0.0
    %6932 = vmatpush2.msra.mxu0 0.0
    %6933 = vmatprep.subr.mxu0 0.0
    %6934 = vmatpush2.msra.mxu0 0.0
    %6935 = vmatprep.subr.mxu0 0.0
    %6936 = vmatpush2.msra.mxu0 0.0
    %6937 = vmatprep.subr.mxu0 0.0
    %6938 = vmatpush2.msra.mxu0 0.0
    %6939 = vmatprep.subr.mxu0 0.0
    %6940 = vmatpush2.msra.mxu0 0.0
    %6941 = vmatprep.subr.mxu0 0.0
    %6942 = vmatpush2.msra.mxu0 0.0
    %6943 = vmatprep.subr.mxu0 0.0
    %6944 = vmatpush2.msra.mxu0 0.0
    %6945 = vmatprep.subr.mxu0 0.0
    %6946 = vmatpush2.msra.mxu0 0.0
    %6947 = vmatprep.subr.mxu0 0.0
    %6948 = vmatpush2.msra.mxu0 0.0
    %6949 = vmatprep.subr.mxu0 0.0
    %6950 = vmatpush2.msra.mxu0 0.0
    %6951 = vmatprep.subr.mxu0 0.0
    %6952 = vmatpush2.msra.mxu0 0.0
    %6953 = vmatprep.subr.mxu0 0.0
    %6954 = vmatpush2.msra.mxu0 0.0
    %6955 = vmatprep.subr.mxu0 0.0
    %6956 = vmatpush2.msra.mxu0 0.0
    %6957 = vmatprep.subr.mxu0 0.0
    %6958 = vmatpush2.msra.mxu0 0.0
    %6959 = vmatprep.mubr.f32.mxu0 0.0
    %6960 = vmatmul.mubr.f32.gmra.mxu0 %v3565
    %v6961 = vpop.f32.mrf.mxu0
    %v6962 = vadd.f32 0.0, %v6961
    %v6963 = vpop.f32.mrf.mxu0
    %6964 = vdwg.mxu0
    %v6965 = vld [vmem:[%s109] sm:$0xff]
    %v6966 = vld [vmem:[%s109 + $0x8] sm:$0xff]
    %v6967 = vld [vmem:[%s109 + $0x10] sm:$0xff]
    %v6968 = vld [vmem:[%s109 + $0x18] sm:$0xff]
    %v6969 = vld [vmem:[%s109 + $0x20] sm:$0xff]
    %v6970 = vld [vmem:[%s109 + $0x28] sm:$0xff]
    %v6971 = vld [vmem:[%s109 + $0x30] sm:$0xff]
    %v6972 = vld [vmem:[%s109 + $0x38] sm:$0xff]
    %v6974 = vsel %vm445, %v6824, 0
    %6976 = vmatprep.subr.mxu0 0.0
    %6977 = vmatpush1.msra.mxu0 0.0
    %6978 = vmatprep.subr.mxu0 0.0
    %6979 = vmatpush1.msra.mxu0 0.0
    %6980 = vmatprep.subr.mxu0 0.0
    %6981 = vmatpush1.msra.mxu0 0.0
    %6982 = vmatprep.subr.mxu0 0.0
    %6983 = vmatpush1.msra.mxu0 0.0
    %6984 = vmatprep.subr.mxu0 0.0
    %6985 = vmatpush1.msra.mxu0 0.0
    %6986 = vmatprep.subr.mxu0 0.0
    %6987 = vmatpush1.msra.mxu0 0.0
    %6988 = vmatprep.subr.mxu0 0.0
    %6989 = vmatpush1.msra.mxu0 0.0
    %6990 = vmatprep.subr.mxu0 0.0
    %6991 = vmatpush1.msra.mxu0 0.0
    %6992 = vmatprep.subr.mxu0 0.0
    %6993 = vmatpush1.msra.mxu0 0.0
    %6994 = vmatprep.subr.mxu0 0.0
    %6995 = vmatpush1.msra.mxu0 0.0
    %6996 = vmatprep.subr.mxu0 0.0
    %6997 = vmatpush1.msra.mxu0 0.0
    %6998 = vmatprep.subr.mxu0 0.0
    %6999 = vmatpush1.msra.mxu0 0.0
    %7000 = vmatprep.subr.mxu0 0.0
    %7001 = vmatpush1.msra.mxu0 %v6972
    %7002 = vmatprep.subr.mxu0 0.0
    %7003 = vmatpush1.msra.mxu0 %v6971
    %7004 = vmatprep.subr.mxu0 0.0
    %7005 = vmatpush1.msra.mxu0 %v6970
    %7006 = vmatprep.subr.mxu0 0.0
    %7007 = vmatpush1.msra.mxu0 %v6969
    %7008 = vmatprep.subr.mxu0 0.0
    %7009 = vmatpush2.msra.mxu0 0.0
    %7010 = vmatprep.subr.mxu0 0.0
    %7011 = vmatpush2.msra.mxu0 0.0
    %7012 = vmatprep.subr.mxu0 0.0
    %7013 = vmatpush2.msra.mxu0 0.0
    %7014 = vmatprep.subr.mxu0 0.0
    %7015 = vmatpush2.msra.mxu0 0.0
    %7016 = vmatprep.subr.mxu0 0.0
    %7017 = vmatpush2.msra.mxu0 0.0
    %7018 = vmatprep.subr.mxu0 0.0
    %7019 = vmatpush2.msra.mxu0 0.0
    %7020 = vmatprep.subr.mxu0 0.0
    %7021 = vmatpush2.msra.mxu0 0.0
    %7022 = vmatprep.subr.mxu0 0.0
    %7023 = vmatpush2.msra.mxu0 0.0
    %7024 = vmatprep.subr.mxu0 0.0
    %7025 = vmatpush2.msra.mxu0 0.0
    %7026 = vmatprep.subr.mxu0 0.0
    %7027 = vmatpush2.msra.mxu0 0.0
    %7028 = vmatprep.subr.mxu0 0.0
    %7029 = vmatpush2.msra.mxu0 0.0
    %7030 = vmatprep.subr.mxu0 0.0
    %7031 = vmatpush2.msra.mxu0 0.0
    %7032 = vmatprep.subr.mxu0 0.0
    %7033 = vmatpush2.msra.mxu0 0.0
    %7034 = vmatprep.subr.mxu0 0.0
    %7035 = vmatpush2.msra.mxu0 0.0
    %7036 = vmatprep.subr.mxu0 0.0
    %7037 = vmatpush2.msra.mxu0 0.0
    %7038 = vmatprep.subr.mxu0 0.0
    %7039 = vmatpush2.msra.mxu0 0.0
    %7040 = vmatprep.mubr.f32.mxu0 0.0
    %7041 = vmatmul.mubr.f32.gmra.mxu0 %v6974
    %v7042 = vpop.f32.mrf.mxu0
    %v7043 = vadd.f32 0.0, %v7042
    %v7044 = vpop.f32.mrf.mxu0
    %7045 = vdwg.mxu0
    %v7047 = vsel %vm445, %v6892, 0
    %7049 = vmatprep.subr.mxu0 0.0
    %7050 = vmatpush1.msra.mxu0 0.0
    %7051 = vmatprep.subr.mxu0 0.0
    %7052 = vmatpush1.msra.mxu0 0.0
    %7053 = vmatprep.subr.mxu0 0.0
    %7054 = vmatpush1.msra.mxu0 0.0
    %7055 = vmatprep.subr.mxu0 0.0
    %7056 = vmatpush1.msra.mxu0 0.0
    %7057 = vmatprep.subr.mxu0 0.0
    %7058 = vmatpush1.msra.mxu0 0.0
    %7059 = vmatprep.subr.mxu0 0.0
    %7060 = vmatpush1.msra.mxu0 0.0
    %7061 = vmatprep.subr.mxu0 0.0
    %7062 = vmatpush1.msra.mxu0 0.0
    %7063 = vmatprep.subr.mxu0 0.0
    %7064 = vmatpush1.msra.mxu0 0.0
    %7065 = vmatprep.subr.mxu0 0.0
    %7066 = vmatpush1.msra.mxu0 0.0
    %7067 = vmatprep.subr.mxu0 0.0
    %7068 = vmatpush1.msra.mxu0 0.0
    %7069 = vmatprep.subr.mxu0 0.0
    %7070 = vmatpush1.msra.mxu0 0.0
    %7071 = vmatprep.subr.mxu0 0.0
    %7072 = vmatpush1.msra.mxu0 0.0
    %7073 = vmatprep.subr.mxu0 0.0
    %7074 = vmatpush1.msra.mxu0 %v6968
    %7075 = vmatprep.subr.mxu0 0.0
    %7076 = vmatpush1.msra.mxu0 %v6967
    %7077 = vmatprep.subr.mxu0 0.0
    %7078 = vmatpush1.msra.mxu0 %v6966
    %7079 = vmatprep.subr.mxu0 0.0
    %7080 = vmatpush1.msra.mxu0 %v6965
    %7081 = vmatprep.subr.mxu0 0.0
    %7082 = vmatpush2.msra.mxu0 0.0
    %7083 = vmatprep.subr.mxu0 0.0
    %7084 = vmatpush2.msra.mxu0 0.0
    %7085 = vmatprep.subr.mxu0 0.0
    %7086 = vmatpush2.msra.mxu0 0.0
    %7087 = vmatprep.subr.mxu0 0.0
    %7088 = vmatpush2.msra.mxu0 0.0
    %7089 = vmatprep.subr.mxu0 0.0
    %7090 = vmatpush2.msra.mxu0 0.0
    %7091 = vmatprep.subr.mxu0 0.0
    %7092 = vmatpush2.msra.mxu0 0.0
    %7093 = vmatprep.subr.mxu0 0.0
    %7094 = vmatpush2.msra.mxu0 0.0
    %7095 = vmatprep.subr.mxu0 0.0
    %7096 = vmatpush2.msra.mxu0 0.0
    %7097 = vmatprep.subr.mxu0 0.0
    %7098 = vmatpush2.msra.mxu0 0.0
    %7099 = vmatprep.subr.mxu0 0.0
    %7100 = vmatpush2.msra.mxu0 0.0
    %7101 = vmatprep.subr.mxu0 0.0
    %7102 = vmatpush2.msra.mxu0 0.0
    %7103 = vmatprep.subr.mxu0 0.0
    %7104 = vmatpush2.msra.mxu0 0.0
    %7105 = vmatprep.subr.mxu0 0.0
    %7106 = vmatpush2.msra.mxu0 0.0
    %7107 = vmatprep.subr.mxu0 0.0
    %7108 = vmatpush2.msra.mxu0 0.0
    %7109 = vmatprep.subr.mxu0 0.0
    %7110 = vmatpush2.msra.mxu0 0.0
    %7111 = vmatprep.subr.mxu0 0.0
    %7112 = vmatpush2.msra.mxu0 0.0
    %7113 = vmatprep.mubr.f32.mxu0 0.0
    %7114 = vmatmul.mubr.f32.gmra.mxu0 %v7047
    %v7115 = vpop.f32.mrf.mxu0
    %v7116 = vadd.f32 %v7043, %v7115
    %v7117 = vpop.f32.mrf.mxu0
    %7118 = vdwg.mxu0
    %v7119 = vld [vmem:[%s109 + $0x40] sm:$0xff]
    %v7120 = vld [vmem:[%s109 + $0x48] sm:$0xff]
    %v7121 = vld [vmem:[%s109 + $0x50] sm:$0xff]
    %v7122 = vld [vmem:[%s109 + $0x58] sm:$0xff]
    %v7124 = vsel %vm445, %v6962, 0
    %7126 = vmatprep.subr.mxu0 0.0
    %7127 = vmatpush1.msra.mxu0 0.0
    %7128 = vmatprep.subr.mxu0 0.0
    %7129 = vmatpush1.msra.mxu0 0.0
    %7130 = vmatprep.subr.mxu0 0.0
    %7131 = vmatpush1.msra.mxu0 0.0
    %7132 = vmatprep.subr.mxu0 0.0
    %7133 = vmatpush1.msra.mxu0 0.0
    %7134 = vmatprep.subr.mxu0 0.0
    %7135 = vmatpush1.msra.mxu0 0.0
    %7136 = vmatprep.subr.mxu0 0.0
    %7137 = vmatpush1.msra.mxu0 0.0
    %7138 = vmatprep.subr.mxu0 0.0
    %7139 = vmatpush1.msra.mxu0 0.0
    %7140 = vmatprep.subr.mxu0 0.0
    %7141 = vmatpush1.msra.mxu0 0.0
    %7142 = vmatprep.subr.mxu0 0.0
    %7143 = vmatpush1.msra.mxu0 0.0
    %7144 = vmatprep.subr.mxu0 0.0
    %7145 = vmatpush1.msra.mxu0 0.0
    %7146 = vmatprep.subr.mxu0 0.0
    %7147 = vmatpush1.msra.mxu0 0.0
    %7148 = vmatprep.subr.mxu0 0.0
    %7149 = vmatpush1.msra.mxu0 0.0
    %7150 = vmatprep.subr.mxu0 0.0
    %7151 = vmatpush1.msra.mxu0 %v7122
    %7152 = vmatprep.subr.mxu0 0.0
    %7153 = vmatpush1.msra.mxu0 %v7121
    %7154 = vmatprep.subr.mxu0 0.0
    %7155 = vmatpush1.msra.mxu0 %v7120
    %7156 = vmatprep.subr.mxu0 0.0
    %7157 = vmatpush1.msra.mxu0 %v7119
    %7158 = vmatprep.subr.mxu0 0.0
    %7159 = vmatpush2.msra.mxu0 0.0
    %7160 = vmatprep.subr.mxu0 0.0
    %7161 = vmatpush2.msra.mxu0 0.0
    %7162 = vmatprep.subr.mxu0 0.0
    %7163 = vmatpush2.msra.mxu0 0.0
    %7164 = vmatprep.subr.mxu0 0.0
    %7165 = vmatpush2.msra.mxu0 0.0
    %7166 = vmatprep.subr.mxu0 0.0
    %7167 = vmatpush2.msra.mxu0 0.0
    %7168 = vmatprep.subr.mxu0 0.0
    %7169 = vmatpush2.msra.mxu0 0.0
    %7170 = vmatprep.subr.mxu0 0.0
    %7171 = vmatpush2.msra.mxu0 0.0
    %7172 = vmatprep.subr.mxu0 0.0
    %7173 = vmatpush2.msra.mxu0 0.0
    %7174 = vmatprep.subr.mxu0 0.0
    %7175 = vmatpush2.msra.mxu0 0.0
    %7176 = vmatprep.subr.mxu0 0.0
    %7177 = vmatpush2.msra.mxu0 0.0
    %7178 = vmatprep.subr.mxu0 0.0
    %7179 = vmatpush2.msra.mxu0 0.0
    %7180 = vmatprep.subr.mxu0 0.0
    %7181 = vmatpush2.msra.mxu0 0.0
    %7182 = vmatprep.subr.mxu0 0.0
    %7183 = vmatpush2.msra.mxu0 0.0
    %7184 = vmatprep.subr.mxu0 0.0
    %7185 = vmatpush2.msra.mxu0 0.0
    %7186 = vmatprep.subr.mxu0 0.0
    %7187 = vmatpush2.msra.mxu0 0.0
    %7188 = vmatprep.subr.mxu0 0.0
    %7189 = vmatpush2.msra.mxu0 0.0
    %7190 = vmatprep.mubr.f32.mxu0 0.0
    %7191 = vmatmul.mubr.f32.gmra.mxu0 %v7124
    %v7192 = vpop.f32.mrf.mxu0
    %v7193 = vadd.f32 0.0, %v7192
    %v7194 = vpop.f32.mrf.mxu0
    %7195 = vdwg.mxu0
    %v7196 = vadd.f32 %v7116, %v7193
    %v7197 = vld [vmem:[#allocation17] sm:$0x1]
    %v7199 = vlaneseq
    %v7200 = vshrl.u32 %v7199, 7
    %v7201 = vsub.s32 0, %v7200
    %v7202 = vrot.slane %v7197, %v7201
    %v7204 = vadd.f32 %v7196, %v7202
    %v7205 = vmul.f32 %v7204, 0.01
    %v7206 = vmax.f32 %v7204, %v7205
    %v7207 = vld [vmem:[%s113] sm:$0xff]
    %v7208 = vld [vmem:[%s113 + $0x8] sm:$0xff]
    %v7209 = vld [vmem:[%s113 + $0x10] sm:$0xff]
    %v7210 = vld [vmem:[%s113 + $0x18] sm:$0xff]
    %v7211 = vld [vmem:[#allocation19] sm:$0x1]
    %v7213 = vlaneseq
    %v7214 = vshrl.u32 %v7213, 7
    %v7215 = vsub.s32 0, %v7214
    %v7216 = vrot.slane %v7211, %v7215
    %v7219 = vsel %vm445, %v7206, 0
    %7221 = vmatprep.subr.mxu0 0.0
    %7222 = vmatpush1.msra.mxu0 0.0
    %7223 = vmatprep.subr.mxu0 0.0
    %7224 = vmatpush1.msra.mxu0 0.0
    %7225 = vmatprep.subr.mxu0 0.0
    %7226 = vmatpush1.msra.mxu0 0.0
    %7227 = vmatprep.subr.mxu0 0.0
    %7228 = vmatpush1.msra.mxu0 0.0
    %7229 = vmatprep.subr.mxu0 0.0
    %7230 = vmatpush1.msra.mxu0 0.0
    %7231 = vmatprep.subr.mxu0 0.0
    %7232 = vmatpush1.msra.mxu0 0.0
    %7233 = vmatprep.subr.mxu0 0.0
    %7234 = vmatpush1.msra.mxu0 0.0
    %7235 = vmatprep.subr.mxu0 0.0
    %7236 = vmatpush1.msra.mxu0 0.0
    %7237 = vmatprep.subr.mxu0 0.0
    %7238 = vmatpush1.msra.mxu0 0.0
    %7239 = vmatprep.subr.mxu0 0.0
    %7240 = vmatpush1.msra.mxu0 0.0
    %7241 = vmatprep.subr.mxu0 0.0
    %7242 = vmatpush1.msra.mxu0 0.0
    %7243 = vmatprep.subr.mxu0 0.0
    %7244 = vmatpush1.msra.mxu0 0.0
    %7245 = vmatprep.subr.mxu0 0.0
    %7246 = vmatpush1.msra.mxu0 %v7210
    %7247 = vmatprep.subr.mxu0 0.0
    %7248 = vmatpush1.msra.mxu0 %v7209
    %7249 = vmatprep.subr.mxu0 0.0
    %7250 = vmatpush1.msra.mxu0 %v7208
    %7251 = vmatprep.subr.mxu0 0.0
    %7252 = vmatpush1.msra.mxu0 %v7207
    %7253 = vmatprep.subr.mxu0 0.0
    %7254 = vmatpush2.msra.mxu0 0.0
    %7255 = vmatprep.subr.mxu0 0.0
    %7256 = vmatpush2.msra.mxu0 0.0
    %7257 = vmatprep.subr.mxu0 0.0
    %7258 = vmatpush2.msra.mxu0 0.0
    %7259 = vmatprep.subr.mxu0 0.0
    %7260 = vmatpush2.msra.mxu0 0.0
    %7261 = vmatprep.subr.mxu0 0.0
    %7262 = vmatpush2.msra.mxu0 0.0
    %7263 = vmatprep.subr.mxu0 0.0
    %7264 = vmatpush2.msra.mxu0 0.0
    %7265 = vmatprep.subr.mxu0 0.0
    %7266 = vmatpush2.msra.mxu0 0.0
    %7267 = vmatprep.subr.mxu0 0.0
    %7268 = vmatpush2.msra.mxu0 0.0
    %7269 = vmatprep.subr.mxu0 0.0
    %7270 = vmatpush2.msra.mxu0 0.0
    %7271 = vmatprep.subr.mxu0 0.0
    %7272 = vmatpush2.msra.mxu0 0.0
    %7273 = vmatprep.subr.mxu0 0.0
    %7274 = vmatpush2.msra.mxu0 0.0
    %7275 = vmatprep.subr.mxu0 0.0
    %7276 = vmatpush2.msra.mxu0 0.0
    %7277 = vmatprep.subr.mxu0 0.0
    %7278 = vmatpush2.msra.mxu0 0.0
    %7279 = vmatprep.subr.mxu0 0.0
    %7280 = vmatpush2.msra.mxu0 0.0
    %7281 = vmatprep.subr.mxu0 0.0
    %7282 = vmatpush2.msra.mxu0 0.0
    %7283 = vmatprep.subr.mxu0 0.0
    %7284 = vmatpush2.msra.mxu0 0.0
    %7285 = vmatprep.mubr.f32.mxu0 0.0
    %7286 = vmatmul.mubr.f32.gmra.mxu0 %v7219
    %v7287 = vpop.f32.mrf.mxu0
    %v7288 = vadd.f32 %v7216, %v7287
    %v7289 = vpop.f32.mrf.mxu0
    %7290 = vdwg.mxu0
    %v7291 = vld [vmem:[%s113 + $0x20] sm:$0xff]
    %v7292 = vld [vmem:[%s113 + $0x28] sm:$0xff]
    %v7293 = vld [vmem:[%s113 + $0x30] sm:$0xff]
    %v7294 = vld [vmem:[%s113 + $0x38] sm:$0xff]
    %7295 = vmatprep.subr.mxu0 0.0
    %7296 = vmatpush1.msra.mxu0 0.0
    %7297 = vmatprep.subr.mxu0 0.0
    %7298 = vmatpush1.msra.mxu0 0.0
    %7299 = vmatprep.subr.mxu0 0.0
    %7300 = vmatpush1.msra.mxu0 0.0
    %7301 = vmatprep.subr.mxu0 0.0
    %7302 = vmatpush1.msra.mxu0 0.0
    %7303 = vmatprep.subr.mxu0 0.0
    %7304 = vmatpush1.msra.mxu0 0.0
    %7305 = vmatprep.subr.mxu0 0.0
    %7306 = vmatpush1.msra.mxu0 0.0
    %7307 = vmatprep.subr.mxu0 0.0
    %7308 = vmatpush1.msra.mxu0 0.0
    %7309 = vmatprep.subr.mxu0 0.0
    %7310 = vmatpush1.msra.mxu0 0.0
    %7311 = vmatprep.subr.mxu0 0.0
    %7312 = vmatpush1.msra.mxu0 0.0
    %7313 = vmatprep.subr.mxu0 0.0
    %7314 = vmatpush1.msra.mxu0 0.0
    %7315 = vmatprep.subr.mxu0 0.0
    %7316 = vmatpush1.msra.mxu0 0.0
    %7317 = vmatprep.subr.mxu0 0.0
    %7318 = vmatpush1.msra.mxu0 0.0
    %7319 = vmatprep.subr.mxu0 0.0
    %7320 = vmatpush1.msra.mxu0 %v7294
    %7321 = vmatprep.subr.mxu0 0.0
    %7322 = vmatpush1.msra.mxu0 %v7293
    %7323 = vmatprep.subr.mxu0 0.0
    %7324 = vmatpush1.msra.mxu0 %v7292
    %7325 = vmatprep.subr.mxu0 0.0
    %7326 = vmatpush1.msra.mxu0 %v7291
    %7327 = vmatprep.subr.mxu0 0.0
    %7328 = vmatpush2.msra.mxu0 0.0
    %7329 = vmatprep.subr.mxu0 0.0
    %7330 = vmatpush2.msra.mxu0 0.0
    %7331 = vmatprep.subr.mxu0 0.0
    %7332 = vmatpush2.msra.mxu0 0.0
    %7333 = vmatprep.subr.mxu0 0.0
    %7334 = vmatpush2.msra.mxu0 0.0
    %7335 = vmatprep.subr.mxu0 0.0
    %7336 = vmatpush2.msra.mxu0 0.0
    %7337 = vmatprep.subr.mxu0 0.0
    %7338 = vmatpush2.msra.mxu0 0.0
    %7339 = vmatprep.subr.mxu0 0.0
    %7340 = vmatpush2.msra.mxu0 0.0
    %7341 = vmatprep.subr.mxu0 0.0
    %7342 = vmatpush2.msra.mxu0 0.0
    %7343 = vmatprep.subr.mxu0 0.0
    %7344 = vmatpush2.msra.mxu0 0.0
    %7345 = vmatprep.subr.mxu0 0.0
    %7346 = vmatpush2.msra.mxu0 0.0
    %7347 = vmatprep.subr.mxu0 0.0
    %7348 = vmatpush2.msra.mxu0 0.0
    %7349 = vmatprep.subr.mxu0 0.0
    %7350 = vmatpush2.msra.mxu0 0.0
    %7351 = vmatprep.subr.mxu0 0.0
    %7352 = vmatpush2.msra.mxu0 0.0
    %7353 = vmatprep.subr.mxu0 0.0
    %7354 = vmatpush2.msra.mxu0 0.0
    %7355 = vmatprep.subr.mxu0 0.0
    %7356 = vmatpush2.msra.mxu0 0.0
    %7357 = vmatprep.subr.mxu0 0.0
    %7358 = vmatpush2.msra.mxu0 0.0
    %7359 = vmatprep.mubr.f32.mxu0 0.0
    %7360 = vmatmul.mubr.f32.gmra.mxu0 %v7219
    %v7361 = vpop.f32.mrf.mxu0
    %v7362 = vadd.f32 %v7216, %v7361
    %v7363 = vpop.f32.mrf.mxu0
    %7364 = vdwg.mxu0
    %v7365 = vld [vmem:[%s115] sm:$0xff]
    %v7366 = vld [vmem:[%s115 + $0x8] sm:$0xff]
    %v7367 = vld [vmem:[%s117] sm:$0xff]
    %v7368 = vld [vmem:[%s117 + $0x8] sm:$0xff]
    %v7370 = vsel %vm3489, %v7367, 0
    %v7373 = vsel %vm3489, %v7368, 0
    %7375 = vmatprep.subr.mxu0 0.0
    %7376 = vmatpush1.msra.mxu0 0.0
    %7377 = vmatprep.subr.mxu0 0.0
    %7378 = vmatpush1.msra.mxu0 0.0
    %7379 = vmatprep.subr.mxu0 0.0
    %7380 = vmatpush1.msra.mxu0 0.0
    %7381 = vmatprep.subr.mxu0 0.0
    %7382 = vmatpush1.msra.mxu0 0.0
    %7383 = vmatprep.subr.mxu0 0.0
    %7384 = vmatpush1.msra.mxu0 0.0
    %7385 = vmatprep.subr.mxu0 0.0
    %7386 = vmatpush1.msra.mxu0 0.0
    %7387 = vmatprep.subr.mxu0 0.0
    %7388 = vmatpush1.msra.mxu0 0.0
    %7389 = vmatprep.subr.mxu0 0.0
    %7390 = vmatpush1.msra.mxu0 0.0
    %7391 = vmatprep.subr.mxu0 0.0
    %7392 = vmatpush1.msra.mxu0 0.0
    %7393 = vmatprep.subr.mxu0 0.0
    %7394 = vmatpush1.msra.mxu0 0.0
    %7395 = vmatprep.subr.mxu0 0.0
    %7396 = vmatpush1.msra.mxu0 0.0
    %7397 = vmatprep.subr.mxu0 0.0
    %7398 = vmatpush1.msra.mxu0 0.0
    %7399 = vmatprep.subr.mxu0 0.0
    %7400 = vmatpush1.msra.mxu0 0.0
    %7401 = vmatprep.subr.mxu0 0.0
    %7402 = vmatpush1.msra.mxu0 0.0
    %7403 = vmatprep.subr.mxu0 0.0
    %7404 = vmatpush1.msra.mxu0 0.0
    %7405 = vmatprep.subr.mxu0 0.0
    %7406 = vmatpush1.msra.mxu0 %v7362
    %7407 = vmatprep.subr.mxu0 0.0
    %7408 = vmatpush2.msra.mxu0 0.0
    %7409 = vmatprep.subr.mxu0 0.0
    %7410 = vmatpush2.msra.mxu0 0.0
    %7411 = vmatprep.subr.mxu0 0.0
    %7412 = vmatpush2.msra.mxu0 0.0
    %7413 = vmatprep.subr.mxu0 0.0
    %7414 = vmatpush2.msra.mxu0 0.0
    %7415 = vmatprep.subr.mxu0 0.0
    %7416 = vmatpush2.msra.mxu0 0.0
    %7417 = vmatprep.subr.mxu0 0.0
    %7418 = vmatpush2.msra.mxu0 0.0
    %7419 = vmatprep.subr.mxu0 0.0
    %7420 = vmatpush2.msra.mxu0 0.0
    %7421 = vmatprep.subr.mxu0 0.0
    %7422 = vmatpush2.msra.mxu0 0.0
    %7423 = vmatprep.subr.mxu0 0.0
    %7424 = vmatpush2.msra.mxu0 0.0
    %7425 = vmatprep.subr.mxu0 0.0
    %7426 = vmatpush2.msra.mxu0 0.0
    %7427 = vmatprep.subr.mxu0 0.0
    %7428 = vmatpush2.msra.mxu0 0.0
    %7429 = vmatprep.subr.mxu0 0.0
    %7430 = vmatpush2.msra.mxu0 0.0
    %7431 = vmatprep.subr.mxu0 0.0
    %7432 = vmatpush2.msra.mxu0 0.0
    %7433 = vmatprep.subr.mxu0 0.0
    %7434 = vmatpush2.msra.mxu0 0.0
    %7435 = vmatprep.subr.mxu0 0.0
    %7436 = vmatpush2.msra.mxu0 0.0
    %7437 = vmatprep.subr.mxu0 0.0
    %7438 = vmatpush2.msra.mxu0 0.0
    %7439 = vmatprep.mubr.f32.mxu0 0.0
    %7440 = vmatmul.mubr.f32.gmra.mxu0 %v7370
    %v7441 = vpop.f32.mrf.mxu0
    %v7442 = vadd.f32 0.0, %v7441
    %v7443 = vpop.f32.mrf.mxu0
    %7444 = vmatprep.mubr.f32.mxu0 0.0
    %7445 = vmatmul.mubr.f32.gmra.mxu0 %v7373
    %v7446 = vpop.f32.mrf.mxu0
    %v7447 = vadd.f32 0.0, %v7446
    %v7448 = vpop.f32.mrf.mxu0
    %7449 = vdwg.mxu0
    %v7451 = vsel %vm3489, %v7365, 0
    %v7454 = vsel %vm3489, %v7366, 0
    %7456 = vmatprep.subr.mxu0 0.0
    %7457 = vmatpush1.msra.mxu0 0.0
    %7458 = vmatprep.subr.mxu0 0.0
    %7459 = vmatpush1.msra.mxu0 0.0
    %7460 = vmatprep.subr.mxu0 0.0
    %7461 = vmatpush1.msra.mxu0 0.0
    %7462 = vmatprep.subr.mxu0 0.0
    %7463 = vmatpush1.msra.mxu0 0.0
    %7464 = vmatprep.subr.mxu0 0.0
    %7465 = vmatpush1.msra.mxu0 0.0
    %7466 = vmatprep.subr.mxu0 0.0
    %7467 = vmatpush1.msra.mxu0 0.0
    %7468 = vmatprep.subr.mxu0 0.0
    %7469 = vmatpush1.msra.mxu0 0.0
    %7470 = vmatprep.subr.mxu0 0.0
    %7471 = vmatpush1.msra.mxu0 0.0
    %7472 = vmatprep.subr.mxu0 0.0
    %7473 = vmatpush1.msra.mxu0 0.0
    %7474 = vmatprep.subr.mxu0 0.0
    %7475 = vmatpush1.msra.mxu0 0.0
    %7476 = vmatprep.subr.mxu0 0.0
    %7477 = vmatpush1.msra.mxu0 0.0
    %7478 = vmatprep.subr.mxu0 0.0
    %7479 = vmatpush1.msra.mxu0 0.0
    %7480 = vmatprep.subr.mxu0 0.0
    %7481 = vmatpush1.msra.mxu0 0.0
    %7482 = vmatprep.subr.mxu0 0.0
    %7483 = vmatpush1.msra.mxu0 0.0
    %7484 = vmatprep.subr.mxu0 0.0
    %7485 = vmatpush1.msra.mxu0 0.0
    %7486 = vmatprep.subr.mxu0 0.0
    %7487 = vmatpush1.msra.mxu0 %v7288
    %7488 = vmatprep.subr.mxu0 0.0
    %7489 = vmatpush2.msra.mxu0 0.0
    %7490 = vmatprep.subr.mxu0 0.0
    %7491 = vmatpush2.msra.mxu0 0.0
    %7492 = vmatprep.subr.mxu0 0.0
    %7493 = vmatpush2.msra.mxu0 0.0
    %7494 = vmatprep.subr.mxu0 0.0
    %7495 = vmatpush2.msra.mxu0 0.0
    %7496 = vmatprep.subr.mxu0 0.0
    %7497 = vmatpush2.msra.mxu0 0.0
    %7498 = vmatprep.subr.mxu0 0.0
    %7499 = vmatpush2.msra.mxu0 0.0
    %7500 = vmatprep.subr.mxu0 0.0
    %7501 = vmatpush2.msra.mxu0 0.0
    %7502 = vmatprep.subr.mxu0 0.0
    %7503 = vmatpush2.msra.mxu0 0.0
    %7504 = vmatprep.subr.mxu0 0.0
    %7505 = vmatpush2.msra.mxu0 0.0
    %7506 = vmatprep.subr.mxu0 0.0
    %7507 = vmatpush2.msra.mxu0 0.0
    %7508 = vmatprep.subr.mxu0 0.0
    %7509 = vmatpush2.msra.mxu0 0.0
    %7510 = vmatprep.subr.mxu0 0.0
    %7511 = vmatpush2.msra.mxu0 0.0
    %7512 = vmatprep.subr.mxu0 0.0
    %7513 = vmatpush2.msra.mxu0 0.0
    %7514 = vmatprep.subr.mxu0 0.0
    %7515 = vmatpush2.msra.mxu0 0.0
    %7516 = vmatprep.subr.mxu0 0.0
    %7517 = vmatpush2.msra.mxu0 0.0
    %7518 = vmatprep.subr.mxu0 0.0
    %7519 = vmatpush2.msra.mxu0 0.0
    %7520 = vmatprep.mubr.f32.mxu0 0.0
    %7521 = vmatmul.mubr.f32.gmra.mxu0 %v7451
    %v7522 = vpop.f32.mrf.mxu0
    %v7523 = vadd.f32 %v7442, %v7522
    %v7524 = vpop.f32.mrf.mxu0
    %7525 = vmatprep.mubr.f32.mxu0 0.0
    %7526 = vmatmul.mubr.f32.gmra.mxu0 %v7454
    %v7527 = vpop.f32.mrf.mxu0
    %v7528 = vadd.f32 %v7447, %v7527
    %v7529 = vpop.f32.mrf.mxu0
    %7530 = vdwg.mxu0
    %7531 = vmatprep.subr.mxu0 0.0
    %7532 = vmatpush1.msra.mxu0 0.0
    %7533 = vmatprep.subr.mxu0 0.0
    %7534 = vmatpush1.msra.mxu0 0.0
    %7535 = vmatprep.subr.mxu0 0.0
    %7536 = vmatpush1.msra.mxu0 0.0
    %7537 = vmatprep.subr.mxu0 0.0
    %7538 = vmatpush1.msra.mxu0 0.0
    %7539 = vmatprep.subr.mxu0 0.0
    %7540 = vmatpush1.msra.mxu0 0.0
    %7541 = vmatprep.subr.mxu0 0.0
    %7542 = vmatpush1.msra.mxu0 0.0
    %7543 = vmatprep.subr.mxu0 0.0
    %7544 = vmatpush1.msra.mxu0 0.0
    %7545 = vmatprep.subr.mxu0 0.0
    %7546 = vmatpush1.msra.mxu0 0.0
    %7547 = vmatprep.subr.mxu0 0.0
    %7548 = vmatpush1.msra.mxu0 0.0
    %7549 = vmatprep.subr.mxu0 0.0
    %7550 = vmatpush1.msra.mxu0 0.0
    %7551 = vmatprep.subr.mxu0 0.0
    %7552 = vmatpush1.msra.mxu0 0.0
    %7553 = vmatprep.subr.mxu0 0.0
    %7554 = vmatpush1.msra.mxu0 0.0
    %7555 = vmatprep.subr.mxu0 0.0
    %7556 = vmatpush1.msra.mxu0 0.0
    %7557 = vmatprep.subr.mxu0 0.0
    %7558 = vmatpush1.msra.mxu0 0.0
    %7559 = vmatprep.subr.mxu0 0.0
    %7560 = vmatpush1.msra.mxu0 %v7528
    %7561 = vmatprep.subr.mxu0 0.0
    %7562 = vmatpush1.msra.mxu0 %v7523
    %7563 = vmatprep.subr.mxu0 0.0
    %7564 = vmatpush2.msra.mxu0 0.0
    %7565 = vmatprep.subr.mxu0 0.0
    %7566 = vmatpush2.msra.mxu0 0.0
    %7567 = vmatprep.subr.mxu0 0.0
    %7568 = vmatpush2.msra.mxu0 0.0
    %7569 = vmatprep.subr.mxu0 0.0
    %7570 = vmatpush2.msra.mxu0 0.0
    %7571 = vmatprep.subr.mxu0 0.0
    %7572 = vmatpush2.msra.mxu0 0.0
    %7573 = vmatprep.subr.mxu0 0.0
    %7574 = vmatpush2.msra.mxu0 0.0
    %7575 = vmatprep.subr.mxu0 0.0
    %7576 = vmatpush2.msra.mxu0 0.0
    %7577 = vmatprep.subr.mxu0 0.0
    %7578 = vmatpush2.msra.mxu0 0.0
    %7579 = vmatprep.subr.mxu0 0.0
    %7580 = vmatpush2.msra.mxu0 0.0
    %7581 = vmatprep.subr.mxu0 0.0
    %7582 = vmatpush2.msra.mxu0 0.0
    %7583 = vmatprep.subr.mxu0 0.0
    %7584 = vmatpush2.msra.mxu0 0.0
    %7585 = vmatprep.subr.mxu0 0.0
    %7586 = vmatpush2.msra.mxu0 0.0
    %7587 = vmatprep.subr.mxu0 0.0
    %7588 = vmatpush2.msra.mxu0 0.0
    %7589 = vmatprep.subr.mxu0 0.0
    %7590 = vmatpush2.msra.mxu0 0.0
    %7591 = vmatprep.subr.mxu0 0.0
    %7592 = vmatpush2.msra.mxu0 0.0
    %7593 = vmatprep.subr.mxu0 0.0
    %7594 = vmatpush2.msra.mxu0 0.0
    %7595 = vmatprep.mubr.f32.mxu0 0.0
    %7596 = vmatmul.mubr.f32.gmra.mxu0 %v2301
    %v7597 = vpop.f32.mrf.mxu0
    %v7598 = vadd.f32 0.0, %v7597
    %v7599 = vpop.f32.mrf.mxu0
    %7600 = vmatprep.mubr.f32.mxu0 0.0
    %7601 = vmatmul.mubr.f32.gmra.mxu0 %v2304
    %v7602 = vpop.f32.mrf.mxu0
    %v7603 = vadd.f32 0.0, %v7602
    %v7604 = vpop.f32.mrf.mxu0
    %7605 = vdwg.mxu0
    %7606 = vmatprep.subr.mxu0 0.0
    %7607 = vmatpush1.msra.mxu0 0.0
    %7608 = vmatprep.subr.mxu0 0.0
    %7609 = vmatpush1.msra.mxu0 0.0
    %7610 = vmatprep.subr.mxu0 0.0
    %7611 = vmatpush1.msra.mxu0 0.0
    %7612 = vmatprep.subr.mxu0 0.0
    %7613 = vmatpush1.msra.mxu0 0.0
    %7614 = vmatprep.subr.mxu0 0.0
    %7615 = vmatpush1.msra.mxu0 0.0
    %7616 = vmatprep.subr.mxu0 0.0
    %7617 = vmatpush1.msra.mxu0 0.0
    %7618 = vmatprep.subr.mxu0 0.0
    %7619 = vmatpush1.msra.mxu0 0.0
    %7620 = vmatprep.subr.mxu0 0.0
    %7621 = vmatpush1.msra.mxu0 0.0
    %7622 = vmatprep.subr.mxu0 0.0
    %7623 = vmatpush1.msra.mxu0 0.0
    %7624 = vmatprep.subr.mxu0 0.0
    %7625 = vmatpush1.msra.mxu0 0.0
    %7626 = vmatprep.subr.mxu0 0.0
    %7627 = vmatpush1.msra.mxu0 0.0
    %7628 = vmatprep.subr.mxu0 0.0
    %7629 = vmatpush1.msra.mxu0 0.0
    %7630 = vmatprep.subr.mxu0 0.0
    %7631 = vmatpush1.msra.mxu0 0.0
    %7632 = vmatprep.subr.mxu0 0.0
    %7633 = vmatpush1.msra.mxu0 0.0
    %7634 = vmatprep.subr.mxu0 0.0
    %7635 = vmatpush1.msra.mxu0 %v7528
    %7636 = vmatprep.subr.mxu0 0.0
    %7637 = vmatpush1.msra.mxu0 %v7523
    %7638 = vmatprep.subr.mxu0 0.0
    %7639 = vmatpush2.msra.mxu0 0.0
    %7640 = vmatprep.subr.mxu0 0.0
    %7641 = vmatpush2.msra.mxu0 0.0
    %7642 = vmatprep.subr.mxu0 0.0
    %7643 = vmatpush2.msra.mxu0 0.0
    %7644 = vmatprep.subr.mxu0 0.0
    %7645 = vmatpush2.msra.mxu0 0.0
    %7646 = vmatprep.subr.mxu0 0.0
    %7647 = vmatpush2.msra.mxu0 0.0
    %7648 = vmatprep.subr.mxu0 0.0
    %7649 = vmatpush2.msra.mxu0 0.0
    %7650 = vmatprep.subr.mxu0 0.0
    %7651 = vmatpush2.msra.mxu0 0.0
    %7652 = vmatprep.subr.mxu0 0.0
    %7653 = vmatpush2.msra.mxu0 0.0
    %7654 = vmatprep.subr.mxu0 0.0
    %7655 = vmatpush2.msra.mxu0 0.0
    %7656 = vmatprep.subr.mxu0 0.0
    %7657 = vmatpush2.msra.mxu0 0.0
    %7658 = vmatprep.subr.mxu0 0.0
    %7659 = vmatpush2.msra.mxu0 0.0
    %7660 = vmatprep.subr.mxu0 0.0
    %7661 = vmatpush2.msra.mxu0 0.0
    %7662 = vmatprep.subr.mxu0 0.0
    %7663 = vmatpush2.msra.mxu0 0.0
    %7664 = vmatprep.subr.mxu0 0.0
    %7665 = vmatpush2.msra.mxu0 0.0
    %7666 = vmatprep.subr.mxu0 0.0
    %7667 = vmatpush2.msra.mxu0 0.0
    %7668 = vmatprep.subr.mxu0 0.0
    %7669 = vmatpush2.msra.mxu0 0.0
    %7670 = vmatprep.mubr.f32.mxu0 0.0
    %7671 = vmatmul.mubr.f32.gmra.mxu0 %v2384
    %v7672 = vpop.f32.mrf.mxu0
    %v7673 = vadd.f32 0.0, %v7672
    %v7674 = vpop.f32.mrf.mxu0
    %7675 = vmatprep.mubr.f32.mxu0 0.0
    %7676 = vmatmul.mubr.f32.gmra.mxu0 %v2387
    %v7677 = vpop.f32.mrf.mxu0
    %v7678 = vadd.f32 0.0, %v7677
    %v7679 = vpop.f32.mrf.mxu0
    %7680 = vdwg.mxu0
    %v7681 = vld [vmem:[%s121] sm:$0xff]
    %v7682 = vld [vmem:[%s121 + $0x8] sm:$0xff]
    %v7683 = vld [vmem:[%s121 + $0x10] sm:$0xff]
    %v7684 = vld [vmem:[%s121 + $0x18] sm:$0xff]
    %v7685 = vld [vmem:[%s121 + $0x20] sm:$0xff]
    %v7686 = vld [vmem:[%s121 + $0x28] sm:$0xff]
    %v7687 = vld [vmem:[%s121 + $0x30] sm:$0xff]
    %v7688 = vld [vmem:[%s121 + $0x38] sm:$0xff]
    %v7689 = vld [vmem:[%s121 + $0x40] sm:$0xff]
    %v7690 = vld [vmem:[%s121 + $0x48] sm:$0xff]
    %v7691 = vld [vmem:[%s121 + $0x50] sm:$0xff]
    %v7692 = vld [vmem:[%s121 + $0x58] sm:$0xff]
    %v7693 = vld [vmem:[%s121 + $0x60] sm:$0xff]
    %v7694 = vld [vmem:[%s121 + $0x68] sm:$0xff]
    %v7695 = vld [vmem:[%s121 + $0x70] sm:$0xff]
    %v7696 = vld [vmem:[%s121 + $0x78] sm:$0xff]
    %v7698 = vsel %vm2480, %v7523, 0
    %v7701 = vsel %vm2480, %v7528, 0
    %7703 = vmatprep.subr.mxu0 0.0
    %7704 = vmatpush1.msra.mxu0 0.0
    %7705 = vmatprep.subr.mxu0 0.0
    %7706 = vmatpush1.msra.mxu0 0.0
    %7707 = vmatprep.subr.mxu0 0.0
    %7708 = vmatpush1.msra.mxu0 0.0
    %7709 = vmatprep.subr.mxu0 0.0
    %7710 = vmatpush1.msra.mxu0 0.0
    %7711 = vmatprep.subr.mxu0 0.0
    %7712 = vmatpush1.msra.mxu0 0.0
    %7713 = vmatprep.subr.mxu0 0.0
    %7714 = vmatpush1.msra.mxu0 0.0
    %7715 = vmatprep.subr.mxu0 0.0
    %7716 = vmatpush1.msra.mxu0 0.0
    %7717 = vmatprep.subr.mxu0 0.0
    %7718 = vmatpush1.msra.mxu0 0.0
    %7719 = vmatprep.subr.mxu0 0.0
    %7720 = vmatpush1.msra.mxu0 %v7696
    %7721 = vmatprep.subr.mxu0 0.0
    %7722 = vmatpush1.msra.mxu0 %v7695
    %7723 = vmatprep.subr.mxu0 0.0
    %7724 = vmatpush1.msra.mxu0 %v7694
    %7725 = vmatprep.subr.mxu0 0.0
    %7726 = vmatpush1.msra.mxu0 %v7693
    %7727 = vmatprep.subr.mxu0 0.0
    %7728 = vmatpush1.msra.mxu0 %v7692
    %7729 = vmatprep.subr.mxu0 0.0
    %7730 = vmatpush1.msra.mxu0 %v7691
    %7731 = vmatprep.subr.mxu0 0.0
    %7732 = vmatpush1.msra.mxu0 %v7690
    %7733 = vmatprep.subr.mxu0 0.0
    %7734 = vmatpush1.msra.mxu0 %v7689
    %7735 = vmatprep.subr.mxu0 0.0
    %7736 = vmatpush2.msra.mxu0 0.0
    %7737 = vmatprep.subr.mxu0 0.0
    %7738 = vmatpush2.msra.mxu0 0.0
    %7739 = vmatprep.subr.mxu0 0.0
    %7740 = vmatpush2.msra.mxu0 0.0
    %7741 = vmatprep.subr.mxu0 0.0
    %7742 = vmatpush2.msra.mxu0 0.0
    %7743 = vmatprep.subr.mxu0 0.0
    %7744 = vmatpush2.msra.mxu0 0.0
    %7745 = vmatprep.subr.mxu0 0.0
    %7746 = vmatpush2.msra.mxu0 0.0
    %7747 = vmatprep.subr.mxu0 0.0
    %7748 = vmatpush2.msra.mxu0 0.0
    %7749 = vmatprep.subr.mxu0 0.0
    %7750 = vmatpush2.msra.mxu0 0.0
    %7751 = vmatprep.subr.mxu0 0.0
    %7752 = vmatpush2.msra.mxu0 0.0
    %7753 = vmatprep.subr.mxu0 0.0
    %7754 = vmatpush2.msra.mxu0 0.0
    %7755 = vmatprep.subr.mxu0 0.0
    %7756 = vmatpush2.msra.mxu0 0.0
    %7757 = vmatprep.subr.mxu0 0.0
    %7758 = vmatpush2.msra.mxu0 0.0
    %7759 = vmatprep.subr.mxu0 0.0
    %7760 = vmatpush2.msra.mxu0 0.0
    %7761 = vmatprep.subr.mxu0 0.0
    %7762 = vmatpush2.msra.mxu0 0.0
    %7763 = vmatprep.subr.mxu0 0.0
    %7764 = vmatpush2.msra.mxu0 0.0
    %7765 = vmatprep.subr.mxu0 0.0
    %7766 = vmatpush2.msra.mxu0 0.0
    %7767 = vmatprep.mubr.f32.mxu0 0.0
    %7768 = vmatmul.mubr.f32.gmra.mxu0 %v7698
    %v7769 = vpop.f32.mrf.mxu0
    %v7770 = vadd.f32 0.0, %v7769
    %v7771 = vpop.f32.mrf.mxu0
    %7772 = vmatprep.mubr.f32.mxu0 0.0
    %7773 = vmatmul.mubr.f32.gmra.mxu0 %v7701
    %v7774 = vpop.f32.mrf.mxu0
    %v7775 = vadd.f32 0.0, %v7774
    %v7776 = vpop.f32.mrf.mxu0
    %7777 = vdwg.mxu0
    %v7779 = vsel %vm2480, %v7598, 0
    %v7782 = vsel %vm2480, %v7603, 0
    %7784 = vmatprep.subr.mxu0 0.0
    %7785 = vmatpush1.msra.mxu0 0.0
    %7786 = vmatprep.subr.mxu0 0.0
    %7787 = vmatpush1.msra.mxu0 0.0
    %7788 = vmatprep.subr.mxu0 0.0
    %7789 = vmatpush1.msra.mxu0 0.0
    %7790 = vmatprep.subr.mxu0 0.0
    %7791 = vmatpush1.msra.mxu0 0.0
    %7792 = vmatprep.subr.mxu0 0.0
    %7793 = vmatpush1.msra.mxu0 0.0
    %7794 = vmatprep.subr.mxu0 0.0
    %7795 = vmatpush1.msra.mxu0 0.0
    %7796 = vmatprep.subr.mxu0 0.0
    %7797 = vmatpush1.msra.mxu0 0.0
    %7798 = vmatprep.subr.mxu0 0.0
    %7799 = vmatpush1.msra.mxu0 0.0
    %7800 = vmatprep.subr.mxu0 0.0
    %7801 = vmatpush1.msra.mxu0 %v7688
    %7802 = vmatprep.subr.mxu0 0.0
    %7803 = vmatpush1.msra.mxu0 %v7687
    %7804 = vmatprep.subr.mxu0 0.0
    %7805 = vmatpush1.msra.mxu0 %v7686
    %7806 = vmatprep.subr.mxu0 0.0
    %7807 = vmatpush1.msra.mxu0 %v7685
    %7808 = vmatprep.subr.mxu0 0.0
    %7809 = vmatpush1.msra.mxu0 %v7684
    %7810 = vmatprep.subr.mxu0 0.0
    %7811 = vmatpush1.msra.mxu0 %v7683
    %7812 = vmatprep.subr.mxu0 0.0
    %7813 = vmatpush1.msra.mxu0 %v7682
    %7814 = vmatprep.subr.mxu0 0.0
    %7815 = vmatpush1.msra.mxu0 %v7681
    %7816 = vmatprep.subr.mxu0 0.0
    %7817 = vmatpush2.msra.mxu0 0.0
    %7818 = vmatprep.subr.mxu0 0.0
    %7819 = vmatpush2.msra.mxu0 0.0
    %7820 = vmatprep.subr.mxu0 0.0
    %7821 = vmatpush2.msra.mxu0 0.0
    %7822 = vmatprep.subr.mxu0 0.0
    %7823 = vmatpush2.msra.mxu0 0.0
    %7824 = vmatprep.subr.mxu0 0.0
    %7825 = vmatpush2.msra.mxu0 0.0
    %7826 = vmatprep.subr.mxu0 0.0
    %7827 = vmatpush2.msra.mxu0 0.0
    %7828 = vmatprep.subr.mxu0 0.0
    %7829 = vmatpush2.msra.mxu0 0.0
    %7830 = vmatprep.subr.mxu0 0.0
    %7831 = vmatpush2.msra.mxu0 0.0
    %7832 = vmatprep.subr.mxu0 0.0
    %7833 = vmatpush2.msra.mxu0 0.0
    %7834 = vmatprep.subr.mxu0 0.0
    %7835 = vmatpush2.msra.mxu0 0.0
    %7836 = vmatprep.subr.mxu0 0.0
    %7837 = vmatpush2.msra.mxu0 0.0
    %7838 = vmatprep.subr.mxu0 0.0
    %7839 = vmatpush2.msra.mxu0 0.0
    %7840 = vmatprep.subr.mxu0 0.0
    %7841 = vmatpush2.msra.mxu0 0.0
    %7842 = vmatprep.subr.mxu0 0.0
    %7843 = vmatpush2.msra.mxu0 0.0
    %7844 = vmatprep.subr.mxu0 0.0
    %7845 = vmatpush2.msra.mxu0 0.0
    %7846 = vmatprep.subr.mxu0 0.0
    %7847 = vmatpush2.msra.mxu0 0.0
    %7848 = vmatprep.mubr.f32.mxu0 0.0
    %7849 = vmatmul.mubr.f32.gmra.mxu0 %v7779
    %v7850 = vpop.f32.mrf.mxu0
    %v7851 = vadd.f32 %v7770, %v7850
    %v7852 = vpop.f32.mrf.mxu0
    %7853 = vmatprep.mubr.f32.mxu0 0.0
    %7854 = vmatmul.mubr.f32.gmra.mxu0 %v7782
    %v7855 = vpop.f32.mrf.mxu0
    %v7856 = vadd.f32 %v7775, %v7855
    %v7857 = vpop.f32.mrf.mxu0
    %7858 = vdwg.mxu0
    %v7859 = vld [vmem:[%s121 + $0x80] sm:$0xff]
    %v7860 = vld [vmem:[%s121 + $0x88] sm:$0xff]
    %v7861 = vld [vmem:[%s121 + $0x90] sm:$0xff]
    %v7862 = vld [vmem:[%s121 + $0x98] sm:$0xff]
    %v7863 = vld [vmem:[%s121 + $0xa0] sm:$0xff]
    %v7864 = vld [vmem:[%s121 + $0xa8] sm:$0xff]
    %v7865 = vld [vmem:[%s121 + $0xb0] sm:$0xff]
    %v7866 = vld [vmem:[%s121 + $0xb8] sm:$0xff]
    %v7868 = vsel %vm2480, %v7673, 0
    %v7871 = vsel %vm2480, %v7678, 0
    %7873 = vmatprep.subr.mxu0 0.0
    %7874 = vmatpush1.msra.mxu0 0.0
    %7875 = vmatprep.subr.mxu0 0.0
    %7876 = vmatpush1.msra.mxu0 0.0
    %7877 = vmatprep.subr.mxu0 0.0
    %7878 = vmatpush1.msra.mxu0 0.0
    %7879 = vmatprep.subr.mxu0 0.0
    %7880 = vmatpush1.msra.mxu0 0.0
    %7881 = vmatprep.subr.mxu0 0.0
    %7882 = vmatpush1.msra.mxu0 0.0
    %7883 = vmatprep.subr.mxu0 0.0
    %7884 = vmatpush1.msra.mxu0 0.0
    %7885 = vmatprep.subr.mxu0 0.0
    %7886 = vmatpush1.msra.mxu0 0.0
    %7887 = vmatprep.subr.mxu0 0.0
    %7888 = vmatpush1.msra.mxu0 0.0
    %7889 = vmatprep.subr.mxu0 0.0
    %7890 = vmatpush1.msra.mxu0 %v7866
    %7891 = vmatprep.subr.mxu0 0.0
    %7892 = vmatpush1.msra.mxu0 %v7865
    %7893 = vmatprep.subr.mxu0 0.0
    %7894 = vmatpush1.msra.mxu0 %v7864
    %7895 = vmatprep.subr.mxu0 0.0
    %7896 = vmatpush1.msra.mxu0 %v7863
    %7897 = vmatprep.subr.mxu0 0.0
    %7898 = vmatpush1.msra.mxu0 %v7862
    %7899 = vmatprep.subr.mxu0 0.0
    %7900 = vmatpush1.msra.mxu0 %v7861
    %7901 = vmatprep.subr.mxu0 0.0
    %7902 = vmatpush1.msra.mxu0 %v7860
    %7903 = vmatprep.subr.mxu0 0.0
    %7904 = vmatpush1.msra.mxu0 %v7859
    %7905 = vmatprep.subr.mxu0 0.0
    %7906 = vmatpush2.msra.mxu0 0.0
    %7907 = vmatprep.subr.mxu0 0.0
    %7908 = vmatpush2.msra.mxu0 0.0
    %7909 = vmatprep.subr.mxu0 0.0
    %7910 = vmatpush2.msra.mxu0 0.0
    %7911 = vmatprep.subr.mxu0 0.0
    %7912 = vmatpush2.msra.mxu0 0.0
    %7913 = vmatprep.subr.mxu0 0.0
    %7914 = vmatpush2.msra.mxu0 0.0
    %7915 = vmatprep.subr.mxu0 0.0
    %7916 = vmatpush2.msra.mxu0 0.0
    %7917 = vmatprep.subr.mxu0 0.0
    %7918 = vmatpush2.msra.mxu0 0.0
    %7919 = vmatprep.subr.mxu0 0.0
    %7920 = vmatpush2.msra.mxu0 0.0
    %7921 = vmatprep.subr.mxu0 0.0
    %7922 = vmatpush2.msra.mxu0 0.0
    %7923 = vmatprep.subr.mxu0 0.0
    %7924 = vmatpush2.msra.mxu0 0.0
    %7925 = vmatprep.subr.mxu0 0.0
    %7926 = vmatpush2.msra.mxu0 0.0
    %7927 = vmatprep.subr.mxu0 0.0
    %7928 = vmatpush2.msra.mxu0 0.0
    %7929 = vmatprep.subr.mxu0 0.0
    %7930 = vmatpush2.msra.mxu0 0.0
    %7931 = vmatprep.subr.mxu0 0.0
    %7932 = vmatpush2.msra.mxu0 0.0
    %7933 = vmatprep.subr.mxu0 0.0
    %7934 = vmatpush2.msra.mxu0 0.0
    %7935 = vmatprep.subr.mxu0 0.0
    %7936 = vmatpush2.msra.mxu0 0.0
    %7937 = vmatprep.mubr.f32.mxu0 0.0
    %7938 = vmatmul.mubr.f32.gmra.mxu0 %v7868
    %v7939 = vpop.f32.mrf.mxu0
    %v7940 = vadd.f32 0.0, %v7939
    %v7941 = vpop.f32.mrf.mxu0
    %7942 = vmatprep.mubr.f32.mxu0 0.0
    %7943 = vmatmul.mubr.f32.gmra.mxu0 %v7871
    %v7944 = vpop.f32.mrf.mxu0
    %v7945 = vadd.f32 0.0, %v7944
    %v7946 = vpop.f32.mrf.mxu0
    %7947 = vdwg.mxu0
    %v7948 = vadd.f32 %v7851, %v7940
    %v7949 = vadd.f32 %v7856, %v7945
    %v7950 = vld [vmem:[#allocation20] sm:$0x1]
    %v7952 = vlaneseq
    %v7953 = vshrl.u32 %v7952, 7
    %v7954 = vsub.s32 0, %v7953
    %v7955 = vrot.slane %v7950, %v7954
    %v7957 = vadd.f32 %v7948, %v7955
    %v7958 = vadd.f32 %v7949, %v7955
    %v7959 = vmul.f32 %v7957, 0.01
    %v7960 = vmul.f32 %v7958, 0.01
    %v7961 = vmax.f32 %v7957, %v7959
    %v7962 = vmax.f32 %v7958, %v7960
    %7963 = vmatprep.subr.mxu0 0.0
    %7964 = vmatpush1.msra.mxu0 0.0
    %7965 = vmatprep.subr.mxu0 0.0
    %7966 = vmatpush1.msra.mxu0 0.0
    %7967 = vmatprep.subr.mxu0 0.0
    %7968 = vmatpush1.msra.mxu0 0.0
    %7969 = vmatprep.subr.mxu0 0.0
    %7970 = vmatpush1.msra.mxu0 0.0
    %7971 = vmatprep.subr.mxu0 0.0
    %7972 = vmatpush1.msra.mxu0 0.0
    %7973 = vmatprep.subr.mxu0 0.0
    %7974 = vmatpush1.msra.mxu0 0.0
    %7975 = vmatprep.subr.mxu0 0.0
    %7976 = vmatpush1.msra.mxu0 0.0
    %7977 = vmatprep.subr.mxu0 0.0
    %7978 = vmatpush1.msra.mxu0 0.0
    %7979 = vmatprep.subr.mxu0 0.0
    %7980 = vmatpush1.msra.mxu0 0.0
    %7981 = vmatprep.subr.mxu0 0.0
    %7982 = vmatpush1.msra.mxu0 0.0
    %7983 = vmatprep.subr.mxu0 0.0
    %7984 = vmatpush1.msra.mxu0 0.0
    %7985 = vmatprep.subr.mxu0 0.0
    %7986 = vmatpush1.msra.mxu0 0.0
    %7987 = vmatprep.subr.mxu0 0.0
    %7988 = vmatpush1.msra.mxu0 0.0
    %7989 = vmatprep.subr.mxu0 0.0
    %7990 = vmatpush1.msra.mxu0 0.0
    %7991 = vmatprep.subr.mxu0 0.0
    %7992 = vmatpush1.msra.mxu0 %v7962
    %7993 = vmatprep.subr.mxu0 0.0
    %7994 = vmatpush1.msra.mxu0 %v7961
    %7995 = vmatprep.subr.mxu0 0.0
    %7996 = vmatpush2.msra.mxu0 0.0
    %7997 = vmatprep.subr.mxu0 0.0
    %7998 = vmatpush2.msra.mxu0 0.0
    %7999 = vmatprep.subr.mxu0 0.0
    %8000 = vmatpush2.msra.mxu0 0.0
    %8001 = vmatprep.subr.mxu0 0.0
    %8002 = vmatpush2.msra.mxu0 0.0
    %8003 = vmatprep.subr.mxu0 0.0
    %8004 = vmatpush2.msra.mxu0 0.0
    %8005 = vmatprep.subr.mxu0 0.0
    %8006 = vmatpush2.msra.mxu0 0.0
    %8007 = vmatprep.subr.mxu0 0.0
    %8008 = vmatpush2.msra.mxu0 0.0
    %8009 = vmatprep.subr.mxu0 0.0
    %8010 = vmatpush2.msra.mxu0 0.0
    %8011 = vmatprep.subr.mxu0 0.0
    %8012 = vmatpush2.msra.mxu0 0.0
    %8013 = vmatprep.subr.mxu0 0.0
    %8014 = vmatpush2.msra.mxu0 0.0
    %8015 = vmatprep.subr.mxu0 0.0
    %8016 = vmatpush2.msra.mxu0 0.0
    %8017 = vmatprep.subr.mxu0 0.0
    %8018 = vmatpush2.msra.mxu0 0.0
    %8019 = vmatprep.subr.mxu0 0.0
    %8020 = vmatpush2.msra.mxu0 0.0
    %8021 = vmatprep.subr.mxu0 0.0
    %8022 = vmatpush2.msra.mxu0 0.0
    %8023 = vmatprep.subr.mxu0 0.0
    %8024 = vmatpush2.msra.mxu0 0.0
    %8025 = vmatprep.subr.mxu0 0.0
    %8026 = vmatpush2.msra.mxu0 0.0
    %8027 = vmatprep.mubr.f32.mxu0 0.0
    %8028 = vmatmul.mubr.f32.gmra.mxu0 %v2301
    %v8029 = vpop.f32.mrf.mxu0
    %v8030 = vadd.f32 0.0, %v8029
    %v8031 = vpop.f32.mrf.mxu0
    %8032 = vmatprep.mubr.f32.mxu0 0.0
    %8033 = vmatmul.mubr.f32.gmra.mxu0 %v2304
    %v8034 = vpop.f32.mrf.mxu0
    %v8035 = vadd.f32 0.0, %v8034
    %v8036 = vpop.f32.mrf.mxu0
    %8037 = vdwg.mxu0
    %8038 = vmatprep.subr.mxu0 0.0
    %8039 = vmatpush1.msra.mxu0 0.0
    %8040 = vmatprep.subr.mxu0 0.0
    %8041 = vmatpush1.msra.mxu0 0.0
    %8042 = vmatprep.subr.mxu0 0.0
    %8043 = vmatpush1.msra.mxu0 0.0
    %8044 = vmatprep.subr.mxu0 0.0
    %8045 = vmatpush1.msra.mxu0 0.0
    %8046 = vmatprep.subr.mxu0 0.0
    %8047 = vmatpush1.msra.mxu0 0.0
    %8048 = vmatprep.subr.mxu0 0.0
    %8049 = vmatpush1.msra.mxu0 0.0
    %8050 = vmatprep.subr.mxu0 0.0
    %8051 = vmatpush1.msra.mxu0 0.0
    %8052 = vmatprep.subr.mxu0 0.0
    %8053 = vmatpush1.msra.mxu0 0.0
    %8054 = vmatprep.subr.mxu0 0.0
    %8055 = vmatpush1.msra.mxu0 0.0
    %8056 = vmatprep.subr.mxu0 0.0
    %8057 = vmatpush1.msra.mxu0 0.0
    %8058 = vmatprep.subr.mxu0 0.0
    %8059 = vmatpush1.msra.mxu0 0.0
    %8060 = vmatprep.subr.mxu0 0.0
    %8061 = vmatpush1.msra.mxu0 0.0
    %8062 = vmatprep.subr.mxu0 0.0
    %8063 = vmatpush1.msra.mxu0 0.0
    %8064 = vmatprep.subr.mxu0 0.0
    %8065 = vmatpush1.msra.mxu0 0.0
    %8066 = vmatprep.subr.mxu0 0.0
    %8067 = vmatpush1.msra.mxu0 %v7962
    %8068 = vmatprep.subr.mxu0 0.0
    %8069 = vmatpush1.msra.mxu0 %v7961
    %8070 = vmatprep.subr.mxu0 0.0
    %8071 = vmatpush2.msra.mxu0 0.0
    %8072 = vmatprep.subr.mxu0 0.0
    %8073 = vmatpush2.msra.mxu0 0.0
    %8074 = vmatprep.subr.mxu0 0.0
    %8075 = vmatpush2.msra.mxu0 0.0
    %8076 = vmatprep.subr.mxu0 0.0
    %8077 = vmatpush2.msra.mxu0 0.0
    %8078 = vmatprep.subr.mxu0 0.0
    %8079 = vmatpush2.msra.mxu0 0.0
    %8080 = vmatprep.subr.mxu0 0.0
    %8081 = vmatpush2.msra.mxu0 0.0
    %8082 = vmatprep.subr.mxu0 0.0
    %8083 = vmatpush2.msra.mxu0 0.0
    %8084 = vmatprep.subr.mxu0 0.0
    %8085 = vmatpush2.msra.mxu0 0.0
    %8086 = vmatprep.subr.mxu0 0.0
    %8087 = vmatpush2.msra.mxu0 0.0
    %8088 = vmatprep.subr.mxu0 0.0
    %8089 = vmatpush2.msra.mxu0 0.0
    %8090 = vmatprep.subr.mxu0 0.0
    %8091 = vmatpush2.msra.mxu0 0.0
    %8092 = vmatprep.subr.mxu0 0.0
    %8093 = vmatpush2.msra.mxu0 0.0
    %8094 = vmatprep.subr.mxu0 0.0
    %8095 = vmatpush2.msra.mxu0 0.0
    %8096 = vmatprep.subr.mxu0 0.0
    %8097 = vmatpush2.msra.mxu0 0.0
    %8098 = vmatprep.subr.mxu0 0.0
    %8099 = vmatpush2.msra.mxu0 0.0
    %8100 = vmatprep.subr.mxu0 0.0
    %8101 = vmatpush2.msra.mxu0 0.0
    %8102 = vmatprep.mubr.f32.mxu0 0.0
    %8103 = vmatmul.mubr.f32.gmra.mxu0 %v2384
    %v8104 = vpop.f32.mrf.mxu0
    %v8105 = vadd.f32 0.0, %v8104
    %v8106 = vpop.f32.mrf.mxu0
    %8107 = vmatprep.mubr.f32.mxu0 0.0
    %8108 = vmatmul.mubr.f32.gmra.mxu0 %v2387
    %v8109 = vpop.f32.mrf.mxu0
    %v8110 = vadd.f32 0.0, %v8109
    %v8111 = vpop.f32.mrf.mxu0
    %8112 = vdwg.mxu0
    %v8113 = vld [vmem:[%s125] sm:$0xff]
    %v8114 = vld [vmem:[%s125 + $0x8] sm:$0xff]
    %v8115 = vld [vmem:[%s125 + $0x10] sm:$0xff]
    %v8116 = vld [vmem:[%s125 + $0x18] sm:$0xff]
    %v8117 = vld [vmem:[%s125 + $0x20] sm:$0xff]
    %v8118 = vld [vmem:[%s125 + $0x28] sm:$0xff]
    %v8119 = vld [vmem:[%s125 + $0x30] sm:$0xff]
    %v8120 = vld [vmem:[%s125 + $0x38] sm:$0xff]
    %v8121 = vld [vmem:[%s125 + $0x40] sm:$0xff]
    %v8122 = vld [vmem:[%s125 + $0x48] sm:$0xff]
    %v8123 = vld [vmem:[%s125 + $0x50] sm:$0xff]
    %v8124 = vld [vmem:[%s125 + $0x58] sm:$0xff]
    %v8125 = vld [vmem:[%s125 + $0x60] sm:$0xff]
    %v8126 = vld [vmem:[%s125 + $0x68] sm:$0xff]
    %v8127 = vld [vmem:[%s125 + $0x70] sm:$0xff]
    %v8128 = vld [vmem:[%s125 + $0x78] sm:$0xff]
    %v8130 = vsel %vm2480, %v7961, 0
    %v8133 = vsel %vm2480, %v7962, 0
    %8135 = vmatprep.subr.mxu0 0.0
    %8136 = vmatpush1.msra.mxu0 0.0
    %8137 = vmatprep.subr.mxu0 0.0
    %8138 = vmatpush1.msra.mxu0 0.0
    %8139 = vmatprep.subr.mxu0 0.0
    %8140 = vmatpush1.msra.mxu0 0.0
    %8141 = vmatprep.subr.mxu0 0.0
    %8142 = vmatpush1.msra.mxu0 0.0
    %8143 = vmatprep.subr.mxu0 0.0
    %8144 = vmatpush1.msra.mxu0 0.0
    %8145 = vmatprep.subr.mxu0 0.0
    %8146 = vmatpush1.msra.mxu0 0.0
    %8147 = vmatprep.subr.mxu0 0.0
    %8148 = vmatpush1.msra.mxu0 0.0
    %8149 = vmatprep.subr.mxu0 0.0
    %8150 = vmatpush1.msra.mxu0 0.0
    %8151 = vmatprep.subr.mxu0 0.0
    %8152 = vmatpush1.msra.mxu0 %v8128
    %8153 = vmatprep.subr.mxu0 0.0
    %8154 = vmatpush1.msra.mxu0 %v8127
    %8155 = vmatprep.subr.mxu0 0.0
    %8156 = vmatpush1.msra.mxu0 %v8126
    %8157 = vmatprep.subr.mxu0 0.0
    %8158 = vmatpush1.msra.mxu0 %v8125
    %8159 = vmatprep.subr.mxu0 0.0
    %8160 = vmatpush1.msra.mxu0 %v8124
    %8161 = vmatprep.subr.mxu0 0.0
    %8162 = vmatpush1.msra.mxu0 %v8123
    %8163 = vmatprep.subr.mxu0 0.0
    %8164 = vmatpush1.msra.mxu0 %v8122
    %8165 = vmatprep.subr.mxu0 0.0
    %8166 = vmatpush1.msra.mxu0 %v8121
    %8167 = vmatprep.subr.mxu0 0.0
    %8168 = vmatpush2.msra.mxu0 0.0
    %8169 = vmatprep.subr.mxu0 0.0
    %8170 = vmatpush2.msra.mxu0 0.0
    %8171 = vmatprep.subr.mxu0 0.0
    %8172 = vmatpush2.msra.mxu0 0.0
    %8173 = vmatprep.subr.mxu0 0.0
    %8174 = vmatpush2.msra.mxu0 0.0
    %8175 = vmatprep.subr.mxu0 0.0
    %8176 = vmatpush2.msra.mxu0 0.0
    %8177 = vmatprep.subr.mxu0 0.0
    %8178 = vmatpush2.msra.mxu0 0.0
    %8179 = vmatprep.subr.mxu0 0.0
    %8180 = vmatpush2.msra.mxu0 0.0
    %8181 = vmatprep.subr.mxu0 0.0
    %8182 = vmatpush2.msra.mxu0 0.0
    %8183 = vmatprep.subr.mxu0 0.0
    %8184 = vmatpush2.msra.mxu0 0.0
    %8185 = vmatprep.subr.mxu0 0.0
    %8186 = vmatpush2.msra.mxu0 0.0
    %8187 = vmatprep.subr.mxu0 0.0
    %8188 = vmatpush2.msra.mxu0 0.0
    %8189 = vmatprep.subr.mxu0 0.0
    %8190 = vmatpush2.msra.mxu0 0.0
    %8191 = vmatprep.subr.mxu0 0.0
    %8192 = vmatpush2.msra.mxu0 0.0
    %8193 = vmatprep.subr.mxu0 0.0
    %8194 = vmatpush2.msra.mxu0 0.0
    %8195 = vmatprep.subr.mxu0 0.0
    %8196 = vmatpush2.msra.mxu0 0.0
    %8197 = vmatprep.subr.mxu0 0.0
    %8198 = vmatpush2.msra.mxu0 0.0
    %8199 = vmatprep.mubr.f32.mxu0 0.0
    %8200 = vmatmul.mubr.f32.gmra.mxu0 %v8130
    %v8201 = vpop.f32.mrf.mxu0
    %v8202 = vadd.f32 0.0, %v8201
    %v8203 = vpop.f32.mrf.mxu0
    %8204 = vmatprep.mubr.f32.mxu0 0.0
    %8205 = vmatmul.mubr.f32.gmra.mxu0 %v8133
    %v8206 = vpop.f32.mrf.mxu0
    %v8207 = vadd.f32 0.0, %v8206
    %v8208 = vpop.f32.mrf.mxu0
    %8209 = vdwg.mxu0
    %v8211 = vsel %vm2480, %v8030, 0
    %v8214 = vsel %vm2480, %v8035, 0
    %8216 = vmatprep.subr.mxu0 0.0
    %8217 = vmatpush1.msra.mxu0 0.0
    %8218 = vmatprep.subr.mxu0 0.0
    %8219 = vmatpush1.msra.mxu0 0.0
    %8220 = vmatprep.subr.mxu0 0.0
    %8221 = vmatpush1.msra.mxu0 0.0
    %8222 = vmatprep.subr.mxu0 0.0
    %8223 = vmatpush1.msra.mxu0 0.0
    %8224 = vmatprep.subr.mxu0 0.0
    %8225 = vmatpush1.msra.mxu0 0.0
    %8226 = vmatprep.subr.mxu0 0.0
    %8227 = vmatpush1.msra.mxu0 0.0
    %8228 = vmatprep.subr.mxu0 0.0
    %8229 = vmatpush1.msra.mxu0 0.0
    %8230 = vmatprep.subr.mxu0 0.0
    %8231 = vmatpush1.msra.mxu0 0.0
    %8232 = vmatprep.subr.mxu0 0.0
    %8233 = vmatpush1.msra.mxu0 %v8120
    %8234 = vmatprep.subr.mxu0 0.0
    %8235 = vmatpush1.msra.mxu0 %v8119
    %8236 = vmatprep.subr.mxu0 0.0
    %8237 = vmatpush1.msra.mxu0 %v8118
    %8238 = vmatprep.subr.mxu0 0.0
    %8239 = vmatpush1.msra.mxu0 %v8117
    %8240 = vmatprep.subr.mxu0 0.0
    %8241 = vmatpush1.msra.mxu0 %v8116
    %8242 = vmatprep.subr.mxu0 0.0
    %8243 = vmatpush1.msra.mxu0 %v8115
    %8244 = vmatprep.subr.mxu0 0.0
    %8245 = vmatpush1.msra.mxu0 %v8114
    %8246 = vmatprep.subr.mxu0 0.0
    %8247 = vmatpush1.msra.mxu0 %v8113
    %8248 = vmatprep.subr.mxu0 0.0
    %8249 = vmatpush2.msra.mxu0 0.0
    %8250 = vmatprep.subr.mxu0 0.0
    %8251 = vmatpush2.msra.mxu0 0.0
    %8252 = vmatprep.subr.mxu0 0.0
    %8253 = vmatpush2.msra.mxu0 0.0
    %8254 = vmatprep.subr.mxu0 0.0
    %8255 = vmatpush2.msra.mxu0 0.0
    %8256 = vmatprep.subr.mxu0 0.0
    %8257 = vmatpush2.msra.mxu0 0.0
    %8258 = vmatprep.subr.mxu0 0.0
    %8259 = vmatpush2.msra.mxu0 0.0
    %8260 = vmatprep.subr.mxu0 0.0
    %8261 = vmatpush2.msra.mxu0 0.0
    %8262 = vmatprep.subr.mxu0 0.0
    %8263 = vmatpush2.msra.mxu0 0.0
    %8264 = vmatprep.subr.mxu0 0.0
    %8265 = vmatpush2.msra.mxu0 0.0
    %8266 = vmatprep.subr.mxu0 0.0
    %8267 = vmatpush2.msra.mxu0 0.0
    %8268 = vmatprep.subr.mxu0 0.0
    %8269 = vmatpush2.msra.mxu0 0.0
    %8270 = vmatprep.subr.mxu0 0.0
    %8271 = vmatpush2.msra.mxu0 0.0
    %8272 = vmatprep.subr.mxu0 0.0
    %8273 = vmatpush2.msra.mxu0 0.0
    %8274 = vmatprep.subr.mxu0 0.0
    %8275 = vmatpush2.msra.mxu0 0.0
    %8276 = vmatprep.subr.mxu0 0.0
    %8277 = vmatpush2.msra.mxu0 0.0
    %8278 = vmatprep.subr.mxu0 0.0
    %8279 = vmatpush2.msra.mxu0 0.0
    %8280 = vmatprep.mubr.f32.mxu0 0.0
    %8281 = vmatmul.mubr.f32.gmra.mxu0 %v8211
    %v8282 = vpop.f32.mrf.mxu0
    %v8283 = vadd.f32 %v8202, %v8282
    %v8284 = vpop.f32.mrf.mxu0
    %8285 = vmatprep.mubr.f32.mxu0 0.0
    %8286 = vmatmul.mubr.f32.gmra.mxu0 %v8214
    %v8287 = vpop.f32.mrf.mxu0
    %v8288 = vadd.f32 %v8207, %v8287
    %v8289 = vpop.f32.mrf.mxu0
    %8290 = vdwg.mxu0
    %v8291 = vld [vmem:[%s125 + $0x80] sm:$0xff]
    %v8292 = vld [vmem:[%s125 + $0x88] sm:$0xff]
    %v8293 = vld [vmem:[%s125 + $0x90] sm:$0xff]
    %v8294 = vld [vmem:[%s125 + $0x98] sm:$0xff]
    %v8295 = vld [vmem:[%s125 + $0xa0] sm:$0xff]
    %v8296 = vld [vmem:[%s125 + $0xa8] sm:$0xff]
    %v8297 = vld [vmem:[%s125 + $0xb0] sm:$0xff]
    %v8298 = vld [vmem:[%s125 + $0xb8] sm:$0xff]
    %v8300 = vsel %vm2480, %v8105, 0
    %v8303 = vsel %vm2480, %v8110, 0
    %8305 = vmatprep.subr.mxu0 0.0
    %8306 = vmatpush1.msra.mxu0 0.0
    %8307 = vmatprep.subr.mxu0 0.0
    %8308 = vmatpush1.msra.mxu0 0.0
    %8309 = vmatprep.subr.mxu0 0.0
    %8310 = vmatpush1.msra.mxu0 0.0
    %8311 = vmatprep.subr.mxu0 0.0
    %8312 = vmatpush1.msra.mxu0 0.0
    %8313 = vmatprep.subr.mxu0 0.0
    %8314 = vmatpush1.msra.mxu0 0.0
    %8315 = vmatprep.subr.mxu0 0.0
    %8316 = vmatpush1.msra.mxu0 0.0
    %8317 = vmatprep.subr.mxu0 0.0
    %8318 = vmatpush1.msra.mxu0 0.0
    %8319 = vmatprep.subr.mxu0 0.0
    %8320 = vmatpush1.msra.mxu0 0.0
    %8321 = vmatprep.subr.mxu0 0.0
    %8322 = vmatpush1.msra.mxu0 %v8298
    %8323 = vmatprep.subr.mxu0 0.0
    %8324 = vmatpush1.msra.mxu0 %v8297
    %8325 = vmatprep.subr.mxu0 0.0
    %8326 = vmatpush1.msra.mxu0 %v8296
    %8327 = vmatprep.subr.mxu0 0.0
    %8328 = vmatpush1.msra.mxu0 %v8295
    %8329 = vmatprep.subr.mxu0 0.0
    %8330 = vmatpush1.msra.mxu0 %v8294
    %8331 = vmatprep.subr.mxu0 0.0
    %8332 = vmatpush1.msra.mxu0 %v8293
    %8333 = vmatprep.subr.mxu0 0.0
    %8334 = vmatpush1.msra.mxu0 %v8292
    %8335 = vmatprep.subr.mxu0 0.0
    %8336 = vmatpush1.msra.mxu0 %v8291
    %8337 = vmatprep.subr.mxu0 0.0
    %8338 = vmatpush2.msra.mxu0 0.0
    %8339 = vmatprep.subr.mxu0 0.0
    %8340 = vmatpush2.msra.mxu0 0.0
    %8341 = vmatprep.subr.mxu0 0.0
    %8342 = vmatpush2.msra.mxu0 0.0
    %8343 = vmatprep.subr.mxu0 0.0
    %8344 = vmatpush2.msra.mxu0 0.0
    %8345 = vmatprep.subr.mxu0 0.0
    %8346 = vmatpush2.msra.mxu0 0.0
    %8347 = vmatprep.subr.mxu0 0.0
    %8348 = vmatpush2.msra.mxu0 0.0
    %8349 = vmatprep.subr.mxu0 0.0
    %8350 = vmatpush2.msra.mxu0 0.0
    %8351 = vmatprep.subr.mxu0 0.0
    %8352 = vmatpush2.msra.mxu0 0.0
    %8353 = vmatprep.subr.mxu0 0.0
    %8354 = vmatpush2.msra.mxu0 0.0
    %8355 = vmatprep.subr.mxu0 0.0
    %8356 = vmatpush2.msra.mxu0 0.0
    %8357 = vmatprep.subr.mxu0 0.0
    %8358 = vmatpush2.msra.mxu0 0.0
    %8359 = vmatprep.subr.mxu0 0.0
    %8360 = vmatpush2.msra.mxu0 0.0
    %8361 = vmatprep.subr.mxu0 0.0
    %8362 = vmatpush2.msra.mxu0 0.0
    %8363 = vmatprep.subr.mxu0 0.0
    %8364 = vmatpush2.msra.mxu0 0.0
    %8365 = vmatprep.subr.mxu0 0.0
    %8366 = vmatpush2.msra.mxu0 0.0
    %8367 = vmatprep.subr.mxu0 0.0
    %8368 = vmatpush2.msra.mxu0 0.0
    %8369 = vmatprep.mubr.f32.mxu0 0.0
    %8370 = vmatmul.mubr.f32.gmra.mxu0 %v8300
    %v8371 = vpop.f32.mrf.mxu0
    %v8372 = vadd.f32 0.0, %v8371
    %v8373 = vpop.f32.mrf.mxu0
    %8374 = vmatprep.mubr.f32.mxu0 0.0
    %8375 = vmatmul.mubr.f32.gmra.mxu0 %v8303
    %v8376 = vpop.f32.mrf.mxu0
    %v8377 = vadd.f32 0.0, %v8376
    %v8378 = vpop.f32.mrf.mxu0
    %8379 = vdwg.mxu0
    %v8380 = vadd.f32 %v8283, %v8372
    %v8381 = vadd.f32 %v8288, %v8377
    %v8382 = vld [vmem:[#allocation22] sm:$0x1]
    %v8384 = vlaneseq
    %v8385 = vshrl.u32 %v8384, 7
    %v8386 = vsub.s32 0, %v8385
    %v8387 = vrot.slane %v8382, %v8386
    %v8389 = vadd.f32 %v8380, %v8387
    %v8390 = vadd.f32 %v8381, %v8387
    %v8391 = vmul.f32 %v8389, 0.01
    %v8392 = vmul.f32 %v8390, 0.01
    %v8393 = vmax.f32 %v8389, %v8391
    %v8394 = vmax.f32 %v8390, %v8392
    %v8395 = vld [vmem:[%s129] sm:$0xff]
    %v8396 = vld [vmem:[%s129 + $0x8] sm:$0xff]
    %v8397 = vld [vmem:[%s129 + $0x10] sm:$0xff]
    %v8398 = vld [vmem:[%s129 + $0x18] sm:$0xff]
    %v8399 = vld [vmem:[%s129 + $0x20] sm:$0xff]
    %v8400 = vld [vmem:[%s129 + $0x28] sm:$0xff]
    %v8401 = vld [vmem:[%s129 + $0x30] sm:$0xff]
    %v8402 = vld [vmem:[%s129 + $0x38] sm:$0xff]
    %v8403 = vld [vmem:[#allocation23] sm:$0x1]
    %v8405 = vlaneseq
    %v8406 = vshrl.u32 %v8405, 7
    %v8407 = vsub.s32 0, %v8406
    %v8408 = vrot.slane %v8403, %v8407
    %v8411 = vsel %vm2480, %v8393, 0
    %v8414 = vsel %vm2480, %v8394, 0
    %8416 = vmatprep.subr.mxu0 0.0
    %8417 = vmatpush1.msra.mxu0 0.0
    %8418 = vmatprep.subr.mxu0 0.0
    %8419 = vmatpush1.msra.mxu0 0.0
    %8420 = vmatprep.subr.mxu0 0.0
    %8421 = vmatpush1.msra.mxu0 0.0
    %8422 = vmatprep.subr.mxu0 0.0
    %8423 = vmatpush1.msra.mxu0 0.0
    %8424 = vmatprep.subr.mxu0 0.0
    %8425 = vmatpush1.msra.mxu0 0.0
    %8426 = vmatprep.subr.mxu0 0.0
    %8427 = vmatpush1.msra.mxu0 0.0
    %8428 = vmatprep.subr.mxu0 0.0
    %8429 = vmatpush1.msra.mxu0 0.0
    %8430 = vmatprep.subr.mxu0 0.0
    %8431 = vmatpush1.msra.mxu0 0.0
    %8432 = vmatprep.subr.mxu0 0.0
    %8433 = vmatpush1.msra.mxu0 %v8402
    %8434 = vmatprep.subr.mxu0 0.0
    %8435 = vmatpush1.msra.mxu0 %v8401
    %8436 = vmatprep.subr.mxu0 0.0
    %8437 = vmatpush1.msra.mxu0 %v8400
    %8438 = vmatprep.subr.mxu0 0.0
    %8439 = vmatpush1.msra.mxu0 %v8399
    %8440 = vmatprep.subr.mxu0 0.0
    %8441 = vmatpush1.msra.mxu0 %v8398
    %8442 = vmatprep.subr.mxu0 0.0
    %8443 = vmatpush1.msra.mxu0 %v8397
    %8444 = vmatprep.subr.mxu0 0.0
    %8445 = vmatpush1.msra.mxu0 %v8396
    %8446 = vmatprep.subr.mxu0 0.0
    %8447 = vmatpush1.msra.mxu0 %v8395
    %8448 = vmatprep.subr.mxu0 0.0
    %8449 = vmatpush2.msra.mxu0 0.0
    %8450 = vmatprep.subr.mxu0 0.0
    %8451 = vmatpush2.msra.mxu0 0.0
    %8452 = vmatprep.subr.mxu0 0.0
    %8453 = vmatpush2.msra.mxu0 0.0
    %8454 = vmatprep.subr.mxu0 0.0
    %8455 = vmatpush2.msra.mxu0 0.0
    %8456 = vmatprep.subr.mxu0 0.0
    %8457 = vmatpush2.msra.mxu0 0.0
    %8458 = vmatprep.subr.mxu0 0.0
    %8459 = vmatpush2.msra.mxu0 0.0
    %8460 = vmatprep.subr.mxu0 0.0
    %8461 = vmatpush2.msra.mxu0 0.0
    %8462 = vmatprep.subr.mxu0 0.0
    %8463 = vmatpush2.msra.mxu0 0.0
    %8464 = vmatprep.subr.mxu0 0.0
    %8465 = vmatpush2.msra.mxu0 0.0
    %8466 = vmatprep.subr.mxu0 0.0
    %8467 = vmatpush2.msra.mxu0 0.0
    %8468 = vmatprep.subr.mxu0 0.0
    %8469 = vmatpush2.msra.mxu0 0.0
    %8470 = vmatprep.subr.mxu0 0.0
    %8471 = vmatpush2.msra.mxu0 0.0
    %8472 = vmatprep.subr.mxu0 0.0
    %8473 = vmatpush2.msra.mxu0 0.0
    %8474 = vmatprep.subr.mxu0 0.0
    %8475 = vmatpush2.msra.mxu0 0.0
    %8476 = vmatprep.subr.mxu0 0.0
    %8477 = vmatpush2.msra.mxu0 0.0
    %8478 = vmatprep.subr.mxu0 0.0
    %8479 = vmatpush2.msra.mxu0 0.0
    %8480 = vmatprep.mubr.f32.mxu0 0.0
    %8481 = vmatmul.mubr.f32.gmra.mxu0 %v8411
    %v8482 = vpop.f32.mrf.mxu0
    %v8483 = vadd.f32 %v8408, %v8482
    %v8484 = vpop.f32.mrf.mxu0
    %8485 = vmatprep.mubr.f32.mxu0 0.0
    %8486 = vmatmul.mubr.f32.gmra.mxu0 %v8414
    %v8487 = vpop.f32.mrf.mxu0
    %v8488 = vadd.f32 %v8408, %v8487
    %v8489 = vpop.f32.mrf.mxu0
    %8490 = vdwg.mxu0
    %v8491 = vld [vmem:[%s129 + $0x40] sm:$0xff]
    %v8492 = vld [vmem:[%s129 + $0x48] sm:$0xff]
    %v8493 = vld [vmem:[%s129 + $0x50] sm:$0xff]
    %v8494 = vld [vmem:[%s129 + $0x58] sm:$0xff]
    %v8495 = vld [vmem:[%s129 + $0x60] sm:$0xff]
    %v8496 = vld [vmem:[%s129 + $0x68] sm:$0xff]
    %v8497 = vld [vmem:[%s129 + $0x70] sm:$0xff]
    %v8498 = vld [vmem:[%s129 + $0x78] sm:$0xff]
    %8499 = vmatprep.subr.mxu0 0.0
    %8500 = vmatpush1.msra.mxu0 0.0
    %8501 = vmatprep.subr.mxu0 0.0
    %8502 = vmatpush1.msra.mxu0 0.0
    %8503 = vmatprep.subr.mxu0 0.0
    %8504 = vmatpush1.msra.mxu0 0.0
    %8505 = vmatprep.subr.mxu0 0.0
    %8506 = vmatpush1.msra.mxu0 0.0
    %8507 = vmatprep.subr.mxu0 0.0
    %8508 = vmatpush1.msra.mxu0 0.0
    %8509 = vmatprep.subr.mxu0 0.0
    %8510 = vmatpush1.msra.mxu0 0.0
    %8511 = vmatprep.subr.mxu0 0.0
    %8512 = vmatpush1.msra.mxu0 0.0
    %8513 = vmatprep.subr.mxu0 0.0
    %8514 = vmatpush1.msra.mxu0 0.0
    %8515 = vmatprep.subr.mxu0 0.0
    %8516 = vmatpush1.msra.mxu0 %v8498
    %8517 = vmatprep.subr.mxu0 0.0
    %8518 = vmatpush1.msra.mxu0 %v8497
    %8519 = vmatprep.subr.mxu0 0.0
    %8520 = vmatpush1.msra.mxu0 %v8496
    %8521 = vmatprep.subr.mxu0 0.0
    %8522 = vmatpush1.msra.mxu0 %v8495
    %8523 = vmatprep.subr.mxu0 0.0
    %8524 = vmatpush1.msra.mxu0 %v8494
    %8525 = vmatprep.subr.mxu0 0.0
    %8526 = vmatpush1.msra.mxu0 %v8493
    %8527 = vmatprep.subr.mxu0 0.0
    %8528 = vmatpush1.msra.mxu0 %v8492
    %8529 = vmatprep.subr.mxu0 0.0
    %8530 = vmatpush1.msra.mxu0 %v8491
    %8531 = vmatprep.subr.mxu0 0.0
    %8532 = vmatpush2.msra.mxu0 0.0
    %8533 = vmatprep.subr.mxu0 0.0
    %8534 = vmatpush2.msra.mxu0 0.0
    %8535 = vmatprep.subr.mxu0 0.0
    %8536 = vmatpush2.msra.mxu0 0.0
    %8537 = vmatprep.subr.mxu0 0.0
    %8538 = vmatpush2.msra.mxu0 0.0
    %8539 = vmatprep.subr.mxu0 0.0
    %8540 = vmatpush2.msra.mxu0 0.0
    %8541 = vmatprep.subr.mxu0 0.0
    %8542 = vmatpush2.msra.mxu0 0.0
    %8543 = vmatprep.subr.mxu0 0.0
    %8544 = vmatpush2.msra.mxu0 0.0
    %8545 = vmatprep.subr.mxu0 0.0
    %8546 = vmatpush2.msra.mxu0 0.0
    %8547 = vmatprep.subr.mxu0 0.0
    %8548 = vmatpush2.msra.mxu0 0.0
    %8549 = vmatprep.subr.mxu0 0.0
    %8550 = vmatpush2.msra.mxu0 0.0
    %8551 = vmatprep.subr.mxu0 0.0
    %8552 = vmatpush2.msra.mxu0 0.0
    %8553 = vmatprep.subr.mxu0 0.0
    %8554 = vmatpush2.msra.mxu0 0.0
    %8555 = vmatprep.subr.mxu0 0.0
    %8556 = vmatpush2.msra.mxu0 0.0
    %8557 = vmatprep.subr.mxu0 0.0
    %8558 = vmatpush2.msra.mxu0 0.0
    %8559 = vmatprep.subr.mxu0 0.0
    %8560 = vmatpush2.msra.mxu0 0.0
    %8561 = vmatprep.subr.mxu0 0.0
    %8562 = vmatpush2.msra.mxu0 0.0
    %8563 = vmatprep.mubr.f32.mxu0 0.0
    %8564 = vmatmul.mubr.f32.gmra.mxu0 %v8411
    %v8565 = vpop.f32.mrf.mxu0
    %v8566 = vadd.f32 %v8408, %v8565
    %v8567 = vpop.f32.mrf.mxu0
    %8568 = vmatprep.mubr.f32.mxu0 0.0
    %8569 = vmatmul.mubr.f32.gmra.mxu0 %v8414
    %v8570 = vpop.f32.mrf.mxu0
    %v8571 = vadd.f32 %v8408, %v8570
    %v8572 = vpop.f32.mrf.mxu0
    %8573 = vdwg.mxu0
    %v8574 = vld [vmem:[%s131] sm:$0xff]
    %v8575 = vld [vmem:[%s131 + $0x8] sm:$0xff]
    %v8576 = vld [vmem:[%s131 + $0x10] sm:$0xff]
    %v8577 = vld [vmem:[%s131 + $0x18] sm:$0xff]
    %v8578 = vld [vmem:[%s133] sm:$0xff]
    %v8579 = vld [vmem:[%s133 + $0x8] sm:$0xff]
    %v8580 = vld [vmem:[%s133 + $0x10] sm:$0xff]
    %v8581 = vld [vmem:[%s133 + $0x18] sm:$0xff]
    %v8583 = vsel %vm2299, %v8578, 0
    %v8586 = vsel %vm2299, %v8579, 0
    %v8589 = vsel %vm2299, %v8580, 0
    %v8592 = vsel %vm2299, %v8581, 0
    %8594 = vmatprep.subr.mxu0 0.0
    %8595 = vmatpush1.msra.mxu0 0.0
    %8596 = vmatprep.subr.mxu0 0.0
    %8597 = vmatpush1.msra.mxu0 0.0
    %8598 = vmatprep.subr.mxu0 0.0
    %8599 = vmatpush1.msra.mxu0 0.0
    %8600 = vmatprep.subr.mxu0 0.0
    %8601 = vmatpush1.msra.mxu0 0.0
    %8602 = vmatprep.subr.mxu0 0.0
    %8603 = vmatpush1.msra.mxu0 0.0
    %8604 = vmatprep.subr.mxu0 0.0
    %8605 = vmatpush1.msra.mxu0 0.0
    %8606 = vmatprep.subr.mxu0 0.0
    %8607 = vmatpush1.msra.mxu0 0.0
    %8608 = vmatprep.subr.mxu0 0.0
    %8609 = vmatpush1.msra.mxu0 0.0
    %8610 = vmatprep.subr.mxu0 0.0
    %8611 = vmatpush1.msra.mxu0 0.0
    %8612 = vmatprep.subr.mxu0 0.0
    %8613 = vmatpush1.msra.mxu0 0.0
    %8614 = vmatprep.subr.mxu0 0.0
    %8615 = vmatpush1.msra.mxu0 0.0
    %8616 = vmatprep.subr.mxu0 0.0
    %8617 = vmatpush1.msra.mxu0 0.0
    %8618 = vmatprep.subr.mxu0 0.0
    %8619 = vmatpush1.msra.mxu0 0.0
    %8620 = vmatprep.subr.mxu0 0.0
    %8621 = vmatpush1.msra.mxu0 0.0
    %8622 = vmatprep.subr.mxu0 0.0
    %8623 = vmatpush1.msra.mxu0 %v8571
    %8624 = vmatprep.subr.mxu0 0.0
    %8625 = vmatpush1.msra.mxu0 %v8566
    %8626 = vmatprep.subr.mxu0 0.0
    %8627 = vmatpush2.msra.mxu0 0.0
    %8628 = vmatprep.subr.mxu0 0.0
    %8629 = vmatpush2.msra.mxu0 0.0
    %8630 = vmatprep.subr.mxu0 0.0
    %8631 = vmatpush2.msra.mxu0 0.0
    %8632 = vmatprep.subr.mxu0 0.0
    %8633 = vmatpush2.msra.mxu0 0.0
    %8634 = vmatprep.subr.mxu0 0.0
    %8635 = vmatpush2.msra.mxu0 0.0
    %8636 = vmatprep.subr.mxu0 0.0
    %8637 = vmatpush2.msra.mxu0 0.0
    %8638 = vmatprep.subr.mxu0 0.0
    %8639 = vmatpush2.msra.mxu0 0.0
    %8640 = vmatprep.subr.mxu0 0.0
    %8641 = vmatpush2.msra.mxu0 0.0
    %8642 = vmatprep.subr.mxu0 0.0
    %8643 = vmatpush2.msra.mxu0 0.0
    %8644 = vmatprep.subr.mxu0 0.0
    %8645 = vmatpush2.msra.mxu0 0.0
    %8646 = vmatprep.subr.mxu0 0.0
    %8647 = vmatpush2.msra.mxu0 0.0
    %8648 = vmatprep.subr.mxu0 0.0
    %8649 = vmatpush2.msra.mxu0 0.0
    %8650 = vmatprep.subr.mxu0 0.0
    %8651 = vmatpush2.msra.mxu0 0.0
    %8652 = vmatprep.subr.mxu0 0.0
    %8653 = vmatpush2.msra.mxu0 0.0
    %8654 = vmatprep.subr.mxu0 0.0
    %8655 = vmatpush2.msra.mxu0 0.0
    %8656 = vmatprep.subr.mxu0 0.0
    %8657 = vmatpush2.msra.mxu0 0.0
    %8658 = vmatprep.mubr.f32.mxu0 0.0
    %8659 = vmatmul.mubr.f32.gmra.mxu0 %v8583
    %v8660 = vpop.f32.mrf.mxu0
    %v8661 = vadd.f32 0.0, %v8660
    %v8662 = vpop.f32.mrf.mxu0
    %8663 = vmatprep.mubr.f32.mxu0 0.0
    %8664 = vmatmul.mubr.f32.gmra.mxu0 %v8586
    %v8665 = vpop.f32.mrf.mxu0
    %v8666 = vadd.f32 0.0, %v8665
    %v8667 = vpop.f32.mrf.mxu0
    %8668 = vmatprep.mubr.f32.mxu0 0.0
    %8669 = vmatmul.mubr.f32.gmra.mxu0 %v8589
    %v8670 = vpop.f32.mrf.mxu0
    %v8671 = vadd.f32 0.0, %v8670
    %v8672 = vpop.f32.mrf.mxu0
    %8673 = vmatprep.mubr.f32.mxu0 0.0
    %8674 = vmatmul.mubr.f32.gmra.mxu0 %v8592
    %v8675 = vpop.f32.mrf.mxu0
    %v8676 = vadd.f32 0.0, %v8675
    %v8677 = vpop.f32.mrf.mxu0
    %8678 = vdwg.mxu0
    %v8680 = vsel %vm2299, %v8574, 0
    %v8683 = vsel %vm2299, %v8575, 0
    %v8686 = vsel %vm2299, %v8576, 0
    %v8689 = vsel %vm2299, %v8577, 0
    %8691 = vmatprep.subr.mxu0 0.0
    %8692 = vmatpush1.msra.mxu0 0.0
    %8693 = vmatprep.subr.mxu0 0.0
    %8694 = vmatpush1.msra.mxu0 0.0
    %8695 = vmatprep.subr.mxu0 0.0
    %8696 = vmatpush1.msra.mxu0 0.0
    %8697 = vmatprep.subr.mxu0 0.0
    %8698 = vmatpush1.msra.mxu0 0.0
    %8699 = vmatprep.subr.mxu0 0.0
    %8700 = vmatpush1.msra.mxu0 0.0
    %8701 = vmatprep.subr.mxu0 0.0
    %8702 = vmatpush1.msra.mxu0 0.0
    %8703 = vmatprep.subr.mxu0 0.0
    %8704 = vmatpush1.msra.mxu0 0.0
    %8705 = vmatprep.subr.mxu0 0.0
    %8706 = vmatpush1.msra.mxu0 0.0
    %8707 = vmatprep.subr.mxu0 0.0
    %8708 = vmatpush1.msra.mxu0 0.0
    %8709 = vmatprep.subr.mxu0 0.0
    %8710 = vmatpush1.msra.mxu0 0.0
    %8711 = vmatprep.subr.mxu0 0.0
    %8712 = vmatpush1.msra.mxu0 0.0
    %8713 = vmatprep.subr.mxu0 0.0
    %8714 = vmatpush1.msra.mxu0 0.0
    %8715 = vmatprep.subr.mxu0 0.0
    %8716 = vmatpush1.msra.mxu0 0.0
    %8717 = vmatprep.subr.mxu0 0.0
    %8718 = vmatpush1.msra.mxu0 0.0
    %8719 = vmatprep.subr.mxu0 0.0
    %8720 = vmatpush1.msra.mxu0 %v8488
    %8721 = vmatprep.subr.mxu0 0.0
    %8722 = vmatpush1.msra.mxu0 %v8483
    %8723 = vmatprep.subr.mxu0 0.0
    %8724 = vmatpush2.msra.mxu0 0.0
    %8725 = vmatprep.subr.mxu0 0.0
    %8726 = vmatpush2.msra.mxu0 0.0
    %8727 = vmatprep.subr.mxu0 0.0
    %8728 = vmatpush2.msra.mxu0 0.0
    %8729 = vmatprep.subr.mxu0 0.0
    %8730 = vmatpush2.msra.mxu0 0.0
    %8731 = vmatprep.subr.mxu0 0.0
    %8732 = vmatpush2.msra.mxu0 0.0
    %8733 = vmatprep.subr.mxu0 0.0
    %8734 = vmatpush2.msra.mxu0 0.0
    %8735 = vmatprep.subr.mxu0 0.0
    %8736 = vmatpush2.msra.mxu0 0.0
    %8737 = vmatprep.subr.mxu0 0.0
    %8738 = vmatpush2.msra.mxu0 0.0
    %8739 = vmatprep.subr.mxu0 0.0
    %8740 = vmatpush2.msra.mxu0 0.0
    %8741 = vmatprep.subr.mxu0 0.0
    %8742 = vmatpush2.msra.mxu0 0.0
    %8743 = vmatprep.subr.mxu0 0.0
    %8744 = vmatpush2.msra.mxu0 0.0
    %8745 = vmatprep.subr.mxu0 0.0
    %8746 = vmatpush2.msra.mxu0 0.0
    %8747 = vmatprep.subr.mxu0 0.0
    %8748 = vmatpush2.msra.mxu0 0.0
    %8749 = vmatprep.subr.mxu0 0.0
    %8750 = vmatpush2.msra.mxu0 0.0
    %8751 = vmatprep.subr.mxu0 0.0
    %8752 = vmatpush2.msra.mxu0 0.0
    %8753 = vmatprep.subr.mxu0 0.0
    %8754 = vmatpush2.msra.mxu0 0.0
    %8755 = vmatprep.mubr.f32.mxu0 0.0
    %8756 = vmatmul.mubr.f32.gmra.mxu0 %v8680
    %v8757 = vpop.f32.mrf.mxu0
    %v8758 = vadd.f32 %v8661, %v8757
    %v8759 = vpop.f32.mrf.mxu0
    %8760 = vmatprep.mubr.f32.mxu0 0.0
    %8761 = vmatmul.mubr.f32.gmra.mxu0 %v8683
    %v8762 = vpop.f32.mrf.mxu0
    %v8763 = vadd.f32 %v8666, %v8762
    %v8764 = vpop.f32.mrf.mxu0
    %8765 = vmatprep.mubr.f32.mxu0 0.0
    %8766 = vmatmul.mubr.f32.gmra.mxu0 %v8686
    %v8767 = vpop.f32.mrf.mxu0
    %v8768 = vadd.f32 %v8671, %v8767
    %v8769 = vpop.f32.mrf.mxu0
    %8770 = vmatprep.mubr.f32.mxu0 0.0
    %8771 = vmatmul.mubr.f32.gmra.mxu0 %v8689
    %v8772 = vpop.f32.mrf.mxu0
    %v8773 = vadd.f32 %v8676, %v8772
    %v8774 = vpop.f32.mrf.mxu0
    %8775 = vdwg.mxu0
    %8776 = vmatprep.subr.mxu0 0.0
    %8777 = vmatpush1.msra.mxu0 0.0
    %8778 = vmatprep.subr.mxu0 0.0
    %8779 = vmatpush1.msra.mxu0 0.0
    %8780 = vmatprep.subr.mxu0 0.0
    %8781 = vmatpush1.msra.mxu0 0.0
    %8782 = vmatprep.subr.mxu0 0.0
    %8783 = vmatpush1.msra.mxu0 0.0
    %8784 = vmatprep.subr.mxu0 0.0
    %8785 = vmatpush1.msra.mxu0 0.0
    %8786 = vmatprep.subr.mxu0 0.0
    %8787 = vmatpush1.msra.mxu0 0.0
    %8788 = vmatprep.subr.mxu0 0.0
    %8789 = vmatpush1.msra.mxu0 0.0
    %8790 = vmatprep.subr.mxu0 0.0
    %8791 = vmatpush1.msra.mxu0 0.0
    %8792 = vmatprep.subr.mxu0 0.0
    %8793 = vmatpush1.msra.mxu0 0.0
    %8794 = vmatprep.subr.mxu0 0.0
    %8795 = vmatpush1.msra.mxu0 0.0
    %8796 = vmatprep.subr.mxu0 0.0
    %8797 = vmatpush1.msra.mxu0 0.0
    %8798 = vmatprep.subr.mxu0 0.0
    %8799 = vmatpush1.msra.mxu0 0.0
    %8800 = vmatprep.subr.mxu0 0.0
    %8801 = vmatpush1.msra.mxu0 %v8773
    %8802 = vmatprep.subr.mxu0 0.0
    %8803 = vmatpush1.msra.mxu0 %v8768
    %8804 = vmatprep.subr.mxu0 0.0
    %8805 = vmatpush1.msra.mxu0 %v8763
    %8806 = vmatprep.subr.mxu0 0.0
    %8807 = vmatpush1.msra.mxu0 %v8758
    %8808 = vmatprep.subr.mxu0 0.0
    %8809 = vmatpush2.msra.mxu0 0.0
    %8810 = vmatprep.subr.mxu0 0.0
    %8811 = vmatpush2.msra.mxu0 0.0
    %8812 = vmatprep.subr.mxu0 0.0
    %8813 = vmatpush2.msra.mxu0 0.0
    %8814 = vmatprep.subr.mxu0 0.0
    %8815 = vmatpush2.msra.mxu0 0.0
    %8816 = vmatprep.subr.mxu0 0.0
    %8817 = vmatpush2.msra.mxu0 0.0
    %8818 = vmatprep.subr.mxu0 0.0
    %8819 = vmatpush2.msra.mxu0 0.0
    %8820 = vmatprep.subr.mxu0 0.0
    %8821 = vmatpush2.msra.mxu0 0.0
    %8822 = vmatprep.subr.mxu0 0.0
    %8823 = vmatpush2.msra.mxu0 0.0
    %8824 = vmatprep.subr.mxu0 0.0
    %8825 = vmatpush2.msra.mxu0 0.0
    %8826 = vmatprep.subr.mxu0 0.0
    %8827 = vmatpush2.msra.mxu0 0.0
    %8828 = vmatprep.subr.mxu0 0.0
    %8829 = vmatpush2.msra.mxu0 0.0
    %8830 = vmatprep.subr.mxu0 0.0
    %8831 = vmatpush2.msra.mxu0 0.0
    %8832 = vmatprep.subr.mxu0 0.0
    %8833 = vmatpush2.msra.mxu0 0.0
    %8834 = vmatprep.subr.mxu0 0.0
    %8835 = vmatpush2.msra.mxu0 0.0
    %8836 = vmatprep.subr.mxu0 0.0
    %8837 = vmatpush2.msra.mxu0 0.0
    %8838 = vmatprep.subr.mxu0 0.0
    %8839 = vmatpush2.msra.mxu0 0.0
    %8840 = vmatprep.mubr.f32.mxu0 0.0
    %8841 = vmatmul.mubr.f32.gmra.mxu0 %v447
    %v8842 = vpop.f32.mrf.mxu0
    %v8843 = vadd.f32 0.0, %v8842
    %v8844 = vpop.f32.mrf.mxu0
    %8845 = vmatprep.mubr.f32.mxu0 0.0
    %8846 = vmatmul.mubr.f32.gmra.mxu0 %v450
    %v8847 = vpop.f32.mrf.mxu0
    %v8848 = vadd.f32 0.0, %v8847
    %v8849 = vpop.f32.mrf.mxu0
    %8850 = vmatprep.mubr.f32.mxu0 0.0
    %8851 = vmatmul.mubr.f32.gmra.mxu0 %v453
    %v8852 = vpop.f32.mrf.mxu0
    %v8853 = vadd.f32 0.0, %v8852
    %v8854 = vpop.f32.mrf.mxu0
    %8855 = vmatprep.mubr.f32.mxu0 0.0
    %8856 = vmatmul.mubr.f32.gmra.mxu0 %v456
    %v8857 = vpop.f32.mrf.mxu0
    %v8858 = vadd.f32 0.0, %v8857
    %v8859 = vpop.f32.mrf.mxu0
    %8860 = vdwg.mxu0
    %8861 = vmatprep.subr.mxu0 0.0
    %8862 = vmatpush1.msra.mxu0 0.0
    %8863 = vmatprep.subr.mxu0 0.0
    %8864 = vmatpush1.msra.mxu0 0.0
    %8865 = vmatprep.subr.mxu0 0.0
    %8866 = vmatpush1.msra.mxu0 0.0
    %8867 = vmatprep.subr.mxu0 0.0
    %8868 = vmatpush1.msra.mxu0 0.0
    %8869 = vmatprep.subr.mxu0 0.0
    %8870 = vmatpush1.msra.mxu0 0.0
    %8871 = vmatprep.subr.mxu0 0.0
    %8872 = vmatpush1.msra.mxu0 0.0
    %8873 = vmatprep.subr.mxu0 0.0
    %8874 = vmatpush1.msra.mxu0 0.0
    %8875 = vmatprep.subr.mxu0 0.0
    %8876 = vmatpush1.msra.mxu0 0.0
    %8877 = vmatprep.subr.mxu0 0.0
    %8878 = vmatpush1.msra.mxu0 0.0
    %8879 = vmatprep.subr.mxu0 0.0
    %8880 = vmatpush1.msra.mxu0 0.0
    %8881 = vmatprep.subr.mxu0 0.0
    %8882 = vmatpush1.msra.mxu0 0.0
    %8883 = vmatprep.subr.mxu0 0.0
    %8884 = vmatpush1.msra.mxu0 0.0
    %8885 = vmatprep.subr.mxu0 0.0
    %8886 = vmatpush1.msra.mxu0 %v8773
    %8887 = vmatprep.subr.mxu0 0.0
    %8888 = vmatpush1.msra.mxu0 %v8768
    %8889 = vmatprep.subr.mxu0 0.0
    %8890 = vmatpush1.msra.mxu0 %v8763
    %8891 = vmatprep.subr.mxu0 0.0
    %8892 = vmatpush1.msra.mxu0 %v8758
    %8893 = vmatprep.subr.mxu0 0.0
    %8894 = vmatpush2.msra.mxu0 0.0
    %8895 = vmatprep.subr.mxu0 0.0
    %8896 = vmatpush2.msra.mxu0 0.0
    %8897 = vmatprep.subr.mxu0 0.0
    %8898 = vmatpush2.msra.mxu0 0.0
    %8899 = vmatprep.subr.mxu0 0.0
    %8900 = vmatpush2.msra.mxu0 0.0
    %8901 = vmatprep.subr.mxu0 0.0
    %8902 = vmatpush2.msra.mxu0 0.0
    %8903 = vmatprep.subr.mxu0 0.0
    %8904 = vmatpush2.msra.mxu0 0.0
    %8905 = vmatprep.subr.mxu0 0.0
    %8906 = vmatpush2.msra.mxu0 0.0
    %8907 = vmatprep.subr.mxu0 0.0
    %8908 = vmatpush2.msra.mxu0 0.0
    %8909 = vmatprep.subr.mxu0 0.0
    %8910 = vmatpush2.msra.mxu0 0.0
    %8911 = vmatprep.subr.mxu0 0.0
    %8912 = vmatpush2.msra.mxu0 0.0
    %8913 = vmatprep.subr.mxu0 0.0
    %8914 = vmatpush2.msra.mxu0 0.0
    %8915 = vmatprep.subr.mxu0 0.0
    %8916 = vmatpush2.msra.mxu0 0.0
    %8917 = vmatprep.subr.mxu0 0.0
    %8918 = vmatpush2.msra.mxu0 0.0
    %8919 = vmatprep.subr.mxu0 0.0
    %8920 = vmatpush2.msra.mxu0 0.0
    %8921 = vmatprep.subr.mxu0 0.0
    %8922 = vmatpush2.msra.mxu0 0.0
    %8923 = vmatprep.subr.mxu0 0.0
    %8924 = vmatpush2.msra.mxu0 0.0
    %8925 = vmatprep.mubr.f32.mxu0 0.0
    %8926 = vmatmul.mubr.f32.gmra.mxu0 %v548
    %v8927 = vpop.f32.mrf.mxu0
    %v8928 = vadd.f32 0.0, %v8927
    %v8929 = vpop.f32.mrf.mxu0
    %8930 = vmatprep.mubr.f32.mxu0 0.0
    %8931 = vmatmul.mubr.f32.gmra.mxu0 %v551
    %v8932 = vpop.f32.mrf.mxu0
    %v8933 = vadd.f32 0.0, %v8932
    %v8934 = vpop.f32.mrf.mxu0
    %8935 = vmatprep.mubr.f32.mxu0 0.0
    %8936 = vmatmul.mubr.f32.gmra.mxu0 %v554
    %v8937 = vpop.f32.mrf.mxu0
    %v8938 = vadd.f32 0.0, %v8937
    %v8939 = vpop.f32.mrf.mxu0
    %8940 = vmatprep.mubr.f32.mxu0 0.0
    %8941 = vmatmul.mubr.f32.gmra.mxu0 %v557
    %v8942 = vpop.f32.mrf.mxu0
    %v8943 = vadd.f32 0.0, %v8942
    %v8944 = vpop.f32.mrf.mxu0
    %8945 = vdwg.mxu0
    %v8946 = vld [vmem:[%s73] sm:$0xff]
    %v8947 = vld [vmem:[%s73 + $0x8] sm:$0xff]
    %v8948 = vld [vmem:[%s73 + $0x10] sm:$0xff]
    %v8949 = vld [vmem:[%s73 + $0x18] sm:$0xff]
    %v8950 = vld [vmem:[%s73 + $0x20] sm:$0xff]
    %v8951 = vld [vmem:[%s73 + $0x28] sm:$0xff]
    %v8952 = vld [vmem:[%s73 + $0x30] sm:$0xff]
    %v8953 = vld [vmem:[%s73 + $0x38] sm:$0xff]
    %v8954 = vld [vmem:[%s73 + $0x40] sm:$0xff]
    %v8955 = vld [vmem:[%s73 + $0x48] sm:$0xff]
    %v8956 = vld [vmem:[%s73 + $0x50] sm:$0xff]
    %v8957 = vld [vmem:[%s73 + $0x58] sm:$0xff]
    %v8958 = vld [vmem:[%s73 + $0x60] sm:$0xff]
    %v8959 = vld [vmem:[%s73 + $0x68] sm:$0xff]
    %v8960 = vld [vmem:[%s73 + $0x70] sm:$0xff]
    %v8961 = vld [vmem:[%s73 + $0x78] sm:$0xff]
    %v8962 = vld [vmem:[%s73 + $0x80] sm:$0xff]
    %v8963 = vld [vmem:[%s73 + $0x88] sm:$0xff]
    %v8964 = vld [vmem:[%s73 + $0x90] sm:$0xff]
    %v8965 = vld [vmem:[%s73 + $0x98] sm:$0xff]
    %v8966 = vld [vmem:[%s73 + $0xa0] sm:$0xff]
    %v8967 = vld [vmem:[%s73 + $0xa8] sm:$0xff]
    %v8968 = vld [vmem:[%s73 + $0xb0] sm:$0xff]
    %v8969 = vld [vmem:[%s73 + $0xb8] sm:$0xff]
    %v8970 = vld [vmem:[%s73 + $0xc0] sm:$0xff]
    %v8971 = vld [vmem:[%s73 + $0xc8] sm:$0xff]
    %v8972 = vld [vmem:[%s73 + $0xd0] sm:$0xff]
    %v8973 = vld [vmem:[%s73 + $0xd8] sm:$0xff]
    %v8974 = vld [vmem:[%s73 + $0xe0] sm:$0xff]
    %v8975 = vld [vmem:[%s73 + $0xe8] sm:$0xff]
    %v8976 = vld [vmem:[%s73 + $0xf0] sm:$0xff]
    %v8977 = vld [vmem:[%s73 + $0xf8] sm:$0xff]
    %8978 = vmatprep.subr.mxu0 0.0
    %8979 = vmatpush1.msra.mxu0 %v8977
    %8980 = vmatprep.subr.mxu0 0.0
    %8981 = vmatpush1.msra.mxu0 %v8976
    %8982 = vmatprep.subr.mxu0 0.0
    %8983 = vmatpush1.msra.mxu0 %v8975
    %8984 = vmatprep.subr.mxu0 0.0
    %8985 = vmatpush1.msra.mxu0 %v8974
    %8986 = vmatprep.subr.mxu0 0.0
    %8987 = vmatpush1.msra.mxu0 %v8973
    %8988 = vmatprep.subr.mxu0 0.0
    %8989 = vmatpush1.msra.mxu0 %v8972
    %8990 = vmatprep.subr.mxu0 0.0
    %8991 = vmatpush1.msra.mxu0 %v8971
    %8992 = vmatprep.subr.mxu0 0.0
    %8993 = vmatpush1.msra.mxu0 %v8970
    %8994 = vmatprep.subr.mxu0 0.0
    %8995 = vmatpush1.msra.mxu0 %v8969
    %8996 = vmatprep.subr.mxu0 0.0
    %8997 = vmatpush1.msra.mxu0 %v8968
    %8998 = vmatprep.subr.mxu0 0.0
    %8999 = vmatpush1.msra.mxu0 %v8967
    %9000 = vmatprep.subr.mxu0 0.0
    %9001 = vmatpush1.msra.mxu0 %v8966
    %9002 = vmatprep.subr.mxu0 0.0
    %9003 = vmatpush1.msra.mxu0 %v8965
    %9004 = vmatprep.subr.mxu0 0.0
    %9005 = vmatpush1.msra.mxu0 %v8964
    %9006 = vmatprep.subr.mxu0 0.0
    %9007 = vmatpush1.msra.mxu0 %v8963
    %9008 = vmatprep.subr.mxu0 0.0
    %9009 = vmatpush1.msra.mxu0 %v8962
    %9010 = vmatprep.subr.mxu0 0.0
    %9011 = vmatpush2.msra.mxu0 0.0
    %9012 = vmatprep.subr.mxu0 0.0
    %9013 = vmatpush2.msra.mxu0 0.0
    %9014 = vmatprep.subr.mxu0 0.0
    %9015 = vmatpush2.msra.mxu0 0.0
    %9016 = vmatprep.subr.mxu0 0.0
    %9017 = vmatpush2.msra.mxu0 0.0
    %9018 = vmatprep.subr.mxu0 0.0
    %9019 = vmatpush2.msra.mxu0 0.0
    %9020 = vmatprep.subr.mxu0 0.0
    %9021 = vmatpush2.msra.mxu0 0.0
    %9022 = vmatprep.subr.mxu0 0.0
    %9023 = vmatpush2.msra.mxu0 0.0
    %9024 = vmatprep.subr.mxu0 0.0
    %9025 = vmatpush2.msra.mxu0 0.0
    %9026 = vmatprep.subr.mxu0 0.0
    %9027 = vmatpush2.msra.mxu0 0.0
    %9028 = vmatprep.subr.mxu0 0.0
    %9029 = vmatpush2.msra.mxu0 0.0
    %9030 = vmatprep.subr.mxu0 0.0
    %9031 = vmatpush2.msra.mxu0 0.0
    %9032 = vmatprep.subr.mxu0 0.0
    %9033 = vmatpush2.msra.mxu0 0.0
    %9034 = vmatprep.subr.mxu0 0.0
    %9035 = vmatpush2.msra.mxu0 0.0
    %9036 = vmatprep.subr.mxu0 0.0
    %9037 = vmatpush2.msra.mxu0 0.0
    %9038 = vmatprep.subr.mxu0 0.0
    %9039 = vmatpush2.msra.mxu0 0.0
    %9040 = vmatprep.subr.mxu0 0.0
    %9041 = vmatpush2.msra.mxu0 0.0
    %9042 = vmatprep.mubr.f32.mxu0 0.0
    %9043 = vmatmul.mubr.f32.gmra.mxu0 %v8758
    %v9044 = vpop.f32.mrf.mxu0
    %v9045 = vadd.f32 0.0, %v9044
    %v9046 = vpop.f32.mrf.mxu0
    %9047 = vmatprep.mubr.f32.mxu0 0.0
    %9048 = vmatmul.mubr.f32.gmra.mxu0 %v8763
    %v9049 = vpop.f32.mrf.mxu0
    %v9050 = vadd.f32 0.0, %v9049
    %v9051 = vpop.f32.mrf.mxu0
    %9052 = vmatprep.mubr.f32.mxu0 0.0
    %9053 = vmatmul.mubr.f32.gmra.mxu0 %v8768
    %v9054 = vpop.f32.mrf.mxu0
    %v9055 = vadd.f32 0.0, %v9054
    %v9056 = vpop.f32.mrf.mxu0
    %9057 = vmatprep.mubr.f32.mxu0 0.0
    %9058 = vmatmul.mubr.f32.gmra.mxu0 %v8773
    %v9059 = vpop.f32.mrf.mxu0
    %v9060 = vadd.f32 0.0, %v9059
    %v9061 = vpop.f32.mrf.mxu0
    %9062 = vdwg.mxu0
    %9063 = vmatprep.subr.mxu0 0.0
    %9064 = vmatpush1.msra.mxu0 %v8961
    %9065 = vmatprep.subr.mxu0 0.0
    %9066 = vmatpush1.msra.mxu0 %v8960
    %9067 = vmatprep.subr.mxu0 0.0
    %9068 = vmatpush1.msra.mxu0 %v8959
    %9069 = vmatprep.subr.mxu0 0.0
    %9070 = vmatpush1.msra.mxu0 %v8958
    %9071 = vmatprep.subr.mxu0 0.0
    %9072 = vmatpush1.msra.mxu0 %v8957
    %9073 = vmatprep.subr.mxu0 0.0
    %9074 = vmatpush1.msra.mxu0 %v8956
    %9075 = vmatprep.subr.mxu0 0.0
    %9076 = vmatpush1.msra.mxu0 %v8955
    %9077 = vmatprep.subr.mxu0 0.0
    %9078 = vmatpush1.msra.mxu0 %v8954
    %9079 = vmatprep.subr.mxu0 0.0
    %9080 = vmatpush1.msra.mxu0 %v8953
    %9081 = vmatprep.subr.mxu0 0.0
    %9082 = vmatpush1.msra.mxu0 %v8952
    %9083 = vmatprep.subr.mxu0 0.0
    %9084 = vmatpush1.msra.mxu0 %v8951
    %9085 = vmatprep.subr.mxu0 0.0
    %9086 = vmatpush1.msra.mxu0 %v8950
    %9087 = vmatprep.subr.mxu0 0.0
    %9088 = vmatpush1.msra.mxu0 %v8949
    %9089 = vmatprep.subr.mxu0 0.0
    %9090 = vmatpush1.msra.mxu0 %v8948
    %9091 = vmatprep.subr.mxu0 0.0
    %9092 = vmatpush1.msra.mxu0 %v8947
    %9093 = vmatprep.subr.mxu0 0.0
    %9094 = vmatpush1.msra.mxu0 %v8946
    %9095 = vmatprep.subr.mxu0 0.0
    %9096 = vmatpush2.msra.mxu0 0.0
    %9097 = vmatprep.subr.mxu0 0.0
    %9098 = vmatpush2.msra.mxu0 0.0
    %9099 = vmatprep.subr.mxu0 0.0
    %9100 = vmatpush2.msra.mxu0 0.0
    %9101 = vmatprep.subr.mxu0 0.0
    %9102 = vmatpush2.msra.mxu0 0.0
    %9103 = vmatprep.subr.mxu0 0.0
    %9104 = vmatpush2.msra.mxu0 0.0
    %9105 = vmatprep.subr.mxu0 0.0
    %9106 = vmatpush2.msra.mxu0 0.0
    %9107 = vmatprep.subr.mxu0 0.0
    %9108 = vmatpush2.msra.mxu0 0.0
    %9109 = vmatprep.subr.mxu0 0.0
    %9110 = vmatpush2.msra.mxu0 0.0
    %9111 = vmatprep.subr.mxu0 0.0
    %9112 = vmatpush2.msra.mxu0 0.0
    %9113 = vmatprep.subr.mxu0 0.0
    %9114 = vmatpush2.msra.mxu0 0.0
    %9115 = vmatprep.subr.mxu0 0.0
    %9116 = vmatpush2.msra.mxu0 0.0
    %9117 = vmatprep.subr.mxu0 0.0
    %9118 = vmatpush2.msra.mxu0 0.0
    %9119 = vmatprep.subr.mxu0 0.0
    %9120 = vmatpush2.msra.mxu0 0.0
    %9121 = vmatprep.subr.mxu0 0.0
    %9122 = vmatpush2.msra.mxu0 0.0
    %9123 = vmatprep.subr.mxu0 0.0
    %9124 = vmatpush2.msra.mxu0 0.0
    %9125 = vmatprep.subr.mxu0 0.0
    %9126 = vmatpush2.msra.mxu0 0.0
    %9127 = vmatprep.mubr.f32.mxu0 0.0
    %9128 = vmatmul.mubr.f32.gmra.mxu0 %v8843
    %v9129 = vpop.f32.mrf.mxu0
    %v9130 = vadd.f32 %v9045, %v9129
    %v9131 = vpop.f32.mrf.mxu0
    %9132 = vmatprep.mubr.f32.mxu0 0.0
    %9133 = vmatmul.mubr.f32.gmra.mxu0 %v8848
    %v9134 = vpop.f32.mrf.mxu0
    %v9135 = vadd.f32 %v9050, %v9134
    %v9136 = vpop.f32.mrf.mxu0
    %9137 = vmatprep.mubr.f32.mxu0 0.0
    %9138 = vmatmul.mubr.f32.gmra.mxu0 %v8853
    %v9139 = vpop.f32.mrf.mxu0
    %v9140 = vadd.f32 %v9055, %v9139
    %v9141 = vpop.f32.mrf.mxu0
    %9142 = vmatprep.mubr.f32.mxu0 0.0
    %9143 = vmatmul.mubr.f32.gmra.mxu0 %v8858
    %v9144 = vpop.f32.mrf.mxu0
    %v9145 = vadd.f32 %v9060, %v9144
    %v9146 = vpop.f32.mrf.mxu0
    %9147 = vdwg.mxu0
    %v9148 = vld [vmem:[%s73 + $0x100] sm:$0xff]
    %v9149 = vld [vmem:[%s73 + $0x108] sm:$0xff]
    %v9150 = vld [vmem:[%s73 + $0x110] sm:$0xff]
    %v9151 = vld [vmem:[%s73 + $0x118] sm:$0xff]
    %v9152 = vld [vmem:[%s73 + $0x120] sm:$0xff]
    %v9153 = vld [vmem:[%s73 + $0x128] sm:$0xff]
    %v9154 = vld [vmem:[%s73 + $0x130] sm:$0xff]
    %v9155 = vld [vmem:[%s73 + $0x138] sm:$0xff]
    %v9156 = vld [vmem:[%s73 + $0x140] sm:$0xff]
    %v9157 = vld [vmem:[%s73 + $0x148] sm:$0xff]
    %v9158 = vld [vmem:[%s73 + $0x150] sm:$0xff]
    %v9159 = vld [vmem:[%s73 + $0x158] sm:$0xff]
    %v9160 = vld [vmem:[%s73 + $0x160] sm:$0xff]
    %v9161 = vld [vmem:[%s73 + $0x168] sm:$0xff]
    %v9162 = vld [vmem:[%s73 + $0x170] sm:$0xff]
    %v9163 = vld [vmem:[%s73 + $0x178] sm:$0xff]
    %9164 = vmatprep.subr.mxu0 0.0
    %9165 = vmatpush1.msra.mxu0 %v9163
    %9166 = vmatprep.subr.mxu0 0.0
    %9167 = vmatpush1.msra.mxu0 %v9162
    %9168 = vmatprep.subr.mxu0 0.0
    %9169 = vmatpush1.msra.mxu0 %v9161
    %9170 = vmatprep.subr.mxu0 0.0
    %9171 = vmatpush1.msra.mxu0 %v9160
    %9172 = vmatprep.subr.mxu0 0.0
    %9173 = vmatpush1.msra.mxu0 %v9159
    %9174 = vmatprep.subr.mxu0 0.0
    %9175 = vmatpush1.msra.mxu0 %v9158
    %9176 = vmatprep.subr.mxu0 0.0
    %9177 = vmatpush1.msra.mxu0 %v9157
    %9178 = vmatprep.subr.mxu0 0.0
    %9179 = vmatpush1.msra.mxu0 %v9156
    %9180 = vmatprep.subr.mxu0 0.0
    %9181 = vmatpush1.msra.mxu0 %v9155
    %9182 = vmatprep.subr.mxu0 0.0
    %9183 = vmatpush1.msra.mxu0 %v9154
    %9184 = vmatprep.subr.mxu0 0.0
    %9185 = vmatpush1.msra.mxu0 %v9153
    %9186 = vmatprep.subr.mxu0 0.0
    %9187 = vmatpush1.msra.mxu0 %v9152
    %9188 = vmatprep.subr.mxu0 0.0
    %9189 = vmatpush1.msra.mxu0 %v9151
    %9190 = vmatprep.subr.mxu0 0.0
    %9191 = vmatpush1.msra.mxu0 %v9150
    %9192 = vmatprep.subr.mxu0 0.0
    %9193 = vmatpush1.msra.mxu0 %v9149
    %9194 = vmatprep.subr.mxu0 0.0
    %9195 = vmatpush1.msra.mxu0 %v9148
    %9196 = vmatprep.subr.mxu0 0.0
    %9197 = vmatpush2.msra.mxu0 0.0
    %9198 = vmatprep.subr.mxu0 0.0
    %9199 = vmatpush2.msra.mxu0 0.0
    %9200 = vmatprep.subr.mxu0 0.0
    %9201 = vmatpush2.msra.mxu0 0.0
    %9202 = vmatprep.subr.mxu0 0.0
    %9203 = vmatpush2.msra.mxu0 0.0
    %9204 = vmatprep.subr.mxu0 0.0
    %9205 = vmatpush2.msra.mxu0 0.0
    %9206 = vmatprep.subr.mxu0 0.0
    %9207 = vmatpush2.msra.mxu0 0.0
    %9208 = vmatprep.subr.mxu0 0.0
    %9209 = vmatpush2.msra.mxu0 0.0
    %9210 = vmatprep.subr.mxu0 0.0
    %9211 = vmatpush2.msra.mxu0 0.0
    %9212 = vmatprep.subr.mxu0 0.0
    %9213 = vmatpush2.msra.mxu0 0.0
    %9214 = vmatprep.subr.mxu0 0.0
    %9215 = vmatpush2.msra.mxu0 0.0
    %9216 = vmatprep.subr.mxu0 0.0
    %9217 = vmatpush2.msra.mxu0 0.0
    %9218 = vmatprep.subr.mxu0 0.0
    %9219 = vmatpush2.msra.mxu0 0.0
    %9220 = vmatprep.subr.mxu0 0.0
    %9221 = vmatpush2.msra.mxu0 0.0
    %9222 = vmatprep.subr.mxu0 0.0
    %9223 = vmatpush2.msra.mxu0 0.0
    %9224 = vmatprep.subr.mxu0 0.0
    %9225 = vmatpush2.msra.mxu0 0.0
    %9226 = vmatprep.subr.mxu0 0.0
    %9227 = vmatpush2.msra.mxu0 0.0
    %9228 = vmatprep.mubr.f32.mxu0 0.0
    %9229 = vmatmul.mubr.f32.gmra.mxu0 %v8928
    %v9230 = vpop.f32.mrf.mxu0
    %v9231 = vadd.f32 0.0, %v9230
    %v9232 = vpop.f32.mrf.mxu0
    %9233 = vmatprep.mubr.f32.mxu0 0.0
    %9234 = vmatmul.mubr.f32.gmra.mxu0 %v8933
    %v9235 = vpop.f32.mrf.mxu0
    %v9236 = vadd.f32 0.0, %v9235
    %v9237 = vpop.f32.mrf.mxu0
    %9238 = vmatprep.mubr.f32.mxu0 0.0
    %9239 = vmatmul.mubr.f32.gmra.mxu0 %v8938
    %v9240 = vpop.f32.mrf.mxu0
    %v9241 = vadd.f32 0.0, %v9240
    %v9242 = vpop.f32.mrf.mxu0
    %9243 = vmatprep.mubr.f32.mxu0 0.0
    %9244 = vmatmul.mubr.f32.gmra.mxu0 %v8943
    %v9245 = vpop.f32.mrf.mxu0
    %v9246 = vadd.f32 0.0, %v9245
    %v9247 = vpop.f32.mrf.mxu0
    %9248 = vdwg.mxu0
    %v9249 = vadd.f32 %v9130, %v9231
    %v9250 = vadd.f32 %v9135, %v9236
    %v9251 = vadd.f32 %v9140, %v9241
    %v9252 = vadd.f32 %v9145, %v9246
    %v9253 = vld [vmem:[#allocation11] sm:$0x1]
    %v9255 = vlaneseq
    %v9256 = vshrl.u32 %v9255, 7
    %v9257 = vsub.s32 0, %v9256
    %v9258 = vrot.slane %v9253, %v9257
    %v9260 = vadd.f32 %v9249, %v9258
    %v9261 = vadd.f32 %v9250, %v9258
    %v9262 = vadd.f32 %v9251, %v9258
    %v9263 = vadd.f32 %v9252, %v9258
    %9264 = vmatprep.subr.mxu0 0.0
    %9265 = vmatpush1.msra.mxu0 0.0
    %9266 = vmatprep.subr.mxu0 0.0
    %9267 = vmatpush1.msra.mxu0 0.0
    %9268 = vmatprep.subr.mxu0 0.0
    %9269 = vmatpush1.msra.mxu0 0.0
    %9270 = vmatprep.subr.mxu0 0.0
    %9271 = vmatpush1.msra.mxu0 0.0
    %9272 = vmatprep.subr.mxu0 0.0
    %9273 = vmatpush1.msra.mxu0 0.0
    %9274 = vmatprep.subr.mxu0 0.0
    %9275 = vmatpush1.msra.mxu0 0.0
    %9276 = vmatprep.subr.mxu0 0.0
    %9277 = vmatpush1.msra.mxu0 0.0
    %9278 = vmatprep.subr.mxu0 0.0
    %9279 = vmatpush1.msra.mxu0 0.0
    %9280 = vmatprep.subr.mxu0 0.0
    %9281 = vmatpush1.msra.mxu0 0.0
    %9282 = vmatprep.subr.mxu0 0.0
    %9283 = vmatpush1.msra.mxu0 0.0
    %9284 = vmatprep.subr.mxu0 0.0
    %9285 = vmatpush1.msra.mxu0 0.0
    %9286 = vmatprep.subr.mxu0 0.0
    %9287 = vmatpush1.msra.mxu0 0.0
    %9288 = vmatprep.subr.mxu0 0.0
    %9289 = vmatpush1.msra.mxu0 %v9263
    %9290 = vmatprep.subr.mxu0 0.0
    %9291 = vmatpush1.msra.mxu0 %v9262
    %9292 = vmatprep.subr.mxu0 0.0
    %9293 = vmatpush1.msra.mxu0 %v9261
    %9294 = vmatprep.subr.mxu0 0.0
    %9295 = vmatpush1.msra.mxu0 %v9260
    %9296 = vmatprep.subr.mxu0 0.0
    %9297 = vmatpush2.msra.mxu0 0.0
    %9298 = vmatprep.subr.mxu0 0.0
    %9299 = vmatpush2.msra.mxu0 0.0
    %9300 = vmatprep.subr.mxu0 0.0
    %9301 = vmatpush2.msra.mxu0 0.0
    %9302 = vmatprep.subr.mxu0 0.0
    %9303 = vmatpush2.msra.mxu0 0.0
    %9304 = vmatprep.subr.mxu0 0.0
    %9305 = vmatpush2.msra.mxu0 0.0
    %9306 = vmatprep.subr.mxu0 0.0
    %9307 = vmatpush2.msra.mxu0 0.0
    %9308 = vmatprep.subr.mxu0 0.0
    %9309 = vmatpush2.msra.mxu0 0.0
    %9310 = vmatprep.subr.mxu0 0.0
    %9311 = vmatpush2.msra.mxu0 0.0
    %9312 = vmatprep.subr.mxu0 0.0
    %9313 = vmatpush2.msra.mxu0 0.0
    %9314 = vmatprep.subr.mxu0 0.0
    %9315 = vmatpush2.msra.mxu0 0.0
    %9316 = vmatprep.subr.mxu0 0.0
    %9317 = vmatpush2.msra.mxu0 0.0
    %9318 = vmatprep.subr.mxu0 0.0
    %9319 = vmatpush2.msra.mxu0 0.0
    %9320 = vmatprep.subr.mxu0 0.0
    %9321 = vmatpush2.msra.mxu0 0.0
    %9322 = vmatprep.subr.mxu0 0.0
    %9323 = vmatpush2.msra.mxu0 0.0
    %9324 = vmatprep.subr.mxu0 0.0
    %9325 = vmatpush2.msra.mxu0 0.0
    %9326 = vmatprep.subr.mxu0 0.0
    %9327 = vmatpush2.msra.mxu0 0.0
    %9328 = vmatprep.mubr.f32.mxu0 0.0
    %9329 = vmatmul.mubr.f32.gmra.mxu0 %v447
    %v9330 = vpop.f32.mrf.mxu0
    %v9331 = vadd.f32 0.0, %v9330
    %v9332 = vpop.f32.mrf.mxu0
    %9333 = vmatprep.mubr.f32.mxu0 0.0
    %9334 = vmatmul.mubr.f32.gmra.mxu0 %v450
    %v9335 = vpop.f32.mrf.mxu0
    %v9336 = vadd.f32 0.0, %v9335
    %v9337 = vpop.f32.mrf.mxu0
    %9338 = vmatprep.mubr.f32.mxu0 0.0
    %9339 = vmatmul.mubr.f32.gmra.mxu0 %v453
    %v9340 = vpop.f32.mrf.mxu0
    %v9341 = vadd.f32 0.0, %v9340
    %v9342 = vpop.f32.mrf.mxu0
    %9343 = vmatprep.mubr.f32.mxu0 0.0
    %9344 = vmatmul.mubr.f32.gmra.mxu0 %v456
    %v9345 = vpop.f32.mrf.mxu0
    %v9346 = vadd.f32 0.0, %v9345
    %v9347 = vpop.f32.mrf.mxu0
    %9348 = vdwg.mxu0
    %9349 = vmatprep.subr.mxu0 0.0
    %9350 = vmatpush1.msra.mxu0 0.0
    %9351 = vmatprep.subr.mxu0 0.0
    %9352 = vmatpush1.msra.mxu0 0.0
    %9353 = vmatprep.subr.mxu0 0.0
    %9354 = vmatpush1.msra.mxu0 0.0
    %9355 = vmatprep.subr.mxu0 0.0
    %9356 = vmatpush1.msra.mxu0 0.0
    %9357 = vmatprep.subr.mxu0 0.0
    %9358 = vmatpush1.msra.mxu0 0.0
    %9359 = vmatprep.subr.mxu0 0.0
    %9360 = vmatpush1.msra.mxu0 0.0
    %9361 = vmatprep.subr.mxu0 0.0
    %9362 = vmatpush1.msra.mxu0 0.0
    %9363 = vmatprep.subr.mxu0 0.0
    %9364 = vmatpush1.msra.mxu0 0.0
    %9365 = vmatprep.subr.mxu0 0.0
    %9366 = vmatpush1.msra.mxu0 0.0
    %9367 = vmatprep.subr.mxu0 0.0
    %9368 = vmatpush1.msra.mxu0 0.0
    %9369 = vmatprep.subr.mxu0 0.0
    %9370 = vmatpush1.msra.mxu0 0.0
    %9371 = vmatprep.subr.mxu0 0.0
    %9372 = vmatpush1.msra.mxu0 0.0
    %9373 = vmatprep.subr.mxu0 0.0
    %9374 = vmatpush1.msra.mxu0 %v9263
    %9375 = vmatprep.subr.mxu0 0.0
    %9376 = vmatpush1.msra.mxu0 %v9262
    %9377 = vmatprep.subr.mxu0 0.0
    %9378 = vmatpush1.msra.mxu0 %v9261
    %9379 = vmatprep.subr.mxu0 0.0
    %9380 = vmatpush1.msra.mxu0 %v9260
    %9381 = vmatprep.subr.mxu0 0.0
    %9382 = vmatpush2.msra.mxu0 0.0
    %9383 = vmatprep.subr.mxu0 0.0
    %9384 = vmatpush2.msra.mxu0 0.0
    %9385 = vmatprep.subr.mxu0 0.0
    %9386 = vmatpush2.msra.mxu0 0.0
    %9387 = vmatprep.subr.mxu0 0.0
    %9388 = vmatpush2.msra.mxu0 0.0
    %9389 = vmatprep.subr.mxu0 0.0
    %9390 = vmatpush2.msra.mxu0 0.0
    %9391 = vmatprep.subr.mxu0 0.0
    %9392 = vmatpush2.msra.mxu0 0.0
    %9393 = vmatprep.subr.mxu0 0.0
    %9394 = vmatpush2.msra.mxu0 0.0
    %9395 = vmatprep.subr.mxu0 0.0
    %9396 = vmatpush2.msra.mxu0 0.0
    %9397 = vmatprep.subr.mxu0 0.0
    %9398 = vmatpush2.msra.mxu0 0.0
    %9399 = vmatprep.subr.mxu0 0.0
    %9400 = vmatpush2.msra.mxu0 0.0
    %9401 = vmatprep.subr.mxu0 0.0
    %9402 = vmatpush2.msra.mxu0 0.0
    %9403 = vmatprep.subr.mxu0 0.0
    %9404 = vmatpush2.msra.mxu0 0.0
    %9405 = vmatprep.subr.mxu0 0.0
    %9406 = vmatpush2.msra.mxu0 0.0
    %9407 = vmatprep.subr.mxu0 0.0
    %9408 = vmatpush2.msra.mxu0 0.0
    %9409 = vmatprep.subr.mxu0 0.0
    %9410 = vmatpush2.msra.mxu0 0.0
    %9411 = vmatprep.subr.mxu0 0.0
    %9412 = vmatpush2.msra.mxu0 0.0
    %9413 = vmatprep.mubr.f32.mxu0 0.0
    %9414 = vmatmul.mubr.f32.gmra.mxu0 %v548
    %v9415 = vpop.f32.mrf.mxu0
    %v9416 = vadd.f32 0.0, %v9415
    %v9417 = vpop.f32.mrf.mxu0
    %9418 = vmatprep.mubr.f32.mxu0 0.0
    %9419 = vmatmul.mubr.f32.gmra.mxu0 %v551
    %v9420 = vpop.f32.mrf.mxu0
    %v9421 = vadd.f32 0.0, %v9420
    %v9422 = vpop.f32.mrf.mxu0
    %9423 = vmatprep.mubr.f32.mxu0 0.0
    %9424 = vmatmul.mubr.f32.gmra.mxu0 %v554
    %v9425 = vpop.f32.mrf.mxu0
    %v9426 = vadd.f32 0.0, %v9425
    %v9427 = vpop.f32.mrf.mxu0
    %9428 = vmatprep.mubr.f32.mxu0 0.0
    %9429 = vmatmul.mubr.f32.gmra.mxu0 %v557
    %v9430 = vpop.f32.mrf.mxu0
    %v9431 = vadd.f32 0.0, %v9430
    %v9432 = vpop.f32.mrf.mxu0
    %9433 = vdwg.mxu0
    %v9434 = vld [vmem:[%s77] sm:$0xff]
    %v9435 = vld [vmem:[%s77 + $0x8] sm:$0xff]
    %v9436 = vld [vmem:[%s77 + $0x10] sm:$0xff]
    %v9437 = vld [vmem:[%s77 + $0x18] sm:$0xff]
    %v9438 = vld [vmem:[%s77 + $0x20] sm:$0xff]
    %v9439 = vld [vmem:[%s77 + $0x28] sm:$0xff]
    %v9440 = vld [vmem:[%s77 + $0x30] sm:$0xff]
    %v9441 = vld [vmem:[%s77 + $0x38] sm:$0xff]
    %v9442 = vld [vmem:[%s77 + $0x40] sm:$0xff]
    %v9443 = vld [vmem:[%s77 + $0x48] sm:$0xff]
    %v9444 = vld [vmem:[%s77 + $0x50] sm:$0xff]
    %v9445 = vld [vmem:[%s77 + $0x58] sm:$0xff]
    %v9446 = vld [vmem:[%s77 + $0x60] sm:$0xff]
    %v9447 = vld [vmem:[%s77 + $0x68] sm:$0xff]
    %v9448 = vld [vmem:[%s77 + $0x70] sm:$0xff]
    %v9449 = vld [vmem:[%s77 + $0x78] sm:$0xff]
    %v9450 = vld [vmem:[%s77 + $0x80] sm:$0xff]
    %v9451 = vld [vmem:[%s77 + $0x88] sm:$0xff]
    %v9452 = vld [vmem:[%s77 + $0x90] sm:$0xff]
    %v9453 = vld [vmem:[%s77 + $0x98] sm:$0xff]
    %v9454 = vld [vmem:[%s77 + $0xa0] sm:$0xff]
    %v9455 = vld [vmem:[%s77 + $0xa8] sm:$0xff]
    %v9456 = vld [vmem:[%s77 + $0xb0] sm:$0xff]
    %v9457 = vld [vmem:[%s77 + $0xb8] sm:$0xff]
    %v9458 = vld [vmem:[%s77 + $0xc0] sm:$0xff]
    %v9459 = vld [vmem:[%s77 + $0xc8] sm:$0xff]
    %v9460 = vld [vmem:[%s77 + $0xd0] sm:$0xff]
    %v9461 = vld [vmem:[%s77 + $0xd8] sm:$0xff]
    %v9462 = vld [vmem:[%s77 + $0xe0] sm:$0xff]
    %v9463 = vld [vmem:[%s77 + $0xe8] sm:$0xff]
    %v9464 = vld [vmem:[%s77 + $0xf0] sm:$0xff]
    %v9465 = vld [vmem:[%s77 + $0xf8] sm:$0xff]
    %9466 = vmatprep.subr.mxu0 0.0
    %9467 = vmatpush1.msra.mxu0 %v9465
    %9468 = vmatprep.subr.mxu0 0.0
    %9469 = vmatpush1.msra.mxu0 %v9464
    %9470 = vmatprep.subr.mxu0 0.0
    %9471 = vmatpush1.msra.mxu0 %v9463
    %9472 = vmatprep.subr.mxu0 0.0
    %9473 = vmatpush1.msra.mxu0 %v9462
    %9474 = vmatprep.subr.mxu0 0.0
    %9475 = vmatpush1.msra.mxu0 %v9461
    %9476 = vmatprep.subr.mxu0 0.0
    %9477 = vmatpush1.msra.mxu0 %v9460
    %9478 = vmatprep.subr.mxu0 0.0
    %9479 = vmatpush1.msra.mxu0 %v9459
    %9480 = vmatprep.subr.mxu0 0.0
    %9481 = vmatpush1.msra.mxu0 %v9458
    %9482 = vmatprep.subr.mxu0 0.0
    %9483 = vmatpush1.msra.mxu0 %v9457
    %9484 = vmatprep.subr.mxu0 0.0
    %9485 = vmatpush1.msra.mxu0 %v9456
    %9486 = vmatprep.subr.mxu0 0.0
    %9487 = vmatpush1.msra.mxu0 %v9455
    %9488 = vmatprep.subr.mxu0 0.0
    %9489 = vmatpush1.msra.mxu0 %v9454
    %9490 = vmatprep.subr.mxu0 0.0
    %9491 = vmatpush1.msra.mxu0 %v9453
    %9492 = vmatprep.subr.mxu0 0.0
    %9493 = vmatpush1.msra.mxu0 %v9452
    %9494 = vmatprep.subr.mxu0 0.0
    %9495 = vmatpush1.msra.mxu0 %v9451
    %9496 = vmatprep.subr.mxu0 0.0
    %9497 = vmatpush1.msra.mxu0 %v9450
    %9498 = vmatprep.subr.mxu0 0.0
    %9499 = vmatpush2.msra.mxu0 0.0
    %9500 = vmatprep.subr.mxu0 0.0
    %9501 = vmatpush2.msra.mxu0 0.0
    %9502 = vmatprep.subr.mxu0 0.0
    %9503 = vmatpush2.msra.mxu0 0.0
    %9504 = vmatprep.subr.mxu0 0.0
    %9505 = vmatpush2.msra.mxu0 0.0
    %9506 = vmatprep.subr.mxu0 0.0
    %9507 = vmatpush2.msra.mxu0 0.0
    %9508 = vmatprep.subr.mxu0 0.0
    %9509 = vmatpush2.msra.mxu0 0.0
    %9510 = vmatprep.subr.mxu0 0.0
    %9511 = vmatpush2.msra.mxu0 0.0
    %9512 = vmatprep.subr.mxu0 0.0
    %9513 = vmatpush2.msra.mxu0 0.0
    %9514 = vmatprep.subr.mxu0 0.0
    %9515 = vmatpush2.msra.mxu0 0.0
    %9516 = vmatprep.subr.mxu0 0.0
    %9517 = vmatpush2.msra.mxu0 0.0
    %9518 = vmatprep.subr.mxu0 0.0
    %9519 = vmatpush2.msra.mxu0 0.0
    %9520 = vmatprep.subr.mxu0 0.0
    %9521 = vmatpush2.msra.mxu0 0.0
    %9522 = vmatprep.subr.mxu0 0.0
    %9523 = vmatpush2.msra.mxu0 0.0
    %9524 = vmatprep.subr.mxu0 0.0
    %9525 = vmatpush2.msra.mxu0 0.0
    %9526 = vmatprep.subr.mxu0 0.0
    %9527 = vmatpush2.msra.mxu0 0.0
    %9528 = vmatprep.subr.mxu0 0.0
    %9529 = vmatpush2.msra.mxu0 0.0
    %9530 = vmatprep.mubr.f32.mxu0 0.0
    %9531 = vmatmul.mubr.f32.gmra.mxu0 %v9260
    %v9532 = vpop.f32.mrf.mxu0
    %v9533 = vadd.f32 0.0, %v9532
    %v9534 = vpop.f32.mrf.mxu0
    %9535 = vmatprep.mubr.f32.mxu0 0.0
    %9536 = vmatmul.mubr.f32.gmra.mxu0 %v9261
    %v9537 = vpop.f32.mrf.mxu0
    %v9538 = vadd.f32 0.0, %v9537
    %v9539 = vpop.f32.mrf.mxu0
    %9540 = vmatprep.mubr.f32.mxu0 0.0
    %9541 = vmatmul.mubr.f32.gmra.mxu0 %v9262
    %v9542 = vpop.f32.mrf.mxu0
    %v9543 = vadd.f32 0.0, %v9542
    %v9544 = vpop.f32.mrf.mxu0
    %9545 = vmatprep.mubr.f32.mxu0 0.0
    %9546 = vmatmul.mubr.f32.gmra.mxu0 %v9263
    %v9547 = vpop.f32.mrf.mxu0
    %v9548 = vadd.f32 0.0, %v9547
    %v9549 = vpop.f32.mrf.mxu0
    %9550 = vdwg.mxu0
    %9551 = vmatprep.subr.mxu0 0.0
    %9552 = vmatpush1.msra.mxu0 %v9449
    %9553 = vmatprep.subr.mxu0 0.0
    %9554 = vmatpush1.msra.mxu0 %v9448
    %9555 = vmatprep.subr.mxu0 0.0
    %9556 = vmatpush1.msra.mxu0 %v9447
    %9557 = vmatprep.subr.mxu0 0.0
    %9558 = vmatpush1.msra.mxu0 %v9446
    %9559 = vmatprep.subr.mxu0 0.0
    %9560 = vmatpush1.msra.mxu0 %v9445
    %9561 = vmatprep.subr.mxu0 0.0
    %9562 = vmatpush1.msra.mxu0 %v9444
    %9563 = vmatprep.subr.mxu0 0.0
    %9564 = vmatpush1.msra.mxu0 %v9443
    %9565 = vmatprep.subr.mxu0 0.0
    %9566 = vmatpush1.msra.mxu0 %v9442
    %9567 = vmatprep.subr.mxu0 0.0
    %9568 = vmatpush1.msra.mxu0 %v9441
    %9569 = vmatprep.subr.mxu0 0.0
    %9570 = vmatpush1.msra.mxu0 %v9440
    %9571 = vmatprep.subr.mxu0 0.0
    %9572 = vmatpush1.msra.mxu0 %v9439
    %9573 = vmatprep.subr.mxu0 0.0
    %9574 = vmatpush1.msra.mxu0 %v9438
    %9575 = vmatprep.subr.mxu0 0.0
    %9576 = vmatpush1.msra.mxu0 %v9437
    %9577 = vmatprep.subr.mxu0 0.0
    %9578 = vmatpush1.msra.mxu0 %v9436
    %9579 = vmatprep.subr.mxu0 0.0
    %9580 = vmatpush1.msra.mxu0 %v9435
    %9581 = vmatprep.subr.mxu0 0.0
    %9582 = vmatpush1.msra.mxu0 %v9434
    %9583 = vmatprep.subr.mxu0 0.0
    %9584 = vmatpush2.msra.mxu0 0.0
    %9585 = vmatprep.subr.mxu0 0.0
    %9586 = vmatpush2.msra.mxu0 0.0
    %9587 = vmatprep.subr.mxu0 0.0
    %9588 = vmatpush2.msra.mxu0 0.0
    %9589 = vmatprep.subr.mxu0 0.0
    %9590 = vmatpush2.msra.mxu0 0.0
    %9591 = vmatprep.subr.mxu0 0.0
    %9592 = vmatpush2.msra.mxu0 0.0
    %9593 = vmatprep.subr.mxu0 0.0
    %9594 = vmatpush2.msra.mxu0 0.0
    %9595 = vmatprep.subr.mxu0 0.0
    %9596 = vmatpush2.msra.mxu0 0.0
    %9597 = vmatprep.subr.mxu0 0.0
    %9598 = vmatpush2.msra.mxu0 0.0
    %9599 = vmatprep.subr.mxu0 0.0
    %9600 = vmatpush2.msra.mxu0 0.0
    %9601 = vmatprep.subr.mxu0 0.0
    %9602 = vmatpush2.msra.mxu0 0.0
    %9603 = vmatprep.subr.mxu0 0.0
    %9604 = vmatpush2.msra.mxu0 0.0
    %9605 = vmatprep.subr.mxu0 0.0
    %9606 = vmatpush2.msra.mxu0 0.0
    %9607 = vmatprep.subr.mxu0 0.0
    %9608 = vmatpush2.msra.mxu0 0.0
    %9609 = vmatprep.subr.mxu0 0.0
    %9610 = vmatpush2.msra.mxu0 0.0
    %9611 = vmatprep.subr.mxu0 0.0
    %9612 = vmatpush2.msra.mxu0 0.0
    %9613 = vmatprep.subr.mxu0 0.0
    %9614 = vmatpush2.msra.mxu0 0.0
    %9615 = vmatprep.mubr.f32.mxu0 0.0
    %9616 = vmatmul.mubr.f32.gmra.mxu0 %v9331
    %v9617 = vpop.f32.mrf.mxu0
    %v9618 = vadd.f32 %v9533, %v9617
    %v9619 = vpop.f32.mrf.mxu0
    %9620 = vmatprep.mubr.f32.mxu0 0.0
    %9621 = vmatmul.mubr.f32.gmra.mxu0 %v9336
    %v9622 = vpop.f32.mrf.mxu0
    %v9623 = vadd.f32 %v9538, %v9622
    %v9624 = vpop.f32.mrf.mxu0
    %9625 = vmatprep.mubr.f32.mxu0 0.0
    %9626 = vmatmul.mubr.f32.gmra.mxu0 %v9341
    %v9627 = vpop.f32.mrf.mxu0
    %v9628 = vadd.f32 %v9543, %v9627
    %v9629 = vpop.f32.mrf.mxu0
    %9630 = vmatprep.mubr.f32.mxu0 0.0
    %9631 = vmatmul.mubr.f32.gmra.mxu0 %v9346
    %v9632 = vpop.f32.mrf.mxu0
    %v9633 = vadd.f32 %v9548, %v9632
    %v9634 = vpop.f32.mrf.mxu0
    %9635 = vdwg.mxu0
    %v9636 = vld [vmem:[%s77 + $0x100] sm:$0xff]
    %v9637 = vld [vmem:[%s77 + $0x108] sm:$0xff]
    %v9638 = vld [vmem:[%s77 + $0x110] sm:$0xff]
    %v9639 = vld [vmem:[%s77 + $0x118] sm:$0xff]
    %v9640 = vld [vmem:[%s77 + $0x120] sm:$0xff]
    %v9641 = vld [vmem:[%s77 + $0x128] sm:$0xff]
    %v9642 = vld [vmem:[%s77 + $0x130] sm:$0xff]
    %v9643 = vld [vmem:[%s77 + $0x138] sm:$0xff]
    %v9644 = vld [vmem:[%s77 + $0x140] sm:$0xff]
    %v9645 = vld [vmem:[%s77 + $0x148] sm:$0xff]
    %v9646 = vld [vmem:[%s77 + $0x150] sm:$0xff]
    %v9647 = vld [vmem:[%s77 + $0x158] sm:$0xff]
    %v9648 = vld [vmem:[%s77 + $0x160] sm:$0xff]
    %v9649 = vld [vmem:[%s77 + $0x168] sm:$0xff]
    %v9650 = vld [vmem:[%s77 + $0x170] sm:$0xff]
    %v9651 = vld [vmem:[%s77 + $0x178] sm:$0xff]
    %9652 = vmatprep.subr.mxu0 0.0
    %9653 = vmatpush1.msra.mxu0 %v9651
    %9654 = vmatprep.subr.mxu0 0.0
    %9655 = vmatpush1.msra.mxu0 %v9650
    %9656 = vmatprep.subr.mxu0 0.0
    %9657 = vmatpush1.msra.mxu0 %v9649
    %9658 = vmatprep.subr.mxu0 0.0
    %9659 = vmatpush1.msra.mxu0 %v9648
    %9660 = vmatprep.subr.mxu0 0.0
    %9661 = vmatpush1.msra.mxu0 %v9647
    %9662 = vmatprep.subr.mxu0 0.0
    %9663 = vmatpush1.msra.mxu0 %v9646
    %9664 = vmatprep.subr.mxu0 0.0
    %9665 = vmatpush1.msra.mxu0 %v9645
    %9666 = vmatprep.subr.mxu0 0.0
    %9667 = vmatpush1.msra.mxu0 %v9644
    %9668 = vmatprep.subr.mxu0 0.0
    %9669 = vmatpush1.msra.mxu0 %v9643
    %9670 = vmatprep.subr.mxu0 0.0
    %9671 = vmatpush1.msra.mxu0 %v9642
    %9672 = vmatprep.subr.mxu0 0.0
    %9673 = vmatpush1.msra.mxu0 %v9641
    %9674 = vmatprep.subr.mxu0 0.0
    %9675 = vmatpush1.msra.mxu0 %v9640
    %9676 = vmatprep.subr.mxu0 0.0
    %9677 = vmatpush1.msra.mxu0 %v9639
    %9678 = vmatprep.subr.mxu0 0.0
    %9679 = vmatpush1.msra.mxu0 %v9638
    %9680 = vmatprep.subr.mxu0 0.0
    %9681 = vmatpush1.msra.mxu0 %v9637
    %9682 = vmatprep.subr.mxu0 0.0
    %9683 = vmatpush1.msra.mxu0 %v9636
    %9684 = vmatprep.subr.mxu0 0.0
    %9685 = vmatpush2.msra.mxu0 0.0
    %9686 = vmatprep.subr.mxu0 0.0
    %9687 = vmatpush2.msra.mxu0 0.0
    %9688 = vmatprep.subr.mxu0 0.0
    %9689 = vmatpush2.msra.mxu0 0.0
    %9690 = vmatprep.subr.mxu0 0.0
    %9691 = vmatpush2.msra.mxu0 0.0
    %9692 = vmatprep.subr.mxu0 0.0
    %9693 = vmatpush2.msra.mxu0 0.0
    %9694 = vmatprep.subr.mxu0 0.0
    %9695 = vmatpush2.msra.mxu0 0.0
    %9696 = vmatprep.subr.mxu0 0.0
    %9697 = vmatpush2.msra.mxu0 0.0
    %9698 = vmatprep.subr.mxu0 0.0
    %9699 = vmatpush2.msra.mxu0 0.0
    %9700 = vmatprep.subr.mxu0 0.0
    %9701 = vmatpush2.msra.mxu0 0.0
    %9702 = vmatprep.subr.mxu0 0.0
    %9703 = vmatpush2.msra.mxu0 0.0
    %9704 = vmatprep.subr.mxu0 0.0
    %9705 = vmatpush2.msra.mxu0 0.0
    %9706 = vmatprep.subr.mxu0 0.0
    %9707 = vmatpush2.msra.mxu0 0.0
    %9708 = vmatprep.subr.mxu0 0.0
    %9709 = vmatpush2.msra.mxu0 0.0
    %9710 = vmatprep.subr.mxu0 0.0
    %9711 = vmatpush2.msra.mxu0 0.0
    %9712 = vmatprep.subr.mxu0 0.0
    %9713 = vmatpush2.msra.mxu0 0.0
    %9714 = vmatprep.subr.mxu0 0.0
    %9715 = vmatpush2.msra.mxu0 0.0
    %9716 = vmatprep.mubr.f32.mxu0 0.0
    %9717 = vmatmul.mubr.f32.gmra.mxu0 %v9416
    %v9718 = vpop.f32.mrf.mxu0
    %v9719 = vadd.f32 0.0, %v9718
    %v9720 = vpop.f32.mrf.mxu0
    %9721 = vmatprep.mubr.f32.mxu0 0.0
    %9722 = vmatmul.mubr.f32.gmra.mxu0 %v9421
    %v9723 = vpop.f32.mrf.mxu0
    %v9724 = vadd.f32 0.0, %v9723
    %v9725 = vpop.f32.mrf.mxu0
    %9726 = vmatprep.mubr.f32.mxu0 0.0
    %9727 = vmatmul.mubr.f32.gmra.mxu0 %v9426
    %v9728 = vpop.f32.mrf.mxu0
    %v9729 = vadd.f32 0.0, %v9728
    %v9730 = vpop.f32.mrf.mxu0
    %9731 = vmatprep.mubr.f32.mxu0 0.0
    %9732 = vmatmul.mubr.f32.gmra.mxu0 %v9431
    %v9733 = vpop.f32.mrf.mxu0
    %v9734 = vadd.f32 0.0, %v9733
    %v9735 = vpop.f32.mrf.mxu0
    %9736 = vdwg.mxu0
    %v9737 = vadd.f32 %v9618, %v9719
    %v9738 = vadd.f32 %v9623, %v9724
    %v9739 = vadd.f32 %v9628, %v9729
    %v9740 = vadd.f32 %v9633, %v9734
    %v9741 = vld [vmem:[#allocation13] sm:$0x1]
    %v9743 = vlaneseq
    %v9744 = vshrl.u32 %v9743, 7
    %v9745 = vsub.s32 0, %v9744
    %v9746 = vrot.slane %v9741, %v9745
    %v9748 = vadd.f32 %v9737, %v9746
    %v9749 = vadd.f32 %v9738, %v9746
    %v9750 = vadd.f32 %v9739, %v9746
    %v9751 = vadd.f32 %v9740, %v9746
    %9752 = vst.msk [vmem:[#allocation25] sm:$0xff] %vm2299, %v9748
    %9753 = vst.msk [vmem:[#allocation25 + $0x8] sm:$0xff] %vm2299, %v9749
    %9754 = vst.msk [vmem:[#allocation25 + $0x10] sm:$0xff] %vm2299, %v9750
    %9755 = vst.msk [vmem:[#allocation25 + $0x18] sm:$0xff] %vm2299, %v9751
    // Predicated region
    $region326: #{unet_no_bridge_forward.1} parent=1 // pred_check
      _
    $region327: #{unet_no_bridge_forward.1} parent=1 // pred_check_branch
      %9757 = sbr.rel (0) target = $region329
    $region328: #{unet_no_bridge_forward.1} parent=1 // pred_region
      %s9759 = ssub.s32 512, 512
      %9760 = vsyncadd [#allocation4], %s9759
      %s9761 = sshll.u32 [#allocation25], 4
      %s9762 = int_to_ptr.vmem [resolvable:$true] %s9761
      %9767 = dma.vmem_to_hbm [thread:$0]  %s9762, 512, %s135, [#allocation4], 128, 128, 8
    $region329: #{unet_no_bridge_forward.1} parent=1 // pred_fallthru
      _
    // Predicated region
    $region330: #{unet_no_bridge_forward.1} parent=1 // pred_check
      _
    $region331: #{unet_no_bridge_forward.1} parent=1 // pred_check_branch
      %9769 = sbr.rel (0) target = $region333
    $region332: #{unet_no_bridge_forward.1} parent=1 // pred_region
      %9770 = dma.done [#allocation4], 512
    $region333: #{unet_no_bridge_forward.1} parent=1 // pred_fallthru
      _
    %9771 = vsyncpa [#allocation3], 1
    %9772 = vsyncpa [#allocation6], 1
    %9773 = vsyncpa [#allocation9], 1
    %9774 = vsyncpa [#allocation12], 1
    %9775 = vsyncpa [#allocation15], 1
    %9776 = vsyncpa [#allocation18], 1
    %9777 = vsyncpa [#allocation21], 1
    %9778 = vsyncpa [#allocation24], 1
    %9779 = vsyncpa [#allocation4], 1

</llo_original>
